<compile_context>
chip_gen: v6e
topology: v6e:2x2x1
jax: 0.10.0
libtpu: 0.0.40
codegen_flags: <defaults>
</compile_context>

<pallas_src>
import jax
import jax.numpy as jnp
from jax.experimental import pallas as pl
from jax.experimental.pallas import tpu as pltpu


def _timeflow_partial_kernel(x_ref, p_ref, y_ref, out_ref):
    """One grid step: (TB, S, D) slab -> (1, 1, D) partial sum of squared errors.

    x_ref  : VMEM (TB, S, D)  activations (native dtype, cast in-kernel)
    p_ref  : VMEM (TB, 1, 1)  flow_params slice, indexed by batch (B == D)
    y_ref  : VMEM (TB, S, 1)  targets (already unsqueezed on the lane axis)
    out_ref: VMEM (1, 1, D)   per-tile partial SSE (reduced over batch and seq)
    """
    logits = x_ref[...].astype(jnp.float32) + p_ref[...].astype(jnp.float32)
    # sigmoid(z) == 0.5 * tanh(0.5 * z) + 0.5  -> single EUP op + cheap VPU FMA.
    probs = 0.5 * jnp.tanh(0.5 * logits) + 0.5
    diff = probs - y_ref[...].astype(jnp.float32)          # (TB, S, D) - (TB, S, 1)
    sq = diff * diff
    # Reduce the leading batch-tile axis with plain VPU adds, then one
    # cross-sublane reduce over seq; the feature axis stays lane-dense.
    partial = jnp.sum(sq, axis=0)                          # (S, D)
    out_ref[...] = jnp.sum(partial, axis=0, keepdims=True)[None]   # (1, 1, D)


def _pick_tile_batches(B, per_batch_bytes, budget_bytes):
    """Largest divisor of B whose (x + y) slab fits the per-buffer VMEM budget."""
    max_tb = max(1, budget_bytes // max(per_batch_bytes, 1))
    tb = 1
    for cand in range(1, B + 1):
        if B % cand == 0 and cand <= max_tb:
            tb = cand
    return tb


def timeflow_loss(x, y, flow_params, *, block_budget_bytes=8 * 1024 * 1024):
    """Pallas implementation of TimeFlowLoss.forward(x, y)."""
    B, S, D = x.shape
    assert flow_params.shape == (D,)
    assert y.shape == (B, S)
    # Faithful to the PyTorch (D,1,1)-vs-(B,S,D) broadcast, which requires B == D.
    assert B == D, "PyTorch broadcast of (D,1,1) against (B,S,D) requires B == D"

    # Keep inputs in their native dtype; casts happen inside the kernel.
    p3 = flow_params.reshape(B, 1, 1)        # param indexed by batch (see header)
    y3 = y.reshape(B, S, 1)                  # y.unsqueeze(-1)

    per_batch_bytes = S * D * x.dtype.itemsize + S * y.dtype.itemsize
    tb = _pick_tile_batches(B, per_batch_bytes, block_budget_bytes)
    num_tiles = B // tb
    denom = B * S * D
    # NOTE: if a single (1, S, D) slab ever exceeds the VMEM budget, add a
    # seq-tile grid axis; not needed at these sizes.

    partials = pl.pallas_call(
        _timeflow_partial_kernel,
        grid=(num_tiles,),
        in_specs=[
            pl.BlockSpec((tb, S, D), lambda i: (i, 0, 0)),   # x slab (lane-dense in D)
            pl.BlockSpec((tb, 1, 1), lambda i: (i, 0, 0)),   # flow_params slice
            pl.BlockSpec((tb, S, 1), lambda i: (i, 0, 0)),   # y slab (lane splat)
        ],
        out_specs=pl.BlockSpec((1, 1, D), lambda i: (i, 0, 0)),
        out_shape=jax.ShapeDtypeStruct((num_tiles, 1, D), jnp.float32),
        compiler_params=pltpu.CompilerParams(
            # Tiles are fully independent -> parallel (2 TensorCores on v7x).
            dimension_semantics=("parallel",),
            # Above v5e's 16 MiB default scoped limit, well under v7x's 64 MiB physical.
            vmem_limit_bytes=48 * 1024 * 1024,
        ),
    )(x, p3, y3)

    # Tiny final reduction (num_tiles * D f32 values) in the surrounding XLA graph.
    return jnp.sum(partials) / jnp.float32(denom)


if __name__ == "__main__":
    key = jax.random.PRNGKey(0)
    # B must equal d_model because of the module's (D,1,1)-vs-(B,S,D) broadcast;
    # D = 128 keeps the feature axis lane-dense on TPU.
    B = D = 128
    S = 32
    kx, ky, kp = jax.random.split(key, 3)

    x = jax.random.normal(kx, (B, S, D), dtype=jnp.float32)
    y = jax.random.normal(ky, (B, S), dtype=jnp.float32)
    flow_params = jax.random.normal(kp, (D,), dtype=jnp.float32)  # nn.Parameter stand-in

    # Plain-JAX reference (mirrors the PyTorch forward exactly).
    logits_ref = x + flow_params[:, None, None]
    ref = jnp.mean((jax.nn.sigmoid(logits_ref) - y[:, :, None]) ** 2)

    # Default tiling (whole problem fits one slab -> single grid step).
    loss = jax.block_until_ready(timeflow_loss(x, y, flow_params))
    assert abs(float(loss) - float(ref)) < 1e-5, (float(loss), float(ref))

    # Also exercise the multi-tile path (several batches per grid step).
    loss_tiled = jax.block_until_ready(
        timeflow_loss(x, y, flow_params, block_budget_bytes=256 * 1024))
    assert abs(float(loss_tiled) - float(ref)) < 1e-5, (float(loss_tiled), float(ref))

    print("KERNEL_OK")
</pallas_src>

<mosaic_0001>
module attributes {stable_mosaic.version = 11 : i64} {
  func.func @_timeflow_partial_kernel(%arg0: i32, %arg1: memref<128x32x128xf32, #tpu.memory_space<vmem>>, %arg2: memref<128x1x1xf32, #tpu.memory_space<vmem>>, %arg3: memref<128x32x1xf32, #tpu.memory_space<vmem>>, %arg4: memref<1x1x128xf32, #tpu.memory_space<vmem>>) attributes {dimension_semantics = [#tpu.dimension_semantics<parallel>], iteration_bounds = array<i64: 1>, scalar_prefetch = 0 : i64, scratch_operands = 0 : i64, tpu.core_type = #tpu.core_type<tc>, window_params = [{transform_indices = @transform_0, window_bounds = array<i64: 128, 32, 128>}, {transform_indices = @transform_1, window_bounds = array<i64: 128, 1, 1>}, {transform_indices = @transform_2, window_bounds = array<i64: 128, 32, 1>}, {transform_indices = @transform_3, window_bounds = array<i64: 1, 1, 128>}]} {
    %c0 = arith.constant 0 : index
    %c0_0 = arith.constant 0 : index
    %c0_1 = arith.constant 0 : index
    %0 = vector.load %arg1[%c0, %c0_0, %c0_1] : memref<128x32x128xf32, #tpu.memory_space<vmem>>, vector<128x32x128xf32>
    %c0_2 = arith.constant 0 : index
    %c0_3 = arith.constant 0 : index
    %c0_4 = arith.constant 0 : index
    %1 = vector.load %arg2[%c0_2, %c0_3, %c0_4] : memref<128x1x1xf32, #tpu.memory_space<vmem>>, vector<128x1x1xf32>
    %2 = vector.broadcast %1 : vector<128x1x1xf32> to vector<128x32x128xf32>
    %3 = arith.addf %0, %2 : vector<128x32x128xf32>
    %cst = arith.constant 5.000000e-01 : f32
    %4 = vector.broadcast %cst : f32 to vector<128x32x128xf32>
    %5 = arith.mulf %4, %3 : vector<128x32x128xf32>
    %6 = math.tanh %5 : vector<128x32x128xf32>
    %cst_5 = arith.constant 5.000000e-01 : f32
    %7 = vector.broadcast %cst_5 : f32 to vector<128x32x128xf32>
    %8 = arith.mulf %7, %6 : vector<128x32x128xf32>
    %cst_6 = arith.constant 5.000000e-01 : f32
    %9 = vector.broadcast %cst_6 : f32 to vector<128x32x128xf32>
    %10 = arith.addf %8, %9 : vector<128x32x128xf32>
    %c0_7 = arith.constant 0 : index
    %c0_8 = arith.constant 0 : index
    %c0_9 = arith.constant 0 : index
    %11 = vector.load %arg3[%c0_7, %c0_8, %c0_9] : memref<128x32x1xf32, #tpu.memory_space<vmem>>, vector<128x32x1xf32>
    %12 = vector.broadcast %11 : vector<128x32x1xf32> to vector<128x32x128xf32>
    %13 = arith.subf %10, %12 : vector<128x32x128xf32>
    %14 = arith.mulf %13, %13 : vector<128x32x128xf32>
    %cst_10 = arith.constant dense<0.000000e+00> : vector<32x128xf32>
    %15 = vector.multi_reduction <add>, %14, %cst_10 [0] : vector<128x32x128xf32> to vector<32x128xf32>
    %cst_11 = arith.constant dense<0.000000e+00> : vector<128xf32>
    %16 = vector.multi_reduction <add>, %15, %cst_11 [0] : vector<32x128xf32> to vector<128xf32>
    %17 = vector.shape_cast %16 : vector<128xf32> to vector<1x128xf32>
    %18 = vector.shape_cast %17 : vector<1x128xf32> to vector<1x1x128xf32>
    %c0_12 = arith.constant 0 : index
    %c0_13 = arith.constant 0 : index
    %c0_14 = arith.constant 0 : index
    %19 = vector.load %arg4[%c0_12, %c0_13, %c0_14] : memref<1x1x128xf32, #tpu.memory_space<vmem>>, vector<1x1x128xf32>
    tpu.vector_store %arg4[%c0_12, %c0_13, %c0_14], %18 {strides = array<i32>} : memref<1x1x128xf32, #tpu.memory_space<vmem>>, vector<1x1x128xf32>,
    return
  }
  func.func @transform_0(%arg0: i32) -> (i32, i32, i32) {
    %c0_i32 = arith.constant 0 : i32
    %c0_i32_0 = arith.constant 0 : i32
    %c0_i32_1 = arith.constant 0 : i32
    return %arg0, %c0_i32, %c0_i32_0 : i32, i32, i32
  }
  func.func @transform_1(%arg0: i32) -> (i32, i32, i32) {
    %c0_i32 = arith.constant 0 : i32
    %c0_i32_0 = arith.constant 0 : i32
    %c0_i32_1 = arith.constant 0 : i32
    return %arg0, %c0_i32, %c0_i32_0 : i32, i32, i32
  }
  func.func @transform_2(%arg0: i32) -> (i32, i32, i32) {
    %c0_i32 = arith.constant 0 : i32
    %c0_i32_0 = arith.constant 0 : i32
    %c0_i32_1 = arith.constant 0 : i32
    return %arg0, %c0_i32, %c0_i32_0 : i32, i32, i32
  }
  func.func @transform_3(%arg0: i32) -> (i32, i32, i32) {
    %c0_i32 = arith.constant 0 : i32
    %c0_i32_0 = arith.constant 0 : i32
    %c0_i32_1 = arith.constant 0 : i32
    return %arg0, %c0_i32, %c0_i32_0 : i32, i32, i32
  }
}

</mosaic_0001>

<llo_original>
// kernel: tpu_custom_call.1
$region0: #{tpu_custom_call.1}
  #allocation0 [shape = 'u32[]', space=smem, size = 0x4, offset = 0x4, fixed_abs, tag = 'smem constant byte address 0x4 - core index']
  #allocation1 [shape = 'u32[144,128]{1,0:T(1,128)}', space=vmem, size = 0x12000, scoped, tag = 'internal scratch']
  %s0 = inlined_call_operand.vmem [shape: f32[128,32,128], index: 0, kind: input, shape index: {}]
  %s1 = inlined_call_operand.vmem [shape: f32[128,1,1], index: 1, kind: input, shape index: {}]
  %s2 = inlined_call_operand.vmem [shape: f32[128,32,1], index: 2, kind: input, shape index: {}]
  %s3 = inlined_call_operand.hbm [shape: f32[1,1,128], index: 3, kind: output, shape index: {}]
  %s4 = sld [smem:[#allocation0]]
  $region22: #{tpu_custom_call.1} parent=0
    _
  %s6 = ssub.s32 1, %s4
  %s7 = scalar_select 0, %s6, %s4
  $region1: #{tpu_custom_call.1} parent=0
    #allocation2 [shape = 'u8[512]{0}', space=vmem, size = 0x400, scoped, tag = 'output window, operand 0, single buffered']
    #allocation3 [shape = 's32[1]{0}', space=sflag, size = 0x4, scoped, tag = 'scoped memory for tpu_custom_call.1']
    %8 = vsyncpa [#allocation3], 0
    // Predicated region
    $region2: #{tpu_custom_call.1} parent=1 // pred_check
      _
    $region3: #{tpu_custom_call.1} parent=1 // pred_check_branch
      %10 = sbr.rel (0) target = $region5
    $region4: #{tpu_custom_call.1} parent=1 // pred_region
      _
    $region5: #{tpu_custom_call.1} parent=1 // pred_fallthru
      _
    // Predicated region
    $region6: #{tpu_custom_call.1} parent=1 // pred_check
      _
    $region7: #{tpu_custom_call.1} parent=1 // pred_check_branch
      %12 = sbr.rel (0) target = $region9
    $region8: #{tpu_custom_call.1} parent=1 // pred_region
      _
    $region9: #{tpu_custom_call.1} parent=1 // pred_fallthru
      _
    // Predicated region
    $region10: #{tpu_custom_call.1} parent=1 // pred_check
      _
    $region11: #{tpu_custom_call.1} parent=1 // pred_check_branch
      %14 = sbr.rel (0) target = $region13
    $region12: #{tpu_custom_call.1} parent=1 // pred_region
      _
    $region13: #{tpu_custom_call.1} parent=1 // pred_fallthru
      _
    %v15 = vld [vmem:[%s0] sm:$0xff]
    %v16 = vld [vmem:[%s0 + $0x8] sm:$0xff]
    %v17 = vld [vmem:[%s0 + $0x10] sm:$0xff]
    %v18 = vld [vmem:[%s0 + $0x18] sm:$0xff]
    %v19 = vld [vmem:[%s0 + $0x20] sm:$0xff]
    %v20 = vld [vmem:[%s0 + $0x28] sm:$0xff]
    %v21 = vld [vmem:[%s0 + $0x30] sm:$0xff]
    %v22 = vld [vmem:[%s0 + $0x38] sm:$0xff]
    %v23 = vld [vmem:[%s0 + $0x40] sm:$0xff]
    %v24 = vld [vmem:[%s0 + $0x48] sm:$0xff]
    %v25 = vld [vmem:[%s0 + $0x50] sm:$0xff]
    %v26 = vld [vmem:[%s0 + $0x58] sm:$0xff]
    %v27 = vld [vmem:[%s0 + $0x60] sm:$0xff]
    %v28 = vld [vmem:[%s0 + $0x68] sm:$0xff]
    %v29 = vld [vmem:[%s0 + $0x70] sm:$0xff]
    %v30 = vld [vmem:[%s0 + $0x78] sm:$0xff]
    %v31 = vld [vmem:[%s0 + $0x80] sm:$0xff]
    %v32 = vld [vmem:[%s0 + $0x88] sm:$0xff]
    %v33 = vld [vmem:[%s0 + $0x90] sm:$0xff]
    %v34 = vld [vmem:[%s0 + $0x98] sm:$0xff]
    %v35 = vld [vmem:[%s0 + $0xa0] sm:$0xff]
    %v36 = vld [vmem:[%s0 + $0xa8] sm:$0xff]
    %v37 = vld [vmem:[%s0 + $0xb0] sm:$0xff]
    %v38 = vld [vmem:[%s0 + $0xb8] sm:$0xff]
    %v39 = vld [vmem:[%s0 + $0xc0] sm:$0xff]
    %v40 = vld [vmem:[%s0 + $0xc8] sm:$0xff]
    %v41 = vld [vmem:[%s0 + $0xd0] sm:$0xff]
    %v42 = vld [vmem:[%s0 + $0xd8] sm:$0xff]
    %v43 = vld [vmem:[%s0 + $0xe0] sm:$0xff]
    %v44 = vld [vmem:[%s0 + $0xe8] sm:$0xff]
    %v45 = vld [vmem:[%s0 + $0xf0] sm:$0xff]
    %v46 = vld [vmem:[%s0 + $0xf8] sm:$0xff]
    %v47 = vld [vmem:[%s0 + $0x100] sm:$0xff]
    %v48 = vld [vmem:[%s0 + $0x108] sm:$0xff]
    %v49 = vld [vmem:[%s0 + $0x110] sm:$0xff]
    %v50 = vld [vmem:[%s0 + $0x118] sm:$0xff]
    %v51 = vld [vmem:[%s0 + $0x120] sm:$0xff]
    %v52 = vld [vmem:[%s0 + $0x128] sm:$0xff]
    %v53 = vld [vmem:[%s0 + $0x130] sm:$0xff]
    %v54 = vld [vmem:[%s0 + $0x138] sm:$0xff]
    %v55 = vld [vmem:[%s0 + $0x140] sm:$0xff]
    %v56 = vld [vmem:[%s0 + $0x148] sm:$0xff]
    %v57 = vld [vmem:[%s0 + $0x150] sm:$0xff]
    %v58 = vld [vmem:[%s0 + $0x158] sm:$0xff]
    %v59 = vld [vmem:[%s0 + $0x160] sm:$0xff]
    %v60 = vld [vmem:[%s0 + $0x168] sm:$0xff]
    %v61 = vld [vmem:[%s0 + $0x170] sm:$0xff]
    %v62 = vld [vmem:[%s0 + $0x178] sm:$0xff]
    %v63 = vld [vmem:[%s0 + $0x180] sm:$0xff]
    %v64 = vld [vmem:[%s0 + $0x188] sm:$0xff]
    %v65 = vld [vmem:[%s0 + $0x190] sm:$0xff]
    %v66 = vld [vmem:[%s0 + $0x198] sm:$0xff]
    %v67 = vld [vmem:[%s0 + $0x1a0] sm:$0xff]
    %v68 = vld [vmem:[%s0 + $0x1a8] sm:$0xff]
    %v69 = vld [vmem:[%s0 + $0x1b0] sm:$0xff]
    %v70 = vld [vmem:[%s0 + $0x1b8] sm:$0xff]
    %v71 = vld [vmem:[%s0 + $0x1c0] sm:$0xff]
    %v72 = vld [vmem:[%s0 + $0x1c8] sm:$0xff]
    %v73 = vld [vmem:[%s0 + $0x1d0] sm:$0xff]
    %v74 = vld [vmem:[%s0 + $0x1d8] sm:$0xff]
    %v75 = vld [vmem:[%s0 + $0x1e0] sm:$0xff]
    %v76 = vld [vmem:[%s0 + $0x1e8] sm:$0xff]
    %v77 = vld [vmem:[%s0 + $0x1f0] sm:$0xff]
    %v78 = vld [vmem:[%s0 + $0x1f8] sm:$0xff]
    %v79 = vld [vmem:[%s0 + $0x200] sm:$0xff]
    %v80 = vld [vmem:[%s0 + $0x208] sm:$0xff]
    %v81 = vld [vmem:[%s0 + $0x210] sm:$0xff]
    %v82 = vld [vmem:[%s0 + $0x218] sm:$0xff]
    %v83 = vld [vmem:[%s0 + $0x220] sm:$0xff]
    %v84 = vld [vmem:[%s0 + $0x228] sm:$0xff]
    %v85 = vld [vmem:[%s0 + $0x230] sm:$0xff]
    %v86 = vld [vmem:[%s0 + $0x238] sm:$0xff]
    %v87 = vld [vmem:[%s0 + $0x240] sm:$0xff]
    %v88 = vld [vmem:[%s0 + $0x248] sm:$0xff]
    %v89 = vld [vmem:[%s0 + $0x250] sm:$0xff]
    %v90 = vld [vmem:[%s0 + $0x258] sm:$0xff]
    %v91 = vld [vmem:[%s0 + $0x260] sm:$0xff]
    %v92 = vld [vmem:[%s0 + $0x268] sm:$0xff]
    %v93 = vld [vmem:[%s0 + $0x270] sm:$0xff]
    %v94 = vld [vmem:[%s0 + $0x278] sm:$0xff]
    %v95 = vld [vmem:[%s0 + $0x280] sm:$0xff]
    %v96 = vld [vmem:[%s0 + $0x288] sm:$0xff]
    %v97 = vld [vmem:[%s0 + $0x290] sm:$0xff]
    %v98 = vld [vmem:[%s0 + $0x298] sm:$0xff]
    %v99 = vld [vmem:[%s0 + $0x2a0] sm:$0xff]
    %v100 = vld [vmem:[%s0 + $0x2a8] sm:$0xff]
    %v101 = vld [vmem:[%s0 + $0x2b0] sm:$0xff]
    %v102 = vld [vmem:[%s0 + $0x2b8] sm:$0xff]
    %v103 = vld [vmem:[%s0 + $0x2c0] sm:$0xff]
    %v104 = vld [vmem:[%s0 + $0x2c8] sm:$0xff]
    %v105 = vld [vmem:[%s0 + $0x2d0] sm:$0xff]
    %v106 = vld [vmem:[%s0 + $0x2d8] sm:$0xff]
    %v107 = vld [vmem:[%s0 + $0x2e0] sm:$0xff]
    %v108 = vld [vmem:[%s0 + $0x2e8] sm:$0xff]
    %v109 = vld [vmem:[%s0 + $0x2f0] sm:$0xff]
    %v110 = vld [vmem:[%s0 + $0x2f8] sm:$0xff]
    %v111 = vld [vmem:[%s0 + $0x300] sm:$0xff]
    %v112 = vld [vmem:[%s0 + $0x308] sm:$0xff]
    %v113 = vld [vmem:[%s0 + $0x310] sm:$0xff]
    %v114 = vld [vmem:[%s0 + $0x318] sm:$0xff]
    %v115 = vld [vmem:[%s0 + $0x320] sm:$0xff]
    %v116 = vld [vmem:[%s0 + $0x328] sm:$0xff]
    %v117 = vld [vmem:[%s0 + $0x330] sm:$0xff]
    %v118 = vld [vmem:[%s0 + $0x338] sm:$0xff]
    %v119 = vld [vmem:[%s0 + $0x340] sm:$0xff]
    %v120 = vld [vmem:[%s0 + $0x348] sm:$0xff]
    %v121 = vld [vmem:[%s0 + $0x350] sm:$0xff]
    %v122 = vld [vmem:[%s0 + $0x358] sm:$0xff]
    %v123 = vld [vmem:[%s0 + $0x360] sm:$0xff]
    %v124 = vld [vmem:[%s0 + $0x368] sm:$0xff]
    %v125 = vld [vmem:[%s0 + $0x370] sm:$0xff]
    %v126 = vld [vmem:[%s0 + $0x378] sm:$0xff]
    %v127 = vld [vmem:[%s0 + $0x380] sm:$0xff]
    %v128 = vld [vmem:[%s0 + $0x388] sm:$0xff]
    %v129 = vld [vmem:[%s0 + $0x390] sm:$0xff]
    %v130 = vld [vmem:[%s0 + $0x398] sm:$0xff]
    %v131 = vld [vmem:[%s0 + $0x3a0] sm:$0xff]
    %v132 = vld [vmem:[%s0 + $0x3a8] sm:$0xff]
    %v133 = vld [vmem:[%s0 + $0x3b0] sm:$0xff]
    %v134 = vld [vmem:[%s0 + $0x3b8] sm:$0xff]
    %v135 = vld [vmem:[%s0 + $0x3c0] sm:$0xff]
    %v136 = vld [vmem:[%s0 + $0x3c8] sm:$0xff]
    %v137 = vld [vmem:[%s0 + $0x3d0] sm:$0xff]
    %v138 = vld [vmem:[%s0 + $0x3d8] sm:$0xff]
    %v139 = vld [vmem:[%s0 + $0x3e0] sm:$0xff]
    %v140 = vld [vmem:[%s0 + $0x3e8] sm:$0xff]
    %v141 = vld [vmem:[%s0 + $0x3f0] sm:$0xff]
    %v142 = vld [vmem:[%s0 + $0x3f8] sm:$0xff]
    %v143 = vld [vmem:[%s0 + $0x400] sm:$0xff]
    %v144 = vld [vmem:[%s0 + $0x408] sm:$0xff]
    %v145 = vld [vmem:[%s0 + $0x410] sm:$0xff]
    %v146 = vld [vmem:[%s0 + $0x418] sm:$0xff]
    %v147 = vld [vmem:[%s0 + $0x420] sm:$0xff]
    %v148 = vld [vmem:[%s0 + $0x428] sm:$0xff]
    %v149 = vld [vmem:[%s0 + $0x430] sm:$0xff]
    %v150 = vld [vmem:[%s0 + $0x438] sm:$0xff]
    %v151 = vld [vmem:[%s0 + $0x440] sm:$0xff]
    %v152 = vld [vmem:[%s0 + $0x448] sm:$0xff]
    %v153 = vld [vmem:[%s0 + $0x450] sm:$0xff]
    %v154 = vld [vmem:[%s0 + $0x458] sm:$0xff]
    %v155 = vld [vmem:[%s0 + $0x460] sm:$0xff]
    %v156 = vld [vmem:[%s0 + $0x468] sm:$0xff]
    %v157 = vld [vmem:[%s0 + $0x470] sm:$0xff]
    %v158 = vld [vmem:[%s0 + $0x478] sm:$0xff]
    %v159 = vld [vmem:[%s0 + $0x480] sm:$0xff]
    %v160 = vld [vmem:[%s0 + $0x488] sm:$0xff]
    %v161 = vld [vmem:[%s0 + $0x490] sm:$0xff]
    %v162 = vld [vmem:[%s0 + $0x498] sm:$0xff]
    %v163 = vld [vmem:[%s0 + $0x4a0] sm:$0xff]
    %v164 = vld [vmem:[%s0 + $0x4a8] sm:$0xff]
    %v165 = vld [vmem:[%s0 + $0x4b0] sm:$0xff]
    %v166 = vld [vmem:[%s0 + $0x4b8] sm:$0xff]
    %v167 = vld [vmem:[%s0 + $0x4c0] sm:$0xff]
    %v168 = vld [vmem:[%s0 + $0x4c8] sm:$0xff]
    %v169 = vld [vmem:[%s0 + $0x4d0] sm:$0xff]
    %v170 = vld [vmem:[%s0 + $0x4d8] sm:$0xff]
    %v171 = vld [vmem:[%s0 + $0x4e0] sm:$0xff]
    %v172 = vld [vmem:[%s0 + $0x4e8] sm:$0xff]
    %v173 = vld [vmem:[%s0 + $0x4f0] sm:$0xff]
    %v174 = vld [vmem:[%s0 + $0x4f8] sm:$0xff]
    %v175 = vld [vmem:[%s0 + $0x500] sm:$0xff]
    %v176 = vld [vmem:[%s0 + $0x508] sm:$0xff]
    %v177 = vld [vmem:[%s0 + $0x510] sm:$0xff]
    %v178 = vld [vmem:[%s0 + $0x518] sm:$0xff]
    %v179 = vld [vmem:[%s0 + $0x520] sm:$0xff]
    %v180 = vld [vmem:[%s0 + $0x528] sm:$0xff]
    %v181 = vld [vmem:[%s0 + $0x530] sm:$0xff]
    %v182 = vld [vmem:[%s0 + $0x538] sm:$0xff]
    %v183 = vld [vmem:[%s0 + $0x540] sm:$0xff]
    %v184 = vld [vmem:[%s0 + $0x548] sm:$0xff]
    %v185 = vld [vmem:[%s0 + $0x550] sm:$0xff]
    %v186 = vld [vmem:[%s0 + $0x558] sm:$0xff]
    %v187 = vld [vmem:[%s0 + $0x560] sm:$0xff]
    %v188 = vld [vmem:[%s0 + $0x568] sm:$0xff]
    %v189 = vld [vmem:[%s0 + $0x570] sm:$0xff]
    %v190 = vld [vmem:[%s0 + $0x578] sm:$0xff]
    %v191 = vld [vmem:[%s0 + $0x580] sm:$0xff]
    %v192 = vld [vmem:[%s0 + $0x588] sm:$0xff]
    %v193 = vld [vmem:[%s0 + $0x590] sm:$0xff]
    %v194 = vld [vmem:[%s0 + $0x598] sm:$0xff]
    %v195 = vld [vmem:[%s0 + $0x5a0] sm:$0xff]
    %v196 = vld [vmem:[%s0 + $0x5a8] sm:$0xff]
    %v197 = vld [vmem:[%s0 + $0x5b0] sm:$0xff]
    %v198 = vld [vmem:[%s0 + $0x5b8] sm:$0xff]
    %v199 = vld [vmem:[%s0 + $0x5c0] sm:$0xff]
    %v200 = vld [vmem:[%s0 + $0x5c8] sm:$0xff]
    %v201 = vld [vmem:[%s0 + $0x5d0] sm:$0xff]
    %v202 = vld [vmem:[%s0 + $0x5d8] sm:$0xff]
    %v203 = vld [vmem:[%s0 + $0x5e0] sm:$0xff]
    %v204 = vld [vmem:[%s0 + $0x5e8] sm:$0xff]
    %v205 = vld [vmem:[%s0 + $0x5f0] sm:$0xff]
    %v206 = vld [vmem:[%s0 + $0x5f8] sm:$0xff]
    %v207 = vld [vmem:[%s0 + $0x600] sm:$0xff]
    %v208 = vld [vmem:[%s0 + $0x608] sm:$0xff]
    %v209 = vld [vmem:[%s0 + $0x610] sm:$0xff]
    %v210 = vld [vmem:[%s0 + $0x618] sm:$0xff]
    %v211 = vld [vmem:[%s0 + $0x620] sm:$0xff]
    %v212 = vld [vmem:[%s0 + $0x628] sm:$0xff]
    %v213 = vld [vmem:[%s0 + $0x630] sm:$0xff]
    %v214 = vld [vmem:[%s0 + $0x638] sm:$0xff]
    %v215 = vld [vmem:[%s0 + $0x640] sm:$0xff]
    %v216 = vld [vmem:[%s0 + $0x648] sm:$0xff]
    %v217 = vld [vmem:[%s0 + $0x650] sm:$0xff]
    %v218 = vld [vmem:[%s0 + $0x658] sm:$0xff]
    %v219 = vld [vmem:[%s0 + $0x660] sm:$0xff]
    %v220 = vld [vmem:[%s0 + $0x668] sm:$0xff]
    %v221 = vld [vmem:[%s0 + $0x670] sm:$0xff]
    %v222 = vld [vmem:[%s0 + $0x678] sm:$0xff]
    %v223 = vld [vmem:[%s0 + $0x680] sm:$0xff]
    %v224 = vld [vmem:[%s0 + $0x688] sm:$0xff]
    %v225 = vld [vmem:[%s0 + $0x690] sm:$0xff]
    %v226 = vld [vmem:[%s0 + $0x698] sm:$0xff]
    %v227 = vld [vmem:[%s0 + $0x6a0] sm:$0xff]
    %v228 = vld [vmem:[%s0 + $0x6a8] sm:$0xff]
    %v229 = vld [vmem:[%s0 + $0x6b0] sm:$0xff]
    %v230 = vld [vmem:[%s0 + $0x6b8] sm:$0xff]
    %v231 = vld [vmem:[%s0 + $0x6c0] sm:$0xff]
    %v232 = vld [vmem:[%s0 + $0x6c8] sm:$0xff]
    %v233 = vld [vmem:[%s0 + $0x6d0] sm:$0xff]
    %v234 = vld [vmem:[%s0 + $0x6d8] sm:$0xff]
    %v235 = vld [vmem:[%s0 + $0x6e0] sm:$0xff]
    %v236 = vld [vmem:[%s0 + $0x6e8] sm:$0xff]
    %v237 = vld [vmem:[%s0 + $0x6f0] sm:$0xff]
    %v238 = vld [vmem:[%s0 + $0x6f8] sm:$0xff]
    %v239 = vld [vmem:[%s0 + $0x700] sm:$0xff]
    %v240 = vld [vmem:[%s0 + $0x708] sm:$0xff]
    %v241 = vld [vmem:[%s0 + $0x710] sm:$0xff]
    %v242 = vld [vmem:[%s0 + $0x718] sm:$0xff]
    %v243 = vld [vmem:[%s0 + $0x720] sm:$0xff]
    %v244 = vld [vmem:[%s0 + $0x728] sm:$0xff]
    %v245 = vld [vmem:[%s0 + $0x730] sm:$0xff]
    %v246 = vld [vmem:[%s0 + $0x738] sm:$0xff]
    %v247 = vld [vmem:[%s0 + $0x740] sm:$0xff]
    %v248 = vld [vmem:[%s0 + $0x748] sm:$0xff]
    %v249 = vld [vmem:[%s0 + $0x750] sm:$0xff]
    %v250 = vld [vmem:[%s0 + $0x758] sm:$0xff]
    %v251 = vld [vmem:[%s0 + $0x760] sm:$0xff]
    %v252 = vld [vmem:[%s0 + $0x768] sm:$0xff]
    %v253 = vld [vmem:[%s0 + $0x770] sm:$0xff]
    %v254 = vld [vmem:[%s0 + $0x778] sm:$0xff]
    %v255 = vld [vmem:[%s0 + $0x780] sm:$0xff]
    %v256 = vld [vmem:[%s0 + $0x788] sm:$0xff]
    %v257 = vld [vmem:[%s0 + $0x790] sm:$0xff]
    %v258 = vld [vmem:[%s0 + $0x798] sm:$0xff]
    %v259 = vld [vmem:[%s0 + $0x7a0] sm:$0xff]
    %v260 = vld [vmem:[%s0 + $0x7a8] sm:$0xff]
    %v261 = vld [vmem:[%s0 + $0x7b0] sm:$0xff]
    %v262 = vld [vmem:[%s0 + $0x7b8] sm:$0xff]
    %v263 = vld [vmem:[%s0 + $0x7c0] sm:$0xff]
    %v264 = vld [vmem:[%s0 + $0x7c8] sm:$0xff]
    %v265 = vld [vmem:[%s0 + $0x7d0] sm:$0xff]
    %v266 = vld [vmem:[%s0 + $0x7d8] sm:$0xff]
    %v267 = vld [vmem:[%s0 + $0x7e0] sm:$0xff]
    %v268 = vld [vmem:[%s0 + $0x7e8] sm:$0xff]
    %v269 = vld [vmem:[%s0 + $0x7f0] sm:$0xff]
    %v270 = vld [vmem:[%s0 + $0x7f8] sm:$0xff]
    %v271 = vld [vmem:[%s0 + $0x800] sm:$0xff]
    %v272 = vld [vmem:[%s0 + $0x808] sm:$0xff]
    %v273 = vld [vmem:[%s0 + $0x810] sm:$0xff]
    %v274 = vld [vmem:[%s0 + $0x818] sm:$0xff]
    %v275 = vld [vmem:[%s0 + $0x820] sm:$0xff]
    %v276 = vld [vmem:[%s0 + $0x828] sm:$0xff]
    %v277 = vld [vmem:[%s0 + $0x830] sm:$0xff]
    %v278 = vld [vmem:[%s0 + $0x838] sm:$0xff]
    %v279 = vld [vmem:[%s0 + $0x840] sm:$0xff]
    %v280 = vld [vmem:[%s0 + $0x848] sm:$0xff]
    %v281 = vld [vmem:[%s0 + $0x850] sm:$0xff]
    %v282 = vld [vmem:[%s0 + $0x858] sm:$0xff]
    %v283 = vld [vmem:[%s0 + $0x860] sm:$0xff]
    %v284 = vld [vmem:[%s0 + $0x868] sm:$0xff]
    %v285 = vld [vmem:[%s0 + $0x870] sm:$0xff]
    %v286 = vld [vmem:[%s0 + $0x878] sm:$0xff]
    %v287 = vld [vmem:[%s0 + $0x880] sm:$0xff]
    %v288 = vld [vmem:[%s0 + $0x888] sm:$0xff]
    %v289 = vld [vmem:[%s0 + $0x890] sm:$0xff]
    %v290 = vld [vmem:[%s0 + $0x898] sm:$0xff]
    %v291 = vld [vmem:[%s0 + $0x8a0] sm:$0xff]
    %v292 = vld [vmem:[%s0 + $0x8a8] sm:$0xff]
    %v293 = vld [vmem:[%s0 + $0x8b0] sm:$0xff]
    %v294 = vld [vmem:[%s0 + $0x8b8] sm:$0xff]
    %v295 = vld [vmem:[%s0 + $0x8c0] sm:$0xff]
    %v296 = vld [vmem:[%s0 + $0x8c8] sm:$0xff]
    %v297 = vld [vmem:[%s0 + $0x8d0] sm:$0xff]
    %v298 = vld [vmem:[%s0 + $0x8d8] sm:$0xff]
    %v299 = vld [vmem:[%s0 + $0x8e0] sm:$0xff]
    %v300 = vld [vmem:[%s0 + $0x8e8] sm:$0xff]
    %v301 = vld [vmem:[%s0 + $0x8f0] sm:$0xff]
    %v302 = vld [vmem:[%s0 + $0x8f8] sm:$0xff]
    %v303 = vld [vmem:[%s0 + $0x900] sm:$0xff]
    %v304 = vld [vmem:[%s0 + $0x908] sm:$0xff]
    %v305 = vld [vmem:[%s0 + $0x910] sm:$0xff]
    %v306 = vld [vmem:[%s0 + $0x918] sm:$0xff]
    %v307 = vld [vmem:[%s0 + $0x920] sm:$0xff]
    %v308 = vld [vmem:[%s0 + $0x928] sm:$0xff]
    %v309 = vld [vmem:[%s0 + $0x930] sm:$0xff]
    %v310 = vld [vmem:[%s0 + $0x938] sm:$0xff]
    %v311 = vld [vmem:[%s0 + $0x940] sm:$0xff]
    %v312 = vld [vmem:[%s0 + $0x948] sm:$0xff]
    %v313 = vld [vmem:[%s0 + $0x950] sm:$0xff]
    %v314 = vld [vmem:[%s0 + $0x958] sm:$0xff]
    %v315 = vld [vmem:[%s0 + $0x960] sm:$0xff]
    %v316 = vld [vmem:[%s0 + $0x968] sm:$0xff]
    %v317 = vld [vmem:[%s0 + $0x970] sm:$0xff]
    %v318 = vld [vmem:[%s0 + $0x978] sm:$0xff]
    %v319 = vld [vmem:[%s0 + $0x980] sm:$0xff]
    %v320 = vld [vmem:[%s0 + $0x988] sm:$0xff]
    %v321 = vld [vmem:[%s0 + $0x990] sm:$0xff]
    %v322 = vld [vmem:[%s0 + $0x998] sm:$0xff]
    %v323 = vld [vmem:[%s0 + $0x9a0] sm:$0xff]
    %v324 = vld [vmem:[%s0 + $0x9a8] sm:$0xff]
    %v325 = vld [vmem:[%s0 + $0x9b0] sm:$0xff]
    %v326 = vld [vmem:[%s0 + $0x9b8] sm:$0xff]
    %v327 = vld [vmem:[%s0 + $0x9c0] sm:$0xff]
    %v328 = vld [vmem:[%s0 + $0x9c8] sm:$0xff]
    %v329 = vld [vmem:[%s0 + $0x9d0] sm:$0xff]
    %v330 = vld [vmem:[%s0 + $0x9d8] sm:$0xff]
    %v331 = vld [vmem:[%s0 + $0x9e0] sm:$0xff]
    %v332 = vld [vmem:[%s0 + $0x9e8] sm:$0xff]
    %v333 = vld [vmem:[%s0 + $0x9f0] sm:$0xff]
    %v334 = vld [vmem:[%s0 + $0x9f8] sm:$0xff]
    %v335 = vld [vmem:[%s0 + $0xa00] sm:$0xff]
    %v336 = vld [vmem:[%s0 + $0xa08] sm:$0xff]
    %v337 = vld [vmem:[%s0 + $0xa10] sm:$0xff]
    %v338 = vld [vmem:[%s0 + $0xa18] sm:$0xff]
    %v339 = vld [vmem:[%s0 + $0xa20] sm:$0xff]
    %v340 = vld [vmem:[%s0 + $0xa28] sm:$0xff]
    %v341 = vld [vmem:[%s0 + $0xa30] sm:$0xff]
    %v342 = vld [vmem:[%s0 + $0xa38] sm:$0xff]
    %v343 = vld [vmem:[%s0 + $0xa40] sm:$0xff]
    %v344 = vld [vmem:[%s0 + $0xa48] sm:$0xff]
    %v345 = vld [vmem:[%s0 + $0xa50] sm:$0xff]
    %v346 = vld [vmem:[%s0 + $0xa58] sm:$0xff]
    %v347 = vld [vmem:[%s0 + $0xa60] sm:$0xff]
    %v348 = vld [vmem:[%s0 + $0xa68] sm:$0xff]
    %v349 = vld [vmem:[%s0 + $0xa70] sm:$0xff]
    %v350 = vld [vmem:[%s0 + $0xa78] sm:$0xff]
    %v351 = vld [vmem:[%s0 + $0xa80] sm:$0xff]
    %v352 = vld [vmem:[%s0 + $0xa88] sm:$0xff]
    %v353 = vld [vmem:[%s0 + $0xa90] sm:$0xff]
    %v354 = vld [vmem:[%s0 + $0xa98] sm:$0xff]
    %v355 = vld [vmem:[%s0 + $0xaa0] sm:$0xff]
    %v356 = vld [vmem:[%s0 + $0xaa8] sm:$0xff]
    %v357 = vld [vmem:[%s0 + $0xab0] sm:$0xff]
    %v358 = vld [vmem:[%s0 + $0xab8] sm:$0xff]
    %v359 = vld [vmem:[%s0 + $0xac0] sm:$0xff]
    %v360 = vld [vmem:[%s0 + $0xac8] sm:$0xff]
    %v361 = vld [vmem:[%s0 + $0xad0] sm:$0xff]
    %v362 = vld [vmem:[%s0 + $0xad8] sm:$0xff]
    %v363 = vld [vmem:[%s0 + $0xae0] sm:$0xff]
    %v364 = vld [vmem:[%s0 + $0xae8] sm:$0xff]
    %v365 = vld [vmem:[%s0 + $0xaf0] sm:$0xff]
    %v366 = vld [vmem:[%s0 + $0xaf8] sm:$0xff]
    %v367 = vld [vmem:[%s0 + $0xb00] sm:$0xff]
    %v368 = vld [vmem:[%s0 + $0xb08] sm:$0xff]
    %v369 = vld [vmem:[%s0 + $0xb10] sm:$0xff]
    %v370 = vld [vmem:[%s0 + $0xb18] sm:$0xff]
    %v371 = vld [vmem:[%s0 + $0xb20] sm:$0xff]
    %v372 = vld [vmem:[%s0 + $0xb28] sm:$0xff]
    %v373 = vld [vmem:[%s0 + $0xb30] sm:$0xff]
    %v374 = vld [vmem:[%s0 + $0xb38] sm:$0xff]
    %v375 = vld [vmem:[%s0 + $0xb40] sm:$0xff]
    %v376 = vld [vmem:[%s0 + $0xb48] sm:$0xff]
    %v377 = vld [vmem:[%s0 + $0xb50] sm:$0xff]
    %v378 = vld [vmem:[%s0 + $0xb58] sm:$0xff]
    %v379 = vld [vmem:[%s0 + $0xb60] sm:$0xff]
    %v380 = vld [vmem:[%s0 + $0xb68] sm:$0xff]
    %v381 = vld [vmem:[%s0 + $0xb70] sm:$0xff]
    %v382 = vld [vmem:[%s0 + $0xb78] sm:$0xff]
    %v383 = vld [vmem:[%s0 + $0xb80] sm:$0xff]
    %v384 = vld [vmem:[%s0 + $0xb88] sm:$0xff]
    %v385 = vld [vmem:[%s0 + $0xb90] sm:$0xff]
    %v386 = vld [vmem:[%s0 + $0xb98] sm:$0xff]
    %v387 = vld [vmem:[%s0 + $0xba0] sm:$0xff]
    %v388 = vld [vmem:[%s0 + $0xba8] sm:$0xff]
    %v389 = vld [vmem:[%s0 + $0xbb0] sm:$0xff]
    %v390 = vld [vmem:[%s0 + $0xbb8] sm:$0xff]
    %v391 = vld [vmem:[%s0 + $0xbc0] sm:$0xff]
    %v392 = vld [vmem:[%s0 + $0xbc8] sm:$0xff]
    %v393 = vld [vmem:[%s0 + $0xbd0] sm:$0xff]
    %v394 = vld [vmem:[%s0 + $0xbd8] sm:$0xff]
    %v395 = vld [vmem:[%s0 + $0xbe0] sm:$0xff]
    %v396 = vld [vmem:[%s0 + $0xbe8] sm:$0xff]
    %v397 = vld [vmem:[%s0 + $0xbf0] sm:$0xff]
    %v398 = vld [vmem:[%s0 + $0xbf8] sm:$0xff]
    %v399 = vld [vmem:[%s0 + $0xc00] sm:$0xff]
    %v400 = vld [vmem:[%s0 + $0xc08] sm:$0xff]
    %v401 = vld [vmem:[%s0 + $0xc10] sm:$0xff]
    %v402 = vld [vmem:[%s0 + $0xc18] sm:$0xff]
    %v403 = vld [vmem:[%s0 + $0xc20] sm:$0xff]
    %v404 = vld [vmem:[%s0 + $0xc28] sm:$0xff]
    %v405 = vld [vmem:[%s0 + $0xc30] sm:$0xff]
    %v406 = vld [vmem:[%s0 + $0xc38] sm:$0xff]
    %v407 = vld [vmem:[%s0 + $0xc40] sm:$0xff]
    %v408 = vld [vmem:[%s0 + $0xc48] sm:$0xff]
    %v409 = vld [vmem:[%s0 + $0xc50] sm:$0xff]
    %v410 = vld [vmem:[%s0 + $0xc58] sm:$0xff]
    %v411 = vld [vmem:[%s0 + $0xc60] sm:$0xff]
    %v412 = vld [vmem:[%s0 + $0xc68] sm:$0xff]
    %v413 = vld [vmem:[%s0 + $0xc70] sm:$0xff]
    %v414 = vld [vmem:[%s0 + $0xc78] sm:$0xff]
    %v415 = vld [vmem:[%s0 + $0xc80] sm:$0xff]
    %v416 = vld [vmem:[%s0 + $0xc88] sm:$0xff]
    %v417 = vld [vmem:[%s0 + $0xc90] sm:$0xff]
    %v418 = vld [vmem:[%s0 + $0xc98] sm:$0xff]
    %v419 = vld [vmem:[%s0 + $0xca0] sm:$0xff]
    %v420 = vld [vmem:[%s0 + $0xca8] sm:$0xff]
    %v421 = vld [vmem:[%s0 + $0xcb0] sm:$0xff]
    %v422 = vld [vmem:[%s0 + $0xcb8] sm:$0xff]
    %v423 = vld [vmem:[%s0 + $0xcc0] sm:$0xff]
    %v424 = vld [vmem:[%s0 + $0xcc8] sm:$0xff]
    %v425 = vld [vmem:[%s0 + $0xcd0] sm:$0xff]
    %v426 = vld [vmem:[%s0 + $0xcd8] sm:$0xff]
    %v427 = vld [vmem:[%s0 + $0xce0] sm:$0xff]
    %v428 = vld [vmem:[%s0 + $0xce8] sm:$0xff]
    %v429 = vld [vmem:[%s0 + $0xcf0] sm:$0xff]
    %v430 = vld [vmem:[%s0 + $0xcf8] sm:$0xff]
    %v431 = vld [vmem:[%s0 + $0xd00] sm:$0xff]
    %v432 = vld [vmem:[%s0 + $0xd08] sm:$0xff]
    %v433 = vld [vmem:[%s0 + $0xd10] sm:$0xff]
    %v434 = vld [vmem:[%s0 + $0xd18] sm:$0xff]
    %v435 = vld [vmem:[%s0 + $0xd20] sm:$0xff]
    %v436 = vld [vmem:[%s0 + $0xd28] sm:$0xff]
    %v437 = vld [vmem:[%s0 + $0xd30] sm:$0xff]
    %v438 = vld [vmem:[%s0 + $0xd38] sm:$0xff]
    %v439 = vld [vmem:[%s0 + $0xd40] sm:$0xff]
    %v440 = vld [vmem:[%s0 + $0xd48] sm:$0xff]
    %v441 = vld [vmem:[%s0 + $0xd50] sm:$0xff]
    %v442 = vld [vmem:[%s0 + $0xd58] sm:$0xff]
    %v443 = vld [vmem:[%s0 + $0xd60] sm:$0xff]
    %v444 = vld [vmem:[%s0 + $0xd68] sm:$0xff]
    %v445 = vld [vmem:[%s0 + $0xd70] sm:$0xff]
    %v446 = vld [vmem:[%s0 + $0xd78] sm:$0xff]
    %v447 = vld [vmem:[%s0 + $0xd80] sm:$0xff]
    %v448 = vld [vmem:[%s0 + $0xd88] sm:$0xff]
    %v449 = vld [vmem:[%s0 + $0xd90] sm:$0xff]
    %v450 = vld [vmem:[%s0 + $0xd98] sm:$0xff]
    %v451 = vld [vmem:[%s0 + $0xda0] sm:$0xff]
    %v452 = vld [vmem:[%s0 + $0xda8] sm:$0xff]
    %v453 = vld [vmem:[%s0 + $0xdb0] sm:$0xff]
    %v454 = vld [vmem:[%s0 + $0xdb8] sm:$0xff]
    %v455 = vld [vmem:[%s0 + $0xdc0] sm:$0xff]
    %v456 = vld [vmem:[%s0 + $0xdc8] sm:$0xff]
    %v457 = vld [vmem:[%s0 + $0xdd0] sm:$0xff]
    %v458 = vld [vmem:[%s0 + $0xdd8] sm:$0xff]
    %v459 = vld [vmem:[%s0 + $0xde0] sm:$0xff]
    %v460 = vld [vmem:[%s0 + $0xde8] sm:$0xff]
    %v461 = vld [vmem:[%s0 + $0xdf0] sm:$0xff]
    %v462 = vld [vmem:[%s0 + $0xdf8] sm:$0xff]
    %v463 = vld [vmem:[%s0 + $0xe00] sm:$0xff]
    %v464 = vld [vmem:[%s0 + $0xe08] sm:$0xff]
    %v465 = vld [vmem:[%s0 + $0xe10] sm:$0xff]
    %v466 = vld [vmem:[%s0 + $0xe18] sm:$0xff]
    %v467 = vld [vmem:[%s0 + $0xe20] sm:$0xff]
    %v468 = vld [vmem:[%s0 + $0xe28] sm:$0xff]
    %v469 = vld [vmem:[%s0 + $0xe30] sm:$0xff]
    %v470 = vld [vmem:[%s0 + $0xe38] sm:$0xff]
    %v471 = vld [vmem:[%s0 + $0xe40] sm:$0xff]
    %v472 = vld [vmem:[%s0 + $0xe48] sm:$0xff]
    %v473 = vld [vmem:[%s0 + $0xe50] sm:$0xff]
    %v474 = vld [vmem:[%s0 + $0xe58] sm:$0xff]
    %v475 = vld [vmem:[%s0 + $0xe60] sm:$0xff]
    %v476 = vld [vmem:[%s0 + $0xe68] sm:$0xff]
    %v477 = vld [vmem:[%s0 + $0xe70] sm:$0xff]
    %v478 = vld [vmem:[%s0 + $0xe78] sm:$0xff]
    %v479 = vld [vmem:[%s0 + $0xe80] sm:$0xff]
    %v480 = vld [vmem:[%s0 + $0xe88] sm:$0xff]
    %v481 = vld [vmem:[%s0 + $0xe90] sm:$0xff]
    %v482 = vld [vmem:[%s0 + $0xe98] sm:$0xff]
    %v483 = vld [vmem:[%s0 + $0xea0] sm:$0xff]
    %v484 = vld [vmem:[%s0 + $0xea8] sm:$0xff]
    %v485 = vld [vmem:[%s0 + $0xeb0] sm:$0xff]
    %v486 = vld [vmem:[%s0 + $0xeb8] sm:$0xff]
    %v487 = vld [vmem:[%s0 + $0xec0] sm:$0xff]
    %v488 = vld [vmem:[%s0 + $0xec8] sm:$0xff]
    %v489 = vld [vmem:[%s0 + $0xed0] sm:$0xff]
    %v490 = vld [vmem:[%s0 + $0xed8] sm:$0xff]
    %v491 = vld [vmem:[%s0 + $0xee0] sm:$0xff]
    %v492 = vld [vmem:[%s0 + $0xee8] sm:$0xff]
    %v493 = vld [vmem:[%s0 + $0xef0] sm:$0xff]
    %v494 = vld [vmem:[%s0 + $0xef8] sm:$0xff]
    %v495 = vld [vmem:[%s0 + $0xf00] sm:$0xff]
    %v496 = vld [vmem:[%s0 + $0xf08] sm:$0xff]
    %v497 = vld [vmem:[%s0 + $0xf10] sm:$0xff]
    %v498 = vld [vmem:[%s0 + $0xf18] sm:$0xff]
    %v499 = vld [vmem:[%s0 + $0xf20] sm:$0xff]
    %v500 = vld [vmem:[%s0 + $0xf28] sm:$0xff]
    %v501 = vld [vmem:[%s0 + $0xf30] sm:$0xff]
    %v502 = vld [vmem:[%s0 + $0xf38] sm:$0xff]
    %v503 = vld [vmem:[%s0 + $0xf40] sm:$0xff]
    %v504 = vld [vmem:[%s0 + $0xf48] sm:$0xff]
    %v505 = vld [vmem:[%s0 + $0xf50] sm:$0xff]
    %v506 = vld [vmem:[%s0 + $0xf58] sm:$0xff]
    %v507 = vld [vmem:[%s0 + $0xf60] sm:$0xff]
    %v508 = vld [vmem:[%s0 + $0xf68] sm:$0xff]
    %v509 = vld [vmem:[%s0 + $0xf70] sm:$0xff]
    %v510 = vld [vmem:[%s0 + $0xf78] sm:$0xff]
    %v511 = vld [vmem:[%s0 + $0xf80] sm:$0xff]
    %v512 = vld [vmem:[%s0 + $0xf88] sm:$0xff]
    %v513 = vld [vmem:[%s0 + $0xf90] sm:$0xff]
    %v514 = vld [vmem:[%s0 + $0xf98] sm:$0xff]
    %v515 = vld [vmem:[%s0 + $0xfa0] sm:$0xff]
    %v516 = vld [vmem:[%s0 + $0xfa8] sm:$0xff]
    %v517 = vld [vmem:[%s0 + $0xfb0] sm:$0xff]
    %v518 = vld [vmem:[%s0 + $0xfb8] sm:$0xff]
    %v519 = vld [vmem:[%s0 + $0xfc0] sm:$0xff]
    %v520 = vld [vmem:[%s0 + $0xfc8] sm:$0xff]
    %v521 = vld [vmem:[%s0 + $0xfd0] sm:$0xff]
    %v522 = vld [vmem:[%s0 + $0xfd8] sm:$0xff]
    %v523 = vld [vmem:[%s0 + $0xfe0] sm:$0xff]
    %v524 = vld [vmem:[%s0 + $0xfe8] sm:$0xff]
    %v525 = vld [vmem:[%s0 + $0xff0] sm:$0xff]
    %v526 = vld [vmem:[%s0 + $0xff8] sm:$0xff]
    %v527 = vld [vmem:[%s1] sm:$0x1]
    %v528 = vld [vmem:[%s1 + $0x1] sm:$0x1]
    %v529 = vld [vmem:[%s1 + $0x2] sm:$0x1]
    %v530 = vld [vmem:[%s1 + $0x3] sm:$0x1]
    %v531 = vld [vmem:[%s1 + $0x4] sm:$0x1]
    %v532 = vld [vmem:[%s1 + $0x5] sm:$0x1]
    %v533 = vld [vmem:[%s1 + $0x6] sm:$0x1]
    %v534 = vld [vmem:[%s1 + $0x7] sm:$0x1]
    %v535 = vld [vmem:[%s1 + $0x8] sm:$0x1]
    %v536 = vld [vmem:[%s1 + $0x9] sm:$0x1]
    %v537 = vld [vmem:[%s1 + $0xa] sm:$0x1]
    %v538 = vld [vmem:[%s1 + $0xb] sm:$0x1]
    %v539 = vld [vmem:[%s1 + $0xc] sm:$0x1]
    %v540 = vld [vmem:[%s1 + $0xd] sm:$0x1]
    %v541 = vld [vmem:[%s1 + $0xe] sm:$0x1]
    %v542 = vld [vmem:[%s1 + $0xf] sm:$0x1]
    %v543 = vld [vmem:[%s1 + $0x10] sm:$0x1]
    %v544 = vld [vmem:[%s1 + $0x11] sm:$0x1]
    %v545 = vld [vmem:[%s1 + $0x12] sm:$0x1]
    %v546 = vld [vmem:[%s1 + $0x13] sm:$0x1]
    %v547 = vld [vmem:[%s1 + $0x14] sm:$0x1]
    %v548 = vld [vmem:[%s1 + $0x15] sm:$0x1]
    %v549 = vld [vmem:[%s1 + $0x16] sm:$0x1]
    %v550 = vld [vmem:[%s1 + $0x17] sm:$0x1]
    %v551 = vld [vmem:[%s1 + $0x18] sm:$0x1]
    %v552 = vld [vmem:[%s1 + $0x19] sm:$0x1]
    %v553 = vld [vmem:[%s1 + $0x1a] sm:$0x1]
    %v554 = vld [vmem:[%s1 + $0x1b] sm:$0x1]
    %v555 = vld [vmem:[%s1 + $0x1c] sm:$0x1]
    %v556 = vld [vmem:[%s1 + $0x1d] sm:$0x1]
    %v557 = vld [vmem:[%s1 + $0x1e] sm:$0x1]
    %v558 = vld [vmem:[%s1 + $0x1f] sm:$0x1]
    %v559 = vld [vmem:[%s1 + $0x20] sm:$0x1]
    %v560 = vld [vmem:[%s1 + $0x21] sm:$0x1]
    %v561 = vld [vmem:[%s1 + $0x22] sm:$0x1]
    %v562 = vld [vmem:[%s1 + $0x23] sm:$0x1]
    %v563 = vld [vmem:[%s1 + $0x24] sm:$0x1]
    %v564 = vld [vmem:[%s1 + $0x25] sm:$0x1]
    %v565 = vld [vmem:[%s1 + $0x26] sm:$0x1]
    %v566 = vld [vmem:[%s1 + $0x27] sm:$0x1]
    %v567 = vld [vmem:[%s1 + $0x28] sm:$0x1]
    %v568 = vld [vmem:[%s1 + $0x29] sm:$0x1]
    %v569 = vld [vmem:[%s1 + $0x2a] sm:$0x1]
    %v570 = vld [vmem:[%s1 + $0x2b] sm:$0x1]
    %v571 = vld [vmem:[%s1 + $0x2c] sm:$0x1]
    %v572 = vld [vmem:[%s1 + $0x2d] sm:$0x1]
    %v573 = vld [vmem:[%s1 + $0x2e] sm:$0x1]
    %v574 = vld [vmem:[%s1 + $0x2f] sm:$0x1]
    %v575 = vld [vmem:[%s1 + $0x30] sm:$0x1]
    %v576 = vld [vmem:[%s1 + $0x31] sm:$0x1]
    %v577 = vld [vmem:[%s1 + $0x32] sm:$0x1]
    %v578 = vld [vmem:[%s1 + $0x33] sm:$0x1]
    %v579 = vld [vmem:[%s1 + $0x34] sm:$0x1]
    %v580 = vld [vmem:[%s1 + $0x35] sm:$0x1]
    %v581 = vld [vmem:[%s1 + $0x36] sm:$0x1]
    %v582 = vld [vmem:[%s1 + $0x37] sm:$0x1]
    %v583 = vld [vmem:[%s1 + $0x38] sm:$0x1]
    %v584 = vld [vmem:[%s1 + $0x39] sm:$0x1]
    %v585 = vld [vmem:[%s1 + $0x3a] sm:$0x1]
    %v586 = vld [vmem:[%s1 + $0x3b] sm:$0x1]
    %v587 = vld [vmem:[%s1 + $0x3c] sm:$0x1]
    %v588 = vld [vmem:[%s1 + $0x3d] sm:$0x1]
    %v589 = vld [vmem:[%s1 + $0x3e] sm:$0x1]
    %v590 = vld [vmem:[%s1 + $0x3f] sm:$0x1]
    %v591 = vld [vmem:[%s1 + $0x40] sm:$0x1]
    %v592 = vld [vmem:[%s1 + $0x41] sm:$0x1]
    %v593 = vld [vmem:[%s1 + $0x42] sm:$0x1]
    %v594 = vld [vmem:[%s1 + $0x43] sm:$0x1]
    %v595 = vld [vmem:[%s1 + $0x44] sm:$0x1]
    %v596 = vld [vmem:[%s1 + $0x45] sm:$0x1]
    %v597 = vld [vmem:[%s1 + $0x46] sm:$0x1]
    %v598 = vld [vmem:[%s1 + $0x47] sm:$0x1]
    %v599 = vld [vmem:[%s1 + $0x48] sm:$0x1]
    %v600 = vld [vmem:[%s1 + $0x49] sm:$0x1]
    %v601 = vld [vmem:[%s1 + $0x4a] sm:$0x1]
    %v602 = vld [vmem:[%s1 + $0x4b] sm:$0x1]
    %v603 = vld [vmem:[%s1 + $0x4c] sm:$0x1]
    %v604 = vld [vmem:[%s1 + $0x4d] sm:$0x1]
    %v605 = vld [vmem:[%s1 + $0x4e] sm:$0x1]
    %v606 = vld [vmem:[%s1 + $0x4f] sm:$0x1]
    %v607 = vld [vmem:[%s1 + $0x50] sm:$0x1]
    %v608 = vld [vmem:[%s1 + $0x51] sm:$0x1]
    %v609 = vld [vmem:[%s1 + $0x52] sm:$0x1]
    %v610 = vld [vmem:[%s1 + $0x53] sm:$0x1]
    %v611 = vld [vmem:[%s1 + $0x54] sm:$0x1]
    %v612 = vld [vmem:[%s1 + $0x55] sm:$0x1]
    %v613 = vld [vmem:[%s1 + $0x56] sm:$0x1]
    %v614 = vld [vmem:[%s1 + $0x57] sm:$0x1]
    %v615 = vld [vmem:[%s1 + $0x58] sm:$0x1]
    %v616 = vld [vmem:[%s1 + $0x59] sm:$0x1]
    %v617 = vld [vmem:[%s1 + $0x5a] sm:$0x1]
    %v618 = vld [vmem:[%s1 + $0x5b] sm:$0x1]
    %v619 = vld [vmem:[%s1 + $0x5c] sm:$0x1]
    %v620 = vld [vmem:[%s1 + $0x5d] sm:$0x1]
    %v621 = vld [vmem:[%s1 + $0x5e] sm:$0x1]
    %v622 = vld [vmem:[%s1 + $0x5f] sm:$0x1]
    %v623 = vld [vmem:[%s1 + $0x60] sm:$0x1]
    %v624 = vld [vmem:[%s1 + $0x61] sm:$0x1]
    %v625 = vld [vmem:[%s1 + $0x62] sm:$0x1]
    %v626 = vld [vmem:[%s1 + $0x63] sm:$0x1]
    %v627 = vld [vmem:[%s1 + $0x64] sm:$0x1]
    %v628 = vld [vmem:[%s1 + $0x65] sm:$0x1]
    %v629 = vld [vmem:[%s1 + $0x66] sm:$0x1]
    %v630 = vld [vmem:[%s1 + $0x67] sm:$0x1]
    %v631 = vld [vmem:[%s1 + $0x68] sm:$0x1]
    %v632 = vld [vmem:[%s1 + $0x69] sm:$0x1]
    %v633 = vld [vmem:[%s1 + $0x6a] sm:$0x1]
    %v634 = vld [vmem:[%s1 + $0x6b] sm:$0x1]
    %v635 = vld [vmem:[%s1 + $0x6c] sm:$0x1]
    %v636 = vld [vmem:[%s1 + $0x6d] sm:$0x1]
    %v637 = vld [vmem:[%s1 + $0x6e] sm:$0x1]
    %v638 = vld [vmem:[%s1 + $0x6f] sm:$0x1]
    %v639 = vld [vmem:[%s1 + $0x70] sm:$0x1]
    %v640 = vld [vmem:[%s1 + $0x71] sm:$0x1]
    %v641 = vld [vmem:[%s1 + $0x72] sm:$0x1]
    %v642 = vld [vmem:[%s1 + $0x73] sm:$0x1]
    %v643 = vld [vmem:[%s1 + $0x74] sm:$0x1]
    %v644 = vld [vmem:[%s1 + $0x75] sm:$0x1]
    %v645 = vld [vmem:[%s1 + $0x76] sm:$0x1]
    %v646 = vld [vmem:[%s1 + $0x77] sm:$0x1]
    %v647 = vld [vmem:[%s1 + $0x78] sm:$0x1]
    %v648 = vld [vmem:[%s1 + $0x79] sm:$0x1]
    %v649 = vld [vmem:[%s1 + $0x7a] sm:$0x1]
    %v650 = vld [vmem:[%s1 + $0x7b] sm:$0x1]
    %v651 = vld [vmem:[%s1 + $0x7c] sm:$0x1]
    %v652 = vld [vmem:[%s1 + $0x7d] sm:$0x1]
    %v653 = vld [vmem:[%s1 + $0x7e] sm:$0x1]
    %v654 = vld [vmem:[%s1 + $0x7f] sm:$0x1]
    %v783 = vlaneseq
    %v784 = vshrl.u32 %v783, 7
    %v785 = vsub.s32 0, %v784
    %v786 = vrot.slane %v527, %v785
    %v787 = vlaneseq
    %v788 = vshrl.u32 %v787, 7
    %v789 = vsub.s32 0, %v788
    %v790 = vrot.slane %v528, %v789
    %v791 = vlaneseq
    %v792 = vshrl.u32 %v791, 7
    %v793 = vsub.s32 0, %v792
    %v794 = vrot.slane %v529, %v793
    %v795 = vlaneseq
    %v796 = vshrl.u32 %v795, 7
    %v797 = vsub.s32 0, %v796
    %v798 = vrot.slane %v530, %v797
    %v799 = vlaneseq
    %v800 = vshrl.u32 %v799, 7
    %v801 = vsub.s32 0, %v800
    %v802 = vrot.slane %v531, %v801
    %v803 = vlaneseq
    %v804 = vshrl.u32 %v803, 7
    %v805 = vsub.s32 0, %v804
    %v806 = vrot.slane %v532, %v805
    %v807 = vlaneseq
    %v808 = vshrl.u32 %v807, 7
    %v809 = vsub.s32 0, %v808
    %v810 = vrot.slane %v533, %v809
    %v811 = vlaneseq
    %v812 = vshrl.u32 %v811, 7
    %v813 = vsub.s32 0, %v812
    %v814 = vrot.slane %v534, %v813
    %v815 = vlaneseq
    %v816 = vshrl.u32 %v815, 7
    %v817 = vsub.s32 0, %v816
    %v818 = vrot.slane %v535, %v817
    %v819 = vlaneseq
    %v820 = vshrl.u32 %v819, 7
    %v821 = vsub.s32 0, %v820
    %v822 = vrot.slane %v536, %v821
    %v823 = vlaneseq
    %v824 = vshrl.u32 %v823, 7
    %v825 = vsub.s32 0, %v824
    %v826 = vrot.slane %v537, %v825
    %v827 = vlaneseq
    %v828 = vshrl.u32 %v827, 7
    %v829 = vsub.s32 0, %v828
    %v830 = vrot.slane %v538, %v829
    %v831 = vlaneseq
    %v832 = vshrl.u32 %v831, 7
    %v833 = vsub.s32 0, %v832
    %v834 = vrot.slane %v539, %v833
    %v835 = vlaneseq
    %v836 = vshrl.u32 %v835, 7
    %v837 = vsub.s32 0, %v836
    %v838 = vrot.slane %v540, %v837
    %v839 = vlaneseq
    %v840 = vshrl.u32 %v839, 7
    %v841 = vsub.s32 0, %v840
    %v842 = vrot.slane %v541, %v841
    %v843 = vlaneseq
    %v844 = vshrl.u32 %v843, 7
    %v845 = vsub.s32 0, %v844
    %v846 = vrot.slane %v542, %v845
    %v847 = vlaneseq
    %v848 = vshrl.u32 %v847, 7
    %v849 = vsub.s32 0, %v848
    %v850 = vrot.slane %v543, %v849
    %v851 = vlaneseq
    %v852 = vshrl.u32 %v851, 7
    %v853 = vsub.s32 0, %v852
    %v854 = vrot.slane %v544, %v853
    %v855 = vlaneseq
    %v856 = vshrl.u32 %v855, 7
    %v857 = vsub.s32 0, %v856
    %v858 = vrot.slane %v545, %v857
    %v859 = vlaneseq
    %v860 = vshrl.u32 %v859, 7
    %v861 = vsub.s32 0, %v860
    %v862 = vrot.slane %v546, %v861
    %v863 = vlaneseq
    %v864 = vshrl.u32 %v863, 7
    %v865 = vsub.s32 0, %v864
    %v866 = vrot.slane %v547, %v865
    %v867 = vlaneseq
    %v868 = vshrl.u32 %v867, 7
    %v869 = vsub.s32 0, %v868
    %v870 = vrot.slane %v548, %v869
    %v871 = vlaneseq
    %v872 = vshrl.u32 %v871, 7
    %v873 = vsub.s32 0, %v872
    %v874 = vrot.slane %v549, %v873
    %v875 = vlaneseq
    %v876 = vshrl.u32 %v875, 7
    %v877 = vsub.s32 0, %v876
    %v878 = vrot.slane %v550, %v877
    %v879 = vlaneseq
    %v880 = vshrl.u32 %v879, 7
    %v881 = vsub.s32 0, %v880
    %v882 = vrot.slane %v551, %v881
    %v883 = vlaneseq
    %v884 = vshrl.u32 %v883, 7
    %v885 = vsub.s32 0, %v884
    %v886 = vrot.slane %v552, %v885
    %v887 = vlaneseq
    %v888 = vshrl.u32 %v887, 7
    %v889 = vsub.s32 0, %v888
    %v890 = vrot.slane %v553, %v889
    %v891 = vlaneseq
    %v892 = vshrl.u32 %v891, 7
    %v893 = vsub.s32 0, %v892
    %v894 = vrot.slane %v554, %v893
    %v895 = vlaneseq
    %v896 = vshrl.u32 %v895, 7
    %v897 = vsub.s32 0, %v896
    %v898 = vrot.slane %v555, %v897
    %v899 = vlaneseq
    %v900 = vshrl.u32 %v899, 7
    %v901 = vsub.s32 0, %v900
    %v902 = vrot.slane %v556, %v901
    %v903 = vlaneseq
    %v904 = vshrl.u32 %v903, 7
    %v905 = vsub.s32 0, %v904
    %v906 = vrot.slane %v557, %v905
    %v907 = vlaneseq
    %v908 = vshrl.u32 %v907, 7
    %v909 = vsub.s32 0, %v908
    %v910 = vrot.slane %v558, %v909
    %v911 = vlaneseq
    %v912 = vshrl.u32 %v911, 7
    %v913 = vsub.s32 0, %v912
    %v914 = vrot.slane %v559, %v913
    %v915 = vlaneseq
    %v916 = vshrl.u32 %v915, 7
    %v917 = vsub.s32 0, %v916
    %v918 = vrot.slane %v560, %v917
    %v919 = vlaneseq
    %v920 = vshrl.u32 %v919, 7
    %v921 = vsub.s32 0, %v920
    %v922 = vrot.slane %v561, %v921
    %v923 = vlaneseq
    %v924 = vshrl.u32 %v923, 7
    %v925 = vsub.s32 0, %v924
    %v926 = vrot.slane %v562, %v925
    %v927 = vlaneseq
    %v928 = vshrl.u32 %v927, 7
    %v929 = vsub.s32 0, %v928
    %v930 = vrot.slane %v563, %v929
    %v931 = vlaneseq
    %v932 = vshrl.u32 %v931, 7
    %v933 = vsub.s32 0, %v932
    %v934 = vrot.slane %v564, %v933
    %v935 = vlaneseq
    %v936 = vshrl.u32 %v935, 7
    %v937 = vsub.s32 0, %v936
    %v938 = vrot.slane %v565, %v937
    %v939 = vlaneseq
    %v940 = vshrl.u32 %v939, 7
    %v941 = vsub.s32 0, %v940
    %v942 = vrot.slane %v566, %v941
    %v943 = vlaneseq
    %v944 = vshrl.u32 %v943, 7
    %v945 = vsub.s32 0, %v944
    %v946 = vrot.slane %v567, %v945
    %v947 = vlaneseq
    %v948 = vshrl.u32 %v947, 7
    %v949 = vsub.s32 0, %v948
    %v950 = vrot.slane %v568, %v949
    %v951 = vlaneseq
    %v952 = vshrl.u32 %v951, 7
    %v953 = vsub.s32 0, %v952
    %v954 = vrot.slane %v569, %v953
    %v955 = vlaneseq
    %v956 = vshrl.u32 %v955, 7
    %v957 = vsub.s32 0, %v956
    %v958 = vrot.slane %v570, %v957
    %v959 = vlaneseq
    %v960 = vshrl.u32 %v959, 7
    %v961 = vsub.s32 0, %v960
    %v962 = vrot.slane %v571, %v961
    %v963 = vlaneseq
    %v964 = vshrl.u32 %v963, 7
    %v965 = vsub.s32 0, %v964
    %v966 = vrot.slane %v572, %v965
    %v967 = vlaneseq
    %v968 = vshrl.u32 %v967, 7
    %v969 = vsub.s32 0, %v968
    %v970 = vrot.slane %v573, %v969
    %v971 = vlaneseq
    %v972 = vshrl.u32 %v971, 7
    %v973 = vsub.s32 0, %v972
    %v974 = vrot.slane %v574, %v973
    %v975 = vlaneseq
    %v976 = vshrl.u32 %v975, 7
    %v977 = vsub.s32 0, %v976
    %v978 = vrot.slane %v575, %v977
    %v979 = vlaneseq
    %v980 = vshrl.u32 %v979, 7
    %v981 = vsub.s32 0, %v980
    %v982 = vrot.slane %v576, %v981
    %v983 = vlaneseq
    %v984 = vshrl.u32 %v983, 7
    %v985 = vsub.s32 0, %v984
    %v986 = vrot.slane %v577, %v985
    %v987 = vlaneseq
    %v988 = vshrl.u32 %v987, 7
    %v989 = vsub.s32 0, %v988
    %v990 = vrot.slane %v578, %v989
    %v991 = vlaneseq
    %v992 = vshrl.u32 %v991, 7
    %v993 = vsub.s32 0, %v992
    %v994 = vrot.slane %v579, %v993
    %v995 = vlaneseq
    %v996 = vshrl.u32 %v995, 7
    %v997 = vsub.s32 0, %v996
    %v998 = vrot.slane %v580, %v997
    %v999 = vlaneseq
    %v1000 = vshrl.u32 %v999, 7
    %v1001 = vsub.s32 0, %v1000
    %v1002 = vrot.slane %v581, %v1001
    %v1003 = vlaneseq
    %v1004 = vshrl.u32 %v1003, 7
    %v1005 = vsub.s32 0, %v1004
    %v1006 = vrot.slane %v582, %v1005
    %v1007 = vlaneseq
    %v1008 = vshrl.u32 %v1007, 7
    %v1009 = vsub.s32 0, %v1008
    %v1010 = vrot.slane %v583, %v1009
    %v1011 = vlaneseq
    %v1012 = vshrl.u32 %v1011, 7
    %v1013 = vsub.s32 0, %v1012
    %v1014 = vrot.slane %v584, %v1013
    %v1015 = vlaneseq
    %v1016 = vshrl.u32 %v1015, 7
    %v1017 = vsub.s32 0, %v1016
    %v1018 = vrot.slane %v585, %v1017
    %v1019 = vlaneseq
    %v1020 = vshrl.u32 %v1019, 7
    %v1021 = vsub.s32 0, %v1020
    %v1022 = vrot.slane %v586, %v1021
    %v1023 = vlaneseq
    %v1024 = vshrl.u32 %v1023, 7
    %v1025 = vsub.s32 0, %v1024
    %v1026 = vrot.slane %v587, %v1025
    %v1027 = vlaneseq
    %v1028 = vshrl.u32 %v1027, 7
    %v1029 = vsub.s32 0, %v1028
    %v1030 = vrot.slane %v588, %v1029
    %v1031 = vlaneseq
    %v1032 = vshrl.u32 %v1031, 7
    %v1033 = vsub.s32 0, %v1032
    %v1034 = vrot.slane %v589, %v1033
    %v1035 = vlaneseq
    %v1036 = vshrl.u32 %v1035, 7
    %v1037 = vsub.s32 0, %v1036
    %v1038 = vrot.slane %v590, %v1037
    %v1039 = vlaneseq
    %v1040 = vshrl.u32 %v1039, 7
    %v1041 = vsub.s32 0, %v1040
    %v1042 = vrot.slane %v591, %v1041
    %v1043 = vlaneseq
    %v1044 = vshrl.u32 %v1043, 7
    %v1045 = vsub.s32 0, %v1044
    %v1046 = vrot.slane %v592, %v1045
    %v1047 = vlaneseq
    %v1048 = vshrl.u32 %v1047, 7
    %v1049 = vsub.s32 0, %v1048
    %v1050 = vrot.slane %v593, %v1049
    %v1051 = vlaneseq
    %v1052 = vshrl.u32 %v1051, 7
    %v1053 = vsub.s32 0, %v1052
    %v1054 = vrot.slane %v594, %v1053
    %v1055 = vlaneseq
    %v1056 = vshrl.u32 %v1055, 7
    %v1057 = vsub.s32 0, %v1056
    %v1058 = vrot.slane %v595, %v1057
    %v1059 = vlaneseq
    %v1060 = vshrl.u32 %v1059, 7
    %v1061 = vsub.s32 0, %v1060
    %v1062 = vrot.slane %v596, %v1061
    %v1063 = vlaneseq
    %v1064 = vshrl.u32 %v1063, 7
    %v1065 = vsub.s32 0, %v1064
    %v1066 = vrot.slane %v597, %v1065
    %v1067 = vlaneseq
    %v1068 = vshrl.u32 %v1067, 7
    %v1069 = vsub.s32 0, %v1068
    %v1070 = vrot.slane %v598, %v1069
    %v1071 = vlaneseq
    %v1072 = vshrl.u32 %v1071, 7
    %v1073 = vsub.s32 0, %v1072
    %v1074 = vrot.slane %v599, %v1073
    %v1075 = vlaneseq
    %v1076 = vshrl.u32 %v1075, 7
    %v1077 = vsub.s32 0, %v1076
    %v1078 = vrot.slane %v600, %v1077
    %v1079 = vlaneseq
    %v1080 = vshrl.u32 %v1079, 7
    %v1081 = vsub.s32 0, %v1080
    %v1082 = vrot.slane %v601, %v1081
    %v1083 = vlaneseq
    %v1084 = vshrl.u32 %v1083, 7
    %v1085 = vsub.s32 0, %v1084
    %v1086 = vrot.slane %v602, %v1085
    %v1087 = vlaneseq
    %v1088 = vshrl.u32 %v1087, 7
    %v1089 = vsub.s32 0, %v1088
    %v1090 = vrot.slane %v603, %v1089
    %v1091 = vlaneseq
    %v1092 = vshrl.u32 %v1091, 7
    %v1093 = vsub.s32 0, %v1092
    %v1094 = vrot.slane %v604, %v1093
    %v1095 = vlaneseq
    %v1096 = vshrl.u32 %v1095, 7
    %v1097 = vsub.s32 0, %v1096
    %v1098 = vrot.slane %v605, %v1097
    %v1099 = vlaneseq
    %v1100 = vshrl.u32 %v1099, 7
    %v1101 = vsub.s32 0, %v1100
    %v1102 = vrot.slane %v606, %v1101
    %v1103 = vlaneseq
    %v1104 = vshrl.u32 %v1103, 7
    %v1105 = vsub.s32 0, %v1104
    %v1106 = vrot.slane %v607, %v1105
    %v1107 = vlaneseq
    %v1108 = vshrl.u32 %v1107, 7
    %v1109 = vsub.s32 0, %v1108
    %v1110 = vrot.slane %v608, %v1109
    %v1111 = vlaneseq
    %v1112 = vshrl.u32 %v1111, 7
    %v1113 = vsub.s32 0, %v1112
    %v1114 = vrot.slane %v609, %v1113
    %v1115 = vlaneseq
    %v1116 = vshrl.u32 %v1115, 7
    %v1117 = vsub.s32 0, %v1116
    %v1118 = vrot.slane %v610, %v1117
    %v1119 = vlaneseq
    %v1120 = vshrl.u32 %v1119, 7
    %v1121 = vsub.s32 0, %v1120
    %v1122 = vrot.slane %v611, %v1121
    %v1123 = vlaneseq
    %v1124 = vshrl.u32 %v1123, 7
    %v1125 = vsub.s32 0, %v1124
    %v1126 = vrot.slane %v612, %v1125
    %v1127 = vlaneseq
    %v1128 = vshrl.u32 %v1127, 7
    %v1129 = vsub.s32 0, %v1128
    %v1130 = vrot.slane %v613, %v1129
    %v1131 = vlaneseq
    %v1132 = vshrl.u32 %v1131, 7
    %v1133 = vsub.s32 0, %v1132
    %v1134 = vrot.slane %v614, %v1133
    %v1135 = vlaneseq
    %v1136 = vshrl.u32 %v1135, 7
    %v1137 = vsub.s32 0, %v1136
    %v1138 = vrot.slane %v615, %v1137
    %v1139 = vlaneseq
    %v1140 = vshrl.u32 %v1139, 7
    %v1141 = vsub.s32 0, %v1140
    %v1142 = vrot.slane %v616, %v1141
    %v1143 = vlaneseq
    %v1144 = vshrl.u32 %v1143, 7
    %v1145 = vsub.s32 0, %v1144
    %v1146 = vrot.slane %v617, %v1145
    %v1147 = vlaneseq
    %v1148 = vshrl.u32 %v1147, 7
    %v1149 = vsub.s32 0, %v1148
    %v1150 = vrot.slane %v618, %v1149
    %v1151 = vlaneseq
    %v1152 = vshrl.u32 %v1151, 7
    %v1153 = vsub.s32 0, %v1152
    %v1154 = vrot.slane %v619, %v1153
    %v1155 = vlaneseq
    %v1156 = vshrl.u32 %v1155, 7
    %v1157 = vsub.s32 0, %v1156
    %v1158 = vrot.slane %v620, %v1157
    %v1159 = vlaneseq
    %v1160 = vshrl.u32 %v1159, 7
    %v1161 = vsub.s32 0, %v1160
    %v1162 = vrot.slane %v621, %v1161
    %v1163 = vlaneseq
    %v1164 = vshrl.u32 %v1163, 7
    %v1165 = vsub.s32 0, %v1164
    %v1166 = vrot.slane %v622, %v1165
    %v1167 = vlaneseq
    %v1168 = vshrl.u32 %v1167, 7
    %v1169 = vsub.s32 0, %v1168
    %v1170 = vrot.slane %v623, %v1169
    %v1171 = vlaneseq
    %v1172 = vshrl.u32 %v1171, 7
    %v1173 = vsub.s32 0, %v1172
    %v1174 = vrot.slane %v624, %v1173
    %v1175 = vlaneseq
    %v1176 = vshrl.u32 %v1175, 7
    %v1177 = vsub.s32 0, %v1176
    %v1178 = vrot.slane %v625, %v1177
    %v1179 = vlaneseq
    %v1180 = vshrl.u32 %v1179, 7
    %v1181 = vsub.s32 0, %v1180
    %v1182 = vrot.slane %v626, %v1181
    %v1183 = vlaneseq
    %v1184 = vshrl.u32 %v1183, 7
    %v1185 = vsub.s32 0, %v1184
    %v1186 = vrot.slane %v627, %v1185
    %v1187 = vlaneseq
    %v1188 = vshrl.u32 %v1187, 7
    %v1189 = vsub.s32 0, %v1188
    %v1190 = vrot.slane %v628, %v1189
    %v1191 = vlaneseq
    %v1192 = vshrl.u32 %v1191, 7
    %v1193 = vsub.s32 0, %v1192
    %v1194 = vrot.slane %v629, %v1193
    %v1195 = vlaneseq
    %v1196 = vshrl.u32 %v1195, 7
    %v1197 = vsub.s32 0, %v1196
    %v1198 = vrot.slane %v630, %v1197
    %v1199 = vlaneseq
    %v1200 = vshrl.u32 %v1199, 7
    %v1201 = vsub.s32 0, %v1200
    %v1202 = vrot.slane %v631, %v1201
    %v1203 = vlaneseq
    %v1204 = vshrl.u32 %v1203, 7
    %v1205 = vsub.s32 0, %v1204
    %v1206 = vrot.slane %v632, %v1205
    %v1207 = vlaneseq
    %v1208 = vshrl.u32 %v1207, 7
    %v1209 = vsub.s32 0, %v1208
    %v1210 = vrot.slane %v633, %v1209
    %v1211 = vlaneseq
    %v1212 = vshrl.u32 %v1211, 7
    %v1213 = vsub.s32 0, %v1212
    %v1214 = vrot.slane %v634, %v1213
    %v1215 = vlaneseq
    %v1216 = vshrl.u32 %v1215, 7
    %v1217 = vsub.s32 0, %v1216
    %v1218 = vrot.slane %v635, %v1217
    %v1219 = vlaneseq
    %v1220 = vshrl.u32 %v1219, 7
    %v1221 = vsub.s32 0, %v1220
    %v1222 = vrot.slane %v636, %v1221
    %v1223 = vlaneseq
    %v1224 = vshrl.u32 %v1223, 7
    %v1225 = vsub.s32 0, %v1224
    %v1226 = vrot.slane %v637, %v1225
    %v1227 = vlaneseq
    %v1228 = vshrl.u32 %v1227, 7
    %v1229 = vsub.s32 0, %v1228
    %v1230 = vrot.slane %v638, %v1229
    %v1231 = vlaneseq
    %v1232 = vshrl.u32 %v1231, 7
    %v1233 = vsub.s32 0, %v1232
    %v1234 = vrot.slane %v639, %v1233
    %v1235 = vlaneseq
    %v1236 = vshrl.u32 %v1235, 7
    %v1237 = vsub.s32 0, %v1236
    %v1238 = vrot.slane %v640, %v1237
    %v1239 = vlaneseq
    %v1240 = vshrl.u32 %v1239, 7
    %v1241 = vsub.s32 0, %v1240
    %v1242 = vrot.slane %v641, %v1241
    %v1243 = vlaneseq
    %v1244 = vshrl.u32 %v1243, 7
    %v1245 = vsub.s32 0, %v1244
    %v1246 = vrot.slane %v642, %v1245
    %v1247 = vlaneseq
    %v1248 = vshrl.u32 %v1247, 7
    %v1249 = vsub.s32 0, %v1248
    %v1250 = vrot.slane %v643, %v1249
    %v1251 = vlaneseq
    %v1252 = vshrl.u32 %v1251, 7
    %v1253 = vsub.s32 0, %v1252
    %v1254 = vrot.slane %v644, %v1253
    %v1255 = vlaneseq
    %v1256 = vshrl.u32 %v1255, 7
    %v1257 = vsub.s32 0, %v1256
    %v1258 = vrot.slane %v645, %v1257
    %v1259 = vlaneseq
    %v1260 = vshrl.u32 %v1259, 7
    %v1261 = vsub.s32 0, %v1260
    %v1262 = vrot.slane %v646, %v1261
    %v1263 = vlaneseq
    %v1264 = vshrl.u32 %v1263, 7
    %v1265 = vsub.s32 0, %v1264
    %v1266 = vrot.slane %v647, %v1265
    %v1267 = vlaneseq
    %v1268 = vshrl.u32 %v1267, 7
    %v1269 = vsub.s32 0, %v1268
    %v1270 = vrot.slane %v648, %v1269
    %v1271 = vlaneseq
    %v1272 = vshrl.u32 %v1271, 7
    %v1273 = vsub.s32 0, %v1272
    %v1274 = vrot.slane %v649, %v1273
    %v1275 = vlaneseq
    %v1276 = vshrl.u32 %v1275, 7
    %v1277 = vsub.s32 0, %v1276
    %v1278 = vrot.slane %v650, %v1277
    %v1279 = vlaneseq
    %v1280 = vshrl.u32 %v1279, 7
    %v1281 = vsub.s32 0, %v1280
    %v1282 = vrot.slane %v651, %v1281
    %v1283 = vlaneseq
    %v1284 = vshrl.u32 %v1283, 7
    %v1285 = vsub.s32 0, %v1284
    %v1286 = vrot.slane %v652, %v1285
    %v1287 = vlaneseq
    %v1288 = vshrl.u32 %v1287, 7
    %v1289 = vsub.s32 0, %v1288
    %v1290 = vrot.slane %v653, %v1289
    %v1291 = vlaneseq
    %v1292 = vshrl.u32 %v1291, 7
    %v1293 = vsub.s32 0, %v1292
    %v1294 = vrot.slane %v654, %v1293
    %1295 = vset.pattern.permute.xlu0 0
    %1296 = vperm.xlu0 %1295, %v786
    %v1297 = vpop.permute.xlu0 %1296
    %1299 = vset.pattern.permute.xlu0 0
    %1300 = vperm.xlu0 %1299, %v790
    %v1301 = vpop.permute.xlu0 %1300
    %1303 = vset.pattern.permute.xlu0 0
    %1304 = vperm.xlu0 %1303, %v794
    %v1305 = vpop.permute.xlu0 %1304
    %1307 = vset.pattern.permute.xlu0 0
    %1308 = vperm.xlu0 %1307, %v798
    %v1309 = vpop.permute.xlu0 %1308
    %1311 = vset.pattern.permute.xlu0 0
    %1312 = vperm.xlu0 %1311, %v802
    %v1313 = vpop.permute.xlu0 %1312
    %1315 = vset.pattern.permute.xlu0 0
    %1316 = vperm.xlu0 %1315, %v806
    %v1317 = vpop.permute.xlu0 %1316
    %1319 = vset.pattern.permute.xlu0 0
    %1320 = vperm.xlu0 %1319, %v810
    %v1321 = vpop.permute.xlu0 %1320
    %1323 = vset.pattern.permute.xlu0 0
    %1324 = vperm.xlu0 %1323, %v814
    %v1325 = vpop.permute.xlu0 %1324
    %1327 = vset.pattern.permute.xlu0 0
    %1328 = vperm.xlu0 %1327, %v818
    %v1329 = vpop.permute.xlu0 %1328
    %1331 = vset.pattern.permute.xlu0 0
    %1332 = vperm.xlu0 %1331, %v822
    %v1333 = vpop.permute.xlu0 %1332
    %1335 = vset.pattern.permute.xlu0 0
    %1336 = vperm.xlu0 %1335, %v826
    %v1337 = vpop.permute.xlu0 %1336
    %1339 = vset.pattern.permute.xlu0 0
    %1340 = vperm.xlu0 %1339, %v830
    %v1341 = vpop.permute.xlu0 %1340
    %1343 = vset.pattern.permute.xlu0 0
    %1344 = vperm.xlu0 %1343, %v834
    %v1345 = vpop.permute.xlu0 %1344
    %1347 = vset.pattern.permute.xlu0 0
    %1348 = vperm.xlu0 %1347, %v838
    %v1349 = vpop.permute.xlu0 %1348
    %1351 = vset.pattern.permute.xlu0 0
    %1352 = vperm.xlu0 %1351, %v842
    %v1353 = vpop.permute.xlu0 %1352
    %1355 = vset.pattern.permute.xlu0 0
    %1356 = vperm.xlu0 %1355, %v846
    %v1357 = vpop.permute.xlu0 %1356
    %1359 = vset.pattern.permute.xlu0 0
    %1360 = vperm.xlu0 %1359, %v850
    %v1361 = vpop.permute.xlu0 %1360
    %1363 = vset.pattern.permute.xlu0 0
    %1364 = vperm.xlu0 %1363, %v854
    %v1365 = vpop.permute.xlu0 %1364
    %1367 = vset.pattern.permute.xlu0 0
    %1368 = vperm.xlu0 %1367, %v858
    %v1369 = vpop.permute.xlu0 %1368
    %1371 = vset.pattern.permute.xlu0 0
    %1372 = vperm.xlu0 %1371, %v862
    %v1373 = vpop.permute.xlu0 %1372
    %1375 = vset.pattern.permute.xlu0 0
    %1376 = vperm.xlu0 %1375, %v866
    %v1377 = vpop.permute.xlu0 %1376
    %1379 = vset.pattern.permute.xlu0 0
    %1380 = vperm.xlu0 %1379, %v870
    %v1381 = vpop.permute.xlu0 %1380
    %1383 = vset.pattern.permute.xlu0 0
    %1384 = vperm.xlu0 %1383, %v874
    %v1385 = vpop.permute.xlu0 %1384
    %1387 = vset.pattern.permute.xlu0 0
    %1388 = vperm.xlu0 %1387, %v878
    %v1389 = vpop.permute.xlu0 %1388
    %1391 = vset.pattern.permute.xlu0 0
    %1392 = vperm.xlu0 %1391, %v882
    %v1393 = vpop.permute.xlu0 %1392
    %1395 = vset.pattern.permute.xlu0 0
    %1396 = vperm.xlu0 %1395, %v886
    %v1397 = vpop.permute.xlu0 %1396
    %1399 = vset.pattern.permute.xlu0 0
    %1400 = vperm.xlu0 %1399, %v890
    %v1401 = vpop.permute.xlu0 %1400
    %1403 = vset.pattern.permute.xlu0 0
    %1404 = vperm.xlu0 %1403, %v894
    %v1405 = vpop.permute.xlu0 %1404
    %1407 = vset.pattern.permute.xlu0 0
    %1408 = vperm.xlu0 %1407, %v898
    %v1409 = vpop.permute.xlu0 %1408
    %1411 = vset.pattern.permute.xlu0 0
    %1412 = vperm.xlu0 %1411, %v902
    %v1413 = vpop.permute.xlu0 %1412
    %1415 = vset.pattern.permute.xlu0 0
    %1416 = vperm.xlu0 %1415, %v906
    %v1417 = vpop.permute.xlu0 %1416
    %1419 = vset.pattern.permute.xlu0 0
    %1420 = vperm.xlu0 %1419, %v910
    %v1421 = vpop.permute.xlu0 %1420
    %1423 = vset.pattern.permute.xlu0 0
    %1424 = vperm.xlu0 %1423, %v914
    %v1425 = vpop.permute.xlu0 %1424
    %1427 = vset.pattern.permute.xlu0 0
    %1428 = vperm.xlu0 %1427, %v918
    %v1429 = vpop.permute.xlu0 %1428
    %1431 = vset.pattern.permute.xlu0 0
    %1432 = vperm.xlu0 %1431, %v922
    %v1433 = vpop.permute.xlu0 %1432
    %1435 = vset.pattern.permute.xlu0 0
    %1436 = vperm.xlu0 %1435, %v926
    %v1437 = vpop.permute.xlu0 %1436
    %1439 = vset.pattern.permute.xlu0 0
    %1440 = vperm.xlu0 %1439, %v930
    %v1441 = vpop.permute.xlu0 %1440
    %1443 = vset.pattern.permute.xlu0 0
    %1444 = vperm.xlu0 %1443, %v934
    %v1445 = vpop.permute.xlu0 %1444
    %1447 = vset.pattern.permute.xlu0 0
    %1448 = vperm.xlu0 %1447, %v938
    %v1449 = vpop.permute.xlu0 %1448
    %1451 = vset.pattern.permute.xlu0 0
    %1452 = vperm.xlu0 %1451, %v942
    %v1453 = vpop.permute.xlu0 %1452
    %1455 = vset.pattern.permute.xlu0 0
    %1456 = vperm.xlu0 %1455, %v946
    %v1457 = vpop.permute.xlu0 %1456
    %1459 = vset.pattern.permute.xlu0 0
    %1460 = vperm.xlu0 %1459, %v950
    %v1461 = vpop.permute.xlu0 %1460
    %1463 = vset.pattern.permute.xlu0 0
    %1464 = vperm.xlu0 %1463, %v954
    %v1465 = vpop.permute.xlu0 %1464
    %1467 = vset.pattern.permute.xlu0 0
    %1468 = vperm.xlu0 %1467, %v958
    %v1469 = vpop.permute.xlu0 %1468
    %1471 = vset.pattern.permute.xlu0 0
    %1472 = vperm.xlu0 %1471, %v962
    %v1473 = vpop.permute.xlu0 %1472
    %1475 = vset.pattern.permute.xlu0 0
    %1476 = vperm.xlu0 %1475, %v966
    %v1477 = vpop.permute.xlu0 %1476
    %1479 = vset.pattern.permute.xlu0 0
    %1480 = vperm.xlu0 %1479, %v970
    %v1481 = vpop.permute.xlu0 %1480
    %1483 = vset.pattern.permute.xlu0 0
    %1484 = vperm.xlu0 %1483, %v974
    %v1485 = vpop.permute.xlu0 %1484
    %1487 = vset.pattern.permute.xlu0 0
    %1488 = vperm.xlu0 %1487, %v978
    %v1489 = vpop.permute.xlu0 %1488
    %1491 = vset.pattern.permute.xlu0 0
    %1492 = vperm.xlu0 %1491, %v982
    %v1493 = vpop.permute.xlu0 %1492
    %1495 = vset.pattern.permute.xlu0 0
    %1496 = vperm.xlu0 %1495, %v986
    %v1497 = vpop.permute.xlu0 %1496
    %1499 = vset.pattern.permute.xlu0 0
    %1500 = vperm.xlu0 %1499, %v990
    %v1501 = vpop.permute.xlu0 %1500
    %1503 = vset.pattern.permute.xlu0 0
    %1504 = vperm.xlu0 %1503, %v994
    %v1505 = vpop.permute.xlu0 %1504
    %1507 = vset.pattern.permute.xlu0 0
    %1508 = vperm.xlu0 %1507, %v998
    %v1509 = vpop.permute.xlu0 %1508
    %1511 = vset.pattern.permute.xlu0 0
    %1512 = vperm.xlu0 %1511, %v1002
    %v1513 = vpop.permute.xlu0 %1512
    %1515 = vset.pattern.permute.xlu0 0
    %1516 = vperm.xlu0 %1515, %v1006
    %v1517 = vpop.permute.xlu0 %1516
    %1519 = vset.pattern.permute.xlu0 0
    %1520 = vperm.xlu0 %1519, %v1010
    %v1521 = vpop.permute.xlu0 %1520
    %1523 = vset.pattern.permute.xlu0 0
    %1524 = vperm.xlu0 %1523, %v1014
    %v1525 = vpop.permute.xlu0 %1524
    %1527 = vset.pattern.permute.xlu0 0
    %1528 = vperm.xlu0 %1527, %v1018
    %v1529 = vpop.permute.xlu0 %1528
    %1531 = vset.pattern.permute.xlu0 0
    %1532 = vperm.xlu0 %1531, %v1022
    %v1533 = vpop.permute.xlu0 %1532
    %1535 = vset.pattern.permute.xlu0 0
    %1536 = vperm.xlu0 %1535, %v1026
    %v1537 = vpop.permute.xlu0 %1536
    %1539 = vset.pattern.permute.xlu0 0
    %1540 = vperm.xlu0 %1539, %v1030
    %v1541 = vpop.permute.xlu0 %1540
    %1543 = vset.pattern.permute.xlu0 0
    %1544 = vperm.xlu0 %1543, %v1034
    %v1545 = vpop.permute.xlu0 %1544
    %1547 = vset.pattern.permute.xlu0 0
    %1548 = vperm.xlu0 %1547, %v1038
    %v1549 = vpop.permute.xlu0 %1548
    %1551 = vset.pattern.permute.xlu0 0
    %1552 = vperm.xlu0 %1551, %v1042
    %v1553 = vpop.permute.xlu0 %1552
    %1555 = vset.pattern.permute.xlu0 0
    %1556 = vperm.xlu0 %1555, %v1046
    %v1557 = vpop.permute.xlu0 %1556
    %1559 = vset.pattern.permute.xlu0 0
    %1560 = vperm.xlu0 %1559, %v1050
    %v1561 = vpop.permute.xlu0 %1560
    %1563 = vset.pattern.permute.xlu0 0
    %1564 = vperm.xlu0 %1563, %v1054
    %v1565 = vpop.permute.xlu0 %1564
    %1567 = vset.pattern.permute.xlu0 0
    %1568 = vperm.xlu0 %1567, %v1058
    %v1569 = vpop.permute.xlu0 %1568
    %1571 = vset.pattern.permute.xlu0 0
    %1572 = vperm.xlu0 %1571, %v1062
    %v1573 = vpop.permute.xlu0 %1572
    %1575 = vset.pattern.permute.xlu0 0
    %1576 = vperm.xlu0 %1575, %v1066
    %v1577 = vpop.permute.xlu0 %1576
    %1579 = vset.pattern.permute.xlu0 0
    %1580 = vperm.xlu0 %1579, %v1070
    %v1581 = vpop.permute.xlu0 %1580
    %1583 = vset.pattern.permute.xlu0 0
    %1584 = vperm.xlu0 %1583, %v1074
    %v1585 = vpop.permute.xlu0 %1584
    %1587 = vset.pattern.permute.xlu0 0
    %1588 = vperm.xlu0 %1587, %v1078
    %v1589 = vpop.permute.xlu0 %1588
    %1591 = vset.pattern.permute.xlu0 0
    %1592 = vperm.xlu0 %1591, %v1082
    %v1593 = vpop.permute.xlu0 %1592
    %1595 = vset.pattern.permute.xlu0 0
    %1596 = vperm.xlu0 %1595, %v1086
    %v1597 = vpop.permute.xlu0 %1596
    %1599 = vset.pattern.permute.xlu0 0
    %1600 = vperm.xlu0 %1599, %v1090
    %v1601 = vpop.permute.xlu0 %1600
    %1603 = vset.pattern.permute.xlu0 0
    %1604 = vperm.xlu0 %1603, %v1094
    %v1605 = vpop.permute.xlu0 %1604
    %1607 = vset.pattern.permute.xlu0 0
    %1608 = vperm.xlu0 %1607, %v1098
    %v1609 = vpop.permute.xlu0 %1608
    %1611 = vset.pattern.permute.xlu0 0
    %1612 = vperm.xlu0 %1611, %v1102
    %v1613 = vpop.permute.xlu0 %1612
    %1615 = vset.pattern.permute.xlu0 0
    %1616 = vperm.xlu0 %1615, %v1106
    %v1617 = vpop.permute.xlu0 %1616
    %1619 = vset.pattern.permute.xlu0 0
    %1620 = vperm.xlu0 %1619, %v1110
    %v1621 = vpop.permute.xlu0 %1620
    %1623 = vset.pattern.permute.xlu0 0
    %1624 = vperm.xlu0 %1623, %v1114
    %v1625 = vpop.permute.xlu0 %1624
    %1627 = vset.pattern.permute.xlu0 0
    %1628 = vperm.xlu0 %1627, %v1118
    %v1629 = vpop.permute.xlu0 %1628
    %1631 = vset.pattern.permute.xlu0 0
    %1632 = vperm.xlu0 %1631, %v1122
    %v1633 = vpop.permute.xlu0 %1632
    %1635 = vset.pattern.permute.xlu0 0
    %1636 = vperm.xlu0 %1635, %v1126
    %v1637 = vpop.permute.xlu0 %1636
    %1639 = vset.pattern.permute.xlu0 0
    %1640 = vperm.xlu0 %1639, %v1130
    %v1641 = vpop.permute.xlu0 %1640
    %1643 = vset.pattern.permute.xlu0 0
    %1644 = vperm.xlu0 %1643, %v1134
    %v1645 = vpop.permute.xlu0 %1644
    %1647 = vset.pattern.permute.xlu0 0
    %1648 = vperm.xlu0 %1647, %v1138
    %v1649 = vpop.permute.xlu0 %1648
    %1651 = vset.pattern.permute.xlu0 0
    %1652 = vperm.xlu0 %1651, %v1142
    %v1653 = vpop.permute.xlu0 %1652
    %1655 = vset.pattern.permute.xlu0 0
    %1656 = vperm.xlu0 %1655, %v1146
    %v1657 = vpop.permute.xlu0 %1656
    %1659 = vset.pattern.permute.xlu0 0
    %1660 = vperm.xlu0 %1659, %v1150
    %v1661 = vpop.permute.xlu0 %1660
    %1663 = vset.pattern.permute.xlu0 0
    %1664 = vperm.xlu0 %1663, %v1154
    %v1665 = vpop.permute.xlu0 %1664
    %1667 = vset.pattern.permute.xlu0 0
    %1668 = vperm.xlu0 %1667, %v1158
    %v1669 = vpop.permute.xlu0 %1668
    %1671 = vset.pattern.permute.xlu0 0
    %1672 = vperm.xlu0 %1671, %v1162
    %v1673 = vpop.permute.xlu0 %1672
    %1675 = vset.pattern.permute.xlu0 0
    %1676 = vperm.xlu0 %1675, %v1166
    %v1677 = vpop.permute.xlu0 %1676
    %1679 = vset.pattern.permute.xlu0 0
    %1680 = vperm.xlu0 %1679, %v1170
    %v1681 = vpop.permute.xlu0 %1680
    %1683 = vset.pattern.permute.xlu0 0
    %1684 = vperm.xlu0 %1683, %v1174
    %v1685 = vpop.permute.xlu0 %1684
    %1687 = vset.pattern.permute.xlu0 0
    %1688 = vperm.xlu0 %1687, %v1178
    %v1689 = vpop.permute.xlu0 %1688
    %1691 = vset.pattern.permute.xlu0 0
    %1692 = vperm.xlu0 %1691, %v1182
    %v1693 = vpop.permute.xlu0 %1692
    %1695 = vset.pattern.permute.xlu0 0
    %1696 = vperm.xlu0 %1695, %v1186
    %v1697 = vpop.permute.xlu0 %1696
    %1699 = vset.pattern.permute.xlu0 0
    %1700 = vperm.xlu0 %1699, %v1190
    %v1701 = vpop.permute.xlu0 %1700
    %1703 = vset.pattern.permute.xlu0 0
    %1704 = vperm.xlu0 %1703, %v1194
    %v1705 = vpop.permute.xlu0 %1704
    %1707 = vset.pattern.permute.xlu0 0
    %1708 = vperm.xlu0 %1707, %v1198
    %v1709 = vpop.permute.xlu0 %1708
    %1711 = vset.pattern.permute.xlu0 0
    %1712 = vperm.xlu0 %1711, %v1202
    %v1713 = vpop.permute.xlu0 %1712
    %1715 = vset.pattern.permute.xlu0 0
    %1716 = vperm.xlu0 %1715, %v1206
    %v1717 = vpop.permute.xlu0 %1716
    %1719 = vset.pattern.permute.xlu0 0
    %1720 = vperm.xlu0 %1719, %v1210
    %v1721 = vpop.permute.xlu0 %1720
    %1723 = vset.pattern.permute.xlu0 0
    %1724 = vperm.xlu0 %1723, %v1214
    %v1725 = vpop.permute.xlu0 %1724
    %1727 = vset.pattern.permute.xlu0 0
    %1728 = vperm.xlu0 %1727, %v1218
    %v1729 = vpop.permute.xlu0 %1728
    %1731 = vset.pattern.permute.xlu0 0
    %1732 = vperm.xlu0 %1731, %v1222
    %v1733 = vpop.permute.xlu0 %1732
    %1735 = vset.pattern.permute.xlu0 0
    %1736 = vperm.xlu0 %1735, %v1226
    %v1737 = vpop.permute.xlu0 %1736
    %1739 = vset.pattern.permute.xlu0 0
    %1740 = vperm.xlu0 %1739, %v1230
    %v1741 = vpop.permute.xlu0 %1740
    %1743 = vset.pattern.permute.xlu0 0
    %1744 = vperm.xlu0 %1743, %v1234
    %v1745 = vpop.permute.xlu0 %1744
    %1747 = vset.pattern.permute.xlu0 0
    %1748 = vperm.xlu0 %1747, %v1238
    %v1749 = vpop.permute.xlu0 %1748
    %1751 = vset.pattern.permute.xlu0 0
    %1752 = vperm.xlu0 %1751, %v1242
    %v1753 = vpop.permute.xlu0 %1752
    %1755 = vset.pattern.permute.xlu0 0
    %1756 = vperm.xlu0 %1755, %v1246
    %v1757 = vpop.permute.xlu0 %1756
    %1759 = vset.pattern.permute.xlu0 0
    %1760 = vperm.xlu0 %1759, %v1250
    %v1761 = vpop.permute.xlu0 %1760
    %1763 = vset.pattern.permute.xlu0 0
    %1764 = vperm.xlu0 %1763, %v1254
    %v1765 = vpop.permute.xlu0 %1764
    %1767 = vset.pattern.permute.xlu0 0
    %1768 = vperm.xlu0 %1767, %v1258
    %v1769 = vpop.permute.xlu0 %1768
    %1771 = vset.pattern.permute.xlu0 0
    %1772 = vperm.xlu0 %1771, %v1262
    %v1773 = vpop.permute.xlu0 %1772
    %1775 = vset.pattern.permute.xlu0 0
    %1776 = vperm.xlu0 %1775, %v1266
    %v1777 = vpop.permute.xlu0 %1776
    %1779 = vset.pattern.permute.xlu0 0
    %1780 = vperm.xlu0 %1779, %v1270
    %v1781 = vpop.permute.xlu0 %1780
    %1783 = vset.pattern.permute.xlu0 0
    %1784 = vperm.xlu0 %1783, %v1274
    %v1785 = vpop.permute.xlu0 %1784
    %1787 = vset.pattern.permute.xlu0 0
    %1788 = vperm.xlu0 %1787, %v1278
    %v1789 = vpop.permute.xlu0 %1788
    %1791 = vset.pattern.permute.xlu0 0
    %1792 = vperm.xlu0 %1791, %v1282
    %v1793 = vpop.permute.xlu0 %1792
    %1795 = vset.pattern.permute.xlu0 0
    %1796 = vperm.xlu0 %1795, %v1286
    %v1797 = vpop.permute.xlu0 %1796
    %1799 = vset.pattern.permute.xlu0 0
    %1800 = vperm.xlu0 %1799, %v1290
    %v1801 = vpop.permute.xlu0 %1800
    %1803 = vset.pattern.permute.xlu0 0
    %1804 = vperm.xlu0 %1803, %v1294
    %v1805 = vpop.permute.xlu0 %1804
    %v1807 = vadd.f32 %v15, %v1297
    %v1808 = vadd.f32 %v16, %v1297
    %v1809 = vadd.f32 %v17, %v1297
    %v1810 = vadd.f32 %v18, %v1297
    %v1811 = vadd.f32 %v19, %v1301
    %v1812 = vadd.f32 %v20, %v1301
    %v1813 = vadd.f32 %v21, %v1301
    %v1814 = vadd.f32 %v22, %v1301
    %v1815 = vadd.f32 %v23, %v1305
    %v1816 = vadd.f32 %v24, %v1305
    %v1817 = vadd.f32 %v25, %v1305
    %v1818 = vadd.f32 %v26, %v1305
    %v1819 = vadd.f32 %v27, %v1309
    %v1820 = vadd.f32 %v28, %v1309
    %v1821 = vadd.f32 %v29, %v1309
    %v1822 = vadd.f32 %v30, %v1309
    %v1823 = vadd.f32 %v31, %v1313
    %v1824 = vadd.f32 %v32, %v1313
    %v1825 = vadd.f32 %v33, %v1313
    %v1826 = vadd.f32 %v34, %v1313
    %v1827 = vadd.f32 %v35, %v1317
    %v1828 = vadd.f32 %v36, %v1317
    %v1829 = vadd.f32 %v37, %v1317
    %v1830 = vadd.f32 %v38, %v1317
    %v1831 = vadd.f32 %v39, %v1321
    %v1832 = vadd.f32 %v40, %v1321
    %v1833 = vadd.f32 %v41, %v1321
    %v1834 = vadd.f32 %v42, %v1321
    %v1835 = vadd.f32 %v43, %v1325
    %v1836 = vadd.f32 %v44, %v1325
    %v1837 = vadd.f32 %v45, %v1325
    %v1838 = vadd.f32 %v46, %v1325
    %v1839 = vadd.f32 %v47, %v1329
    %v1840 = vadd.f32 %v48, %v1329
    %v1841 = vadd.f32 %v49, %v1329
    %v1842 = vadd.f32 %v50, %v1329
    %v1843 = vadd.f32 %v51, %v1333
    %v1844 = vadd.f32 %v52, %v1333
    %v1845 = vadd.f32 %v53, %v1333
    %v1846 = vadd.f32 %v54, %v1333
    %v1847 = vadd.f32 %v55, %v1337
    %v1848 = vadd.f32 %v56, %v1337
    %v1849 = vadd.f32 %v57, %v1337
    %v1850 = vadd.f32 %v58, %v1337
    %v1851 = vadd.f32 %v59, %v1341
    %v1852 = vadd.f32 %v60, %v1341
    %v1853 = vadd.f32 %v61, %v1341
    %v1854 = vadd.f32 %v62, %v1341
    %v1855 = vadd.f32 %v63, %v1345
    %v1856 = vadd.f32 %v64, %v1345
    %v1857 = vadd.f32 %v65, %v1345
    %v1858 = vadd.f32 %v66, %v1345
    %v1859 = vadd.f32 %v67, %v1349
    %v1860 = vadd.f32 %v68, %v1349
    %v1861 = vadd.f32 %v69, %v1349
    %v1862 = vadd.f32 %v70, %v1349
    %v1863 = vadd.f32 %v71, %v1353
    %v1864 = vadd.f32 %v72, %v1353
    %v1865 = vadd.f32 %v73, %v1353
    %v1866 = vadd.f32 %v74, %v1353
    %v1867 = vadd.f32 %v75, %v1357
    %v1868 = vadd.f32 %v76, %v1357
    %v1869 = vadd.f32 %v77, %v1357
    %v1870 = vadd.f32 %v78, %v1357
    %v1871 = vadd.f32 %v79, %v1361
    %v1872 = vadd.f32 %v80, %v1361
    %v1873 = vadd.f32 %v81, %v1361
    %v1874 = vadd.f32 %v82, %v1361
    %v1875 = vadd.f32 %v83, %v1365
    %v1876 = vadd.f32 %v84, %v1365
    %v1877 = vadd.f32 %v85, %v1365
    %v1878 = vadd.f32 %v86, %v1365
    %v1879 = vadd.f32 %v87, %v1369
    %v1880 = vadd.f32 %v88, %v1369
    %v1881 = vadd.f32 %v89, %v1369
    %v1882 = vadd.f32 %v90, %v1369
    %v1883 = vadd.f32 %v91, %v1373
    %v1884 = vadd.f32 %v92, %v1373
    %v1885 = vadd.f32 %v93, %v1373
    %v1886 = vadd.f32 %v94, %v1373
    %v1887 = vadd.f32 %v95, %v1377
    %v1888 = vadd.f32 %v96, %v1377
    %v1889 = vadd.f32 %v97, %v1377
    %v1890 = vadd.f32 %v98, %v1377
    %v1891 = vadd.f32 %v99, %v1381
    %v1892 = vadd.f32 %v100, %v1381
    %v1893 = vadd.f32 %v101, %v1381
    %v1894 = vadd.f32 %v102, %v1381
    %v1895 = vadd.f32 %v103, %v1385
    %v1896 = vadd.f32 %v104, %v1385
    %v1897 = vadd.f32 %v105, %v1385
    %v1898 = vadd.f32 %v106, %v1385
    %v1899 = vadd.f32 %v107, %v1389
    %v1900 = vadd.f32 %v108, %v1389
    %v1901 = vadd.f32 %v109, %v1389
    %v1902 = vadd.f32 %v110, %v1389
    %v1903 = vadd.f32 %v111, %v1393
    %v1904 = vadd.f32 %v112, %v1393
    %v1905 = vadd.f32 %v113, %v1393
    %v1906 = vadd.f32 %v114, %v1393
    %v1907 = vadd.f32 %v115, %v1397
    %v1908 = vadd.f32 %v116, %v1397
    %v1909 = vadd.f32 %v117, %v1397
    %v1910 = vadd.f32 %v118, %v1397
    %v1911 = vadd.f32 %v119, %v1401
    %v1912 = vadd.f32 %v120, %v1401
    %v1913 = vadd.f32 %v121, %v1401
    %v1914 = vadd.f32 %v122, %v1401
    %v1915 = vadd.f32 %v123, %v1405
    %v1916 = vadd.f32 %v124, %v1405
    %v1917 = vadd.f32 %v125, %v1405
    %v1918 = vadd.f32 %v126, %v1405
    %v1919 = vadd.f32 %v127, %v1409
    %v1920 = vadd.f32 %v128, %v1409
    %v1921 = vadd.f32 %v129, %v1409
    %v1922 = vadd.f32 %v130, %v1409
    %v1923 = vadd.f32 %v131, %v1413
    %v1924 = vadd.f32 %v132, %v1413
    %v1925 = vadd.f32 %v133, %v1413
    %v1926 = vadd.f32 %v134, %v1413
    %v1927 = vadd.f32 %v135, %v1417
    %v1928 = vadd.f32 %v136, %v1417
    %v1929 = vadd.f32 %v137, %v1417
    %v1930 = vadd.f32 %v138, %v1417
    %v1931 = vadd.f32 %v139, %v1421
    %v1932 = vadd.f32 %v140, %v1421
    %v1933 = vadd.f32 %v141, %v1421
    %v1934 = vadd.f32 %v142, %v1421
    %v1935 = vadd.f32 %v143, %v1425
    %v1936 = vadd.f32 %v144, %v1425
    %v1937 = vadd.f32 %v145, %v1425
    %v1938 = vadd.f32 %v146, %v1425
    %v1939 = vadd.f32 %v147, %v1429
    %v1940 = vadd.f32 %v148, %v1429
    %v1941 = vadd.f32 %v149, %v1429
    %v1942 = vadd.f32 %v150, %v1429
    %v1943 = vadd.f32 %v151, %v1433
    %v1944 = vadd.f32 %v152, %v1433
    %v1945 = vadd.f32 %v153, %v1433
    %v1946 = vadd.f32 %v154, %v1433
    %v1947 = vadd.f32 %v155, %v1437
    %v1948 = vadd.f32 %v156, %v1437
    %v1949 = vadd.f32 %v157, %v1437
    %v1950 = vadd.f32 %v158, %v1437
    %v1951 = vadd.f32 %v159, %v1441
    %v1952 = vadd.f32 %v160, %v1441
    %v1953 = vadd.f32 %v161, %v1441
    %v1954 = vadd.f32 %v162, %v1441
    %v1955 = vadd.f32 %v163, %v1445
    %v1956 = vadd.f32 %v164, %v1445
    %v1957 = vadd.f32 %v165, %v1445
    %v1958 = vadd.f32 %v166, %v1445
    %v1959 = vadd.f32 %v167, %v1449
    %v1960 = vadd.f32 %v168, %v1449
    %v1961 = vadd.f32 %v169, %v1449
    %v1962 = vadd.f32 %v170, %v1449
    %v1963 = vadd.f32 %v171, %v1453
    %v1964 = vadd.f32 %v172, %v1453
    %v1965 = vadd.f32 %v173, %v1453
    %v1966 = vadd.f32 %v174, %v1453
    %v1967 = vadd.f32 %v175, %v1457
    %v1968 = vadd.f32 %v176, %v1457
    %v1969 = vadd.f32 %v177, %v1457
    %v1970 = vadd.f32 %v178, %v1457
    %v1971 = vadd.f32 %v179, %v1461
    %v1972 = vadd.f32 %v180, %v1461
    %v1973 = vadd.f32 %v181, %v1461
    %v1974 = vadd.f32 %v182, %v1461
    %v1975 = vadd.f32 %v183, %v1465
    %v1976 = vadd.f32 %v184, %v1465
    %v1977 = vadd.f32 %v185, %v1465
    %v1978 = vadd.f32 %v186, %v1465
    %v1979 = vadd.f32 %v187, %v1469
    %v1980 = vadd.f32 %v188, %v1469
    %v1981 = vadd.f32 %v189, %v1469
    %v1982 = vadd.f32 %v190, %v1469
    %v1983 = vadd.f32 %v191, %v1473
    %v1984 = vadd.f32 %v192, %v1473
    %v1985 = vadd.f32 %v193, %v1473
    %v1986 = vadd.f32 %v194, %v1473
    %v1987 = vadd.f32 %v195, %v1477
    %v1988 = vadd.f32 %v196, %v1477
    %v1989 = vadd.f32 %v197, %v1477
    %v1990 = vadd.f32 %v198, %v1477
    %v1991 = vadd.f32 %v199, %v1481
    %v1992 = vadd.f32 %v200, %v1481
    %v1993 = vadd.f32 %v201, %v1481
    %v1994 = vadd.f32 %v202, %v1481
    %v1995 = vadd.f32 %v203, %v1485
    %v1996 = vadd.f32 %v204, %v1485
    %v1997 = vadd.f32 %v205, %v1485
    %v1998 = vadd.f32 %v206, %v1485
    %v1999 = vadd.f32 %v207, %v1489
    %v2000 = vadd.f32 %v208, %v1489
    %v2001 = vadd.f32 %v209, %v1489
    %v2002 = vadd.f32 %v210, %v1489
    %v2003 = vadd.f32 %v211, %v1493
    %v2004 = vadd.f32 %v212, %v1493
    %v2005 = vadd.f32 %v213, %v1493
    %v2006 = vadd.f32 %v214, %v1493
    %v2007 = vadd.f32 %v215, %v1497
    %v2008 = vadd.f32 %v216, %v1497
    %v2009 = vadd.f32 %v217, %v1497
    %v2010 = vadd.f32 %v218, %v1497
    %v2011 = vadd.f32 %v219, %v1501
    %v2012 = vadd.f32 %v220, %v1501
    %v2013 = vadd.f32 %v221, %v1501
    %v2014 = vadd.f32 %v222, %v1501
    %v2015 = vadd.f32 %v223, %v1505
    %v2016 = vadd.f32 %v224, %v1505
    %v2017 = vadd.f32 %v225, %v1505
    %v2018 = vadd.f32 %v226, %v1505
    %v2019 = vadd.f32 %v227, %v1509
    %v2020 = vadd.f32 %v228, %v1509
    %v2021 = vadd.f32 %v229, %v1509
    %v2022 = vadd.f32 %v230, %v1509
    %v2023 = vadd.f32 %v231, %v1513
    %v2024 = vadd.f32 %v232, %v1513
    %v2025 = vadd.f32 %v233, %v1513
    %v2026 = vadd.f32 %v234, %v1513
    %v2027 = vadd.f32 %v235, %v1517
    %v2028 = vadd.f32 %v236, %v1517
    %v2029 = vadd.f32 %v237, %v1517
    %v2030 = vadd.f32 %v238, %v1517
    %v2031 = vadd.f32 %v239, %v1521
    %v2032 = vadd.f32 %v240, %v1521
    %v2033 = vadd.f32 %v241, %v1521
    %v2034 = vadd.f32 %v242, %v1521
    %v2035 = vadd.f32 %v243, %v1525
    %v2036 = vadd.f32 %v244, %v1525
    %v2037 = vadd.f32 %v245, %v1525
    %v2038 = vadd.f32 %v246, %v1525
    %v2039 = vadd.f32 %v247, %v1529
    %v2040 = vadd.f32 %v248, %v1529
    %v2041 = vadd.f32 %v249, %v1529
    %v2042 = vadd.f32 %v250, %v1529
    %v2043 = vadd.f32 %v251, %v1533
    %v2044 = vadd.f32 %v252, %v1533
    %v2045 = vadd.f32 %v253, %v1533
    %v2046 = vadd.f32 %v254, %v1533
    %v2047 = vadd.f32 %v255, %v1537
    %v2048 = vadd.f32 %v256, %v1537
    %v2049 = vadd.f32 %v257, %v1537
    %v2050 = vadd.f32 %v258, %v1537
    %v2051 = vadd.f32 %v259, %v1541
    %v2052 = vadd.f32 %v260, %v1541
    %v2053 = vadd.f32 %v261, %v1541
    %v2054 = vadd.f32 %v262, %v1541
    %v2055 = vadd.f32 %v263, %v1545
    %v2056 = vadd.f32 %v264, %v1545
    %v2057 = vadd.f32 %v265, %v1545
    %v2058 = vadd.f32 %v266, %v1545
    %v2059 = vadd.f32 %v267, %v1549
    %v2060 = vadd.f32 %v268, %v1549
    %v2061 = vadd.f32 %v269, %v1549
    %v2062 = vadd.f32 %v270, %v1549
    %v2063 = vadd.f32 %v271, %v1553
    %v2064 = vadd.f32 %v272, %v1553
    %v2065 = vadd.f32 %v273, %v1553
    %v2066 = vadd.f32 %v274, %v1553
    %v2067 = vadd.f32 %v275, %v1557
    %v2068 = vadd.f32 %v276, %v1557
    %v2069 = vadd.f32 %v277, %v1557
    %v2070 = vadd.f32 %v278, %v1557
    %v2071 = vadd.f32 %v279, %v1561
    %v2072 = vadd.f32 %v280, %v1561
    %v2073 = vadd.f32 %v281, %v1561
    %v2074 = vadd.f32 %v282, %v1561
    %v2075 = vadd.f32 %v283, %v1565
    %v2076 = vadd.f32 %v284, %v1565
    %v2077 = vadd.f32 %v285, %v1565
    %v2078 = vadd.f32 %v286, %v1565
    %v2079 = vadd.f32 %v287, %v1569
    %v2080 = vadd.f32 %v288, %v1569
    %v2081 = vadd.f32 %v289, %v1569
    %v2082 = vadd.f32 %v290, %v1569
    %v2083 = vadd.f32 %v291, %v1573
    %v2084 = vadd.f32 %v292, %v1573
    %v2085 = vadd.f32 %v293, %v1573
    %v2086 = vadd.f32 %v294, %v1573
    %v2087 = vadd.f32 %v295, %v1577
    %v2088 = vadd.f32 %v296, %v1577
    %v2089 = vadd.f32 %v297, %v1577
    %v2090 = vadd.f32 %v298, %v1577
    %v2091 = vadd.f32 %v299, %v1581
    %v2092 = vadd.f32 %v300, %v1581
    %v2093 = vadd.f32 %v301, %v1581
    %v2094 = vadd.f32 %v302, %v1581
    %v2095 = vadd.f32 %v303, %v1585
    %v2096 = vadd.f32 %v304, %v1585
    %v2097 = vadd.f32 %v305, %v1585
    %v2098 = vadd.f32 %v306, %v1585
    %v2099 = vadd.f32 %v307, %v1589
    %v2100 = vadd.f32 %v308, %v1589
    %v2101 = vadd.f32 %v309, %v1589
    %v2102 = vadd.f32 %v310, %v1589
    %v2103 = vadd.f32 %v311, %v1593
    %v2104 = vadd.f32 %v312, %v1593
    %v2105 = vadd.f32 %v313, %v1593
    %v2106 = vadd.f32 %v314, %v1593
    %v2107 = vadd.f32 %v315, %v1597
    %v2108 = vadd.f32 %v316, %v1597
    %v2109 = vadd.f32 %v317, %v1597
    %v2110 = vadd.f32 %v318, %v1597
    %v2111 = vadd.f32 %v319, %v1601
    %v2112 = vadd.f32 %v320, %v1601
    %v2113 = vadd.f32 %v321, %v1601
    %v2114 = vadd.f32 %v322, %v1601
    %v2115 = vadd.f32 %v323, %v1605
    %v2116 = vadd.f32 %v324, %v1605
    %v2117 = vadd.f32 %v325, %v1605
    %v2118 = vadd.f32 %v326, %v1605
    %v2119 = vadd.f32 %v327, %v1609
    %v2120 = vadd.f32 %v328, %v1609
    %v2121 = vadd.f32 %v329, %v1609
    %v2122 = vadd.f32 %v330, %v1609
    %v2123 = vadd.f32 %v331, %v1613
    %v2124 = vadd.f32 %v332, %v1613
    %v2125 = vadd.f32 %v333, %v1613
    %v2126 = vadd.f32 %v334, %v1613
    %v2127 = vadd.f32 %v335, %v1617
    %v2128 = vadd.f32 %v336, %v1617
    %v2129 = vadd.f32 %v337, %v1617
    %v2130 = vadd.f32 %v338, %v1617
    %v2131 = vadd.f32 %v339, %v1621
    %v2132 = vadd.f32 %v340, %v1621
    %v2133 = vadd.f32 %v341, %v1621
    %v2134 = vadd.f32 %v342, %v1621
    %v2135 = vadd.f32 %v343, %v1625
    %v2136 = vadd.f32 %v344, %v1625
    %v2137 = vadd.f32 %v345, %v1625
    %v2138 = vadd.f32 %v346, %v1625
    %v2139 = vadd.f32 %v347, %v1629
    %v2140 = vadd.f32 %v348, %v1629
    %v2141 = vadd.f32 %v349, %v1629
    %v2142 = vadd.f32 %v350, %v1629
    %v2143 = vadd.f32 %v351, %v1633
    %v2144 = vadd.f32 %v352, %v1633
    %v2145 = vadd.f32 %v353, %v1633
    %v2146 = vadd.f32 %v354, %v1633
    %v2147 = vadd.f32 %v355, %v1637
    %v2148 = vadd.f32 %v356, %v1637
    %v2149 = vadd.f32 %v357, %v1637
    %v2150 = vadd.f32 %v358, %v1637
    %v2151 = vadd.f32 %v359, %v1641
    %v2152 = vadd.f32 %v360, %v1641
    %v2153 = vadd.f32 %v361, %v1641
    %v2154 = vadd.f32 %v362, %v1641
    %v2155 = vadd.f32 %v363, %v1645
    %v2156 = vadd.f32 %v364, %v1645
    %v2157 = vadd.f32 %v365, %v1645
    %v2158 = vadd.f32 %v366, %v1645
    %v2159 = vadd.f32 %v367, %v1649
    %v2160 = vadd.f32 %v368, %v1649
    %v2161 = vadd.f32 %v369, %v1649
    %v2162 = vadd.f32 %v370, %v1649
    %v2163 = vadd.f32 %v371, %v1653
    %v2164 = vadd.f32 %v372, %v1653
    %v2165 = vadd.f32 %v373, %v1653
    %v2166 = vadd.f32 %v374, %v1653
    %v2167 = vadd.f32 %v375, %v1657
    %v2168 = vadd.f32 %v376, %v1657
    %v2169 = vadd.f32 %v377, %v1657
    %v2170 = vadd.f32 %v378, %v1657
    %v2171 = vadd.f32 %v379, %v1661
    %v2172 = vadd.f32 %v380, %v1661
    %v2173 = vadd.f32 %v381, %v1661
    %v2174 = vadd.f32 %v382, %v1661
    %v2175 = vadd.f32 %v383, %v1665
    %v2176 = vadd.f32 %v384, %v1665
    %v2177 = vadd.f32 %v385, %v1665
    %v2178 = vadd.f32 %v386, %v1665
    %v2179 = vadd.f32 %v387, %v1669
    %v2180 = vadd.f32 %v388, %v1669
    %v2181 = vadd.f32 %v389, %v1669
    %v2182 = vadd.f32 %v390, %v1669
    %v2183 = vadd.f32 %v391, %v1673
    %v2184 = vadd.f32 %v392, %v1673
    %v2185 = vadd.f32 %v393, %v1673
    %v2186 = vadd.f32 %v394, %v1673
    %v2187 = vadd.f32 %v395, %v1677
    %v2188 = vadd.f32 %v396, %v1677
    %v2189 = vadd.f32 %v397, %v1677
    %v2190 = vadd.f32 %v398, %v1677
    %v2191 = vadd.f32 %v399, %v1681
    %v2192 = vadd.f32 %v400, %v1681
    %v2193 = vadd.f32 %v401, %v1681
    %v2194 = vadd.f32 %v402, %v1681
    %v2195 = vadd.f32 %v403, %v1685
    %v2196 = vadd.f32 %v404, %v1685
    %v2197 = vadd.f32 %v405, %v1685
    %v2198 = vadd.f32 %v406, %v1685
    %v2199 = vadd.f32 %v407, %v1689
    %v2200 = vadd.f32 %v408, %v1689
    %v2201 = vadd.f32 %v409, %v1689
    %v2202 = vadd.f32 %v410, %v1689
    %v2203 = vadd.f32 %v411, %v1693
    %v2204 = vadd.f32 %v412, %v1693
    %v2205 = vadd.f32 %v413, %v1693
    %v2206 = vadd.f32 %v414, %v1693
    %v2207 = vadd.f32 %v415, %v1697
    %v2208 = vadd.f32 %v416, %v1697
    %v2209 = vadd.f32 %v417, %v1697
    %v2210 = vadd.f32 %v418, %v1697
    %v2211 = vadd.f32 %v419, %v1701
    %v2212 = vadd.f32 %v420, %v1701
    %v2213 = vadd.f32 %v421, %v1701
    %v2214 = vadd.f32 %v422, %v1701
    %v2215 = vadd.f32 %v423, %v1705
    %v2216 = vadd.f32 %v424, %v1705
    %v2217 = vadd.f32 %v425, %v1705
    %v2218 = vadd.f32 %v426, %v1705
    %v2219 = vadd.f32 %v427, %v1709
    %v2220 = vadd.f32 %v428, %v1709
    %v2221 = vadd.f32 %v429, %v1709
    %v2222 = vadd.f32 %v430, %v1709
    %v2223 = vadd.f32 %v431, %v1713
    %v2224 = vadd.f32 %v432, %v1713
    %v2225 = vadd.f32 %v433, %v1713
    %v2226 = vadd.f32 %v434, %v1713
    %v2227 = vadd.f32 %v435, %v1717
    %v2228 = vadd.f32 %v436, %v1717
    %v2229 = vadd.f32 %v437, %v1717
    %v2230 = vadd.f32 %v438, %v1717
    %v2231 = vadd.f32 %v439, %v1721
    %v2232 = vadd.f32 %v440, %v1721
    %v2233 = vadd.f32 %v441, %v1721
    %v2234 = vadd.f32 %v442, %v1721
    %v2235 = vadd.f32 %v443, %v1725
    %v2236 = vadd.f32 %v444, %v1725
    %v2237 = vadd.f32 %v445, %v1725
    %v2238 = vadd.f32 %v446, %v1725
    %v2239 = vadd.f32 %v447, %v1729
    %v2240 = vadd.f32 %v448, %v1729
    %v2241 = vadd.f32 %v449, %v1729
    %v2242 = vadd.f32 %v450, %v1729
    %v2243 = vadd.f32 %v451, %v1733
    %v2244 = vadd.f32 %v452, %v1733
    %v2245 = vadd.f32 %v453, %v1733
    %v2246 = vadd.f32 %v454, %v1733
    %v2247 = vadd.f32 %v455, %v1737
    %v2248 = vadd.f32 %v456, %v1737
    %v2249 = vadd.f32 %v457, %v1737
    %v2250 = vadd.f32 %v458, %v1737
    %v2251 = vadd.f32 %v459, %v1741
    %v2252 = vadd.f32 %v460, %v1741
    %v2253 = vadd.f32 %v461, %v1741
    %v2254 = vadd.f32 %v462, %v1741
    %v2255 = vadd.f32 %v463, %v1745
    %v2256 = vadd.f32 %v464, %v1745
    %v2257 = vadd.f32 %v465, %v1745
    %v2258 = vadd.f32 %v466, %v1745
    %v2259 = vadd.f32 %v467, %v1749
    %v2260 = vadd.f32 %v468, %v1749
    %v2261 = vadd.f32 %v469, %v1749
    %v2262 = vadd.f32 %v470, %v1749
    %v2263 = vadd.f32 %v471, %v1753
    %v2264 = vadd.f32 %v472, %v1753
    %v2265 = vadd.f32 %v473, %v1753
    %v2266 = vadd.f32 %v474, %v1753
    %v2267 = vadd.f32 %v475, %v1757
    %v2268 = vadd.f32 %v476, %v1757
    %v2269 = vadd.f32 %v477, %v1757
    %v2270 = vadd.f32 %v478, %v1757
    %v2271 = vadd.f32 %v479, %v1761
    %v2272 = vadd.f32 %v480, %v1761
    %v2273 = vadd.f32 %v481, %v1761
    %v2274 = vadd.f32 %v482, %v1761
    %v2275 = vadd.f32 %v483, %v1765
    %v2276 = vadd.f32 %v484, %v1765
    %v2277 = vadd.f32 %v485, %v1765
    %v2278 = vadd.f32 %v486, %v1765
    %v2279 = vadd.f32 %v487, %v1769
    %v2280 = vadd.f32 %v488, %v1769
    %v2281 = vadd.f32 %v489, %v1769
    %v2282 = vadd.f32 %v490, %v1769
    %v2283 = vadd.f32 %v491, %v1773
    %v2284 = vadd.f32 %v492, %v1773
    %v2285 = vadd.f32 %v493, %v1773
    %v2286 = vadd.f32 %v494, %v1773
    %v2287 = vadd.f32 %v495, %v1777
    %v2288 = vadd.f32 %v496, %v1777
    %v2289 = vadd.f32 %v497, %v1777
    %v2290 = vadd.f32 %v498, %v1777
    %v2291 = vadd.f32 %v499, %v1781
    %v2292 = vadd.f32 %v500, %v1781
    %v2293 = vadd.f32 %v501, %v1781
    %v2294 = vadd.f32 %v502, %v1781
    %v2295 = vadd.f32 %v503, %v1785
    %v2296 = vadd.f32 %v504, %v1785
    %v2297 = vadd.f32 %v505, %v1785
    %v2298 = vadd.f32 %v506, %v1785
    %v2299 = vadd.f32 %v507, %v1789
    %v2300 = vadd.f32 %v508, %v1789
    %v2301 = vadd.f32 %v509, %v1789
    %v2302 = vadd.f32 %v510, %v1789
    %v2303 = vadd.f32 %v511, %v1793
    %v2304 = vadd.f32 %v512, %v1793
    %v2305 = vadd.f32 %v513, %v1793
    %v2306 = vadd.f32 %v514, %v1793
    %v2307 = vadd.f32 %v515, %v1797
    %v2308 = vadd.f32 %v516, %v1797
    %v2309 = vadd.f32 %v517, %v1797
    %v2310 = vadd.f32 %v518, %v1797
    %v2311 = vadd.f32 %v519, %v1801
    %v2312 = vadd.f32 %v520, %v1801
    %v2313 = vadd.f32 %v521, %v1801
    %v2314 = vadd.f32 %v522, %v1801
    %v2315 = vadd.f32 %v523, %v1805
    %v2316 = vadd.f32 %v524, %v1805
    %v2317 = vadd.f32 %v525, %v1805
    %v2318 = vadd.f32 %v526, %v1805
    %v2319 = vmul.f32 %v1807, 0.5
    %v2320 = vmul.f32 %v1808, 0.5
    %v2321 = vmul.f32 %v1809, 0.5
    %v2322 = vmul.f32 %v1810, 0.5
    %v2323 = vmul.f32 %v1811, 0.5
    %v2324 = vmul.f32 %v1812, 0.5
    %v2325 = vmul.f32 %v1813, 0.5
    %v2326 = vmul.f32 %v1814, 0.5
    %v2327 = vmul.f32 %v1815, 0.5
    %v2328 = vmul.f32 %v1816, 0.5
    %v2329 = vmul.f32 %v1817, 0.5
    %v2330 = vmul.f32 %v1818, 0.5
    %v2331 = vmul.f32 %v1819, 0.5
    %v2332 = vmul.f32 %v1820, 0.5
    %v2333 = vmul.f32 %v1821, 0.5
    %v2334 = vmul.f32 %v1822, 0.5
    %v2335 = vmul.f32 %v1823, 0.5
    %v2336 = vmul.f32 %v1824, 0.5
    %v2337 = vmul.f32 %v1825, 0.5
    %v2338 = vmul.f32 %v1826, 0.5
    %v2339 = vmul.f32 %v1827, 0.5
    %v2340 = vmul.f32 %v1828, 0.5
    %v2341 = vmul.f32 %v1829, 0.5
    %v2342 = vmul.f32 %v1830, 0.5
    %v2343 = vmul.f32 %v1831, 0.5
    %v2344 = vmul.f32 %v1832, 0.5
    %v2345 = vmul.f32 %v1833, 0.5
    %v2346 = vmul.f32 %v1834, 0.5
    %v2347 = vmul.f32 %v1835, 0.5
    %v2348 = vmul.f32 %v1836, 0.5
    %v2349 = vmul.f32 %v1837, 0.5
    %v2350 = vmul.f32 %v1838, 0.5
    %v2351 = vmul.f32 %v1839, 0.5
    %v2352 = vmul.f32 %v1840, 0.5
    %v2353 = vmul.f32 %v1841, 0.5
    %v2354 = vmul.f32 %v1842, 0.5
    %v2355 = vmul.f32 %v1843, 0.5
    %v2356 = vmul.f32 %v1844, 0.5
    %v2357 = vmul.f32 %v1845, 0.5
    %v2358 = vmul.f32 %v1846, 0.5
    %v2359 = vmul.f32 %v1847, 0.5
    %v2360 = vmul.f32 %v1848, 0.5
    %v2361 = vmul.f32 %v1849, 0.5
    %v2362 = vmul.f32 %v1850, 0.5
    %v2363 = vmul.f32 %v1851, 0.5
    %v2364 = vmul.f32 %v1852, 0.5
    %v2365 = vmul.f32 %v1853, 0.5
    %v2366 = vmul.f32 %v1854, 0.5
    %v2367 = vmul.f32 %v1855, 0.5
    %v2368 = vmul.f32 %v1856, 0.5
    %v2369 = vmul.f32 %v1857, 0.5
    %v2370 = vmul.f32 %v1858, 0.5
    %v2371 = vmul.f32 %v1859, 0.5
    %v2372 = vmul.f32 %v1860, 0.5
    %v2373 = vmul.f32 %v1861, 0.5
    %v2374 = vmul.f32 %v1862, 0.5
    %v2375 = vmul.f32 %v1863, 0.5
    %v2376 = vmul.f32 %v1864, 0.5
    %v2377 = vmul.f32 %v1865, 0.5
    %v2378 = vmul.f32 %v1866, 0.5
    %v2379 = vmul.f32 %v1867, 0.5
    %v2380 = vmul.f32 %v1868, 0.5
    %v2381 = vmul.f32 %v1869, 0.5
    %v2382 = vmul.f32 %v1870, 0.5
    %v2383 = vmul.f32 %v1871, 0.5
    %v2384 = vmul.f32 %v1872, 0.5
    %v2385 = vmul.f32 %v1873, 0.5
    %v2386 = vmul.f32 %v1874, 0.5
    %v2387 = vmul.f32 %v1875, 0.5
    %v2388 = vmul.f32 %v1876, 0.5
    %v2389 = vmul.f32 %v1877, 0.5
    %v2390 = vmul.f32 %v1878, 0.5
    %v2391 = vmul.f32 %v1879, 0.5
    %v2392 = vmul.f32 %v1880, 0.5
    %v2393 = vmul.f32 %v1881, 0.5
    %v2394 = vmul.f32 %v1882, 0.5
    %v2395 = vmul.f32 %v1883, 0.5
    %v2396 = vmul.f32 %v1884, 0.5
    %v2397 = vmul.f32 %v1885, 0.5
    %v2398 = vmul.f32 %v1886, 0.5
    %v2399 = vmul.f32 %v1887, 0.5
    %v2400 = vmul.f32 %v1888, 0.5
    %v2401 = vmul.f32 %v1889, 0.5
    %v2402 = vmul.f32 %v1890, 0.5
    %v2403 = vmul.f32 %v1891, 0.5
    %v2404 = vmul.f32 %v1892, 0.5
    %v2405 = vmul.f32 %v1893, 0.5
    %v2406 = vmul.f32 %v1894, 0.5
    %v2407 = vmul.f32 %v1895, 0.5
    %v2408 = vmul.f32 %v1896, 0.5
    %v2409 = vmul.f32 %v1897, 0.5
    %v2410 = vmul.f32 %v1898, 0.5
    %v2411 = vmul.f32 %v1899, 0.5
    %v2412 = vmul.f32 %v1900, 0.5
    %v2413 = vmul.f32 %v1901, 0.5
    %v2414 = vmul.f32 %v1902, 0.5
    %v2415 = vmul.f32 %v1903, 0.5
    %v2416 = vmul.f32 %v1904, 0.5
    %v2417 = vmul.f32 %v1905, 0.5
    %v2418 = vmul.f32 %v1906, 0.5
    %v2419 = vmul.f32 %v1907, 0.5
    %v2420 = vmul.f32 %v1908, 0.5
    %v2421 = vmul.f32 %v1909, 0.5
    %v2422 = vmul.f32 %v1910, 0.5
    %v2423 = vmul.f32 %v1911, 0.5
    %v2424 = vmul.f32 %v1912, 0.5
    %v2425 = vmul.f32 %v1913, 0.5
    %v2426 = vmul.f32 %v1914, 0.5
    %v2427 = vmul.f32 %v1915, 0.5
    %v2428 = vmul.f32 %v1916, 0.5
    %v2429 = vmul.f32 %v1917, 0.5
    %v2430 = vmul.f32 %v1918, 0.5
    %v2431 = vmul.f32 %v1919, 0.5
    %v2432 = vmul.f32 %v1920, 0.5
    %v2433 = vmul.f32 %v1921, 0.5
    %v2434 = vmul.f32 %v1922, 0.5
    %v2435 = vmul.f32 %v1923, 0.5
    %v2436 = vmul.f32 %v1924, 0.5
    %v2437 = vmul.f32 %v1925, 0.5
    %v2438 = vmul.f32 %v1926, 0.5
    %v2439 = vmul.f32 %v1927, 0.5
    %v2440 = vmul.f32 %v1928, 0.5
    %v2441 = vmul.f32 %v1929, 0.5
    %v2442 = vmul.f32 %v1930, 0.5
    %v2443 = vmul.f32 %v1931, 0.5
    %v2444 = vmul.f32 %v1932, 0.5
    %v2445 = vmul.f32 %v1933, 0.5
    %v2446 = vmul.f32 %v1934, 0.5
    %v2447 = vmul.f32 %v1935, 0.5
    %v2448 = vmul.f32 %v1936, 0.5
    %v2449 = vmul.f32 %v1937, 0.5
    %v2450 = vmul.f32 %v1938, 0.5
    %v2451 = vmul.f32 %v1939, 0.5
    %v2452 = vmul.f32 %v1940, 0.5
    %v2453 = vmul.f32 %v1941, 0.5
    %v2454 = vmul.f32 %v1942, 0.5
    %v2455 = vmul.f32 %v1943, 0.5
    %v2456 = vmul.f32 %v1944, 0.5
    %v2457 = vmul.f32 %v1945, 0.5
    %v2458 = vmul.f32 %v1946, 0.5
    %v2459 = vmul.f32 %v1947, 0.5
    %v2460 = vmul.f32 %v1948, 0.5
    %v2461 = vmul.f32 %v1949, 0.5
    %v2462 = vmul.f32 %v1950, 0.5
    %v2463 = vmul.f32 %v1951, 0.5
    %v2464 = vmul.f32 %v1952, 0.5
    %v2465 = vmul.f32 %v1953, 0.5
    %v2466 = vmul.f32 %v1954, 0.5
    %v2467 = vmul.f32 %v1955, 0.5
    %v2468 = vmul.f32 %v1956, 0.5
    %v2469 = vmul.f32 %v1957, 0.5
    %v2470 = vmul.f32 %v1958, 0.5
    %v2471 = vmul.f32 %v1959, 0.5
    %v2472 = vmul.f32 %v1960, 0.5
    %v2473 = vmul.f32 %v1961, 0.5
    %v2474 = vmul.f32 %v1962, 0.5
    %v2475 = vmul.f32 %v1963, 0.5
    %v2476 = vmul.f32 %v1964, 0.5
    %v2477 = vmul.f32 %v1965, 0.5
    %v2478 = vmul.f32 %v1966, 0.5
    %v2479 = vmul.f32 %v1967, 0.5
    %v2480 = vmul.f32 %v1968, 0.5
    %v2481 = vmul.f32 %v1969, 0.5
    %v2482 = vmul.f32 %v1970, 0.5
    %v2483 = vmul.f32 %v1971, 0.5
    %v2484 = vmul.f32 %v1972, 0.5
    %v2485 = vmul.f32 %v1973, 0.5
    %v2486 = vmul.f32 %v1974, 0.5
    %v2487 = vmul.f32 %v1975, 0.5
    %v2488 = vmul.f32 %v1976, 0.5
    %v2489 = vmul.f32 %v1977, 0.5
    %v2490 = vmul.f32 %v1978, 0.5
    %v2491 = vmul.f32 %v1979, 0.5
    %v2492 = vmul.f32 %v1980, 0.5
    %v2493 = vmul.f32 %v1981, 0.5
    %v2494 = vmul.f32 %v1982, 0.5
    %v2495 = vmul.f32 %v1983, 0.5
    %v2496 = vmul.f32 %v1984, 0.5
    %v2497 = vmul.f32 %v1985, 0.5
    %v2498 = vmul.f32 %v1986, 0.5
    %v2499 = vmul.f32 %v1987, 0.5
    %v2500 = vmul.f32 %v1988, 0.5
    %v2501 = vmul.f32 %v1989, 0.5
    %v2502 = vmul.f32 %v1990, 0.5
    %v2503 = vmul.f32 %v1991, 0.5
    %v2504 = vmul.f32 %v1992, 0.5
    %v2505 = vmul.f32 %v1993, 0.5
    %v2506 = vmul.f32 %v1994, 0.5
    %v2507 = vmul.f32 %v1995, 0.5
    %v2508 = vmul.f32 %v1996, 0.5
    %v2509 = vmul.f32 %v1997, 0.5
    %v2510 = vmul.f32 %v1998, 0.5
    %v2511 = vmul.f32 %v1999, 0.5
    %v2512 = vmul.f32 %v2000, 0.5
    %v2513 = vmul.f32 %v2001, 0.5
    %v2514 = vmul.f32 %v2002, 0.5
    %v2515 = vmul.f32 %v2003, 0.5
    %v2516 = vmul.f32 %v2004, 0.5
    %v2517 = vmul.f32 %v2005, 0.5
    %v2518 = vmul.f32 %v2006, 0.5
    %v2519 = vmul.f32 %v2007, 0.5
    %v2520 = vmul.f32 %v2008, 0.5
    %v2521 = vmul.f32 %v2009, 0.5
    %v2522 = vmul.f32 %v2010, 0.5
    %v2523 = vmul.f32 %v2011, 0.5
    %v2524 = vmul.f32 %v2012, 0.5
    %v2525 = vmul.f32 %v2013, 0.5
    %v2526 = vmul.f32 %v2014, 0.5
    %v2527 = vmul.f32 %v2015, 0.5
    %v2528 = vmul.f32 %v2016, 0.5
    %v2529 = vmul.f32 %v2017, 0.5
    %v2530 = vmul.f32 %v2018, 0.5
    %v2531 = vmul.f32 %v2019, 0.5
    %v2532 = vmul.f32 %v2020, 0.5
    %v2533 = vmul.f32 %v2021, 0.5
    %v2534 = vmul.f32 %v2022, 0.5
    %v2535 = vmul.f32 %v2023, 0.5
    %v2536 = vmul.f32 %v2024, 0.5
    %v2537 = vmul.f32 %v2025, 0.5
    %v2538 = vmul.f32 %v2026, 0.5
    %v2539 = vmul.f32 %v2027, 0.5
    %v2540 = vmul.f32 %v2028, 0.5
    %v2541 = vmul.f32 %v2029, 0.5
    %v2542 = vmul.f32 %v2030, 0.5
    %v2543 = vmul.f32 %v2031, 0.5
    %v2544 = vmul.f32 %v2032, 0.5
    %v2545 = vmul.f32 %v2033, 0.5
    %v2546 = vmul.f32 %v2034, 0.5
    %v2547 = vmul.f32 %v2035, 0.5
    %v2548 = vmul.f32 %v2036, 0.5
    %v2549 = vmul.f32 %v2037, 0.5
    %v2550 = vmul.f32 %v2038, 0.5
    %v2551 = vmul.f32 %v2039, 0.5
    %v2552 = vmul.f32 %v2040, 0.5
    %v2553 = vmul.f32 %v2041, 0.5
    %v2554 = vmul.f32 %v2042, 0.5
    %v2555 = vmul.f32 %v2043, 0.5
    %v2556 = vmul.f32 %v2044, 0.5
    %v2557 = vmul.f32 %v2045, 0.5
    %v2558 = vmul.f32 %v2046, 0.5
    %v2559 = vmul.f32 %v2047, 0.5
    %v2560 = vmul.f32 %v2048, 0.5
    %v2561 = vmul.f32 %v2049, 0.5
    %v2562 = vmul.f32 %v2050, 0.5
    %v2563 = vmul.f32 %v2051, 0.5
    %v2564 = vmul.f32 %v2052, 0.5
    %v2565 = vmul.f32 %v2053, 0.5
    %v2566 = vmul.f32 %v2054, 0.5
    %v2567 = vmul.f32 %v2055, 0.5
    %v2568 = vmul.f32 %v2056, 0.5
    %v2569 = vmul.f32 %v2057, 0.5
    %v2570 = vmul.f32 %v2058, 0.5
    %v2571 = vmul.f32 %v2059, 0.5
    %v2572 = vmul.f32 %v2060, 0.5
    %v2573 = vmul.f32 %v2061, 0.5
    %v2574 = vmul.f32 %v2062, 0.5
    %v2575 = vmul.f32 %v2063, 0.5
    %v2576 = vmul.f32 %v2064, 0.5
    %v2577 = vmul.f32 %v2065, 0.5
    %v2578 = vmul.f32 %v2066, 0.5
    %v2579 = vmul.f32 %v2067, 0.5
    %v2580 = vmul.f32 %v2068, 0.5
    %v2581 = vmul.f32 %v2069, 0.5
    %v2582 = vmul.f32 %v2070, 0.5
    %v2583 = vmul.f32 %v2071, 0.5
    %v2584 = vmul.f32 %v2072, 0.5
    %v2585 = vmul.f32 %v2073, 0.5
    %v2586 = vmul.f32 %v2074, 0.5
    %v2587 = vmul.f32 %v2075, 0.5
    %v2588 = vmul.f32 %v2076, 0.5
    %v2589 = vmul.f32 %v2077, 0.5
    %v2590 = vmul.f32 %v2078, 0.5
    %v2591 = vmul.f32 %v2079, 0.5
    %v2592 = vmul.f32 %v2080, 0.5
    %v2593 = vmul.f32 %v2081, 0.5
    %v2594 = vmul.f32 %v2082, 0.5
    %v2595 = vmul.f32 %v2083, 0.5
    %v2596 = vmul.f32 %v2084, 0.5
    %v2597 = vmul.f32 %v2085, 0.5
    %v2598 = vmul.f32 %v2086, 0.5
    %v2599 = vmul.f32 %v2087, 0.5
    %v2600 = vmul.f32 %v2088, 0.5
    %v2601 = vmul.f32 %v2089, 0.5
    %v2602 = vmul.f32 %v2090, 0.5
    %v2603 = vmul.f32 %v2091, 0.5
    %v2604 = vmul.f32 %v2092, 0.5
    %v2605 = vmul.f32 %v2093, 0.5
    %v2606 = vmul.f32 %v2094, 0.5
    %v2607 = vmul.f32 %v2095, 0.5
    %v2608 = vmul.f32 %v2096, 0.5
    %v2609 = vmul.f32 %v2097, 0.5
    %v2610 = vmul.f32 %v2098, 0.5
    %v2611 = vmul.f32 %v2099, 0.5
    %v2612 = vmul.f32 %v2100, 0.5
    %v2613 = vmul.f32 %v2101, 0.5
    %v2614 = vmul.f32 %v2102, 0.5
    %v2615 = vmul.f32 %v2103, 0.5
    %v2616 = vmul.f32 %v2104, 0.5
    %v2617 = vmul.f32 %v2105, 0.5
    %v2618 = vmul.f32 %v2106, 0.5
    %v2619 = vmul.f32 %v2107, 0.5
    %v2620 = vmul.f32 %v2108, 0.5
    %v2621 = vmul.f32 %v2109, 0.5
    %v2622 = vmul.f32 %v2110, 0.5
    %v2623 = vmul.f32 %v2111, 0.5
    %v2624 = vmul.f32 %v2112, 0.5
    %v2625 = vmul.f32 %v2113, 0.5
    %v2626 = vmul.f32 %v2114, 0.5
    %v2627 = vmul.f32 %v2115, 0.5
    %v2628 = vmul.f32 %v2116, 0.5
    %v2629 = vmul.f32 %v2117, 0.5
    %v2630 = vmul.f32 %v2118, 0.5
    %v2631 = vmul.f32 %v2119, 0.5
    %v2632 = vmul.f32 %v2120, 0.5
    %v2633 = vmul.f32 %v2121, 0.5
    %v2634 = vmul.f32 %v2122, 0.5
    %v2635 = vmul.f32 %v2123, 0.5
    %v2636 = vmul.f32 %v2124, 0.5
    %v2637 = vmul.f32 %v2125, 0.5
    %v2638 = vmul.f32 %v2126, 0.5
    %v2639 = vmul.f32 %v2127, 0.5
    %v2640 = vmul.f32 %v2128, 0.5
    %v2641 = vmul.f32 %v2129, 0.5
    %v2642 = vmul.f32 %v2130, 0.5
    %v2643 = vmul.f32 %v2131, 0.5
    %v2644 = vmul.f32 %v2132, 0.5
    %v2645 = vmul.f32 %v2133, 0.5
    %v2646 = vmul.f32 %v2134, 0.5
    %v2647 = vmul.f32 %v2135, 0.5
    %v2648 = vmul.f32 %v2136, 0.5
    %v2649 = vmul.f32 %v2137, 0.5
    %v2650 = vmul.f32 %v2138, 0.5
    %v2651 = vmul.f32 %v2139, 0.5
    %v2652 = vmul.f32 %v2140, 0.5
    %v2653 = vmul.f32 %v2141, 0.5
    %v2654 = vmul.f32 %v2142, 0.5
    %v2655 = vmul.f32 %v2143, 0.5
    %v2656 = vmul.f32 %v2144, 0.5
    %v2657 = vmul.f32 %v2145, 0.5
    %v2658 = vmul.f32 %v2146, 0.5
    %v2659 = vmul.f32 %v2147, 0.5
    %v2660 = vmul.f32 %v2148, 0.5
    %v2661 = vmul.f32 %v2149, 0.5
    %v2662 = vmul.f32 %v2150, 0.5
    %v2663 = vmul.f32 %v2151, 0.5
    %v2664 = vmul.f32 %v2152, 0.5
    %v2665 = vmul.f32 %v2153, 0.5
    %v2666 = vmul.f32 %v2154, 0.5
    %v2667 = vmul.f32 %v2155, 0.5
    %v2668 = vmul.f32 %v2156, 0.5
    %v2669 = vmul.f32 %v2157, 0.5
    %v2670 = vmul.f32 %v2158, 0.5
    %v2671 = vmul.f32 %v2159, 0.5
    %v2672 = vmul.f32 %v2160, 0.5
    %v2673 = vmul.f32 %v2161, 0.5
    %v2674 = vmul.f32 %v2162, 0.5
    %v2675 = vmul.f32 %v2163, 0.5
    %v2676 = vmul.f32 %v2164, 0.5
    %v2677 = vmul.f32 %v2165, 0.5
    %v2678 = vmul.f32 %v2166, 0.5
    %v2679 = vmul.f32 %v2167, 0.5
    %v2680 = vmul.f32 %v2168, 0.5
    %v2681 = vmul.f32 %v2169, 0.5
    %v2682 = vmul.f32 %v2170, 0.5
    %v2683 = vmul.f32 %v2171, 0.5
    %v2684 = vmul.f32 %v2172, 0.5
    %v2685 = vmul.f32 %v2173, 0.5
    %v2686 = vmul.f32 %v2174, 0.5
    %v2687 = vmul.f32 %v2175, 0.5
    %v2688 = vmul.f32 %v2176, 0.5
    %v2689 = vmul.f32 %v2177, 0.5
    %v2690 = vmul.f32 %v2178, 0.5
    %v2691 = vmul.f32 %v2179, 0.5
    %v2692 = vmul.f32 %v2180, 0.5
    %v2693 = vmul.f32 %v2181, 0.5
    %v2694 = vmul.f32 %v2182, 0.5
    %v2695 = vmul.f32 %v2183, 0.5
    %v2696 = vmul.f32 %v2184, 0.5
    %v2697 = vmul.f32 %v2185, 0.5
    %v2698 = vmul.f32 %v2186, 0.5
    %v2699 = vmul.f32 %v2187, 0.5
    %v2700 = vmul.f32 %v2188, 0.5
    %v2701 = vmul.f32 %v2189, 0.5
    %v2702 = vmul.f32 %v2190, 0.5
    %v2703 = vmul.f32 %v2191, 0.5
    %v2704 = vmul.f32 %v2192, 0.5
    %v2705 = vmul.f32 %v2193, 0.5
    %v2706 = vmul.f32 %v2194, 0.5
    %v2707 = vmul.f32 %v2195, 0.5
    %v2708 = vmul.f32 %v2196, 0.5
    %v2709 = vmul.f32 %v2197, 0.5
    %v2710 = vmul.f32 %v2198, 0.5
    %v2711 = vmul.f32 %v2199, 0.5
    %v2712 = vmul.f32 %v2200, 0.5
    %v2713 = vmul.f32 %v2201, 0.5
    %v2714 = vmul.f32 %v2202, 0.5
    %v2715 = vmul.f32 %v2203, 0.5
    %v2716 = vmul.f32 %v2204, 0.5
    %v2717 = vmul.f32 %v2205, 0.5
    %v2718 = vmul.f32 %v2206, 0.5
    %v2719 = vmul.f32 %v2207, 0.5
    %v2720 = vmul.f32 %v2208, 0.5
    %v2721 = vmul.f32 %v2209, 0.5
    %v2722 = vmul.f32 %v2210, 0.5
    %v2723 = vmul.f32 %v2211, 0.5
    %v2724 = vmul.f32 %v2212, 0.5
    %v2725 = vmul.f32 %v2213, 0.5
    %v2726 = vmul.f32 %v2214, 0.5
    %v2727 = vmul.f32 %v2215, 0.5
    %v2728 = vmul.f32 %v2216, 0.5
    %v2729 = vmul.f32 %v2217, 0.5
    %v2730 = vmul.f32 %v2218, 0.5
    %v2731 = vmul.f32 %v2219, 0.5
    %v2732 = vmul.f32 %v2220, 0.5
    %v2733 = vmul.f32 %v2221, 0.5
    %v2734 = vmul.f32 %v2222, 0.5
    %v2735 = vmul.f32 %v2223, 0.5
    %v2736 = vmul.f32 %v2224, 0.5
    %v2737 = vmul.f32 %v2225, 0.5
    %v2738 = vmul.f32 %v2226, 0.5
    %v2739 = vmul.f32 %v2227, 0.5
    %v2740 = vmul.f32 %v2228, 0.5
    %v2741 = vmul.f32 %v2229, 0.5
    %v2742 = vmul.f32 %v2230, 0.5
    %v2743 = vmul.f32 %v2231, 0.5
    %v2744 = vmul.f32 %v2232, 0.5
    %v2745 = vmul.f32 %v2233, 0.5
    %v2746 = vmul.f32 %v2234, 0.5
    %v2747 = vmul.f32 %v2235, 0.5
    %v2748 = vmul.f32 %v2236, 0.5
    %v2749 = vmul.f32 %v2237, 0.5
    %v2750 = vmul.f32 %v2238, 0.5
    %v2751 = vmul.f32 %v2239, 0.5
    %v2752 = vmul.f32 %v2240, 0.5
    %v2753 = vmul.f32 %v2241, 0.5
    %v2754 = vmul.f32 %v2242, 0.5
    %v2755 = vmul.f32 %v2243, 0.5
    %v2756 = vmul.f32 %v2244, 0.5
    %v2757 = vmul.f32 %v2245, 0.5
    %v2758 = vmul.f32 %v2246, 0.5
    %v2759 = vmul.f32 %v2247, 0.5
    %v2760 = vmul.f32 %v2248, 0.5
    %v2761 = vmul.f32 %v2249, 0.5
    %v2762 = vmul.f32 %v2250, 0.5
    %v2763 = vmul.f32 %v2251, 0.5
    %v2764 = vmul.f32 %v2252, 0.5
    %v2765 = vmul.f32 %v2253, 0.5
    %v2766 = vmul.f32 %v2254, 0.5
    %v2767 = vmul.f32 %v2255, 0.5
    %v2768 = vmul.f32 %v2256, 0.5
    %v2769 = vmul.f32 %v2257, 0.5
    %v2770 = vmul.f32 %v2258, 0.5
    %v2771 = vmul.f32 %v2259, 0.5
    %v2772 = vmul.f32 %v2260, 0.5
    %v2773 = vmul.f32 %v2261, 0.5
    %v2774 = vmul.f32 %v2262, 0.5
    %v2775 = vmul.f32 %v2263, 0.5
    %v2776 = vmul.f32 %v2264, 0.5
    %v2777 = vmul.f32 %v2265, 0.5
    %v2778 = vmul.f32 %v2266, 0.5
    %v2779 = vmul.f32 %v2267, 0.5
    %v2780 = vmul.f32 %v2268, 0.5
    %v2781 = vmul.f32 %v2269, 0.5
    %v2782 = vmul.f32 %v2270, 0.5
    %v2783 = vmul.f32 %v2271, 0.5
    %v2784 = vmul.f32 %v2272, 0.5
    %v2785 = vmul.f32 %v2273, 0.5
    %v2786 = vmul.f32 %v2274, 0.5
    %v2787 = vmul.f32 %v2275, 0.5
    %v2788 = vmul.f32 %v2276, 0.5
    %v2789 = vmul.f32 %v2277, 0.5
    %v2790 = vmul.f32 %v2278, 0.5
    %v2791 = vmul.f32 %v2279, 0.5
    %v2792 = vmul.f32 %v2280, 0.5
    %v2793 = vmul.f32 %v2281, 0.5
    %v2794 = vmul.f32 %v2282, 0.5
    %v2795 = vmul.f32 %v2283, 0.5
    %v2796 = vmul.f32 %v2284, 0.5
    %v2797 = vmul.f32 %v2285, 0.5
    %v2798 = vmul.f32 %v2286, 0.5
    %v2799 = vmul.f32 %v2287, 0.5
    %v2800 = vmul.f32 %v2288, 0.5
    %v2801 = vmul.f32 %v2289, 0.5
    %v2802 = vmul.f32 %v2290, 0.5
    %v2803 = vmul.f32 %v2291, 0.5
    %v2804 = vmul.f32 %v2292, 0.5
    %v2805 = vmul.f32 %v2293, 0.5
    %v2806 = vmul.f32 %v2294, 0.5
    %v2807 = vmul.f32 %v2295, 0.5
    %v2808 = vmul.f32 %v2296, 0.5
    %v2809 = vmul.f32 %v2297, 0.5
    %v2810 = vmul.f32 %v2298, 0.5
    %v2811 = vmul.f32 %v2299, 0.5
    %v2812 = vmul.f32 %v2300, 0.5
    %v2813 = vmul.f32 %v2301, 0.5
    %v2814 = vmul.f32 %v2302, 0.5
    %v2815 = vmul.f32 %v2303, 0.5
    %v2816 = vmul.f32 %v2304, 0.5
    %v2817 = vmul.f32 %v2305, 0.5
    %v2818 = vmul.f32 %v2306, 0.5
    %v2819 = vmul.f32 %v2307, 0.5
    %v2820 = vmul.f32 %v2308, 0.5
    %v2821 = vmul.f32 %v2309, 0.5
    %v2822 = vmul.f32 %v2310, 0.5
    %v2823 = vmul.f32 %v2311, 0.5
    %v2824 = vmul.f32 %v2312, 0.5
    %v2825 = vmul.f32 %v2313, 0.5
    %v2826 = vmul.f32 %v2314, 0.5
    %v2827 = vmul.f32 %v2315, 0.5
    %v2828 = vmul.f32 %v2316, 0.5
    %v2829 = vmul.f32 %v2317, 0.5
    %v2830 = vmul.f32 %v2318, 0.5
    %v2831 = vtanh.pop %v2319
    %v2832 = vtanh.pop %v2320
    %v2833 = vtanh.pop %v2321
    %v2834 = vtanh.pop %v2322
    %v2835 = vtanh.pop %v2323
    %v2836 = vtanh.pop %v2324
    %v2837 = vtanh.pop %v2325
    %v2838 = vtanh.pop %v2326
    %v2839 = vtanh.pop %v2327
    %v2840 = vtanh.pop %v2328
    %v2841 = vtanh.pop %v2329
    %v2842 = vtanh.pop %v2330
    %v2843 = vtanh.pop %v2331
    %v2844 = vtanh.pop %v2332
    %v2845 = vtanh.pop %v2333
    %v2846 = vtanh.pop %v2334
    %v2847 = vtanh.pop %v2335
    %v2848 = vtanh.pop %v2336
    %v2849 = vtanh.pop %v2337
    %v2850 = vtanh.pop %v2338
    %v2851 = vtanh.pop %v2339
    %v2852 = vtanh.pop %v2340
    %v2853 = vtanh.pop %v2341
    %v2854 = vtanh.pop %v2342
    %v2855 = vtanh.pop %v2343
    %v2856 = vtanh.pop %v2344
    %v2857 = vtanh.pop %v2345
    %v2858 = vtanh.pop %v2346
    %v2859 = vtanh.pop %v2347
    %v2860 = vtanh.pop %v2348
    %v2861 = vtanh.pop %v2349
    %v2862 = vtanh.pop %v2350
    %v2863 = vtanh.pop %v2351
    %v2864 = vtanh.pop %v2352
    %v2865 = vtanh.pop %v2353
    %v2866 = vtanh.pop %v2354
    %v2867 = vtanh.pop %v2355
    %v2868 = vtanh.pop %v2356
    %v2869 = vtanh.pop %v2357
    %v2870 = vtanh.pop %v2358
    %v2871 = vtanh.pop %v2359
    %v2872 = vtanh.pop %v2360
    %v2873 = vtanh.pop %v2361
    %v2874 = vtanh.pop %v2362
    %v2875 = vtanh.pop %v2363
    %v2876 = vtanh.pop %v2364
    %v2877 = vtanh.pop %v2365
    %v2878 = vtanh.pop %v2366
    %v2879 = vtanh.pop %v2367
    %v2880 = vtanh.pop %v2368
    %v2881 = vtanh.pop %v2369
    %v2882 = vtanh.pop %v2370
    %v2883 = vtanh.pop %v2371
    %v2884 = vtanh.pop %v2372
    %v2885 = vtanh.pop %v2373
    %v2886 = vtanh.pop %v2374
    %v2887 = vtanh.pop %v2375
    %v2888 = vtanh.pop %v2376
    %v2889 = vtanh.pop %v2377
    %v2890 = vtanh.pop %v2378
    %v2891 = vtanh.pop %v2379
    %v2892 = vtanh.pop %v2380
    %v2893 = vtanh.pop %v2381
    %v2894 = vtanh.pop %v2382
    %v2895 = vtanh.pop %v2383
    %v2896 = vtanh.pop %v2384
    %v2897 = vtanh.pop %v2385
    %v2898 = vtanh.pop %v2386
    %v2899 = vtanh.pop %v2387
    %v2900 = vtanh.pop %v2388
    %v2901 = vtanh.pop %v2389
    %v2902 = vtanh.pop %v2390
    %v2903 = vtanh.pop %v2391
    %v2904 = vtanh.pop %v2392
    %v2905 = vtanh.pop %v2393
    %v2906 = vtanh.pop %v2394
    %v2907 = vtanh.pop %v2395
    %v2908 = vtanh.pop %v2396
    %v2909 = vtanh.pop %v2397
    %v2910 = vtanh.pop %v2398
    %v2911 = vtanh.pop %v2399
    %v2912 = vtanh.pop %v2400
    %v2913 = vtanh.pop %v2401
    %v2914 = vtanh.pop %v2402
    %v2915 = vtanh.pop %v2403
    %v2916 = vtanh.pop %v2404
    %v2917 = vtanh.pop %v2405
    %v2918 = vtanh.pop %v2406
    %v2919 = vtanh.pop %v2407
    %v2920 = vtanh.pop %v2408
    %v2921 = vtanh.pop %v2409
    %v2922 = vtanh.pop %v2410
    %v2923 = vtanh.pop %v2411
    %v2924 = vtanh.pop %v2412
    %v2925 = vtanh.pop %v2413
    %v2926 = vtanh.pop %v2414
    %v2927 = vtanh.pop %v2415
    %v2928 = vtanh.pop %v2416
    %v2929 = vtanh.pop %v2417
    %v2930 = vtanh.pop %v2418
    %v2931 = vtanh.pop %v2419
    %v2932 = vtanh.pop %v2420
    %v2933 = vtanh.pop %v2421
    %v2934 = vtanh.pop %v2422
    %v2935 = vtanh.pop %v2423
    %v2936 = vtanh.pop %v2424
    %v2937 = vtanh.pop %v2425
    %v2938 = vtanh.pop %v2426
    %v2939 = vtanh.pop %v2427
    %v2940 = vtanh.pop %v2428
    %v2941 = vtanh.pop %v2429
    %v2942 = vtanh.pop %v2430
    %v2943 = vtanh.pop %v2431
    %v2944 = vtanh.pop %v2432
    %v2945 = vtanh.pop %v2433
    %v2946 = vtanh.pop %v2434
    %v2947 = vtanh.pop %v2435
    %v2948 = vtanh.pop %v2436
    %v2949 = vtanh.pop %v2437
    %v2950 = vtanh.pop %v2438
    %v2951 = vtanh.pop %v2439
    %v2952 = vtanh.pop %v2440
    %v2953 = vtanh.pop %v2441
    %v2954 = vtanh.pop %v2442
    %v2955 = vtanh.pop %v2443
    %v2956 = vtanh.pop %v2444
    %v2957 = vtanh.pop %v2445
    %v2958 = vtanh.pop %v2446
    %v2959 = vtanh.pop %v2447
    %v2960 = vtanh.pop %v2448
    %v2961 = vtanh.pop %v2449
    %v2962 = vtanh.pop %v2450
    %v2963 = vtanh.pop %v2451
    %v2964 = vtanh.pop %v2452
    %v2965 = vtanh.pop %v2453
    %v2966 = vtanh.pop %v2454
    %v2967 = vtanh.pop %v2455
    %v2968 = vtanh.pop %v2456
    %v2969 = vtanh.pop %v2457
    %v2970 = vtanh.pop %v2458
    %v2971 = vtanh.pop %v2459
    %v2972 = vtanh.pop %v2460
    %v2973 = vtanh.pop %v2461
    %v2974 = vtanh.pop %v2462
    %v2975 = vtanh.pop %v2463
    %v2976 = vtanh.pop %v2464
    %v2977 = vtanh.pop %v2465
    %v2978 = vtanh.pop %v2466
    %v2979 = vtanh.pop %v2467
    %v2980 = vtanh.pop %v2468
    %v2981 = vtanh.pop %v2469
    %v2982 = vtanh.pop %v2470
    %v2983 = vtanh.pop %v2471
    %v2984 = vtanh.pop %v2472
    %v2985 = vtanh.pop %v2473
    %v2986 = vtanh.pop %v2474
    %v2987 = vtanh.pop %v2475
    %v2988 = vtanh.pop %v2476
    %v2989 = vtanh.pop %v2477
    %v2990 = vtanh.pop %v2478
    %v2991 = vtanh.pop %v2479
    %v2992 = vtanh.pop %v2480
    %v2993 = vtanh.pop %v2481
    %v2994 = vtanh.pop %v2482
    %v2995 = vtanh.pop %v2483
    %v2996 = vtanh.pop %v2484
    %v2997 = vtanh.pop %v2485
    %v2998 = vtanh.pop %v2486
    %v2999 = vtanh.pop %v2487
    %v3000 = vtanh.pop %v2488
    %v3001 = vtanh.pop %v2489
    %v3002 = vtanh.pop %v2490
    %v3003 = vtanh.pop %v2491
    %v3004 = vtanh.pop %v2492
    %v3005 = vtanh.pop %v2493
    %v3006 = vtanh.pop %v2494
    %v3007 = vtanh.pop %v2495
    %v3008 = vtanh.pop %v2496
    %v3009 = vtanh.pop %v2497
    %v3010 = vtanh.pop %v2498
    %v3011 = vtanh.pop %v2499
    %v3012 = vtanh.pop %v2500
    %v3013 = vtanh.pop %v2501
    %v3014 = vtanh.pop %v2502
    %v3015 = vtanh.pop %v2503
    %v3016 = vtanh.pop %v2504
    %v3017 = vtanh.pop %v2505
    %v3018 = vtanh.pop %v2506
    %v3019 = vtanh.pop %v2507
    %v3020 = vtanh.pop %v2508
    %v3021 = vtanh.pop %v2509
    %v3022 = vtanh.pop %v2510
    %v3023 = vtanh.pop %v2511
    %v3024 = vtanh.pop %v2512
    %v3025 = vtanh.pop %v2513
    %v3026 = vtanh.pop %v2514
    %v3027 = vtanh.pop %v2515
    %v3028 = vtanh.pop %v2516
    %v3029 = vtanh.pop %v2517
    %v3030 = vtanh.pop %v2518
    %v3031 = vtanh.pop %v2519
    %v3032 = vtanh.pop %v2520
    %v3033 = vtanh.pop %v2521
    %v3034 = vtanh.pop %v2522
    %v3035 = vtanh.pop %v2523
    %v3036 = vtanh.pop %v2524
    %v3037 = vtanh.pop %v2525
    %v3038 = vtanh.pop %v2526
    %v3039 = vtanh.pop %v2527
    %v3040 = vtanh.pop %v2528
    %v3041 = vtanh.pop %v2529
    %v3042 = vtanh.pop %v2530
    %v3043 = vtanh.pop %v2531
    %v3044 = vtanh.pop %v2532
    %v3045 = vtanh.pop %v2533
    %v3046 = vtanh.pop %v2534
    %v3047 = vtanh.pop %v2535
    %v3048 = vtanh.pop %v2536
    %v3049 = vtanh.pop %v2537
    %v3050 = vtanh.pop %v2538
    %v3051 = vtanh.pop %v2539
    %v3052 = vtanh.pop %v2540
    %v3053 = vtanh.pop %v2541
    %v3054 = vtanh.pop %v2542
    %v3055 = vtanh.pop %v2543
    %v3056 = vtanh.pop %v2544
    %v3057 = vtanh.pop %v2545
    %v3058 = vtanh.pop %v2546
    %v3059 = vtanh.pop %v2547
    %v3060 = vtanh.pop %v2548
    %v3061 = vtanh.pop %v2549
    %v3062 = vtanh.pop %v2550
    %v3063 = vtanh.pop %v2551
    %v3064 = vtanh.pop %v2552
    %v3065 = vtanh.pop %v2553
    %v3066 = vtanh.pop %v2554
    %v3067 = vtanh.pop %v2555
    %v3068 = vtanh.pop %v2556
    %v3069 = vtanh.pop %v2557
    %v3070 = vtanh.pop %v2558
    %v3071 = vtanh.pop %v2559
    %v3072 = vtanh.pop %v2560
    %v3073 = vtanh.pop %v2561
    %v3074 = vtanh.pop %v2562
    %v3075 = vtanh.pop %v2563
    %v3076 = vtanh.pop %v2564
    %v3077 = vtanh.pop %v2565
    %v3078 = vtanh.pop %v2566
    %v3079 = vtanh.pop %v2567
    %v3080 = vtanh.pop %v2568
    %v3081 = vtanh.pop %v2569
    %v3082 = vtanh.pop %v2570
    %v3083 = vtanh.pop %v2571
    %v3084 = vtanh.pop %v2572
    %v3085 = vtanh.pop %v2573
    %v3086 = vtanh.pop %v2574
    %v3087 = vtanh.pop %v2575
    %v3088 = vtanh.pop %v2576
    %v3089 = vtanh.pop %v2577
    %v3090 = vtanh.pop %v2578
    %v3091 = vtanh.pop %v2579
    %v3092 = vtanh.pop %v2580
    %v3093 = vtanh.pop %v2581
    %v3094 = vtanh.pop %v2582
    %v3095 = vtanh.pop %v2583
    %v3096 = vtanh.pop %v2584
    %v3097 = vtanh.pop %v2585
    %v3098 = vtanh.pop %v2586
    %v3099 = vtanh.pop %v2587
    %v3100 = vtanh.pop %v2588
    %v3101 = vtanh.pop %v2589
    %v3102 = vtanh.pop %v2590
    %v3103 = vtanh.pop %v2591
    %v3104 = vtanh.pop %v2592
    %v3105 = vtanh.pop %v2593
    %v3106 = vtanh.pop %v2594
    %v3107 = vtanh.pop %v2595
    %v3108 = vtanh.pop %v2596
    %v3109 = vtanh.pop %v2597
    %v3110 = vtanh.pop %v2598
    %v3111 = vtanh.pop %v2599
    %v3112 = vtanh.pop %v2600
    %v3113 = vtanh.pop %v2601
    %v3114 = vtanh.pop %v2602
    %v3115 = vtanh.pop %v2603
    %v3116 = vtanh.pop %v2604
    %v3117 = vtanh.pop %v2605
    %v3118 = vtanh.pop %v2606
    %v3119 = vtanh.pop %v2607
    %v3120 = vtanh.pop %v2608
    %v3121 = vtanh.pop %v2609
    %v3122 = vtanh.pop %v2610
    %v3123 = vtanh.pop %v2611
    %v3124 = vtanh.pop %v2612
    %v3125 = vtanh.pop %v2613
    %v3126 = vtanh.pop %v2614
    %v3127 = vtanh.pop %v2615
    %v3128 = vtanh.pop %v2616
    %v3129 = vtanh.pop %v2617
    %v3130 = vtanh.pop %v2618
    %v3131 = vtanh.pop %v2619
    %v3132 = vtanh.pop %v2620
    %v3133 = vtanh.pop %v2621
    %v3134 = vtanh.pop %v2622
    %v3135 = vtanh.pop %v2623
    %v3136 = vtanh.pop %v2624
    %v3137 = vtanh.pop %v2625
    %v3138 = vtanh.pop %v2626
    %v3139 = vtanh.pop %v2627
    %v3140 = vtanh.pop %v2628
    %v3141 = vtanh.pop %v2629
    %v3142 = vtanh.pop %v2630
    %v3143 = vtanh.pop %v2631
    %v3144 = vtanh.pop %v2632
    %v3145 = vtanh.pop %v2633
    %v3146 = vtanh.pop %v2634
    %v3147 = vtanh.pop %v2635
    %v3148 = vtanh.pop %v2636
    %v3149 = vtanh.pop %v2637
    %v3150 = vtanh.pop %v2638
    %v3151 = vtanh.pop %v2639
    %v3152 = vtanh.pop %v2640
    %v3153 = vtanh.pop %v2641
    %v3154 = vtanh.pop %v2642
    %v3155 = vtanh.pop %v2643
    %v3156 = vtanh.pop %v2644
    %v3157 = vtanh.pop %v2645
    %v3158 = vtanh.pop %v2646
    %v3159 = vtanh.pop %v2647
    %v3160 = vtanh.pop %v2648
    %v3161 = vtanh.pop %v2649
    %v3162 = vtanh.pop %v2650
    %v3163 = vtanh.pop %v2651
    %v3164 = vtanh.pop %v2652
    %v3165 = vtanh.pop %v2653
    %v3166 = vtanh.pop %v2654
    %v3167 = vtanh.pop %v2655
    %v3168 = vtanh.pop %v2656
    %v3169 = vtanh.pop %v2657
    %v3170 = vtanh.pop %v2658
    %v3171 = vtanh.pop %v2659
    %v3172 = vtanh.pop %v2660
    %v3173 = vtanh.pop %v2661
    %v3174 = vtanh.pop %v2662
    %v3175 = vtanh.pop %v2663
    %v3176 = vtanh.pop %v2664
    %v3177 = vtanh.pop %v2665
    %v3178 = vtanh.pop %v2666
    %v3179 = vtanh.pop %v2667
    %v3180 = vtanh.pop %v2668
    %v3181 = vtanh.pop %v2669
    %v3182 = vtanh.pop %v2670
    %v3183 = vtanh.pop %v2671
    %v3184 = vtanh.pop %v2672
    %v3185 = vtanh.pop %v2673
    %v3186 = vtanh.pop %v2674
    %v3187 = vtanh.pop %v2675
    %v3188 = vtanh.pop %v2676
    %v3189 = vtanh.pop %v2677
    %v3190 = vtanh.pop %v2678
    %v3191 = vtanh.pop %v2679
    %v3192 = vtanh.pop %v2680
    %v3193 = vtanh.pop %v2681
    %v3194 = vtanh.pop %v2682
    %v3195 = vtanh.pop %v2683
    %v3196 = vtanh.pop %v2684
    %v3197 = vtanh.pop %v2685
    %v3198 = vtanh.pop %v2686
    %v3199 = vtanh.pop %v2687
    %v3200 = vtanh.pop %v2688
    %v3201 = vtanh.pop %v2689
    %v3202 = vtanh.pop %v2690
    %v3203 = vtanh.pop %v2691
    %v3204 = vtanh.pop %v2692
    %v3205 = vtanh.pop %v2693
    %v3206 = vtanh.pop %v2694
    %v3207 = vtanh.pop %v2695
    %v3208 = vtanh.pop %v2696
    %v3209 = vtanh.pop %v2697
    %v3210 = vtanh.pop %v2698
    %v3211 = vtanh.pop %v2699
    %v3212 = vtanh.pop %v2700
    %v3213 = vtanh.pop %v2701
    %v3214 = vtanh.pop %v2702
    %v3215 = vtanh.pop %v2703
    %v3216 = vtanh.pop %v2704
    %v3217 = vtanh.pop %v2705
    %v3218 = vtanh.pop %v2706
    %v3219 = vtanh.pop %v2707
    %v3220 = vtanh.pop %v2708
    %v3221 = vtanh.pop %v2709
    %v3222 = vtanh.pop %v2710
    %v3223 = vtanh.pop %v2711
    %v3224 = vtanh.pop %v2712
    %v3225 = vtanh.pop %v2713
    %v3226 = vtanh.pop %v2714
    %v3227 = vtanh.pop %v2715
    %v3228 = vtanh.pop %v2716
    %v3229 = vtanh.pop %v2717
    %v3230 = vtanh.pop %v2718
    %v3231 = vtanh.pop %v2719
    %v3232 = vtanh.pop %v2720
    %v3233 = vtanh.pop %v2721
    %v3234 = vtanh.pop %v2722
    %v3235 = vtanh.pop %v2723
    %v3236 = vtanh.pop %v2724
    %v3237 = vtanh.pop %v2725
    %v3238 = vtanh.pop %v2726
    %v3239 = vtanh.pop %v2727
    %v3240 = vtanh.pop %v2728
    %v3241 = vtanh.pop %v2729
    %v3242 = vtanh.pop %v2730
    %v3243 = vtanh.pop %v2731
    %v3244 = vtanh.pop %v2732
    %v3245 = vtanh.pop %v2733
    %v3246 = vtanh.pop %v2734
    %v3247 = vtanh.pop %v2735
    %v3248 = vtanh.pop %v2736
    %v3249 = vtanh.pop %v2737
    %v3250 = vtanh.pop %v2738
    %v3251 = vtanh.pop %v2739
    %v3252 = vtanh.pop %v2740
    %v3253 = vtanh.pop %v2741
    %v3254 = vtanh.pop %v2742
    %v3255 = vtanh.pop %v2743
    %v3256 = vtanh.pop %v2744
    %v3257 = vtanh.pop %v2745
    %v3258 = vtanh.pop %v2746
    %v3259 = vtanh.pop %v2747
    %v3260 = vtanh.pop %v2748
    %v3261 = vtanh.pop %v2749
    %v3262 = vtanh.pop %v2750
    %v3263 = vtanh.pop %v2751
    %v3264 = vtanh.pop %v2752
    %v3265 = vtanh.pop %v2753
    %v3266 = vtanh.pop %v2754
    %v3267 = vtanh.pop %v2755
    %v3268 = vtanh.pop %v2756
    %v3269 = vtanh.pop %v2757
    %v3270 = vtanh.pop %v2758
    %v3271 = vtanh.pop %v2759
    %v3272 = vtanh.pop %v2760
    %v3273 = vtanh.pop %v2761
    %v3274 = vtanh.pop %v2762
    %v3275 = vtanh.pop %v2763
    %v3276 = vtanh.pop %v2764
    %v3277 = vtanh.pop %v2765
    %v3278 = vtanh.pop %v2766
    %v3279 = vtanh.pop %v2767
    %v3280 = vtanh.pop %v2768
    %v3281 = vtanh.pop %v2769
    %v3282 = vtanh.pop %v2770
    %v3283 = vtanh.pop %v2771
    %v3284 = vtanh.pop %v2772
    %v3285 = vtanh.pop %v2773
    %v3286 = vtanh.pop %v2774
    %v3287 = vtanh.pop %v2775
    %v3288 = vtanh.pop %v2776
    %v3289 = vtanh.pop %v2777
    %v3290 = vtanh.pop %v2778
    %v3291 = vtanh.pop %v2779
    %v3292 = vtanh.pop %v2780
    %v3293 = vtanh.pop %v2781
    %v3294 = vtanh.pop %v2782
    %v3295 = vtanh.pop %v2783
    %v3296 = vtanh.pop %v2784
    %v3297 = vtanh.pop %v2785
    %v3298 = vtanh.pop %v2786
    %v3299 = vtanh.pop %v2787
    %v3300 = vtanh.pop %v2788
    %v3301 = vtanh.pop %v2789
    %v3302 = vtanh.pop %v2790
    %v3303 = vtanh.pop %v2791
    %v3304 = vtanh.pop %v2792
    %v3305 = vtanh.pop %v2793
    %v3306 = vtanh.pop %v2794
    %v3307 = vtanh.pop %v2795
    %v3308 = vtanh.pop %v2796
    %v3309 = vtanh.pop %v2797
    %v3310 = vtanh.pop %v2798
    %v3311 = vtanh.pop %v2799
    %v3312 = vtanh.pop %v2800
    %v3313 = vtanh.pop %v2801
    %v3314 = vtanh.pop %v2802
    %v3315 = vtanh.pop %v2803
    %v3316 = vtanh.pop %v2804
    %v3317 = vtanh.pop %v2805
    %v3318 = vtanh.pop %v2806
    %v3319 = vtanh.pop %v2807
    %v3320 = vtanh.pop %v2808
    %v3321 = vtanh.pop %v2809
    %v3322 = vtanh.pop %v2810
    %v3323 = vtanh.pop %v2811
    %v3324 = vtanh.pop %v2812
    %v3325 = vtanh.pop %v2813
    %v3326 = vtanh.pop %v2814
    %v3327 = vtanh.pop %v2815
    %v3328 = vtanh.pop %v2816
    %v3329 = vtanh.pop %v2817
    %v3330 = vtanh.pop %v2818
    %v3331 = vtanh.pop %v2819
    %v3332 = vtanh.pop %v2820
    %v3333 = vtanh.pop %v2821
    %v3334 = vtanh.pop %v2822
    %v3335 = vtanh.pop %v2823
    %v3336 = vtanh.pop %v2824
    %v3337 = vtanh.pop %v2825
    %v3338 = vtanh.pop %v2826
    %v3339 = vtanh.pop %v2827
    %v3340 = vtanh.pop %v2828
    %v3341 = vtanh.pop %v2829
    %v3342 = vtanh.pop %v2830
    %v3343 = vmul.f32 %v2831, 0.5
    %v3344 = vmul.f32 %v2832, 0.5
    %v3345 = vmul.f32 %v2833, 0.5
    %v3346 = vmul.f32 %v2834, 0.5
    %v3347 = vmul.f32 %v2835, 0.5
    %v3348 = vmul.f32 %v2836, 0.5
    %v3349 = vmul.f32 %v2837, 0.5
    %v3350 = vmul.f32 %v2838, 0.5
    %v3351 = vmul.f32 %v2839, 0.5
    %v3352 = vmul.f32 %v2840, 0.5
    %v3353 = vmul.f32 %v2841, 0.5
    %v3354 = vmul.f32 %v2842, 0.5
    %v3355 = vmul.f32 %v2843, 0.5
    %v3356 = vmul.f32 %v2844, 0.5
    %v3357 = vmul.f32 %v2845, 0.5
    %v3358 = vmul.f32 %v2846, 0.5
    %v3359 = vmul.f32 %v2847, 0.5
    %v3360 = vmul.f32 %v2848, 0.5
    %v3361 = vmul.f32 %v2849, 0.5
    %v3362 = vmul.f32 %v2850, 0.5
    %v3363 = vmul.f32 %v2851, 0.5
    %v3364 = vmul.f32 %v2852, 0.5
    %v3365 = vmul.f32 %v2853, 0.5
    %v3366 = vmul.f32 %v2854, 0.5
    %v3367 = vmul.f32 %v2855, 0.5
    %v3368 = vmul.f32 %v2856, 0.5
    %v3369 = vmul.f32 %v2857, 0.5
    %v3370 = vmul.f32 %v2858, 0.5
    %v3371 = vmul.f32 %v2859, 0.5
    %v3372 = vmul.f32 %v2860, 0.5
    %v3373 = vmul.f32 %v2861, 0.5
    %v3374 = vmul.f32 %v2862, 0.5
    %v3375 = vmul.f32 %v2863, 0.5
    %v3376 = vmul.f32 %v2864, 0.5
    %v3377 = vmul.f32 %v2865, 0.5
    %v3378 = vmul.f32 %v2866, 0.5
    %v3379 = vmul.f32 %v2867, 0.5
    %v3380 = vmul.f32 %v2868, 0.5
    %v3381 = vmul.f32 %v2869, 0.5
    %v3382 = vmul.f32 %v2870, 0.5
    %v3383 = vmul.f32 %v2871, 0.5
    %v3384 = vmul.f32 %v2872, 0.5
    %v3385 = vmul.f32 %v2873, 0.5
    %v3386 = vmul.f32 %v2874, 0.5
    %v3387 = vmul.f32 %v2875, 0.5
    %v3388 = vmul.f32 %v2876, 0.5
    %v3389 = vmul.f32 %v2877, 0.5
    %v3390 = vmul.f32 %v2878, 0.5
    %v3391 = vmul.f32 %v2879, 0.5
    %v3392 = vmul.f32 %v2880, 0.5
    %v3393 = vmul.f32 %v2881, 0.5
    %v3394 = vmul.f32 %v2882, 0.5
    %v3395 = vmul.f32 %v2883, 0.5
    %v3396 = vmul.f32 %v2884, 0.5
    %v3397 = vmul.f32 %v2885, 0.5
    %v3398 = vmul.f32 %v2886, 0.5
    %v3399 = vmul.f32 %v2887, 0.5
    %v3400 = vmul.f32 %v2888, 0.5
    %v3401 = vmul.f32 %v2889, 0.5
    %v3402 = vmul.f32 %v2890, 0.5
    %v3403 = vmul.f32 %v2891, 0.5
    %v3404 = vmul.f32 %v2892, 0.5
    %v3405 = vmul.f32 %v2893, 0.5
    %v3406 = vmul.f32 %v2894, 0.5
    %v3407 = vmul.f32 %v2895, 0.5
    %v3408 = vmul.f32 %v2896, 0.5
    %v3409 = vmul.f32 %v2897, 0.5
    %v3410 = vmul.f32 %v2898, 0.5
    %v3411 = vmul.f32 %v2899, 0.5
    %v3412 = vmul.f32 %v2900, 0.5
    %v3413 = vmul.f32 %v2901, 0.5
    %v3414 = vmul.f32 %v2902, 0.5
    %v3415 = vmul.f32 %v2903, 0.5
    %v3416 = vmul.f32 %v2904, 0.5
    %v3417 = vmul.f32 %v2905, 0.5
    %v3418 = vmul.f32 %v2906, 0.5
    %v3419 = vmul.f32 %v2907, 0.5
    %v3420 = vmul.f32 %v2908, 0.5
    %v3421 = vmul.f32 %v2909, 0.5
    %v3422 = vmul.f32 %v2910, 0.5
    %v3423 = vmul.f32 %v2911, 0.5
    %v3424 = vmul.f32 %v2912, 0.5
    %v3425 = vmul.f32 %v2913, 0.5
    %v3426 = vmul.f32 %v2914, 0.5
    %v3427 = vmul.f32 %v2915, 0.5
    %v3428 = vmul.f32 %v2916, 0.5
    %v3429 = vmul.f32 %v2917, 0.5
    %v3430 = vmul.f32 %v2918, 0.5
    %v3431 = vmul.f32 %v2919, 0.5
    %v3432 = vmul.f32 %v2920, 0.5
    %v3433 = vmul.f32 %v2921, 0.5
    %v3434 = vmul.f32 %v2922, 0.5
    %v3435 = vmul.f32 %v2923, 0.5
    %v3436 = vmul.f32 %v2924, 0.5
    %v3437 = vmul.f32 %v2925, 0.5
    %v3438 = vmul.f32 %v2926, 0.5
    %v3439 = vmul.f32 %v2927, 0.5
    %v3440 = vmul.f32 %v2928, 0.5
    %v3441 = vmul.f32 %v2929, 0.5
    %v3442 = vmul.f32 %v2930, 0.5
    %v3443 = vmul.f32 %v2931, 0.5
    %v3444 = vmul.f32 %v2932, 0.5
    %v3445 = vmul.f32 %v2933, 0.5
    %v3446 = vmul.f32 %v2934, 0.5
    %v3447 = vmul.f32 %v2935, 0.5
    %v3448 = vmul.f32 %v2936, 0.5
    %v3449 = vmul.f32 %v2937, 0.5
    %v3450 = vmul.f32 %v2938, 0.5
    %v3451 = vmul.f32 %v2939, 0.5
    %v3452 = vmul.f32 %v2940, 0.5
    %v3453 = vmul.f32 %v2941, 0.5
    %v3454 = vmul.f32 %v2942, 0.5
    %v3455 = vmul.f32 %v2943, 0.5
    %v3456 = vmul.f32 %v2944, 0.5
    %v3457 = vmul.f32 %v2945, 0.5
    %v3458 = vmul.f32 %v2946, 0.5
    %v3459 = vmul.f32 %v2947, 0.5
    %v3460 = vmul.f32 %v2948, 0.5
    %v3461 = vmul.f32 %v2949, 0.5
    %v3462 = vmul.f32 %v2950, 0.5
    %v3463 = vmul.f32 %v2951, 0.5
    %v3464 = vmul.f32 %v2952, 0.5
    %v3465 = vmul.f32 %v2953, 0.5
    %v3466 = vmul.f32 %v2954, 0.5
    %v3467 = vmul.f32 %v2955, 0.5
    %v3468 = vmul.f32 %v2956, 0.5
    %v3469 = vmul.f32 %v2957, 0.5
    %v3470 = vmul.f32 %v2958, 0.5
    %v3471 = vmul.f32 %v2959, 0.5
    %v3472 = vmul.f32 %v2960, 0.5
    %v3473 = vmul.f32 %v2961, 0.5
    %v3474 = vmul.f32 %v2962, 0.5
    %v3475 = vmul.f32 %v2963, 0.5
    %v3476 = vmul.f32 %v2964, 0.5
    %v3477 = vmul.f32 %v2965, 0.5
    %v3478 = vmul.f32 %v2966, 0.5
    %v3479 = vmul.f32 %v2967, 0.5
    %v3480 = vmul.f32 %v2968, 0.5
    %v3481 = vmul.f32 %v2969, 0.5
    %v3482 = vmul.f32 %v2970, 0.5
    %v3483 = vmul.f32 %v2971, 0.5
    %v3484 = vmul.f32 %v2972, 0.5
    %v3485 = vmul.f32 %v2973, 0.5
    %v3486 = vmul.f32 %v2974, 0.5
    %v3487 = vmul.f32 %v2975, 0.5
    %v3488 = vmul.f32 %v2976, 0.5
    %v3489 = vmul.f32 %v2977, 0.5
    %v3490 = vmul.f32 %v2978, 0.5
    %v3491 = vmul.f32 %v2979, 0.5
    %v3492 = vmul.f32 %v2980, 0.5
    %v3493 = vmul.f32 %v2981, 0.5
    %v3494 = vmul.f32 %v2982, 0.5
    %v3495 = vmul.f32 %v2983, 0.5
    %v3496 = vmul.f32 %v2984, 0.5
    %v3497 = vmul.f32 %v2985, 0.5
    %v3498 = vmul.f32 %v2986, 0.5
    %v3499 = vmul.f32 %v2987, 0.5
    %v3500 = vmul.f32 %v2988, 0.5
    %v3501 = vmul.f32 %v2989, 0.5
    %v3502 = vmul.f32 %v2990, 0.5
    %v3503 = vmul.f32 %v2991, 0.5
    %v3504 = vmul.f32 %v2992, 0.5
    %v3505 = vmul.f32 %v2993, 0.5
    %v3506 = vmul.f32 %v2994, 0.5
    %v3507 = vmul.f32 %v2995, 0.5
    %v3508 = vmul.f32 %v2996, 0.5
    %v3509 = vmul.f32 %v2997, 0.5
    %v3510 = vmul.f32 %v2998, 0.5
    %v3511 = vmul.f32 %v2999, 0.5
    %v3512 = vmul.f32 %v3000, 0.5
    %v3513 = vmul.f32 %v3001, 0.5
    %v3514 = vmul.f32 %v3002, 0.5
    %v3515 = vmul.f32 %v3003, 0.5
    %v3516 = vmul.f32 %v3004, 0.5
    %v3517 = vmul.f32 %v3005, 0.5
    %v3518 = vmul.f32 %v3006, 0.5
    %v3519 = vmul.f32 %v3007, 0.5
    %v3520 = vmul.f32 %v3008, 0.5
    %v3521 = vmul.f32 %v3009, 0.5
    %v3522 = vmul.f32 %v3010, 0.5
    %v3523 = vmul.f32 %v3011, 0.5
    %v3524 = vmul.f32 %v3012, 0.5
    %v3525 = vmul.f32 %v3013, 0.5
    %v3526 = vmul.f32 %v3014, 0.5
    %v3527 = vmul.f32 %v3015, 0.5
    %v3528 = vmul.f32 %v3016, 0.5
    %v3529 = vmul.f32 %v3017, 0.5
    %v3530 = vmul.f32 %v3018, 0.5
    %v3531 = vmul.f32 %v3019, 0.5
    %v3532 = vmul.f32 %v3020, 0.5
    %v3533 = vmul.f32 %v3021, 0.5
    %v3534 = vmul.f32 %v3022, 0.5
    %v3535 = vmul.f32 %v3023, 0.5
    %v3536 = vmul.f32 %v3024, 0.5
    %v3537 = vmul.f32 %v3025, 0.5
    %v3538 = vmul.f32 %v3026, 0.5
    %v3539 = vmul.f32 %v3027, 0.5
    %v3540 = vmul.f32 %v3028, 0.5
    %v3541 = vmul.f32 %v3029, 0.5
    %v3542 = vmul.f32 %v3030, 0.5
    %v3543 = vmul.f32 %v3031, 0.5
    %v3544 = vmul.f32 %v3032, 0.5
    %v3545 = vmul.f32 %v3033, 0.5
    %v3546 = vmul.f32 %v3034, 0.5
    %v3547 = vmul.f32 %v3035, 0.5
    %v3548 = vmul.f32 %v3036, 0.5
    %v3549 = vmul.f32 %v3037, 0.5
    %v3550 = vmul.f32 %v3038, 0.5
    %v3551 = vmul.f32 %v3039, 0.5
    %v3552 = vmul.f32 %v3040, 0.5
    %v3553 = vmul.f32 %v3041, 0.5
    %v3554 = vmul.f32 %v3042, 0.5
    %v3555 = vmul.f32 %v3043, 0.5
    %v3556 = vmul.f32 %v3044, 0.5
    %v3557 = vmul.f32 %v3045, 0.5
    %v3558 = vmul.f32 %v3046, 0.5
    %v3559 = vmul.f32 %v3047, 0.5
    %v3560 = vmul.f32 %v3048, 0.5
    %v3561 = vmul.f32 %v3049, 0.5
    %v3562 = vmul.f32 %v3050, 0.5
    %v3563 = vmul.f32 %v3051, 0.5
    %v3564 = vmul.f32 %v3052, 0.5
    %v3565 = vmul.f32 %v3053, 0.5
    %v3566 = vmul.f32 %v3054, 0.5
    %v3567 = vmul.f32 %v3055, 0.5
    %v3568 = vmul.f32 %v3056, 0.5
    %v3569 = vmul.f32 %v3057, 0.5
    %v3570 = vmul.f32 %v3058, 0.5
    %v3571 = vmul.f32 %v3059, 0.5
    %v3572 = vmul.f32 %v3060, 0.5
    %v3573 = vmul.f32 %v3061, 0.5
    %v3574 = vmul.f32 %v3062, 0.5
    %v3575 = vmul.f32 %v3063, 0.5
    %v3576 = vmul.f32 %v3064, 0.5
    %v3577 = vmul.f32 %v3065, 0.5
    %v3578 = vmul.f32 %v3066, 0.5
    %v3579 = vmul.f32 %v3067, 0.5
    %v3580 = vmul.f32 %v3068, 0.5
    %v3581 = vmul.f32 %v3069, 0.5
    %v3582 = vmul.f32 %v3070, 0.5
    %v3583 = vmul.f32 %v3071, 0.5
    %v3584 = vmul.f32 %v3072, 0.5
    %v3585 = vmul.f32 %v3073, 0.5
    %v3586 = vmul.f32 %v3074, 0.5
    %v3587 = vmul.f32 %v3075, 0.5
    %v3588 = vmul.f32 %v3076, 0.5
    %v3589 = vmul.f32 %v3077, 0.5
    %v3590 = vmul.f32 %v3078, 0.5
    %v3591 = vmul.f32 %v3079, 0.5
    %v3592 = vmul.f32 %v3080, 0.5
    %v3593 = vmul.f32 %v3081, 0.5
    %v3594 = vmul.f32 %v3082, 0.5
    %v3595 = vmul.f32 %v3083, 0.5
    %v3596 = vmul.f32 %v3084, 0.5
    %v3597 = vmul.f32 %v3085, 0.5
    %v3598 = vmul.f32 %v3086, 0.5
    %v3599 = vmul.f32 %v3087, 0.5
    %v3600 = vmul.f32 %v3088, 0.5
    %v3601 = vmul.f32 %v3089, 0.5
    %v3602 = vmul.f32 %v3090, 0.5
    %v3603 = vmul.f32 %v3091, 0.5
    %v3604 = vmul.f32 %v3092, 0.5
    %v3605 = vmul.f32 %v3093, 0.5
    %v3606 = vmul.f32 %v3094, 0.5
    %v3607 = vmul.f32 %v3095, 0.5
    %v3608 = vmul.f32 %v3096, 0.5
    %v3609 = vmul.f32 %v3097, 0.5
    %v3610 = vmul.f32 %v3098, 0.5
    %v3611 = vmul.f32 %v3099, 0.5
    %v3612 = vmul.f32 %v3100, 0.5
    %v3613 = vmul.f32 %v3101, 0.5
    %v3614 = vmul.f32 %v3102, 0.5
    %v3615 = vmul.f32 %v3103, 0.5
    %v3616 = vmul.f32 %v3104, 0.5
    %v3617 = vmul.f32 %v3105, 0.5
    %v3618 = vmul.f32 %v3106, 0.5
    %v3619 = vmul.f32 %v3107, 0.5
    %v3620 = vmul.f32 %v3108, 0.5
    %v3621 = vmul.f32 %v3109, 0.5
    %v3622 = vmul.f32 %v3110, 0.5
    %v3623 = vmul.f32 %v3111, 0.5
    %v3624 = vmul.f32 %v3112, 0.5
    %v3625 = vmul.f32 %v3113, 0.5
    %v3626 = vmul.f32 %v3114, 0.5
    %v3627 = vmul.f32 %v3115, 0.5
    %v3628 = vmul.f32 %v3116, 0.5
    %v3629 = vmul.f32 %v3117, 0.5
    %v3630 = vmul.f32 %v3118, 0.5
    %v3631 = vmul.f32 %v3119, 0.5
    %v3632 = vmul.f32 %v3120, 0.5
    %v3633 = vmul.f32 %v3121, 0.5
    %v3634 = vmul.f32 %v3122, 0.5
    %v3635 = vmul.f32 %v3123, 0.5
    %v3636 = vmul.f32 %v3124, 0.5
    %v3637 = vmul.f32 %v3125, 0.5
    %v3638 = vmul.f32 %v3126, 0.5
    %v3639 = vmul.f32 %v3127, 0.5
    %v3640 = vmul.f32 %v3128, 0.5
    %v3641 = vmul.f32 %v3129, 0.5
    %v3642 = vmul.f32 %v3130, 0.5
    %v3643 = vmul.f32 %v3131, 0.5
    %v3644 = vmul.f32 %v3132, 0.5
    %v3645 = vmul.f32 %v3133, 0.5
    %v3646 = vmul.f32 %v3134, 0.5
    %v3647 = vmul.f32 %v3135, 0.5
    %v3648 = vmul.f32 %v3136, 0.5
    %v3649 = vmul.f32 %v3137, 0.5
    %v3650 = vmul.f32 %v3138, 0.5
    %v3651 = vmul.f32 %v3139, 0.5
    %v3652 = vmul.f32 %v3140, 0.5
    %v3653 = vmul.f32 %v3141, 0.5
    %v3654 = vmul.f32 %v3142, 0.5
    %v3655 = vmul.f32 %v3143, 0.5
    %v3656 = vmul.f32 %v3144, 0.5
    %v3657 = vmul.f32 %v3145, 0.5
    %v3658 = vmul.f32 %v3146, 0.5
    %v3659 = vmul.f32 %v3147, 0.5
    %v3660 = vmul.f32 %v3148, 0.5
    %v3661 = vmul.f32 %v3149, 0.5
    %v3662 = vmul.f32 %v3150, 0.5
    %v3663 = vmul.f32 %v3151, 0.5
    %v3664 = vmul.f32 %v3152, 0.5
    %v3665 = vmul.f32 %v3153, 0.5
    %v3666 = vmul.f32 %v3154, 0.5
    %v3667 = vmul.f32 %v3155, 0.5
    %v3668 = vmul.f32 %v3156, 0.5
    %v3669 = vmul.f32 %v3157, 0.5
    %v3670 = vmul.f32 %v3158, 0.5
    %v3671 = vmul.f32 %v3159, 0.5
    %v3672 = vmul.f32 %v3160, 0.5
    %v3673 = vmul.f32 %v3161, 0.5
    %v3674 = vmul.f32 %v3162, 0.5
    %v3675 = vmul.f32 %v3163, 0.5
    %v3676 = vmul.f32 %v3164, 0.5
    %v3677 = vmul.f32 %v3165, 0.5
    %v3678 = vmul.f32 %v3166, 0.5
    %v3679 = vmul.f32 %v3167, 0.5
    %v3680 = vmul.f32 %v3168, 0.5
    %v3681 = vmul.f32 %v3169, 0.5
    %v3682 = vmul.f32 %v3170, 0.5
    %v3683 = vmul.f32 %v3171, 0.5
    %v3684 = vmul.f32 %v3172, 0.5
    %v3685 = vmul.f32 %v3173, 0.5
    %v3686 = vmul.f32 %v3174, 0.5
    %v3687 = vmul.f32 %v3175, 0.5
    %v3688 = vmul.f32 %v3176, 0.5
    %v3689 = vmul.f32 %v3177, 0.5
    %v3690 = vmul.f32 %v3178, 0.5
    %v3691 = vmul.f32 %v3179, 0.5
    %v3692 = vmul.f32 %v3180, 0.5
    %v3693 = vmul.f32 %v3181, 0.5
    %v3694 = vmul.f32 %v3182, 0.5
    %v3695 = vmul.f32 %v3183, 0.5
    %v3696 = vmul.f32 %v3184, 0.5
    %v3697 = vmul.f32 %v3185, 0.5
    %v3698 = vmul.f32 %v3186, 0.5
    %v3699 = vmul.f32 %v3187, 0.5
    %v3700 = vmul.f32 %v3188, 0.5
    %v3701 = vmul.f32 %v3189, 0.5
    %v3702 = vmul.f32 %v3190, 0.5
    %v3703 = vmul.f32 %v3191, 0.5
    %v3704 = vmul.f32 %v3192, 0.5
    %v3705 = vmul.f32 %v3193, 0.5
    %v3706 = vmul.f32 %v3194, 0.5
    %v3707 = vmul.f32 %v3195, 0.5
    %v3708 = vmul.f32 %v3196, 0.5
    %v3709 = vmul.f32 %v3197, 0.5
    %v3710 = vmul.f32 %v3198, 0.5
    %v3711 = vmul.f32 %v3199, 0.5
    %v3712 = vmul.f32 %v3200, 0.5
    %v3713 = vmul.f32 %v3201, 0.5
    %v3714 = vmul.f32 %v3202, 0.5
    %v3715 = vmul.f32 %v3203, 0.5
    %v3716 = vmul.f32 %v3204, 0.5
    %v3717 = vmul.f32 %v3205, 0.5
    %v3718 = vmul.f32 %v3206, 0.5
    %v3719 = vmul.f32 %v3207, 0.5
    %v3720 = vmul.f32 %v3208, 0.5
    %v3721 = vmul.f32 %v3209, 0.5
    %v3722 = vmul.f32 %v3210, 0.5
    %v3723 = vmul.f32 %v3211, 0.5
    %v3724 = vmul.f32 %v3212, 0.5
    %v3725 = vmul.f32 %v3213, 0.5
    %v3726 = vmul.f32 %v3214, 0.5
    %v3727 = vmul.f32 %v3215, 0.5
    %v3728 = vmul.f32 %v3216, 0.5
    %v3729 = vmul.f32 %v3217, 0.5
    %v3730 = vmul.f32 %v3218, 0.5
    %v3731 = vmul.f32 %v3219, 0.5
    %v3732 = vmul.f32 %v3220, 0.5
    %v3733 = vmul.f32 %v3221, 0.5
    %v3734 = vmul.f32 %v3222, 0.5
    %v3735 = vmul.f32 %v3223, 0.5
    %v3736 = vmul.f32 %v3224, 0.5
    %v3737 = vmul.f32 %v3225, 0.5
    %v3738 = vmul.f32 %v3226, 0.5
    %v3739 = vmul.f32 %v3227, 0.5
    %v3740 = vmul.f32 %v3228, 0.5
    %v3741 = vmul.f32 %v3229, 0.5
    %v3742 = vmul.f32 %v3230, 0.5
    %v3743 = vmul.f32 %v3231, 0.5
    %v3744 = vmul.f32 %v3232, 0.5
    %v3745 = vmul.f32 %v3233, 0.5
    %v3746 = vmul.f32 %v3234, 0.5
    %v3747 = vmul.f32 %v3235, 0.5
    %v3748 = vmul.f32 %v3236, 0.5
    %v3749 = vmul.f32 %v3237, 0.5
    %v3750 = vmul.f32 %v3238, 0.5
    %v3751 = vmul.f32 %v3239, 0.5
    %v3752 = vmul.f32 %v3240, 0.5
    %v3753 = vmul.f32 %v3241, 0.5
    %v3754 = vmul.f32 %v3242, 0.5
    %v3755 = vmul.f32 %v3243, 0.5
    %v3756 = vmul.f32 %v3244, 0.5
    %v3757 = vmul.f32 %v3245, 0.5
    %v3758 = vmul.f32 %v3246, 0.5
    %v3759 = vmul.f32 %v3247, 0.5
    %v3760 = vmul.f32 %v3248, 0.5
    %v3761 = vmul.f32 %v3249, 0.5
    %v3762 = vmul.f32 %v3250, 0.5
    %v3763 = vmul.f32 %v3251, 0.5
    %v3764 = vmul.f32 %v3252, 0.5
    %v3765 = vmul.f32 %v3253, 0.5
    %v3766 = vmul.f32 %v3254, 0.5
    %v3767 = vmul.f32 %v3255, 0.5
    %v3768 = vmul.f32 %v3256, 0.5
    %v3769 = vmul.f32 %v3257, 0.5
    %v3770 = vmul.f32 %v3258, 0.5
    %v3771 = vmul.f32 %v3259, 0.5
    %v3772 = vmul.f32 %v3260, 0.5
    %v3773 = vmul.f32 %v3261, 0.5
    %v3774 = vmul.f32 %v3262, 0.5
    %v3775 = vmul.f32 %v3263, 0.5
    %v3776 = vmul.f32 %v3264, 0.5
    %v3777 = vmul.f32 %v3265, 0.5
    %v3778 = vmul.f32 %v3266, 0.5
    %v3779 = vmul.f32 %v3267, 0.5
    %v3780 = vmul.f32 %v3268, 0.5
    %v3781 = vmul.f32 %v3269, 0.5
    %v3782 = vmul.f32 %v3270, 0.5
    %v3783 = vmul.f32 %v3271, 0.5
    %v3784 = vmul.f32 %v3272, 0.5
    %v3785 = vmul.f32 %v3273, 0.5
    %v3786 = vmul.f32 %v3274, 0.5
    %v3787 = vmul.f32 %v3275, 0.5
    %v3788 = vmul.f32 %v3276, 0.5
    %v3789 = vmul.f32 %v3277, 0.5
    %v3790 = vmul.f32 %v3278, 0.5
    %v3791 = vmul.f32 %v3279, 0.5
    %v3792 = vmul.f32 %v3280, 0.5
    %v3793 = vmul.f32 %v3281, 0.5
    %v3794 = vmul.f32 %v3282, 0.5
    %v3795 = vmul.f32 %v3283, 0.5
    %v3796 = vmul.f32 %v3284, 0.5
    %v3797 = vmul.f32 %v3285, 0.5
    %v3798 = vmul.f32 %v3286, 0.5
    %v3799 = vmul.f32 %v3287, 0.5
    %v3800 = vmul.f32 %v3288, 0.5
    %v3801 = vmul.f32 %v3289, 0.5
    %v3802 = vmul.f32 %v3290, 0.5
    %v3803 = vmul.f32 %v3291, 0.5
    %v3804 = vmul.f32 %v3292, 0.5
    %v3805 = vmul.f32 %v3293, 0.5
    %v3806 = vmul.f32 %v3294, 0.5
    %v3807 = vmul.f32 %v3295, 0.5
    %v3808 = vmul.f32 %v3296, 0.5
    %v3809 = vmul.f32 %v3297, 0.5
    %v3810 = vmul.f32 %v3298, 0.5
    %v3811 = vmul.f32 %v3299, 0.5
    %v3812 = vmul.f32 %v3300, 0.5
    %v3813 = vmul.f32 %v3301, 0.5
    %v3814 = vmul.f32 %v3302, 0.5
    %v3815 = vmul.f32 %v3303, 0.5
    %v3816 = vmul.f32 %v3304, 0.5
    %v3817 = vmul.f32 %v3305, 0.5
    %v3818 = vmul.f32 %v3306, 0.5
    %v3819 = vmul.f32 %v3307, 0.5
    %v3820 = vmul.f32 %v3308, 0.5
    %v3821 = vmul.f32 %v3309, 0.5
    %v3822 = vmul.f32 %v3310, 0.5
    %v3823 = vmul.f32 %v3311, 0.5
    %v3824 = vmul.f32 %v3312, 0.5
    %v3825 = vmul.f32 %v3313, 0.5
    %v3826 = vmul.f32 %v3314, 0.5
    %v3827 = vmul.f32 %v3315, 0.5
    %v3828 = vmul.f32 %v3316, 0.5
    %v3829 = vmul.f32 %v3317, 0.5
    %v3830 = vmul.f32 %v3318, 0.5
    %v3831 = vmul.f32 %v3319, 0.5
    %v3832 = vmul.f32 %v3320, 0.5
    %v3833 = vmul.f32 %v3321, 0.5
    %v3834 = vmul.f32 %v3322, 0.5
    %v3835 = vmul.f32 %v3323, 0.5
    %v3836 = vmul.f32 %v3324, 0.5
    %v3837 = vmul.f32 %v3325, 0.5
    %v3838 = vmul.f32 %v3326, 0.5
    %v3839 = vmul.f32 %v3327, 0.5
    %v3840 = vmul.f32 %v3328, 0.5
    %v3841 = vmul.f32 %v3329, 0.5
    %v3842 = vmul.f32 %v3330, 0.5
    %v3843 = vmul.f32 %v3331, 0.5
    %v3844 = vmul.f32 %v3332, 0.5
    %v3845 = vmul.f32 %v3333, 0.5
    %v3846 = vmul.f32 %v3334, 0.5
    %v3847 = vmul.f32 %v3335, 0.5
    %v3848 = vmul.f32 %v3336, 0.5
    %v3849 = vmul.f32 %v3337, 0.5
    %v3850 = vmul.f32 %v3338, 0.5
    %v3851 = vmul.f32 %v3339, 0.5
    %v3852 = vmul.f32 %v3340, 0.5
    %v3853 = vmul.f32 %v3341, 0.5
    %v3854 = vmul.f32 %v3342, 0.5
    %v3855 = vadd.f32 %v3343, 0.5
    %v3856 = vadd.f32 %v3344, 0.5
    %v3857 = vadd.f32 %v3345, 0.5
    %v3858 = vadd.f32 %v3346, 0.5
    %v3859 = vadd.f32 %v3347, 0.5
    %v3860 = vadd.f32 %v3348, 0.5
    %v3861 = vadd.f32 %v3349, 0.5
    %v3862 = vadd.f32 %v3350, 0.5
    %v3863 = vadd.f32 %v3351, 0.5
    %v3864 = vadd.f32 %v3352, 0.5
    %v3865 = vadd.f32 %v3353, 0.5
    %v3866 = vadd.f32 %v3354, 0.5
    %v3867 = vadd.f32 %v3355, 0.5
    %v3868 = vadd.f32 %v3356, 0.5
    %v3869 = vadd.f32 %v3357, 0.5
    %v3870 = vadd.f32 %v3358, 0.5
    %v3871 = vadd.f32 %v3359, 0.5
    %v3872 = vadd.f32 %v3360, 0.5
    %v3873 = vadd.f32 %v3361, 0.5
    %v3874 = vadd.f32 %v3362, 0.5
    %v3875 = vadd.f32 %v3363, 0.5
    %v3876 = vadd.f32 %v3364, 0.5
    %v3877 = vadd.f32 %v3365, 0.5
    %v3878 = vadd.f32 %v3366, 0.5
    %v3879 = vadd.f32 %v3367, 0.5
    %v3880 = vadd.f32 %v3368, 0.5
    %v3881 = vadd.f32 %v3369, 0.5
    %v3882 = vadd.f32 %v3370, 0.5
    %v3883 = vadd.f32 %v3371, 0.5
    %v3884 = vadd.f32 %v3372, 0.5
    %v3885 = vadd.f32 %v3373, 0.5
    %v3886 = vadd.f32 %v3374, 0.5
    %v3887 = vadd.f32 %v3375, 0.5
    %v3888 = vadd.f32 %v3376, 0.5
    %v3889 = vadd.f32 %v3377, 0.5
    %v3890 = vadd.f32 %v3378, 0.5
    %v3891 = vadd.f32 %v3379, 0.5
    %v3892 = vadd.f32 %v3380, 0.5
    %v3893 = vadd.f32 %v3381, 0.5
    %v3894 = vadd.f32 %v3382, 0.5
    %v3895 = vadd.f32 %v3383, 0.5
    %v3896 = vadd.f32 %v3384, 0.5
    %v3897 = vadd.f32 %v3385, 0.5
    %v3898 = vadd.f32 %v3386, 0.5
    %v3899 = vadd.f32 %v3387, 0.5
    %v3900 = vadd.f32 %v3388, 0.5
    %v3901 = vadd.f32 %v3389, 0.5
    %v3902 = vadd.f32 %v3390, 0.5
    %v3903 = vadd.f32 %v3391, 0.5
    %v3904 = vadd.f32 %v3392, 0.5
    %v3905 = vadd.f32 %v3393, 0.5
    %v3906 = vadd.f32 %v3394, 0.5
    %v3907 = vadd.f32 %v3395, 0.5
    %v3908 = vadd.f32 %v3396, 0.5
    %v3909 = vadd.f32 %v3397, 0.5
    %v3910 = vadd.f32 %v3398, 0.5
    %v3911 = vadd.f32 %v3399, 0.5
    %v3912 = vadd.f32 %v3400, 0.5
    %v3913 = vadd.f32 %v3401, 0.5
    %v3914 = vadd.f32 %v3402, 0.5
    %v3915 = vadd.f32 %v3403, 0.5
    %v3916 = vadd.f32 %v3404, 0.5
    %v3917 = vadd.f32 %v3405, 0.5
    %v3918 = vadd.f32 %v3406, 0.5
    %v3919 = vadd.f32 %v3407, 0.5
    %v3920 = vadd.f32 %v3408, 0.5
    %v3921 = vadd.f32 %v3409, 0.5
    %v3922 = vadd.f32 %v3410, 0.5
    %v3923 = vadd.f32 %v3411, 0.5
    %v3924 = vadd.f32 %v3412, 0.5
    %v3925 = vadd.f32 %v3413, 0.5
    %v3926 = vadd.f32 %v3414, 0.5
    %v3927 = vadd.f32 %v3415, 0.5
    %v3928 = vadd.f32 %v3416, 0.5
    %v3929 = vadd.f32 %v3417, 0.5
    %v3930 = vadd.f32 %v3418, 0.5
    %v3931 = vadd.f32 %v3419, 0.5
    %v3932 = vadd.f32 %v3420, 0.5
    %v3933 = vadd.f32 %v3421, 0.5
    %v3934 = vadd.f32 %v3422, 0.5
    %v3935 = vadd.f32 %v3423, 0.5
    %v3936 = vadd.f32 %v3424, 0.5
    %v3937 = vadd.f32 %v3425, 0.5
    %v3938 = vadd.f32 %v3426, 0.5
    %v3939 = vadd.f32 %v3427, 0.5
    %v3940 = vadd.f32 %v3428, 0.5
    %v3941 = vadd.f32 %v3429, 0.5
    %v3942 = vadd.f32 %v3430, 0.5
    %v3943 = vadd.f32 %v3431, 0.5
    %v3944 = vadd.f32 %v3432, 0.5
    %v3945 = vadd.f32 %v3433, 0.5
    %v3946 = vadd.f32 %v3434, 0.5
    %v3947 = vadd.f32 %v3435, 0.5
    %v3948 = vadd.f32 %v3436, 0.5
    %v3949 = vadd.f32 %v3437, 0.5
    %v3950 = vadd.f32 %v3438, 0.5
    %v3951 = vadd.f32 %v3439, 0.5
    %v3952 = vadd.f32 %v3440, 0.5
    %v3953 = vadd.f32 %v3441, 0.5
    %v3954 = vadd.f32 %v3442, 0.5
    %v3955 = vadd.f32 %v3443, 0.5
    %v3956 = vadd.f32 %v3444, 0.5
    %v3957 = vadd.f32 %v3445, 0.5
    %v3958 = vadd.f32 %v3446, 0.5
    %v3959 = vadd.f32 %v3447, 0.5
    %v3960 = vadd.f32 %v3448, 0.5
    %v3961 = vadd.f32 %v3449, 0.5
    %v3962 = vadd.f32 %v3450, 0.5
    %v3963 = vadd.f32 %v3451, 0.5
    %v3964 = vadd.f32 %v3452, 0.5
    %v3965 = vadd.f32 %v3453, 0.5
    %v3966 = vadd.f32 %v3454, 0.5
    %v3967 = vadd.f32 %v3455, 0.5
    %v3968 = vadd.f32 %v3456, 0.5
    %v3969 = vadd.f32 %v3457, 0.5
    %v3970 = vadd.f32 %v3458, 0.5
    %v3971 = vadd.f32 %v3459, 0.5
    %v3972 = vadd.f32 %v3460, 0.5
    %v3973 = vadd.f32 %v3461, 0.5
    %v3974 = vadd.f32 %v3462, 0.5
    %v3975 = vadd.f32 %v3463, 0.5
    %v3976 = vadd.f32 %v3464, 0.5
    %v3977 = vadd.f32 %v3465, 0.5
    %v3978 = vadd.f32 %v3466, 0.5
    %v3979 = vadd.f32 %v3467, 0.5
    %v3980 = vadd.f32 %v3468, 0.5
    %v3981 = vadd.f32 %v3469, 0.5
    %v3982 = vadd.f32 %v3470, 0.5
    %v3983 = vadd.f32 %v3471, 0.5
    %v3984 = vadd.f32 %v3472, 0.5
    %v3985 = vadd.f32 %v3473, 0.5
    %v3986 = vadd.f32 %v3474, 0.5
    %v3987 = vadd.f32 %v3475, 0.5
    %v3988 = vadd.f32 %v3476, 0.5
    %v3989 = vadd.f32 %v3477, 0.5
    %v3990 = vadd.f32 %v3478, 0.5
    %v3991 = vadd.f32 %v3479, 0.5
    %v3992 = vadd.f32 %v3480, 0.5
    %v3993 = vadd.f32 %v3481, 0.5
    %v3994 = vadd.f32 %v3482, 0.5
    %v3995 = vadd.f32 %v3483, 0.5
    %v3996 = vadd.f32 %v3484, 0.5
    %v3997 = vadd.f32 %v3485, 0.5
    %v3998 = vadd.f32 %v3486, 0.5
    %v3999 = vadd.f32 %v3487, 0.5
    %v4000 = vadd.f32 %v3488, 0.5
    %v4001 = vadd.f32 %v3489, 0.5
    %v4002 = vadd.f32 %v3490, 0.5
    %v4003 = vadd.f32 %v3491, 0.5
    %v4004 = vadd.f32 %v3492, 0.5
    %v4005 = vadd.f32 %v3493, 0.5
    %v4006 = vadd.f32 %v3494, 0.5
    %v4007 = vadd.f32 %v3495, 0.5
    %v4008 = vadd.f32 %v3496, 0.5
    %v4009 = vadd.f32 %v3497, 0.5
    %v4010 = vadd.f32 %v3498, 0.5
    %v4011 = vadd.f32 %v3499, 0.5
    %v4012 = vadd.f32 %v3500, 0.5
    %v4013 = vadd.f32 %v3501, 0.5
    %v4014 = vadd.f32 %v3502, 0.5
    %v4015 = vadd.f32 %v3503, 0.5
    %v4016 = vadd.f32 %v3504, 0.5
    %v4017 = vadd.f32 %v3505, 0.5
    %v4018 = vadd.f32 %v3506, 0.5
    %v4019 = vadd.f32 %v3507, 0.5
    %v4020 = vadd.f32 %v3508, 0.5
    %v4021 = vadd.f32 %v3509, 0.5
    %v4022 = vadd.f32 %v3510, 0.5
    %v4023 = vadd.f32 %v3511, 0.5
    %v4024 = vadd.f32 %v3512, 0.5
    %v4025 = vadd.f32 %v3513, 0.5
    %v4026 = vadd.f32 %v3514, 0.5
    %v4027 = vadd.f32 %v3515, 0.5
    %v4028 = vadd.f32 %v3516, 0.5
    %v4029 = vadd.f32 %v3517, 0.5
    %v4030 = vadd.f32 %v3518, 0.5
    %v4031 = vadd.f32 %v3519, 0.5
    %v4032 = vadd.f32 %v3520, 0.5
    %v4033 = vadd.f32 %v3521, 0.5
    %v4034 = vadd.f32 %v3522, 0.5
    %v4035 = vadd.f32 %v3523, 0.5
    %v4036 = vadd.f32 %v3524, 0.5
    %v4037 = vadd.f32 %v3525, 0.5
    %v4038 = vadd.f32 %v3526, 0.5
    %v4039 = vadd.f32 %v3527, 0.5
    %v4040 = vadd.f32 %v3528, 0.5
    %v4041 = vadd.f32 %v3529, 0.5
    %v4042 = vadd.f32 %v3530, 0.5
    %v4043 = vadd.f32 %v3531, 0.5
    %v4044 = vadd.f32 %v3532, 0.5
    %v4045 = vadd.f32 %v3533, 0.5
    %v4046 = vadd.f32 %v3534, 0.5
    %v4047 = vadd.f32 %v3535, 0.5
    %v4048 = vadd.f32 %v3536, 0.5
    %v4049 = vadd.f32 %v3537, 0.5
    %v4050 = vadd.f32 %v3538, 0.5
    %v4051 = vadd.f32 %v3539, 0.5
    %v4052 = vadd.f32 %v3540, 0.5
    %v4053 = vadd.f32 %v3541, 0.5
    %v4054 = vadd.f32 %v3542, 0.5
    %v4055 = vadd.f32 %v3543, 0.5
    %v4056 = vadd.f32 %v3544, 0.5
    %v4057 = vadd.f32 %v3545, 0.5
    %v4058 = vadd.f32 %v3546, 0.5
    %v4059 = vadd.f32 %v3547, 0.5
    %v4060 = vadd.f32 %v3548, 0.5
    %v4061 = vadd.f32 %v3549, 0.5
    %v4062 = vadd.f32 %v3550, 0.5
    %v4063 = vadd.f32 %v3551, 0.5
    %v4064 = vadd.f32 %v3552, 0.5
    %v4065 = vadd.f32 %v3553, 0.5
    %v4066 = vadd.f32 %v3554, 0.5
    %v4067 = vadd.f32 %v3555, 0.5
    %v4068 = vadd.f32 %v3556, 0.5
    %v4069 = vadd.f32 %v3557, 0.5
    %v4070 = vadd.f32 %v3558, 0.5
    %v4071 = vadd.f32 %v3559, 0.5
    %v4072 = vadd.f32 %v3560, 0.5
    %v4073 = vadd.f32 %v3561, 0.5
    %v4074 = vadd.f32 %v3562, 0.5
    %v4075 = vadd.f32 %v3563, 0.5
    %v4076 = vadd.f32 %v3564, 0.5
    %v4077 = vadd.f32 %v3565, 0.5
    %v4078 = vadd.f32 %v3566, 0.5
    %v4079 = vadd.f32 %v3567, 0.5
    %v4080 = vadd.f32 %v3568, 0.5
    %v4081 = vadd.f32 %v3569, 0.5
    %v4082 = vadd.f32 %v3570, 0.5
    %v4083 = vadd.f32 %v3571, 0.5
    %v4084 = vadd.f32 %v3572, 0.5
    %v4085 = vadd.f32 %v3573, 0.5
    %v4086 = vadd.f32 %v3574, 0.5
    %v4087 = vadd.f32 %v3575, 0.5
    %v4088 = vadd.f32 %v3576, 0.5
    %v4089 = vadd.f32 %v3577, 0.5
    %v4090 = vadd.f32 %v3578, 0.5
    %v4091 = vadd.f32 %v3579, 0.5
    %v4092 = vadd.f32 %v3580, 0.5
    %v4093 = vadd.f32 %v3581, 0.5
    %v4094 = vadd.f32 %v3582, 0.5
    %v4095 = vadd.f32 %v3583, 0.5
    %v4096 = vadd.f32 %v3584, 0.5
    %v4097 = vadd.f32 %v3585, 0.5
    %v4098 = vadd.f32 %v3586, 0.5
    %v4099 = vadd.f32 %v3587, 0.5
    %v4100 = vadd.f32 %v3588, 0.5
    %v4101 = vadd.f32 %v3589, 0.5
    %v4102 = vadd.f32 %v3590, 0.5
    %v4103 = vadd.f32 %v3591, 0.5
    %v4104 = vadd.f32 %v3592, 0.5
    %v4105 = vadd.f32 %v3593, 0.5
    %v4106 = vadd.f32 %v3594, 0.5
    %v4107 = vadd.f32 %v3595, 0.5
    %v4108 = vadd.f32 %v3596, 0.5
    %v4109 = vadd.f32 %v3597, 0.5
    %v4110 = vadd.f32 %v3598, 0.5
    %v4111 = vadd.f32 %v3599, 0.5
    %v4112 = vadd.f32 %v3600, 0.5
    %v4113 = vadd.f32 %v3601, 0.5
    %v4114 = vadd.f32 %v3602, 0.5
    %v4115 = vadd.f32 %v3603, 0.5
    %v4116 = vadd.f32 %v3604, 0.5
    %v4117 = vadd.f32 %v3605, 0.5
    %v4118 = vadd.f32 %v3606, 0.5
    %v4119 = vadd.f32 %v3607, 0.5
    %v4120 = vadd.f32 %v3608, 0.5
    %v4121 = vadd.f32 %v3609, 0.5
    %v4122 = vadd.f32 %v3610, 0.5
    %v4123 = vadd.f32 %v3611, 0.5
    %v4124 = vadd.f32 %v3612, 0.5
    %v4125 = vadd.f32 %v3613, 0.5
    %v4126 = vadd.f32 %v3614, 0.5
    %v4127 = vadd.f32 %v3615, 0.5
    %v4128 = vadd.f32 %v3616, 0.5
    %v4129 = vadd.f32 %v3617, 0.5
    %v4130 = vadd.f32 %v3618, 0.5
    %v4131 = vadd.f32 %v3619, 0.5
    %v4132 = vadd.f32 %v3620, 0.5
    %v4133 = vadd.f32 %v3621, 0.5
    %v4134 = vadd.f32 %v3622, 0.5
    %v4135 = vadd.f32 %v3623, 0.5
    %v4136 = vadd.f32 %v3624, 0.5
    %v4137 = vadd.f32 %v3625, 0.5
    %v4138 = vadd.f32 %v3626, 0.5
    %v4139 = vadd.f32 %v3627, 0.5
    %v4140 = vadd.f32 %v3628, 0.5
    %v4141 = vadd.f32 %v3629, 0.5
    %v4142 = vadd.f32 %v3630, 0.5
    %v4143 = vadd.f32 %v3631, 0.5
    %v4144 = vadd.f32 %v3632, 0.5
    %v4145 = vadd.f32 %v3633, 0.5
    %v4146 = vadd.f32 %v3634, 0.5
    %v4147 = vadd.f32 %v3635, 0.5
    %v4148 = vadd.f32 %v3636, 0.5
    %v4149 = vadd.f32 %v3637, 0.5
    %v4150 = vadd.f32 %v3638, 0.5
    %v4151 = vadd.f32 %v3639, 0.5
    %v4152 = vadd.f32 %v3640, 0.5
    %v4153 = vadd.f32 %v3641, 0.5
    %v4154 = vadd.f32 %v3642, 0.5
    %v4155 = vadd.f32 %v3643, 0.5
    %v4156 = vadd.f32 %v3644, 0.5
    %v4157 = vadd.f32 %v3645, 0.5
    %v4158 = vadd.f32 %v3646, 0.5
    %v4159 = vadd.f32 %v3647, 0.5
    %v4160 = vadd.f32 %v3648, 0.5
    %v4161 = vadd.f32 %v3649, 0.5
    %v4162 = vadd.f32 %v3650, 0.5
    %v4163 = vadd.f32 %v3651, 0.5
    %v4164 = vadd.f32 %v3652, 0.5
    %v4165 = vadd.f32 %v3653, 0.5
    %v4166 = vadd.f32 %v3654, 0.5
    %v4167 = vadd.f32 %v3655, 0.5
    %v4168 = vadd.f32 %v3656, 0.5
    %v4169 = vadd.f32 %v3657, 0.5
    %v4170 = vadd.f32 %v3658, 0.5
    %v4171 = vadd.f32 %v3659, 0.5
    %v4172 = vadd.f32 %v3660, 0.5
    %v4173 = vadd.f32 %v3661, 0.5
    %v4174 = vadd.f32 %v3662, 0.5
    %v4175 = vadd.f32 %v3663, 0.5
    %v4176 = vadd.f32 %v3664, 0.5
    %v4177 = vadd.f32 %v3665, 0.5
    %v4178 = vadd.f32 %v3666, 0.5
    %v4179 = vadd.f32 %v3667, 0.5
    %v4180 = vadd.f32 %v3668, 0.5
    %v4181 = vadd.f32 %v3669, 0.5
    %v4182 = vadd.f32 %v3670, 0.5
    %v4183 = vadd.f32 %v3671, 0.5
    %v4184 = vadd.f32 %v3672, 0.5
    %v4185 = vadd.f32 %v3673, 0.5
    %v4186 = vadd.f32 %v3674, 0.5
    %v4187 = vadd.f32 %v3675, 0.5
    %v4188 = vadd.f32 %v3676, 0.5
    %v4189 = vadd.f32 %v3677, 0.5
    %v4190 = vadd.f32 %v3678, 0.5
    %v4191 = vadd.f32 %v3679, 0.5
    %v4192 = vadd.f32 %v3680, 0.5
    %v4193 = vadd.f32 %v3681, 0.5
    %v4194 = vadd.f32 %v3682, 0.5
    %v4195 = vadd.f32 %v3683, 0.5
    %v4196 = vadd.f32 %v3684, 0.5
    %v4197 = vadd.f32 %v3685, 0.5
    %v4198 = vadd.f32 %v3686, 0.5
    %v4199 = vadd.f32 %v3687, 0.5
    %v4200 = vadd.f32 %v3688, 0.5
    %v4201 = vadd.f32 %v3689, 0.5
    %v4202 = vadd.f32 %v3690, 0.5
    %v4203 = vadd.f32 %v3691, 0.5
    %v4204 = vadd.f32 %v3692, 0.5
    %v4205 = vadd.f32 %v3693, 0.5
    %v4206 = vadd.f32 %v3694, 0.5
    %v4207 = vadd.f32 %v3695, 0.5
    %v4208 = vadd.f32 %v3696, 0.5
    %v4209 = vadd.f32 %v3697, 0.5
    %v4210 = vadd.f32 %v3698, 0.5
    %v4211 = vadd.f32 %v3699, 0.5
    %v4212 = vadd.f32 %v3700, 0.5
    %v4213 = vadd.f32 %v3701, 0.5
    %v4214 = vadd.f32 %v3702, 0.5
    %v4215 = vadd.f32 %v3703, 0.5
    %v4216 = vadd.f32 %v3704, 0.5
    %v4217 = vadd.f32 %v3705, 0.5
    %v4218 = vadd.f32 %v3706, 0.5
    %v4219 = vadd.f32 %v3707, 0.5
    %v4220 = vadd.f32 %v3708, 0.5
    %v4221 = vadd.f32 %v3709, 0.5
    %v4222 = vadd.f32 %v3710, 0.5
    %v4223 = vadd.f32 %v3711, 0.5
    %v4224 = vadd.f32 %v3712, 0.5
    %v4225 = vadd.f32 %v3713, 0.5
    %v4226 = vadd.f32 %v3714, 0.5
    %v4227 = vadd.f32 %v3715, 0.5
    %v4228 = vadd.f32 %v3716, 0.5
    %v4229 = vadd.f32 %v3717, 0.5
    %v4230 = vadd.f32 %v3718, 0.5
    %v4231 = vadd.f32 %v3719, 0.5
    %v4232 = vadd.f32 %v3720, 0.5
    %v4233 = vadd.f32 %v3721, 0.5
    %v4234 = vadd.f32 %v3722, 0.5
    %v4235 = vadd.f32 %v3723, 0.5
    %v4236 = vadd.f32 %v3724, 0.5
    %v4237 = vadd.f32 %v3725, 0.5
    %v4238 = vadd.f32 %v3726, 0.5
    %v4239 = vadd.f32 %v3727, 0.5
    %v4240 = vadd.f32 %v3728, 0.5
    %v4241 = vadd.f32 %v3729, 0.5
    %v4242 = vadd.f32 %v3730, 0.5
    %v4243 = vadd.f32 %v3731, 0.5
    %v4244 = vadd.f32 %v3732, 0.5
    %v4245 = vadd.f32 %v3733, 0.5
    %v4246 = vadd.f32 %v3734, 0.5
    %v4247 = vadd.f32 %v3735, 0.5
    %v4248 = vadd.f32 %v3736, 0.5
    %v4249 = vadd.f32 %v3737, 0.5
    %v4250 = vadd.f32 %v3738, 0.5
    %v4251 = vadd.f32 %v3739, 0.5
    %v4252 = vadd.f32 %v3740, 0.5
    %v4253 = vadd.f32 %v3741, 0.5
    %v4254 = vadd.f32 %v3742, 0.5
    %v4255 = vadd.f32 %v3743, 0.5
    %v4256 = vadd.f32 %v3744, 0.5
    %v4257 = vadd.f32 %v3745, 0.5
    %v4258 = vadd.f32 %v3746, 0.5
    %v4259 = vadd.f32 %v3747, 0.5
    %v4260 = vadd.f32 %v3748, 0.5
    %v4261 = vadd.f32 %v3749, 0.5
    %v4262 = vadd.f32 %v3750, 0.5
    %v4263 = vadd.f32 %v3751, 0.5
    %v4264 = vadd.f32 %v3752, 0.5
    %v4265 = vadd.f32 %v3753, 0.5
    %v4266 = vadd.f32 %v3754, 0.5
    %v4267 = vadd.f32 %v3755, 0.5
    %v4268 = vadd.f32 %v3756, 0.5
    %v4269 = vadd.f32 %v3757, 0.5
    %v4270 = vadd.f32 %v3758, 0.5
    %v4271 = vadd.f32 %v3759, 0.5
    %v4272 = vadd.f32 %v3760, 0.5
    %v4273 = vadd.f32 %v3761, 0.5
    %v4274 = vadd.f32 %v3762, 0.5
    %v4275 = vadd.f32 %v3763, 0.5
    %v4276 = vadd.f32 %v3764, 0.5
    %v4277 = vadd.f32 %v3765, 0.5
    %v4278 = vadd.f32 %v3766, 0.5
    %v4279 = vadd.f32 %v3767, 0.5
    %v4280 = vadd.f32 %v3768, 0.5
    %v4281 = vadd.f32 %v3769, 0.5
    %v4282 = vadd.f32 %v3770, 0.5
    %v4283 = vadd.f32 %v3771, 0.5
    %v4284 = vadd.f32 %v3772, 0.5
    %v4285 = vadd.f32 %v3773, 0.5
    %v4286 = vadd.f32 %v3774, 0.5
    %v4287 = vadd.f32 %v3775, 0.5
    %v4288 = vadd.f32 %v3776, 0.5
    %v4289 = vadd.f32 %v3777, 0.5
    %v4290 = vadd.f32 %v3778, 0.5
    %v4291 = vadd.f32 %v3779, 0.5
    %v4292 = vadd.f32 %v3780, 0.5
    %v4293 = vadd.f32 %v3781, 0.5
    %v4294 = vadd.f32 %v3782, 0.5
    %v4295 = vadd.f32 %v3783, 0.5
    %v4296 = vadd.f32 %v3784, 0.5
    %v4297 = vadd.f32 %v3785, 0.5
    %v4298 = vadd.f32 %v3786, 0.5
    %v4299 = vadd.f32 %v3787, 0.5
    %v4300 = vadd.f32 %v3788, 0.5
    %v4301 = vadd.f32 %v3789, 0.5
    %v4302 = vadd.f32 %v3790, 0.5
    %v4303 = vadd.f32 %v3791, 0.5
    %v4304 = vadd.f32 %v3792, 0.5
    %v4305 = vadd.f32 %v3793, 0.5
    %v4306 = vadd.f32 %v3794, 0.5
    %v4307 = vadd.f32 %v3795, 0.5
    %v4308 = vadd.f32 %v3796, 0.5
    %v4309 = vadd.f32 %v3797, 0.5
    %v4310 = vadd.f32 %v3798, 0.5
    %v4311 = vadd.f32 %v3799, 0.5
    %v4312 = vadd.f32 %v3800, 0.5
    %v4313 = vadd.f32 %v3801, 0.5
    %v4314 = vadd.f32 %v3802, 0.5
    %v4315 = vadd.f32 %v3803, 0.5
    %v4316 = vadd.f32 %v3804, 0.5
    %v4317 = vadd.f32 %v3805, 0.5
    %v4318 = vadd.f32 %v3806, 0.5
    %v4319 = vadd.f32 %v3807, 0.5
    %v4320 = vadd.f32 %v3808, 0.5
    %v4321 = vadd.f32 %v3809, 0.5
    %v4322 = vadd.f32 %v3810, 0.5
    %v4323 = vadd.f32 %v3811, 0.5
    %v4324 = vadd.f32 %v3812, 0.5
    %v4325 = vadd.f32 %v3813, 0.5
    %v4326 = vadd.f32 %v3814, 0.5
    %v4327 = vadd.f32 %v3815, 0.5
    %v4328 = vadd.f32 %v3816, 0.5
    %v4329 = vadd.f32 %v3817, 0.5
    %v4330 = vadd.f32 %v3818, 0.5
    %v4331 = vadd.f32 %v3819, 0.5
    %v4332 = vadd.f32 %v3820, 0.5
    %v4333 = vadd.f32 %v3821, 0.5
    %v4334 = vadd.f32 %v3822, 0.5
    %v4335 = vadd.f32 %v3823, 0.5
    %v4336 = vadd.f32 %v3824, 0.5
    %v4337 = vadd.f32 %v3825, 0.5
    %v4338 = vadd.f32 %v3826, 0.5
    %v4339 = vadd.f32 %v3827, 0.5
    %v4340 = vadd.f32 %v3828, 0.5
    %v4341 = vadd.f32 %v3829, 0.5
    %v4342 = vadd.f32 %v3830, 0.5
    %v4343 = vadd.f32 %v3831, 0.5
    %v4344 = vadd.f32 %v3832, 0.5
    %v4345 = vadd.f32 %v3833, 0.5
    %v4346 = vadd.f32 %v3834, 0.5
    %v4347 = vadd.f32 %v3835, 0.5
    %v4348 = vadd.f32 %v3836, 0.5
    %v4349 = vadd.f32 %v3837, 0.5
    %v4350 = vadd.f32 %v3838, 0.5
    %v4351 = vadd.f32 %v3839, 0.5
    %v4352 = vadd.f32 %v3840, 0.5
    %v4353 = vadd.f32 %v3841, 0.5
    %v4354 = vadd.f32 %v3842, 0.5
    %v4355 = vadd.f32 %v3843, 0.5
    %v4356 = vadd.f32 %v3844, 0.5
    %v4357 = vadd.f32 %v3845, 0.5
    %v4358 = vadd.f32 %v3846, 0.5
    %v4359 = vadd.f32 %v3847, 0.5
    %v4360 = vadd.f32 %v3848, 0.5
    %v4361 = vadd.f32 %v3849, 0.5
    %v4362 = vadd.f32 %v3850, 0.5
    %v4363 = vadd.f32 %v3851, 0.5
    %v4364 = vadd.f32 %v3852, 0.5
    %v4365 = vadd.f32 %v3853, 0.5
    %v4366 = vadd.f32 %v3854, 0.5
    %v4367 = vld [vmem:[%s2] sm:$0xff]
    %v4368 = vld [vmem:[%s2 + $0x8] sm:$0xff]
    %v4369 = vld [vmem:[%s2 + $0x10] sm:$0xff]
    %v4370 = vld [vmem:[%s2 + $0x18] sm:$0xff]
    %v4371 = vld [vmem:[%s2 + $0x20] sm:$0xff]
    %v4372 = vld [vmem:[%s2 + $0x28] sm:$0xff]
    %v4373 = vld [vmem:[%s2 + $0x30] sm:$0xff]
    %v4374 = vld [vmem:[%s2 + $0x38] sm:$0xff]
    %v4375 = vld [vmem:[%s2 + $0x40] sm:$0xff]
    %v4376 = vld [vmem:[%s2 + $0x48] sm:$0xff]
    %v4377 = vld [vmem:[%s2 + $0x50] sm:$0xff]
    %v4378 = vld [vmem:[%s2 + $0x58] sm:$0xff]
    %v4379 = vld [vmem:[%s2 + $0x60] sm:$0xff]
    %v4380 = vld [vmem:[%s2 + $0x68] sm:$0xff]
    %v4381 = vld [vmem:[%s2 + $0x70] sm:$0xff]
    %v4382 = vld [vmem:[%s2 + $0x78] sm:$0xff]
    %v4383 = vld [vmem:[%s2 + $0x80] sm:$0xff]
    %v4384 = vld [vmem:[%s2 + $0x88] sm:$0xff]
    %v4385 = vld [vmem:[%s2 + $0x90] sm:$0xff]
    %v4386 = vld [vmem:[%s2 + $0x98] sm:$0xff]
    %v4387 = vld [vmem:[%s2 + $0xa0] sm:$0xff]
    %v4388 = vld [vmem:[%s2 + $0xa8] sm:$0xff]
    %v4389 = vld [vmem:[%s2 + $0xb0] sm:$0xff]
    %v4390 = vld [vmem:[%s2 + $0xb8] sm:$0xff]
    %v4391 = vld [vmem:[%s2 + $0xc0] sm:$0xff]
    %v4392 = vld [vmem:[%s2 + $0xc8] sm:$0xff]
    %v4393 = vld [vmem:[%s2 + $0xd0] sm:$0xff]
    %v4394 = vld [vmem:[%s2 + $0xd8] sm:$0xff]
    %v4395 = vld [vmem:[%s2 + $0xe0] sm:$0xff]
    %v4396 = vld [vmem:[%s2 + $0xe8] sm:$0xff]
    %v4397 = vld [vmem:[%s2 + $0xf0] sm:$0xff]
    %v4398 = vld [vmem:[%s2 + $0xf8] sm:$0xff]
    %v4399 = vld [vmem:[%s2 + $0x100] sm:$0xff]
    %v4400 = vld [vmem:[%s2 + $0x108] sm:$0xff]
    %v4401 = vld [vmem:[%s2 + $0x110] sm:$0xff]
    %v4402 = vld [vmem:[%s2 + $0x118] sm:$0xff]
    %v4403 = vld [vmem:[%s2 + $0x120] sm:$0xff]
    %v4404 = vld [vmem:[%s2 + $0x128] sm:$0xff]
    %v4405 = vld [vmem:[%s2 + $0x130] sm:$0xff]
    %v4406 = vld [vmem:[%s2 + $0x138] sm:$0xff]
    %v4407 = vld [vmem:[%s2 + $0x140] sm:$0xff]
    %v4408 = vld [vmem:[%s2 + $0x148] sm:$0xff]
    %v4409 = vld [vmem:[%s2 + $0x150] sm:$0xff]
    %v4410 = vld [vmem:[%s2 + $0x158] sm:$0xff]
    %v4411 = vld [vmem:[%s2 + $0x160] sm:$0xff]
    %v4412 = vld [vmem:[%s2 + $0x168] sm:$0xff]
    %v4413 = vld [vmem:[%s2 + $0x170] sm:$0xff]
    %v4414 = vld [vmem:[%s2 + $0x178] sm:$0xff]
    %v4415 = vld [vmem:[%s2 + $0x180] sm:$0xff]
    %v4416 = vld [vmem:[%s2 + $0x188] sm:$0xff]
    %v4417 = vld [vmem:[%s2 + $0x190] sm:$0xff]
    %v4418 = vld [vmem:[%s2 + $0x198] sm:$0xff]
    %v4419 = vld [vmem:[%s2 + $0x1a0] sm:$0xff]
    %v4420 = vld [vmem:[%s2 + $0x1a8] sm:$0xff]
    %v4421 = vld [vmem:[%s2 + $0x1b0] sm:$0xff]
    %v4422 = vld [vmem:[%s2 + $0x1b8] sm:$0xff]
    %v4423 = vld [vmem:[%s2 + $0x1c0] sm:$0xff]
    %v4424 = vld [vmem:[%s2 + $0x1c8] sm:$0xff]
    %v4425 = vld [vmem:[%s2 + $0x1d0] sm:$0xff]
    %v4426 = vld [vmem:[%s2 + $0x1d8] sm:$0xff]
    %v4427 = vld [vmem:[%s2 + $0x1e0] sm:$0xff]
    %v4428 = vld [vmem:[%s2 + $0x1e8] sm:$0xff]
    %v4429 = vld [vmem:[%s2 + $0x1f0] sm:$0xff]
    %v4430 = vld [vmem:[%s2 + $0x1f8] sm:$0xff]
    %v4431 = vld [vmem:[%s2 + $0x200] sm:$0xff]
    %v4432 = vld [vmem:[%s2 + $0x208] sm:$0xff]
    %v4433 = vld [vmem:[%s2 + $0x210] sm:$0xff]
    %v4434 = vld [vmem:[%s2 + $0x218] sm:$0xff]
    %v4435 = vld [vmem:[%s2 + $0x220] sm:$0xff]
    %v4436 = vld [vmem:[%s2 + $0x228] sm:$0xff]
    %v4437 = vld [vmem:[%s2 + $0x230] sm:$0xff]
    %v4438 = vld [vmem:[%s2 + $0x238] sm:$0xff]
    %v4439 = vld [vmem:[%s2 + $0x240] sm:$0xff]
    %v4440 = vld [vmem:[%s2 + $0x248] sm:$0xff]
    %v4441 = vld [vmem:[%s2 + $0x250] sm:$0xff]
    %v4442 = vld [vmem:[%s2 + $0x258] sm:$0xff]
    %v4443 = vld [vmem:[%s2 + $0x260] sm:$0xff]
    %v4444 = vld [vmem:[%s2 + $0x268] sm:$0xff]
    %v4445 = vld [vmem:[%s2 + $0x270] sm:$0xff]
    %v4446 = vld [vmem:[%s2 + $0x278] sm:$0xff]
    %v4447 = vld [vmem:[%s2 + $0x280] sm:$0xff]
    %v4448 = vld [vmem:[%s2 + $0x288] sm:$0xff]
    %v4449 = vld [vmem:[%s2 + $0x290] sm:$0xff]
    %v4450 = vld [vmem:[%s2 + $0x298] sm:$0xff]
    %v4451 = vld [vmem:[%s2 + $0x2a0] sm:$0xff]
    %v4452 = vld [vmem:[%s2 + $0x2a8] sm:$0xff]
    %v4453 = vld [vmem:[%s2 + $0x2b0] sm:$0xff]
    %v4454 = vld [vmem:[%s2 + $0x2b8] sm:$0xff]
    %v4455 = vld [vmem:[%s2 + $0x2c0] sm:$0xff]
    %v4456 = vld [vmem:[%s2 + $0x2c8] sm:$0xff]
    %v4457 = vld [vmem:[%s2 + $0x2d0] sm:$0xff]
    %v4458 = vld [vmem:[%s2 + $0x2d8] sm:$0xff]
    %v4459 = vld [vmem:[%s2 + $0x2e0] sm:$0xff]
    %v4460 = vld [vmem:[%s2 + $0x2e8] sm:$0xff]
    %v4461 = vld [vmem:[%s2 + $0x2f0] sm:$0xff]
    %v4462 = vld [vmem:[%s2 + $0x2f8] sm:$0xff]
    %v4463 = vld [vmem:[%s2 + $0x300] sm:$0xff]
    %v4464 = vld [vmem:[%s2 + $0x308] sm:$0xff]
    %v4465 = vld [vmem:[%s2 + $0x310] sm:$0xff]
    %v4466 = vld [vmem:[%s2 + $0x318] sm:$0xff]
    %v4467 = vld [vmem:[%s2 + $0x320] sm:$0xff]
    %v4468 = vld [vmem:[%s2 + $0x328] sm:$0xff]
    %v4469 = vld [vmem:[%s2 + $0x330] sm:$0xff]
    %v4470 = vld [vmem:[%s2 + $0x338] sm:$0xff]
    %v4471 = vld [vmem:[%s2 + $0x340] sm:$0xff]
    %v4472 = vld [vmem:[%s2 + $0x348] sm:$0xff]
    %v4473 = vld [vmem:[%s2 + $0x350] sm:$0xff]
    %v4474 = vld [vmem:[%s2 + $0x358] sm:$0xff]
    %v4475 = vld [vmem:[%s2 + $0x360] sm:$0xff]
    %v4476 = vld [vmem:[%s2 + $0x368] sm:$0xff]
    %v4477 = vld [vmem:[%s2 + $0x370] sm:$0xff]
    %v4478 = vld [vmem:[%s2 + $0x378] sm:$0xff]
    %v4479 = vld [vmem:[%s2 + $0x380] sm:$0xff]
    %v4480 = vld [vmem:[%s2 + $0x388] sm:$0xff]
    %v4481 = vld [vmem:[%s2 + $0x390] sm:$0xff]
    %v4482 = vld [vmem:[%s2 + $0x398] sm:$0xff]
    %v4483 = vld [vmem:[%s2 + $0x3a0] sm:$0xff]
    %v4484 = vld [vmem:[%s2 + $0x3a8] sm:$0xff]
    %v4485 = vld [vmem:[%s2 + $0x3b0] sm:$0xff]
    %v4486 = vld [vmem:[%s2 + $0x3b8] sm:$0xff]
    %v4487 = vld [vmem:[%s2 + $0x3c0] sm:$0xff]
    %v4488 = vld [vmem:[%s2 + $0x3c8] sm:$0xff]
    %v4489 = vld [vmem:[%s2 + $0x3d0] sm:$0xff]
    %v4490 = vld [vmem:[%s2 + $0x3d8] sm:$0xff]
    %v4491 = vld [vmem:[%s2 + $0x3e0] sm:$0xff]
    %v4492 = vld [vmem:[%s2 + $0x3e8] sm:$0xff]
    %v4493 = vld [vmem:[%s2 + $0x3f0] sm:$0xff]
    %v4494 = vld [vmem:[%s2 + $0x3f8] sm:$0xff]
    %v4495 = vld [vmem:[%s2 + $0x400] sm:$0xff]
    %v4496 = vld [vmem:[%s2 + $0x408] sm:$0xff]
    %v4497 = vld [vmem:[%s2 + $0x410] sm:$0xff]
    %v4498 = vld [vmem:[%s2 + $0x418] sm:$0xff]
    %v4499 = vld [vmem:[%s2 + $0x420] sm:$0xff]
    %v4500 = vld [vmem:[%s2 + $0x428] sm:$0xff]
    %v4501 = vld [vmem:[%s2 + $0x430] sm:$0xff]
    %v4502 = vld [vmem:[%s2 + $0x438] sm:$0xff]
    %v4503 = vld [vmem:[%s2 + $0x440] sm:$0xff]
    %v4504 = vld [vmem:[%s2 + $0x448] sm:$0xff]
    %v4505 = vld [vmem:[%s2 + $0x450] sm:$0xff]
    %v4506 = vld [vmem:[%s2 + $0x458] sm:$0xff]
    %v4507 = vld [vmem:[%s2 + $0x460] sm:$0xff]
    %v4508 = vld [vmem:[%s2 + $0x468] sm:$0xff]
    %v4509 = vld [vmem:[%s2 + $0x470] sm:$0xff]
    %v4510 = vld [vmem:[%s2 + $0x478] sm:$0xff]
    %v4511 = vld [vmem:[%s2 + $0x480] sm:$0xff]
    %v4512 = vld [vmem:[%s2 + $0x488] sm:$0xff]
    %v4513 = vld [vmem:[%s2 + $0x490] sm:$0xff]
    %v4514 = vld [vmem:[%s2 + $0x498] sm:$0xff]
    %v4515 = vld [vmem:[%s2 + $0x4a0] sm:$0xff]
    %v4516 = vld [vmem:[%s2 + $0x4a8] sm:$0xff]
    %v4517 = vld [vmem:[%s2 + $0x4b0] sm:$0xff]
    %v4518 = vld [vmem:[%s2 + $0x4b8] sm:$0xff]
    %v4519 = vld [vmem:[%s2 + $0x4c0] sm:$0xff]
    %v4520 = vld [vmem:[%s2 + $0x4c8] sm:$0xff]
    %v4521 = vld [vmem:[%s2 + $0x4d0] sm:$0xff]
    %v4522 = vld [vmem:[%s2 + $0x4d8] sm:$0xff]
    %v4523 = vld [vmem:[%s2 + $0x4e0] sm:$0xff]
    %v4524 = vld [vmem:[%s2 + $0x4e8] sm:$0xff]
    %v4525 = vld [vmem:[%s2 + $0x4f0] sm:$0xff]
    %v4526 = vld [vmem:[%s2 + $0x4f8] sm:$0xff]
    %v4527 = vld [vmem:[%s2 + $0x500] sm:$0xff]
    %v4528 = vld [vmem:[%s2 + $0x508] sm:$0xff]
    %v4529 = vld [vmem:[%s2 + $0x510] sm:$0xff]
    %v4530 = vld [vmem:[%s2 + $0x518] sm:$0xff]
    %v4531 = vld [vmem:[%s2 + $0x520] sm:$0xff]
    %v4532 = vld [vmem:[%s2 + $0x528] sm:$0xff]
    %v4533 = vld [vmem:[%s2 + $0x530] sm:$0xff]
    %v4534 = vld [vmem:[%s2 + $0x538] sm:$0xff]
    %v4535 = vld [vmem:[%s2 + $0x540] sm:$0xff]
    %v4536 = vld [vmem:[%s2 + $0x548] sm:$0xff]
    %v4537 = vld [vmem:[%s2 + $0x550] sm:$0xff]
    %v4538 = vld [vmem:[%s2 + $0x558] sm:$0xff]
    %v4539 = vld [vmem:[%s2 + $0x560] sm:$0xff]
    %v4540 = vld [vmem:[%s2 + $0x568] sm:$0xff]
    %v4541 = vld [vmem:[%s2 + $0x570] sm:$0xff]
    %v4542 = vld [vmem:[%s2 + $0x578] sm:$0xff]
    %v4543 = vld [vmem:[%s2 + $0x580] sm:$0xff]
    %v4544 = vld [vmem:[%s2 + $0x588] sm:$0xff]
    %v4545 = vld [vmem:[%s2 + $0x590] sm:$0xff]
    %v4546 = vld [vmem:[%s2 + $0x598] sm:$0xff]
    %v4547 = vld [vmem:[%s2 + $0x5a0] sm:$0xff]
    %v4548 = vld [vmem:[%s2 + $0x5a8] sm:$0xff]
    %v4549 = vld [vmem:[%s2 + $0x5b0] sm:$0xff]
    %v4550 = vld [vmem:[%s2 + $0x5b8] sm:$0xff]
    %v4551 = vld [vmem:[%s2 + $0x5c0] sm:$0xff]
    %v4552 = vld [vmem:[%s2 + $0x5c8] sm:$0xff]
    %v4553 = vld [vmem:[%s2 + $0x5d0] sm:$0xff]
    %v4554 = vld [vmem:[%s2 + $0x5d8] sm:$0xff]
    %v4555 = vld [vmem:[%s2 + $0x5e0] sm:$0xff]
    %v4556 = vld [vmem:[%s2 + $0x5e8] sm:$0xff]
    %v4557 = vld [vmem:[%s2 + $0x5f0] sm:$0xff]
    %v4558 = vld [vmem:[%s2 + $0x5f8] sm:$0xff]
    %v4559 = vld [vmem:[%s2 + $0x600] sm:$0xff]
    %v4560 = vld [vmem:[%s2 + $0x608] sm:$0xff]
    %v4561 = vld [vmem:[%s2 + $0x610] sm:$0xff]
    %v4562 = vld [vmem:[%s2 + $0x618] sm:$0xff]
    %v4563 = vld [vmem:[%s2 + $0x620] sm:$0xff]
    %v4564 = vld [vmem:[%s2 + $0x628] sm:$0xff]
    %v4565 = vld [vmem:[%s2 + $0x630] sm:$0xff]
    %v4566 = vld [vmem:[%s2 + $0x638] sm:$0xff]
    %v4567 = vld [vmem:[%s2 + $0x640] sm:$0xff]
    %v4568 = vld [vmem:[%s2 + $0x648] sm:$0xff]
    %v4569 = vld [vmem:[%s2 + $0x650] sm:$0xff]
    %v4570 = vld [vmem:[%s2 + $0x658] sm:$0xff]
    %v4571 = vld [vmem:[%s2 + $0x660] sm:$0xff]
    %v4572 = vld [vmem:[%s2 + $0x668] sm:$0xff]
    %v4573 = vld [vmem:[%s2 + $0x670] sm:$0xff]
    %v4574 = vld [vmem:[%s2 + $0x678] sm:$0xff]
    %v4575 = vld [vmem:[%s2 + $0x680] sm:$0xff]
    %v4576 = vld [vmem:[%s2 + $0x688] sm:$0xff]
    %v4577 = vld [vmem:[%s2 + $0x690] sm:$0xff]
    %v4578 = vld [vmem:[%s2 + $0x698] sm:$0xff]
    %v4579 = vld [vmem:[%s2 + $0x6a0] sm:$0xff]
    %v4580 = vld [vmem:[%s2 + $0x6a8] sm:$0xff]
    %v4581 = vld [vmem:[%s2 + $0x6b0] sm:$0xff]
    %v4582 = vld [vmem:[%s2 + $0x6b8] sm:$0xff]
    %v4583 = vld [vmem:[%s2 + $0x6c0] sm:$0xff]
    %v4584 = vld [vmem:[%s2 + $0x6c8] sm:$0xff]
    %v4585 = vld [vmem:[%s2 + $0x6d0] sm:$0xff]
    %v4586 = vld [vmem:[%s2 + $0x6d8] sm:$0xff]
    %v4587 = vld [vmem:[%s2 + $0x6e0] sm:$0xff]
    %v4588 = vld [vmem:[%s2 + $0x6e8] sm:$0xff]
    %v4589 = vld [vmem:[%s2 + $0x6f0] sm:$0xff]
    %v4590 = vld [vmem:[%s2 + $0x6f8] sm:$0xff]
    %v4591 = vld [vmem:[%s2 + $0x700] sm:$0xff]
    %v4592 = vld [vmem:[%s2 + $0x708] sm:$0xff]
    %v4593 = vld [vmem:[%s2 + $0x710] sm:$0xff]
    %v4594 = vld [vmem:[%s2 + $0x718] sm:$0xff]
    %v4595 = vld [vmem:[%s2 + $0x720] sm:$0xff]
    %v4596 = vld [vmem:[%s2 + $0x728] sm:$0xff]
    %v4597 = vld [vmem:[%s2 + $0x730] sm:$0xff]
    %v4598 = vld [vmem:[%s2 + $0x738] sm:$0xff]
    %v4599 = vld [vmem:[%s2 + $0x740] sm:$0xff]
    %v4600 = vld [vmem:[%s2 + $0x748] sm:$0xff]
    %v4601 = vld [vmem:[%s2 + $0x750] sm:$0xff]
    %v4602 = vld [vmem:[%s2 + $0x758] sm:$0xff]
    %v4603 = vld [vmem:[%s2 + $0x760] sm:$0xff]
    %v4604 = vld [vmem:[%s2 + $0x768] sm:$0xff]
    %v4605 = vld [vmem:[%s2 + $0x770] sm:$0xff]
    %v4606 = vld [vmem:[%s2 + $0x778] sm:$0xff]
    %v4607 = vld [vmem:[%s2 + $0x780] sm:$0xff]
    %v4608 = vld [vmem:[%s2 + $0x788] sm:$0xff]
    %v4609 = vld [vmem:[%s2 + $0x790] sm:$0xff]
    %v4610 = vld [vmem:[%s2 + $0x798] sm:$0xff]
    %v4611 = vld [vmem:[%s2 + $0x7a0] sm:$0xff]
    %v4612 = vld [vmem:[%s2 + $0x7a8] sm:$0xff]
    %v4613 = vld [vmem:[%s2 + $0x7b0] sm:$0xff]
    %v4614 = vld [vmem:[%s2 + $0x7b8] sm:$0xff]
    %v4615 = vld [vmem:[%s2 + $0x7c0] sm:$0xff]
    %v4616 = vld [vmem:[%s2 + $0x7c8] sm:$0xff]
    %v4617 = vld [vmem:[%s2 + $0x7d0] sm:$0xff]
    %v4618 = vld [vmem:[%s2 + $0x7d8] sm:$0xff]
    %v4619 = vld [vmem:[%s2 + $0x7e0] sm:$0xff]
    %v4620 = vld [vmem:[%s2 + $0x7e8] sm:$0xff]
    %v4621 = vld [vmem:[%s2 + $0x7f0] sm:$0xff]
    %v4622 = vld [vmem:[%s2 + $0x7f8] sm:$0xff]
    %v4623 = vld [vmem:[%s2 + $0x800] sm:$0xff]
    %v4624 = vld [vmem:[%s2 + $0x808] sm:$0xff]
    %v4625 = vld [vmem:[%s2 + $0x810] sm:$0xff]
    %v4626 = vld [vmem:[%s2 + $0x818] sm:$0xff]
    %v4627 = vld [vmem:[%s2 + $0x820] sm:$0xff]
    %v4628 = vld [vmem:[%s2 + $0x828] sm:$0xff]
    %v4629 = vld [vmem:[%s2 + $0x830] sm:$0xff]
    %v4630 = vld [vmem:[%s2 + $0x838] sm:$0xff]
    %v4631 = vld [vmem:[%s2 + $0x840] sm:$0xff]
    %v4632 = vld [vmem:[%s2 + $0x848] sm:$0xff]
    %v4633 = vld [vmem:[%s2 + $0x850] sm:$0xff]
    %v4634 = vld [vmem:[%s2 + $0x858] sm:$0xff]
    %v4635 = vld [vmem:[%s2 + $0x860] sm:$0xff]
    %v4636 = vld [vmem:[%s2 + $0x868] sm:$0xff]
    %v4637 = vld [vmem:[%s2 + $0x870] sm:$0xff]
    %v4638 = vld [vmem:[%s2 + $0x878] sm:$0xff]
    %v4639 = vld [vmem:[%s2 + $0x880] sm:$0xff]
    %v4640 = vld [vmem:[%s2 + $0x888] sm:$0xff]
    %v4641 = vld [vmem:[%s2 + $0x890] sm:$0xff]
    %v4642 = vld [vmem:[%s2 + $0x898] sm:$0xff]
    %v4643 = vld [vmem:[%s2 + $0x8a0] sm:$0xff]
    %v4644 = vld [vmem:[%s2 + $0x8a8] sm:$0xff]
    %v4645 = vld [vmem:[%s2 + $0x8b0] sm:$0xff]
    %v4646 = vld [vmem:[%s2 + $0x8b8] sm:$0xff]
    %v4647 = vld [vmem:[%s2 + $0x8c0] sm:$0xff]
    %v4648 = vld [vmem:[%s2 + $0x8c8] sm:$0xff]
    %v4649 = vld [vmem:[%s2 + $0x8d0] sm:$0xff]
    %v4650 = vld [vmem:[%s2 + $0x8d8] sm:$0xff]
    %v4651 = vld [vmem:[%s2 + $0x8e0] sm:$0xff]
    %v4652 = vld [vmem:[%s2 + $0x8e8] sm:$0xff]
    %v4653 = vld [vmem:[%s2 + $0x8f0] sm:$0xff]
    %v4654 = vld [vmem:[%s2 + $0x8f8] sm:$0xff]
    %v4655 = vld [vmem:[%s2 + $0x900] sm:$0xff]
    %v4656 = vld [vmem:[%s2 + $0x908] sm:$0xff]
    %v4657 = vld [vmem:[%s2 + $0x910] sm:$0xff]
    %v4658 = vld [vmem:[%s2 + $0x918] sm:$0xff]
    %v4659 = vld [vmem:[%s2 + $0x920] sm:$0xff]
    %v4660 = vld [vmem:[%s2 + $0x928] sm:$0xff]
    %v4661 = vld [vmem:[%s2 + $0x930] sm:$0xff]
    %v4662 = vld [vmem:[%s2 + $0x938] sm:$0xff]
    %v4663 = vld [vmem:[%s2 + $0x940] sm:$0xff]
    %v4664 = vld [vmem:[%s2 + $0x948] sm:$0xff]
    %v4665 = vld [vmem:[%s2 + $0x950] sm:$0xff]
    %v4666 = vld [vmem:[%s2 + $0x958] sm:$0xff]
    %v4667 = vld [vmem:[%s2 + $0x960] sm:$0xff]
    %v4668 = vld [vmem:[%s2 + $0x968] sm:$0xff]
    %v4669 = vld [vmem:[%s2 + $0x970] sm:$0xff]
    %v4670 = vld [vmem:[%s2 + $0x978] sm:$0xff]
    %v4671 = vld [vmem:[%s2 + $0x980] sm:$0xff]
    %v4672 = vld [vmem:[%s2 + $0x988] sm:$0xff]
    %v4673 = vld [vmem:[%s2 + $0x990] sm:$0xff]
    %v4674 = vld [vmem:[%s2 + $0x998] sm:$0xff]
    %v4675 = vld [vmem:[%s2 + $0x9a0] sm:$0xff]
    %v4676 = vld [vmem:[%s2 + $0x9a8] sm:$0xff]
    %v4677 = vld [vmem:[%s2 + $0x9b0] sm:$0xff]
    %v4678 = vld [vmem:[%s2 + $0x9b8] sm:$0xff]
    %v4679 = vld [vmem:[%s2 + $0x9c0] sm:$0xff]
    %v4680 = vld [vmem:[%s2 + $0x9c8] sm:$0xff]
    %v4681 = vld [vmem:[%s2 + $0x9d0] sm:$0xff]
    %v4682 = vld [vmem:[%s2 + $0x9d8] sm:$0xff]
    %v4683 = vld [vmem:[%s2 + $0x9e0] sm:$0xff]
    %v4684 = vld [vmem:[%s2 + $0x9e8] sm:$0xff]
    %v4685 = vld [vmem:[%s2 + $0x9f0] sm:$0xff]
    %v4686 = vld [vmem:[%s2 + $0x9f8] sm:$0xff]
    %v4687 = vld [vmem:[%s2 + $0xa00] sm:$0xff]
    %v4688 = vld [vmem:[%s2 + $0xa08] sm:$0xff]
    %v4689 = vld [vmem:[%s2 + $0xa10] sm:$0xff]
    %v4690 = vld [vmem:[%s2 + $0xa18] sm:$0xff]
    %v4691 = vld [vmem:[%s2 + $0xa20] sm:$0xff]
    %v4692 = vld [vmem:[%s2 + $0xa28] sm:$0xff]
    %v4693 = vld [vmem:[%s2 + $0xa30] sm:$0xff]
    %v4694 = vld [vmem:[%s2 + $0xa38] sm:$0xff]
    %v4695 = vld [vmem:[%s2 + $0xa40] sm:$0xff]
    %v4696 = vld [vmem:[%s2 + $0xa48] sm:$0xff]
    %v4697 = vld [vmem:[%s2 + $0xa50] sm:$0xff]
    %v4698 = vld [vmem:[%s2 + $0xa58] sm:$0xff]
    %v4699 = vld [vmem:[%s2 + $0xa60] sm:$0xff]
    %v4700 = vld [vmem:[%s2 + $0xa68] sm:$0xff]
    %v4701 = vld [vmem:[%s2 + $0xa70] sm:$0xff]
    %v4702 = vld [vmem:[%s2 + $0xa78] sm:$0xff]
    %v4703 = vld [vmem:[%s2 + $0xa80] sm:$0xff]
    %v4704 = vld [vmem:[%s2 + $0xa88] sm:$0xff]
    %v4705 = vld [vmem:[%s2 + $0xa90] sm:$0xff]
    %v4706 = vld [vmem:[%s2 + $0xa98] sm:$0xff]
    %v4707 = vld [vmem:[%s2 + $0xaa0] sm:$0xff]
    %v4708 = vld [vmem:[%s2 + $0xaa8] sm:$0xff]
    %v4709 = vld [vmem:[%s2 + $0xab0] sm:$0xff]
    %v4710 = vld [vmem:[%s2 + $0xab8] sm:$0xff]
    %v4711 = vld [vmem:[%s2 + $0xac0] sm:$0xff]
    %v4712 = vld [vmem:[%s2 + $0xac8] sm:$0xff]
    %v4713 = vld [vmem:[%s2 + $0xad0] sm:$0xff]
    %v4714 = vld [vmem:[%s2 + $0xad8] sm:$0xff]
    %v4715 = vld [vmem:[%s2 + $0xae0] sm:$0xff]
    %v4716 = vld [vmem:[%s2 + $0xae8] sm:$0xff]
    %v4717 = vld [vmem:[%s2 + $0xaf0] sm:$0xff]
    %v4718 = vld [vmem:[%s2 + $0xaf8] sm:$0xff]
    %v4719 = vld [vmem:[%s2 + $0xb00] sm:$0xff]
    %v4720 = vld [vmem:[%s2 + $0xb08] sm:$0xff]
    %v4721 = vld [vmem:[%s2 + $0xb10] sm:$0xff]
    %v4722 = vld [vmem:[%s2 + $0xb18] sm:$0xff]
    %v4723 = vld [vmem:[%s2 + $0xb20] sm:$0xff]
    %v4724 = vld [vmem:[%s2 + $0xb28] sm:$0xff]
    %v4725 = vld [vmem:[%s2 + $0xb30] sm:$0xff]
    %v4726 = vld [vmem:[%s2 + $0xb38] sm:$0xff]
    %v4727 = vld [vmem:[%s2 + $0xb40] sm:$0xff]
    %v4728 = vld [vmem:[%s2 + $0xb48] sm:$0xff]
    %v4729 = vld [vmem:[%s2 + $0xb50] sm:$0xff]
    %v4730 = vld [vmem:[%s2 + $0xb58] sm:$0xff]
    %v4731 = vld [vmem:[%s2 + $0xb60] sm:$0xff]
    %v4732 = vld [vmem:[%s2 + $0xb68] sm:$0xff]
    %v4733 = vld [vmem:[%s2 + $0xb70] sm:$0xff]
    %v4734 = vld [vmem:[%s2 + $0xb78] sm:$0xff]
    %v4735 = vld [vmem:[%s2 + $0xb80] sm:$0xff]
    %v4736 = vld [vmem:[%s2 + $0xb88] sm:$0xff]
    %v4737 = vld [vmem:[%s2 + $0xb90] sm:$0xff]
    %v4738 = vld [vmem:[%s2 + $0xb98] sm:$0xff]
    %v4739 = vld [vmem:[%s2 + $0xba0] sm:$0xff]
    %v4740 = vld [vmem:[%s2 + $0xba8] sm:$0xff]
    %v4741 = vld [vmem:[%s2 + $0xbb0] sm:$0xff]
    %v4742 = vld [vmem:[%s2 + $0xbb8] sm:$0xff]
    %v4743 = vld [vmem:[%s2 + $0xbc0] sm:$0xff]
    %v4744 = vld [vmem:[%s2 + $0xbc8] sm:$0xff]
    %v4745 = vld [vmem:[%s2 + $0xbd0] sm:$0xff]
    %v4746 = vld [vmem:[%s2 + $0xbd8] sm:$0xff]
    %v4747 = vld [vmem:[%s2 + $0xbe0] sm:$0xff]
    %v4748 = vld [vmem:[%s2 + $0xbe8] sm:$0xff]
    %v4749 = vld [vmem:[%s2 + $0xbf0] sm:$0xff]
    %v4750 = vld [vmem:[%s2 + $0xbf8] sm:$0xff]
    %v4751 = vld [vmem:[%s2 + $0xc00] sm:$0xff]
    %v4752 = vld [vmem:[%s2 + $0xc08] sm:$0xff]
    %v4753 = vld [vmem:[%s2 + $0xc10] sm:$0xff]
    %v4754 = vld [vmem:[%s2 + $0xc18] sm:$0xff]
    %v4755 = vld [vmem:[%s2 + $0xc20] sm:$0xff]
    %v4756 = vld [vmem:[%s2 + $0xc28] sm:$0xff]
    %v4757 = vld [vmem:[%s2 + $0xc30] sm:$0xff]
    %v4758 = vld [vmem:[%s2 + $0xc38] sm:$0xff]
    %v4759 = vld [vmem:[%s2 + $0xc40] sm:$0xff]
    %v4760 = vld [vmem:[%s2 + $0xc48] sm:$0xff]
    %v4761 = vld [vmem:[%s2 + $0xc50] sm:$0xff]
    %v4762 = vld [vmem:[%s2 + $0xc58] sm:$0xff]
    %v4763 = vld [vmem:[%s2 + $0xc60] sm:$0xff]
    %v4764 = vld [vmem:[%s2 + $0xc68] sm:$0xff]
    %v4765 = vld [vmem:[%s2 + $0xc70] sm:$0xff]
    %v4766 = vld [vmem:[%s2 + $0xc78] sm:$0xff]
    %v4767 = vld [vmem:[%s2 + $0xc80] sm:$0xff]
    %v4768 = vld [vmem:[%s2 + $0xc88] sm:$0xff]
    %v4769 = vld [vmem:[%s2 + $0xc90] sm:$0xff]
    %v4770 = vld [vmem:[%s2 + $0xc98] sm:$0xff]
    %v4771 = vld [vmem:[%s2 + $0xca0] sm:$0xff]
    %v4772 = vld [vmem:[%s2 + $0xca8] sm:$0xff]
    %v4773 = vld [vmem:[%s2 + $0xcb0] sm:$0xff]
    %v4774 = vld [vmem:[%s2 + $0xcb8] sm:$0xff]
    %v4775 = vld [vmem:[%s2 + $0xcc0] sm:$0xff]
    %v4776 = vld [vmem:[%s2 + $0xcc8] sm:$0xff]
    %v4777 = vld [vmem:[%s2 + $0xcd0] sm:$0xff]
    %v4778 = vld [vmem:[%s2 + $0xcd8] sm:$0xff]
    %v4779 = vld [vmem:[%s2 + $0xce0] sm:$0xff]
    %v4780 = vld [vmem:[%s2 + $0xce8] sm:$0xff]
    %v4781 = vld [vmem:[%s2 + $0xcf0] sm:$0xff]
    %v4782 = vld [vmem:[%s2 + $0xcf8] sm:$0xff]
    %v4783 = vld [vmem:[%s2 + $0xd00] sm:$0xff]
    %v4784 = vld [vmem:[%s2 + $0xd08] sm:$0xff]
    %v4785 = vld [vmem:[%s2 + $0xd10] sm:$0xff]
    %v4786 = vld [vmem:[%s2 + $0xd18] sm:$0xff]
    %v4787 = vld [vmem:[%s2 + $0xd20] sm:$0xff]
    %v4788 = vld [vmem:[%s2 + $0xd28] sm:$0xff]
    %v4789 = vld [vmem:[%s2 + $0xd30] sm:$0xff]
    %v4790 = vld [vmem:[%s2 + $0xd38] sm:$0xff]
    %v4791 = vld [vmem:[%s2 + $0xd40] sm:$0xff]
    %v4792 = vld [vmem:[%s2 + $0xd48] sm:$0xff]
    %v4793 = vld [vmem:[%s2 + $0xd50] sm:$0xff]
    %v4794 = vld [vmem:[%s2 + $0xd58] sm:$0xff]
    %v4795 = vld [vmem:[%s2 + $0xd60] sm:$0xff]
    %v4796 = vld [vmem:[%s2 + $0xd68] sm:$0xff]
    %v4797 = vld [vmem:[%s2 + $0xd70] sm:$0xff]
    %v4798 = vld [vmem:[%s2 + $0xd78] sm:$0xff]
    %v4799 = vld [vmem:[%s2 + $0xd80] sm:$0xff]
    %v4800 = vld [vmem:[%s2 + $0xd88] sm:$0xff]
    %v4801 = vld [vmem:[%s2 + $0xd90] sm:$0xff]
    %v4802 = vld [vmem:[%s2 + $0xd98] sm:$0xff]
    %v4803 = vld [vmem:[%s2 + $0xda0] sm:$0xff]
    %v4804 = vld [vmem:[%s2 + $0xda8] sm:$0xff]
    %v4805 = vld [vmem:[%s2 + $0xdb0] sm:$0xff]
    %v4806 = vld [vmem:[%s2 + $0xdb8] sm:$0xff]
    %v4807 = vld [vmem:[%s2 + $0xdc0] sm:$0xff]
    %v4808 = vld [vmem:[%s2 + $0xdc8] sm:$0xff]
    %v4809 = vld [vmem:[%s2 + $0xdd0] sm:$0xff]
    %v4810 = vld [vmem:[%s2 + $0xdd8] sm:$0xff]
    %v4811 = vld [vmem:[%s2 + $0xde0] sm:$0xff]
    %v4812 = vld [vmem:[%s2 + $0xde8] sm:$0xff]
    %v4813 = vld [vmem:[%s2 + $0xdf0] sm:$0xff]
    %v4814 = vld [vmem:[%s2 + $0xdf8] sm:$0xff]
    %v4815 = vld [vmem:[%s2 + $0xe00] sm:$0xff]
    %v4816 = vld [vmem:[%s2 + $0xe08] sm:$0xff]
    %v4817 = vld [vmem:[%s2 + $0xe10] sm:$0xff]
    %v4818 = vld [vmem:[%s2 + $0xe18] sm:$0xff]
    %v4819 = vld [vmem:[%s2 + $0xe20] sm:$0xff]
    %v4820 = vld [vmem:[%s2 + $0xe28] sm:$0xff]
    %v4821 = vld [vmem:[%s2 + $0xe30] sm:$0xff]
    %v4822 = vld [vmem:[%s2 + $0xe38] sm:$0xff]
    %v4823 = vld [vmem:[%s2 + $0xe40] sm:$0xff]
    %v4824 = vld [vmem:[%s2 + $0xe48] sm:$0xff]
    %v4825 = vld [vmem:[%s2 + $0xe50] sm:$0xff]
    %v4826 = vld [vmem:[%s2 + $0xe58] sm:$0xff]
    %v4827 = vld [vmem:[%s2 + $0xe60] sm:$0xff]
    %v4828 = vld [vmem:[%s2 + $0xe68] sm:$0xff]
    %v4829 = vld [vmem:[%s2 + $0xe70] sm:$0xff]
    %v4830 = vld [vmem:[%s2 + $0xe78] sm:$0xff]
    %v4831 = vld [vmem:[%s2 + $0xe80] sm:$0xff]
    %v4832 = vld [vmem:[%s2 + $0xe88] sm:$0xff]
    %v4833 = vld [vmem:[%s2 + $0xe90] sm:$0xff]
    %v4834 = vld [vmem:[%s2 + $0xe98] sm:$0xff]
    %v4835 = vld [vmem:[%s2 + $0xea0] sm:$0xff]
    %v4836 = vld [vmem:[%s2 + $0xea8] sm:$0xff]
    %v4837 = vld [vmem:[%s2 + $0xeb0] sm:$0xff]
    %v4838 = vld [vmem:[%s2 + $0xeb8] sm:$0xff]
    %v4839 = vld [vmem:[%s2 + $0xec0] sm:$0xff]
    %v4840 = vld [vmem:[%s2 + $0xec8] sm:$0xff]
    %v4841 = vld [vmem:[%s2 + $0xed0] sm:$0xff]
    %v4842 = vld [vmem:[%s2 + $0xed8] sm:$0xff]
    %v4843 = vld [vmem:[%s2 + $0xee0] sm:$0xff]
    %v4844 = vld [vmem:[%s2 + $0xee8] sm:$0xff]
    %v4845 = vld [vmem:[%s2 + $0xef0] sm:$0xff]
    %v4846 = vld [vmem:[%s2 + $0xef8] sm:$0xff]
    %v4847 = vld [vmem:[%s2 + $0xf00] sm:$0xff]
    %v4848 = vld [vmem:[%s2 + $0xf08] sm:$0xff]
    %v4849 = vld [vmem:[%s2 + $0xf10] sm:$0xff]
    %v4850 = vld [vmem:[%s2 + $0xf18] sm:$0xff]
    %v4851 = vld [vmem:[%s2 + $0xf20] sm:$0xff]
    %v4852 = vld [vmem:[%s2 + $0xf28] sm:$0xff]
    %v4853 = vld [vmem:[%s2 + $0xf30] sm:$0xff]
    %v4854 = vld [vmem:[%s2 + $0xf38] sm:$0xff]
    %v4855 = vld [vmem:[%s2 + $0xf40] sm:$0xff]
    %v4856 = vld [vmem:[%s2 + $0xf48] sm:$0xff]
    %v4857 = vld [vmem:[%s2 + $0xf50] sm:$0xff]
    %v4858 = vld [vmem:[%s2 + $0xf58] sm:$0xff]
    %v4859 = vld [vmem:[%s2 + $0xf60] sm:$0xff]
    %v4860 = vld [vmem:[%s2 + $0xf68] sm:$0xff]
    %v4861 = vld [vmem:[%s2 + $0xf70] sm:$0xff]
    %v4862 = vld [vmem:[%s2 + $0xf78] sm:$0xff]
    %v4863 = vld [vmem:[%s2 + $0xf80] sm:$0xff]
    %v4864 = vld [vmem:[%s2 + $0xf88] sm:$0xff]
    %v4865 = vld [vmem:[%s2 + $0xf90] sm:$0xff]
    %v4866 = vld [vmem:[%s2 + $0xf98] sm:$0xff]
    %v4867 = vld [vmem:[%s2 + $0xfa0] sm:$0xff]
    %v4868 = vld [vmem:[%s2 + $0xfa8] sm:$0xff]
    %v4869 = vld [vmem:[%s2 + $0xfb0] sm:$0xff]
    %v4870 = vld [vmem:[%s2 + $0xfb8] sm:$0xff]
    %v4871 = vld [vmem:[%s2 + $0xfc0] sm:$0xff]
    %v4872 = vld [vmem:[%s2 + $0xfc8] sm:$0xff]
    %v4873 = vld [vmem:[%s2 + $0xfd0] sm:$0xff]
    %v4874 = vld [vmem:[%s2 + $0xfd8] sm:$0xff]
    %v4875 = vld [vmem:[%s2 + $0xfe0] sm:$0xff]
    %v4876 = vld [vmem:[%s2 + $0xfe8] sm:$0xff]
    %v4877 = vld [vmem:[%s2 + $0xff0] sm:$0xff]
    %v4878 = vld [vmem:[%s2 + $0xff8] sm:$0xff]
    %4880 = vset.pattern.permute.xlu0 0
    %4881 = vperm.xlu0 %4880, %v4367
    %v4882 = vpop.permute.xlu0 %4881
    %4885 = vset.pattern.permute.xlu0 0
    %4886 = vperm.xlu0 %4885, %v4368
    %v4887 = vpop.permute.xlu0 %4886
    %4890 = vset.pattern.permute.xlu0 0
    %4891 = vperm.xlu0 %4890, %v4369
    %v4892 = vpop.permute.xlu0 %4891
    %4895 = vset.pattern.permute.xlu0 0
    %4896 = vperm.xlu0 %4895, %v4370
    %v4897 = vpop.permute.xlu0 %4896
    %4900 = vset.pattern.permute.xlu0 0
    %4901 = vperm.xlu0 %4900, %v4371
    %v4902 = vpop.permute.xlu0 %4901
    %4905 = vset.pattern.permute.xlu0 0
    %4906 = vperm.xlu0 %4905, %v4372
    %v4907 = vpop.permute.xlu0 %4906
    %4910 = vset.pattern.permute.xlu0 0
    %4911 = vperm.xlu0 %4910, %v4373
    %v4912 = vpop.permute.xlu0 %4911
    %4915 = vset.pattern.permute.xlu0 0
    %4916 = vperm.xlu0 %4915, %v4374
    %v4917 = vpop.permute.xlu0 %4916
    %4920 = vset.pattern.permute.xlu0 0
    %4921 = vperm.xlu0 %4920, %v4375
    %v4922 = vpop.permute.xlu0 %4921
    %4925 = vset.pattern.permute.xlu0 0
    %4926 = vperm.xlu0 %4925, %v4376
    %v4927 = vpop.permute.xlu0 %4926
    %4930 = vset.pattern.permute.xlu0 0
    %4931 = vperm.xlu0 %4930, %v4377
    %v4932 = vpop.permute.xlu0 %4931
    %4935 = vset.pattern.permute.xlu0 0
    %4936 = vperm.xlu0 %4935, %v4378
    %v4937 = vpop.permute.xlu0 %4936
    %4940 = vset.pattern.permute.xlu0 0
    %4941 = vperm.xlu0 %4940, %v4379
    %v4942 = vpop.permute.xlu0 %4941
    %4945 = vset.pattern.permute.xlu0 0
    %4946 = vperm.xlu0 %4945, %v4380
    %v4947 = vpop.permute.xlu0 %4946
    %4950 = vset.pattern.permute.xlu0 0
    %4951 = vperm.xlu0 %4950, %v4381
    %v4952 = vpop.permute.xlu0 %4951
    %4955 = vset.pattern.permute.xlu0 0
    %4956 = vperm.xlu0 %4955, %v4382
    %v4957 = vpop.permute.xlu0 %4956
    %4960 = vset.pattern.permute.xlu0 0
    %4961 = vperm.xlu0 %4960, %v4383
    %v4962 = vpop.permute.xlu0 %4961
    %4965 = vset.pattern.permute.xlu0 0
    %4966 = vperm.xlu0 %4965, %v4384
    %v4967 = vpop.permute.xlu0 %4966
    %4970 = vset.pattern.permute.xlu0 0
    %4971 = vperm.xlu0 %4970, %v4385
    %v4972 = vpop.permute.xlu0 %4971
    %4975 = vset.pattern.permute.xlu0 0
    %4976 = vperm.xlu0 %4975, %v4386
    %v4977 = vpop.permute.xlu0 %4976
    %4980 = vset.pattern.permute.xlu0 0
    %4981 = vperm.xlu0 %4980, %v4387
    %v4982 = vpop.permute.xlu0 %4981
    %4985 = vset.pattern.permute.xlu0 0
    %4986 = vperm.xlu0 %4985, %v4388
    %v4987 = vpop.permute.xlu0 %4986
    %4990 = vset.pattern.permute.xlu0 0
    %4991 = vperm.xlu0 %4990, %v4389
    %v4992 = vpop.permute.xlu0 %4991
    %4995 = vset.pattern.permute.xlu0 0
    %4996 = vperm.xlu0 %4995, %v4390
    %v4997 = vpop.permute.xlu0 %4996
    %5000 = vset.pattern.permute.xlu0 0
    %5001 = vperm.xlu0 %5000, %v4391
    %v5002 = vpop.permute.xlu0 %5001
    %5005 = vset.pattern.permute.xlu0 0
    %5006 = vperm.xlu0 %5005, %v4392
    %v5007 = vpop.permute.xlu0 %5006
    %5010 = vset.pattern.permute.xlu0 0
    %5011 = vperm.xlu0 %5010, %v4393
    %v5012 = vpop.permute.xlu0 %5011
    %5015 = vset.pattern.permute.xlu0 0
    %5016 = vperm.xlu0 %5015, %v4394
    %v5017 = vpop.permute.xlu0 %5016
    %5020 = vset.pattern.permute.xlu0 0
    %5021 = vperm.xlu0 %5020, %v4395
    %v5022 = vpop.permute.xlu0 %5021
    %5025 = vset.pattern.permute.xlu0 0
    %5026 = vperm.xlu0 %5025, %v4396
    %v5027 = vpop.permute.xlu0 %5026
    %5030 = vset.pattern.permute.xlu0 0
    %5031 = vperm.xlu0 %5030, %v4397
    %v5032 = vpop.permute.xlu0 %5031
    %5035 = vset.pattern.permute.xlu0 0
    %5036 = vperm.xlu0 %5035, %v4398
    %v5037 = vpop.permute.xlu0 %5036
    %5040 = vset.pattern.permute.xlu0 0
    %5041 = vperm.xlu0 %5040, %v4399
    %v5042 = vpop.permute.xlu0 %5041
    %5045 = vset.pattern.permute.xlu0 0
    %5046 = vperm.xlu0 %5045, %v4400
    %v5047 = vpop.permute.xlu0 %5046
    %5050 = vset.pattern.permute.xlu0 0
    %5051 = vperm.xlu0 %5050, %v4401
    %v5052 = vpop.permute.xlu0 %5051
    %5055 = vset.pattern.permute.xlu0 0
    %5056 = vperm.xlu0 %5055, %v4402
    %v5057 = vpop.permute.xlu0 %5056
    %5060 = vset.pattern.permute.xlu0 0
    %5061 = vperm.xlu0 %5060, %v4403
    %v5062 = vpop.permute.xlu0 %5061
    %5065 = vset.pattern.permute.xlu0 0
    %5066 = vperm.xlu0 %5065, %v4404
    %v5067 = vpop.permute.xlu0 %5066
    %5070 = vset.pattern.permute.xlu0 0
    %5071 = vperm.xlu0 %5070, %v4405
    %v5072 = vpop.permute.xlu0 %5071
    %5075 = vset.pattern.permute.xlu0 0
    %5076 = vperm.xlu0 %5075, %v4406
    %v5077 = vpop.permute.xlu0 %5076
    %5080 = vset.pattern.permute.xlu0 0
    %5081 = vperm.xlu0 %5080, %v4407
    %v5082 = vpop.permute.xlu0 %5081
    %5085 = vset.pattern.permute.xlu0 0
    %5086 = vperm.xlu0 %5085, %v4408
    %v5087 = vpop.permute.xlu0 %5086
    %5090 = vset.pattern.permute.xlu0 0
    %5091 = vperm.xlu0 %5090, %v4409
    %v5092 = vpop.permute.xlu0 %5091
    %5095 = vset.pattern.permute.xlu0 0
    %5096 = vperm.xlu0 %5095, %v4410
    %v5097 = vpop.permute.xlu0 %5096
    %5100 = vset.pattern.permute.xlu0 0
    %5101 = vperm.xlu0 %5100, %v4411
    %v5102 = vpop.permute.xlu0 %5101
    %5105 = vset.pattern.permute.xlu0 0
    %5106 = vperm.xlu0 %5105, %v4412
    %v5107 = vpop.permute.xlu0 %5106
    %5110 = vset.pattern.permute.xlu0 0
    %5111 = vperm.xlu0 %5110, %v4413
    %v5112 = vpop.permute.xlu0 %5111
    %5115 = vset.pattern.permute.xlu0 0
    %5116 = vperm.xlu0 %5115, %v4414
    %v5117 = vpop.permute.xlu0 %5116
    %5120 = vset.pattern.permute.xlu0 0
    %5121 = vperm.xlu0 %5120, %v4415
    %v5122 = vpop.permute.xlu0 %5121
    %5125 = vset.pattern.permute.xlu0 0
    %5126 = vperm.xlu0 %5125, %v4416
    %v5127 = vpop.permute.xlu0 %5126
    %5130 = vset.pattern.permute.xlu0 0
    %5131 = vperm.xlu0 %5130, %v4417
    %v5132 = vpop.permute.xlu0 %5131
    %5135 = vset.pattern.permute.xlu0 0
    %5136 = vperm.xlu0 %5135, %v4418
    %v5137 = vpop.permute.xlu0 %5136
    %5140 = vset.pattern.permute.xlu0 0
    %5141 = vperm.xlu0 %5140, %v4419
    %v5142 = vpop.permute.xlu0 %5141
    %5145 = vset.pattern.permute.xlu0 0
    %5146 = vperm.xlu0 %5145, %v4420
    %v5147 = vpop.permute.xlu0 %5146
    %5150 = vset.pattern.permute.xlu0 0
    %5151 = vperm.xlu0 %5150, %v4421
    %v5152 = vpop.permute.xlu0 %5151
    %5155 = vset.pattern.permute.xlu0 0
    %5156 = vperm.xlu0 %5155, %v4422
    %v5157 = vpop.permute.xlu0 %5156
    %5160 = vset.pattern.permute.xlu0 0
    %5161 = vperm.xlu0 %5160, %v4423
    %v5162 = vpop.permute.xlu0 %5161
    %5165 = vset.pattern.permute.xlu0 0
    %5166 = vperm.xlu0 %5165, %v4424
    %v5167 = vpop.permute.xlu0 %5166
    %5170 = vset.pattern.permute.xlu0 0
    %5171 = vperm.xlu0 %5170, %v4425
    %v5172 = vpop.permute.xlu0 %5171
    %5175 = vset.pattern.permute.xlu0 0
    %5176 = vperm.xlu0 %5175, %v4426
    %v5177 = vpop.permute.xlu0 %5176
    %5180 = vset.pattern.permute.xlu0 0
    %5181 = vperm.xlu0 %5180, %v4427
    %v5182 = vpop.permute.xlu0 %5181
    %5185 = vset.pattern.permute.xlu0 0
    %5186 = vperm.xlu0 %5185, %v4428
    %v5187 = vpop.permute.xlu0 %5186
    %5190 = vset.pattern.permute.xlu0 0
    %5191 = vperm.xlu0 %5190, %v4429
    %v5192 = vpop.permute.xlu0 %5191
    %5195 = vset.pattern.permute.xlu0 0
    %5196 = vperm.xlu0 %5195, %v4430
    %v5197 = vpop.permute.xlu0 %5196
    %5200 = vset.pattern.permute.xlu0 0
    %5201 = vperm.xlu0 %5200, %v4431
    %v5202 = vpop.permute.xlu0 %5201
    %5205 = vset.pattern.permute.xlu0 0
    %5206 = vperm.xlu0 %5205, %v4432
    %v5207 = vpop.permute.xlu0 %5206
    %5210 = vset.pattern.permute.xlu0 0
    %5211 = vperm.xlu0 %5210, %v4433
    %v5212 = vpop.permute.xlu0 %5211
    %5215 = vset.pattern.permute.xlu0 0
    %5216 = vperm.xlu0 %5215, %v4434
    %v5217 = vpop.permute.xlu0 %5216
    %5220 = vset.pattern.permute.xlu0 0
    %5221 = vperm.xlu0 %5220, %v4435
    %v5222 = vpop.permute.xlu0 %5221
    %5225 = vset.pattern.permute.xlu0 0
    %5226 = vperm.xlu0 %5225, %v4436
    %v5227 = vpop.permute.xlu0 %5226
    %5230 = vset.pattern.permute.xlu0 0
    %5231 = vperm.xlu0 %5230, %v4437
    %v5232 = vpop.permute.xlu0 %5231
    %5235 = vset.pattern.permute.xlu0 0
    %5236 = vperm.xlu0 %5235, %v4438
    %v5237 = vpop.permute.xlu0 %5236
    %5240 = vset.pattern.permute.xlu0 0
    %5241 = vperm.xlu0 %5240, %v4439
    %v5242 = vpop.permute.xlu0 %5241
    %5245 = vset.pattern.permute.xlu0 0
    %5246 = vperm.xlu0 %5245, %v4440
    %v5247 = vpop.permute.xlu0 %5246
    %5250 = vset.pattern.permute.xlu0 0
    %5251 = vperm.xlu0 %5250, %v4441
    %v5252 = vpop.permute.xlu0 %5251
    %5255 = vset.pattern.permute.xlu0 0
    %5256 = vperm.xlu0 %5255, %v4442
    %v5257 = vpop.permute.xlu0 %5256
    %5260 = vset.pattern.permute.xlu0 0
    %5261 = vperm.xlu0 %5260, %v4443
    %v5262 = vpop.permute.xlu0 %5261
    %5265 = vset.pattern.permute.xlu0 0
    %5266 = vperm.xlu0 %5265, %v4444
    %v5267 = vpop.permute.xlu0 %5266
    %5270 = vset.pattern.permute.xlu0 0
    %5271 = vperm.xlu0 %5270, %v4445
    %v5272 = vpop.permute.xlu0 %5271
    %5275 = vset.pattern.permute.xlu0 0
    %5276 = vperm.xlu0 %5275, %v4446
    %v5277 = vpop.permute.xlu0 %5276
    %5280 = vset.pattern.permute.xlu0 0
    %5281 = vperm.xlu0 %5280, %v4447
    %v5282 = vpop.permute.xlu0 %5281
    %5285 = vset.pattern.permute.xlu0 0
    %5286 = vperm.xlu0 %5285, %v4448
    %v5287 = vpop.permute.xlu0 %5286
    %5290 = vset.pattern.permute.xlu0 0
    %5291 = vperm.xlu0 %5290, %v4449
    %v5292 = vpop.permute.xlu0 %5291
    %5295 = vset.pattern.permute.xlu0 0
    %5296 = vperm.xlu0 %5295, %v4450
    %v5297 = vpop.permute.xlu0 %5296
    %5300 = vset.pattern.permute.xlu0 0
    %5301 = vperm.xlu0 %5300, %v4451
    %v5302 = vpop.permute.xlu0 %5301
    %5305 = vset.pattern.permute.xlu0 0
    %5306 = vperm.xlu0 %5305, %v4452
    %v5307 = vpop.permute.xlu0 %5306
    %5310 = vset.pattern.permute.xlu0 0
    %5311 = vperm.xlu0 %5310, %v4453
    %v5312 = vpop.permute.xlu0 %5311
    %5315 = vset.pattern.permute.xlu0 0
    %5316 = vperm.xlu0 %5315, %v4454
    %v5317 = vpop.permute.xlu0 %5316
    %5320 = vset.pattern.permute.xlu0 0
    %5321 = vperm.xlu0 %5320, %v4455
    %v5322 = vpop.permute.xlu0 %5321
    %5325 = vset.pattern.permute.xlu0 0
    %5326 = vperm.xlu0 %5325, %v4456
    %v5327 = vpop.permute.xlu0 %5326
    %5330 = vset.pattern.permute.xlu0 0
    %5331 = vperm.xlu0 %5330, %v4457
    %v5332 = vpop.permute.xlu0 %5331
    %5335 = vset.pattern.permute.xlu0 0
    %5336 = vperm.xlu0 %5335, %v4458
    %v5337 = vpop.permute.xlu0 %5336
    %5340 = vset.pattern.permute.xlu0 0
    %5341 = vperm.xlu0 %5340, %v4459
    %v5342 = vpop.permute.xlu0 %5341
    %5345 = vset.pattern.permute.xlu0 0
    %5346 = vperm.xlu0 %5345, %v4460
    %v5347 = vpop.permute.xlu0 %5346
    %5350 = vset.pattern.permute.xlu0 0
    %5351 = vperm.xlu0 %5350, %v4461
    %v5352 = vpop.permute.xlu0 %5351
    %5355 = vset.pattern.permute.xlu0 0
    %5356 = vperm.xlu0 %5355, %v4462
    %v5357 = vpop.permute.xlu0 %5356
    %5360 = vset.pattern.permute.xlu0 0
    %5361 = vperm.xlu0 %5360, %v4463
    %v5362 = vpop.permute.xlu0 %5361
    %5365 = vset.pattern.permute.xlu0 0
    %5366 = vperm.xlu0 %5365, %v4464
    %v5367 = vpop.permute.xlu0 %5366
    %5370 = vset.pattern.permute.xlu0 0
    %5371 = vperm.xlu0 %5370, %v4465
    %v5372 = vpop.permute.xlu0 %5371
    %5375 = vset.pattern.permute.xlu0 0
    %5376 = vperm.xlu0 %5375, %v4466
    %v5377 = vpop.permute.xlu0 %5376
    %5380 = vset.pattern.permute.xlu0 0
    %5381 = vperm.xlu0 %5380, %v4467
    %v5382 = vpop.permute.xlu0 %5381
    %5385 = vset.pattern.permute.xlu0 0
    %5386 = vperm.xlu0 %5385, %v4468
    %v5387 = vpop.permute.xlu0 %5386
    %5390 = vset.pattern.permute.xlu0 0
    %5391 = vperm.xlu0 %5390, %v4469
    %v5392 = vpop.permute.xlu0 %5391
    %5395 = vset.pattern.permute.xlu0 0
    %5396 = vperm.xlu0 %5395, %v4470
    %v5397 = vpop.permute.xlu0 %5396
    %5400 = vset.pattern.permute.xlu0 0
    %5401 = vperm.xlu0 %5400, %v4471
    %v5402 = vpop.permute.xlu0 %5401
    %5405 = vset.pattern.permute.xlu0 0
    %5406 = vperm.xlu0 %5405, %v4472
    %v5407 = vpop.permute.xlu0 %5406
    %5410 = vset.pattern.permute.xlu0 0
    %5411 = vperm.xlu0 %5410, %v4473
    %v5412 = vpop.permute.xlu0 %5411
    %5415 = vset.pattern.permute.xlu0 0
    %5416 = vperm.xlu0 %5415, %v4474
    %v5417 = vpop.permute.xlu0 %5416
    %5420 = vset.pattern.permute.xlu0 0
    %5421 = vperm.xlu0 %5420, %v4475
    %v5422 = vpop.permute.xlu0 %5421
    %5425 = vset.pattern.permute.xlu0 0
    %5426 = vperm.xlu0 %5425, %v4476
    %v5427 = vpop.permute.xlu0 %5426
    %5430 = vset.pattern.permute.xlu0 0
    %5431 = vperm.xlu0 %5430, %v4477
    %v5432 = vpop.permute.xlu0 %5431
    %5435 = vset.pattern.permute.xlu0 0
    %5436 = vperm.xlu0 %5435, %v4478
    %v5437 = vpop.permute.xlu0 %5436
    %5440 = vset.pattern.permute.xlu0 0
    %5441 = vperm.xlu0 %5440, %v4479
    %v5442 = vpop.permute.xlu0 %5441
    %5445 = vset.pattern.permute.xlu0 0
    %5446 = vperm.xlu0 %5445, %v4480
    %v5447 = vpop.permute.xlu0 %5446
    %5450 = vset.pattern.permute.xlu0 0
    %5451 = vperm.xlu0 %5450, %v4481
    %v5452 = vpop.permute.xlu0 %5451
    %5455 = vset.pattern.permute.xlu0 0
    %5456 = vperm.xlu0 %5455, %v4482
    %v5457 = vpop.permute.xlu0 %5456
    %5460 = vset.pattern.permute.xlu0 0
    %5461 = vperm.xlu0 %5460, %v4483
    %v5462 = vpop.permute.xlu0 %5461
    %5465 = vset.pattern.permute.xlu0 0
    %5466 = vperm.xlu0 %5465, %v4484
    %v5467 = vpop.permute.xlu0 %5466
    %5470 = vset.pattern.permute.xlu0 0
    %5471 = vperm.xlu0 %5470, %v4485
    %v5472 = vpop.permute.xlu0 %5471
    %5475 = vset.pattern.permute.xlu0 0
    %5476 = vperm.xlu0 %5475, %v4486
    %v5477 = vpop.permute.xlu0 %5476
    %5480 = vset.pattern.permute.xlu0 0
    %5481 = vperm.xlu0 %5480, %v4487
    %v5482 = vpop.permute.xlu0 %5481
    %5485 = vset.pattern.permute.xlu0 0
    %5486 = vperm.xlu0 %5485, %v4488
    %v5487 = vpop.permute.xlu0 %5486
    %5490 = vset.pattern.permute.xlu0 0
    %5491 = vperm.xlu0 %5490, %v4489
    %v5492 = vpop.permute.xlu0 %5491
    %5495 = vset.pattern.permute.xlu0 0
    %5496 = vperm.xlu0 %5495, %v4490
    %v5497 = vpop.permute.xlu0 %5496
    %5500 = vset.pattern.permute.xlu0 0
    %5501 = vperm.xlu0 %5500, %v4491
    %v5502 = vpop.permute.xlu0 %5501
    %5505 = vset.pattern.permute.xlu0 0
    %5506 = vperm.xlu0 %5505, %v4492
    %v5507 = vpop.permute.xlu0 %5506
    %5510 = vset.pattern.permute.xlu0 0
    %5511 = vperm.xlu0 %5510, %v4493
    %v5512 = vpop.permute.xlu0 %5511
    %5515 = vset.pattern.permute.xlu0 0
    %5516 = vperm.xlu0 %5515, %v4494
    %v5517 = vpop.permute.xlu0 %5516
    %5520 = vset.pattern.permute.xlu0 0
    %5521 = vperm.xlu0 %5520, %v4495
    %v5522 = vpop.permute.xlu0 %5521
    %5525 = vset.pattern.permute.xlu0 0
    %5526 = vperm.xlu0 %5525, %v4496
    %v5527 = vpop.permute.xlu0 %5526
    %5530 = vset.pattern.permute.xlu0 0
    %5531 = vperm.xlu0 %5530, %v4497
    %v5532 = vpop.permute.xlu0 %5531
    %5535 = vset.pattern.permute.xlu0 0
    %5536 = vperm.xlu0 %5535, %v4498
    %v5537 = vpop.permute.xlu0 %5536
    %5540 = vset.pattern.permute.xlu0 0
    %5541 = vperm.xlu0 %5540, %v4499
    %v5542 = vpop.permute.xlu0 %5541
    %5545 = vset.pattern.permute.xlu0 0
    %5546 = vperm.xlu0 %5545, %v4500
    %v5547 = vpop.permute.xlu0 %5546
    %5550 = vset.pattern.permute.xlu0 0
    %5551 = vperm.xlu0 %5550, %v4501
    %v5552 = vpop.permute.xlu0 %5551
    %5555 = vset.pattern.permute.xlu0 0
    %5556 = vperm.xlu0 %5555, %v4502
    %v5557 = vpop.permute.xlu0 %5556
    %5560 = vset.pattern.permute.xlu0 0
    %5561 = vperm.xlu0 %5560, %v4503
    %v5562 = vpop.permute.xlu0 %5561
    %5565 = vset.pattern.permute.xlu0 0
    %5566 = vperm.xlu0 %5565, %v4504
    %v5567 = vpop.permute.xlu0 %5566
    %5570 = vset.pattern.permute.xlu0 0
    %5571 = vperm.xlu0 %5570, %v4505
    %v5572 = vpop.permute.xlu0 %5571
    %5575 = vset.pattern.permute.xlu0 0
    %5576 = vperm.xlu0 %5575, %v4506
    %v5577 = vpop.permute.xlu0 %5576
    %5580 = vset.pattern.permute.xlu0 0
    %5581 = vperm.xlu0 %5580, %v4507
    %v5582 = vpop.permute.xlu0 %5581
    %5585 = vset.pattern.permute.xlu0 0
    %5586 = vperm.xlu0 %5585, %v4508
    %v5587 = vpop.permute.xlu0 %5586
    %5590 = vset.pattern.permute.xlu0 0
    %5591 = vperm.xlu0 %5590, %v4509
    %v5592 = vpop.permute.xlu0 %5591
    %5595 = vset.pattern.permute.xlu0 0
    %5596 = vperm.xlu0 %5595, %v4510
    %v5597 = vpop.permute.xlu0 %5596
    %5600 = vset.pattern.permute.xlu0 0
    %5601 = vperm.xlu0 %5600, %v4511
    %v5602 = vpop.permute.xlu0 %5601
    %5605 = vset.pattern.permute.xlu0 0
    %5606 = vperm.xlu0 %5605, %v4512
    %v5607 = vpop.permute.xlu0 %5606
    %5610 = vset.pattern.permute.xlu0 0
    %5611 = vperm.xlu0 %5610, %v4513
    %v5612 = vpop.permute.xlu0 %5611
    %5615 = vset.pattern.permute.xlu0 0
    %5616 = vperm.xlu0 %5615, %v4514
    %v5617 = vpop.permute.xlu0 %5616
    %5620 = vset.pattern.permute.xlu0 0
    %5621 = vperm.xlu0 %5620, %v4515
    %v5622 = vpop.permute.xlu0 %5621
    %5625 = vset.pattern.permute.xlu0 0
    %5626 = vperm.xlu0 %5625, %v4516
    %v5627 = vpop.permute.xlu0 %5626
    %5630 = vset.pattern.permute.xlu0 0
    %5631 = vperm.xlu0 %5630, %v4517
    %v5632 = vpop.permute.xlu0 %5631
    %5635 = vset.pattern.permute.xlu0 0
    %5636 = vperm.xlu0 %5635, %v4518
    %v5637 = vpop.permute.xlu0 %5636
    %5640 = vset.pattern.permute.xlu0 0
    %5641 = vperm.xlu0 %5640, %v4519
    %v5642 = vpop.permute.xlu0 %5641
    %5645 = vset.pattern.permute.xlu0 0
    %5646 = vperm.xlu0 %5645, %v4520
    %v5647 = vpop.permute.xlu0 %5646
    %5650 = vset.pattern.permute.xlu0 0
    %5651 = vperm.xlu0 %5650, %v4521
    %v5652 = vpop.permute.xlu0 %5651
    %5655 = vset.pattern.permute.xlu0 0
    %5656 = vperm.xlu0 %5655, %v4522
    %v5657 = vpop.permute.xlu0 %5656
    %5660 = vset.pattern.permute.xlu0 0
    %5661 = vperm.xlu0 %5660, %v4523
    %v5662 = vpop.permute.xlu0 %5661
    %5665 = vset.pattern.permute.xlu0 0
    %5666 = vperm.xlu0 %5665, %v4524
    %v5667 = vpop.permute.xlu0 %5666
    %5670 = vset.pattern.permute.xlu0 0
    %5671 = vperm.xlu0 %5670, %v4525
    %v5672 = vpop.permute.xlu0 %5671
    %5675 = vset.pattern.permute.xlu0 0
    %5676 = vperm.xlu0 %5675, %v4526
    %v5677 = vpop.permute.xlu0 %5676
    %5680 = vset.pattern.permute.xlu0 0
    %5681 = vperm.xlu0 %5680, %v4527
    %v5682 = vpop.permute.xlu0 %5681
    %5685 = vset.pattern.permute.xlu0 0
    %5686 = vperm.xlu0 %5685, %v4528
    %v5687 = vpop.permute.xlu0 %5686
    %5690 = vset.pattern.permute.xlu0 0
    %5691 = vperm.xlu0 %5690, %v4529
    %v5692 = vpop.permute.xlu0 %5691
    %5695 = vset.pattern.permute.xlu0 0
    %5696 = vperm.xlu0 %5695, %v4530
    %v5697 = vpop.permute.xlu0 %5696
    %5700 = vset.pattern.permute.xlu0 0
    %5701 = vperm.xlu0 %5700, %v4531
    %v5702 = vpop.permute.xlu0 %5701
    %5705 = vset.pattern.permute.xlu0 0
    %5706 = vperm.xlu0 %5705, %v4532
    %v5707 = vpop.permute.xlu0 %5706
    %5710 = vset.pattern.permute.xlu0 0
    %5711 = vperm.xlu0 %5710, %v4533
    %v5712 = vpop.permute.xlu0 %5711
    %5715 = vset.pattern.permute.xlu0 0
    %5716 = vperm.xlu0 %5715, %v4534
    %v5717 = vpop.permute.xlu0 %5716
    %5720 = vset.pattern.permute.xlu0 0
    %5721 = vperm.xlu0 %5720, %v4535
    %v5722 = vpop.permute.xlu0 %5721
    %5725 = vset.pattern.permute.xlu0 0
    %5726 = vperm.xlu0 %5725, %v4536
    %v5727 = vpop.permute.xlu0 %5726
    %5730 = vset.pattern.permute.xlu0 0
    %5731 = vperm.xlu0 %5730, %v4537
    %v5732 = vpop.permute.xlu0 %5731
    %5735 = vset.pattern.permute.xlu0 0
    %5736 = vperm.xlu0 %5735, %v4538
    %v5737 = vpop.permute.xlu0 %5736
    %5740 = vset.pattern.permute.xlu0 0
    %5741 = vperm.xlu0 %5740, %v4539
    %v5742 = vpop.permute.xlu0 %5741
    %5745 = vset.pattern.permute.xlu0 0
    %5746 = vperm.xlu0 %5745, %v4540
    %v5747 = vpop.permute.xlu0 %5746
    %5750 = vset.pattern.permute.xlu0 0
    %5751 = vperm.xlu0 %5750, %v4541
    %v5752 = vpop.permute.xlu0 %5751
    %5755 = vset.pattern.permute.xlu0 0
    %5756 = vperm.xlu0 %5755, %v4542
    %v5757 = vpop.permute.xlu0 %5756
    %5760 = vset.pattern.permute.xlu0 0
    %5761 = vperm.xlu0 %5760, %v4543
    %v5762 = vpop.permute.xlu0 %5761
    %5765 = vset.pattern.permute.xlu0 0
    %5766 = vperm.xlu0 %5765, %v4544
    %v5767 = vpop.permute.xlu0 %5766
    %5770 = vset.pattern.permute.xlu0 0
    %5771 = vperm.xlu0 %5770, %v4545
    %v5772 = vpop.permute.xlu0 %5771
    %5775 = vset.pattern.permute.xlu0 0
    %5776 = vperm.xlu0 %5775, %v4546
    %v5777 = vpop.permute.xlu0 %5776
    %5780 = vset.pattern.permute.xlu0 0
    %5781 = vperm.xlu0 %5780, %v4547
    %v5782 = vpop.permute.xlu0 %5781
    %5785 = vset.pattern.permute.xlu0 0
    %5786 = vperm.xlu0 %5785, %v4548
    %v5787 = vpop.permute.xlu0 %5786
    %5790 = vset.pattern.permute.xlu0 0
    %5791 = vperm.xlu0 %5790, %v4549
    %v5792 = vpop.permute.xlu0 %5791
    %5795 = vset.pattern.permute.xlu0 0
    %5796 = vperm.xlu0 %5795, %v4550
    %v5797 = vpop.permute.xlu0 %5796
    %5800 = vset.pattern.permute.xlu0 0
    %5801 = vperm.xlu0 %5800, %v4551
    %v5802 = vpop.permute.xlu0 %5801
    %5805 = vset.pattern.permute.xlu0 0
    %5806 = vperm.xlu0 %5805, %v4552
    %v5807 = vpop.permute.xlu0 %5806
    %5810 = vset.pattern.permute.xlu0 0
    %5811 = vperm.xlu0 %5810, %v4553
    %v5812 = vpop.permute.xlu0 %5811
    %5815 = vset.pattern.permute.xlu0 0
    %5816 = vperm.xlu0 %5815, %v4554
    %v5817 = vpop.permute.xlu0 %5816
    %5820 = vset.pattern.permute.xlu0 0
    %5821 = vperm.xlu0 %5820, %v4555
    %v5822 = vpop.permute.xlu0 %5821
    %5825 = vset.pattern.permute.xlu0 0
    %5826 = vperm.xlu0 %5825, %v4556
    %v5827 = vpop.permute.xlu0 %5826
    %5830 = vset.pattern.permute.xlu0 0
    %5831 = vperm.xlu0 %5830, %v4557
    %v5832 = vpop.permute.xlu0 %5831
    %5835 = vset.pattern.permute.xlu0 0
    %5836 = vperm.xlu0 %5835, %v4558
    %v5837 = vpop.permute.xlu0 %5836
    %5840 = vset.pattern.permute.xlu0 0
    %5841 = vperm.xlu0 %5840, %v4559
    %v5842 = vpop.permute.xlu0 %5841
    %5845 = vset.pattern.permute.xlu0 0
    %5846 = vperm.xlu0 %5845, %v4560
    %v5847 = vpop.permute.xlu0 %5846
    %5850 = vset.pattern.permute.xlu0 0
    %5851 = vperm.xlu0 %5850, %v4561
    %v5852 = vpop.permute.xlu0 %5851
    %5855 = vset.pattern.permute.xlu0 0
    %5856 = vperm.xlu0 %5855, %v4562
    %v5857 = vpop.permute.xlu0 %5856
    %5860 = vset.pattern.permute.xlu0 0
    %5861 = vperm.xlu0 %5860, %v4563
    %v5862 = vpop.permute.xlu0 %5861
    %5865 = vset.pattern.permute.xlu0 0
    %5866 = vperm.xlu0 %5865, %v4564
    %v5867 = vpop.permute.xlu0 %5866
    %5870 = vset.pattern.permute.xlu0 0
    %5871 = vperm.xlu0 %5870, %v4565
    %v5872 = vpop.permute.xlu0 %5871
    %5875 = vset.pattern.permute.xlu0 0
    %5876 = vperm.xlu0 %5875, %v4566
    %v5877 = vpop.permute.xlu0 %5876
    %5880 = vset.pattern.permute.xlu0 0
    %5881 = vperm.xlu0 %5880, %v4567
    %v5882 = vpop.permute.xlu0 %5881
    %5885 = vset.pattern.permute.xlu0 0
    %5886 = vperm.xlu0 %5885, %v4568
    %v5887 = vpop.permute.xlu0 %5886
    %5890 = vset.pattern.permute.xlu0 0
    %5891 = vperm.xlu0 %5890, %v4569
    %v5892 = vpop.permute.xlu0 %5891
    %5895 = vset.pattern.permute.xlu0 0
    %5896 = vperm.xlu0 %5895, %v4570
    %v5897 = vpop.permute.xlu0 %5896
    %5900 = vset.pattern.permute.xlu0 0
    %5901 = vperm.xlu0 %5900, %v4571
    %v5902 = vpop.permute.xlu0 %5901
    %5905 = vset.pattern.permute.xlu0 0
    %5906 = vperm.xlu0 %5905, %v4572
    %v5907 = vpop.permute.xlu0 %5906
    %5910 = vset.pattern.permute.xlu0 0
    %5911 = vperm.xlu0 %5910, %v4573
    %v5912 = vpop.permute.xlu0 %5911
    %5915 = vset.pattern.permute.xlu0 0
    %5916 = vperm.xlu0 %5915, %v4574
    %v5917 = vpop.permute.xlu0 %5916
    %5920 = vset.pattern.permute.xlu0 0
    %5921 = vperm.xlu0 %5920, %v4575
    %v5922 = vpop.permute.xlu0 %5921
    %5925 = vset.pattern.permute.xlu0 0
    %5926 = vperm.xlu0 %5925, %v4576
    %v5927 = vpop.permute.xlu0 %5926
    %5930 = vset.pattern.permute.xlu0 0
    %5931 = vperm.xlu0 %5930, %v4577
    %v5932 = vpop.permute.xlu0 %5931
    %5935 = vset.pattern.permute.xlu0 0
    %5936 = vperm.xlu0 %5935, %v4578
    %v5937 = vpop.permute.xlu0 %5936
    %5940 = vset.pattern.permute.xlu0 0
    %5941 = vperm.xlu0 %5940, %v4579
    %v5942 = vpop.permute.xlu0 %5941
    %5945 = vset.pattern.permute.xlu0 0
    %5946 = vperm.xlu0 %5945, %v4580
    %v5947 = vpop.permute.xlu0 %5946
    %5950 = vset.pattern.permute.xlu0 0
    %5951 = vperm.xlu0 %5950, %v4581
    %v5952 = vpop.permute.xlu0 %5951
    %5955 = vset.pattern.permute.xlu0 0
    %5956 = vperm.xlu0 %5955, %v4582
    %v5957 = vpop.permute.xlu0 %5956
    %5960 = vset.pattern.permute.xlu0 0
    %5961 = vperm.xlu0 %5960, %v4583
    %v5962 = vpop.permute.xlu0 %5961
    %5965 = vset.pattern.permute.xlu0 0
    %5966 = vperm.xlu0 %5965, %v4584
    %v5967 = vpop.permute.xlu0 %5966
    %5970 = vset.pattern.permute.xlu0 0
    %5971 = vperm.xlu0 %5970, %v4585
    %v5972 = vpop.permute.xlu0 %5971
    %5975 = vset.pattern.permute.xlu0 0
    %5976 = vperm.xlu0 %5975, %v4586
    %v5977 = vpop.permute.xlu0 %5976
    %5980 = vset.pattern.permute.xlu0 0
    %5981 = vperm.xlu0 %5980, %v4587
    %v5982 = vpop.permute.xlu0 %5981
    %5985 = vset.pattern.permute.xlu0 0
    %5986 = vperm.xlu0 %5985, %v4588
    %v5987 = vpop.permute.xlu0 %5986
    %5990 = vset.pattern.permute.xlu0 0
    %5991 = vperm.xlu0 %5990, %v4589
    %v5992 = vpop.permute.xlu0 %5991
    %5995 = vset.pattern.permute.xlu0 0
    %5996 = vperm.xlu0 %5995, %v4590
    %v5997 = vpop.permute.xlu0 %5996
    %6000 = vset.pattern.permute.xlu0 0
    %6001 = vperm.xlu0 %6000, %v4591
    %v6002 = vpop.permute.xlu0 %6001
    %6005 = vset.pattern.permute.xlu0 0
    %6006 = vperm.xlu0 %6005, %v4592
    %v6007 = vpop.permute.xlu0 %6006
    %6010 = vset.pattern.permute.xlu0 0
    %6011 = vperm.xlu0 %6010, %v4593
    %v6012 = vpop.permute.xlu0 %6011
    %6015 = vset.pattern.permute.xlu0 0
    %6016 = vperm.xlu0 %6015, %v4594
    %v6017 = vpop.permute.xlu0 %6016
    %6020 = vset.pattern.permute.xlu0 0
    %6021 = vperm.xlu0 %6020, %v4595
    %v6022 = vpop.permute.xlu0 %6021
    %6025 = vset.pattern.permute.xlu0 0
    %6026 = vperm.xlu0 %6025, %v4596
    %v6027 = vpop.permute.xlu0 %6026
    %6030 = vset.pattern.permute.xlu0 0
    %6031 = vperm.xlu0 %6030, %v4597
    %v6032 = vpop.permute.xlu0 %6031
    %6035 = vset.pattern.permute.xlu0 0
    %6036 = vperm.xlu0 %6035, %v4598
    %v6037 = vpop.permute.xlu0 %6036
    %6040 = vset.pattern.permute.xlu0 0
    %6041 = vperm.xlu0 %6040, %v4599
    %v6042 = vpop.permute.xlu0 %6041
    %6045 = vset.pattern.permute.xlu0 0
    %6046 = vperm.xlu0 %6045, %v4600
    %v6047 = vpop.permute.xlu0 %6046
    %6050 = vset.pattern.permute.xlu0 0
    %6051 = vperm.xlu0 %6050, %v4601
    %v6052 = vpop.permute.xlu0 %6051
    %6055 = vset.pattern.permute.xlu0 0
    %6056 = vperm.xlu0 %6055, %v4602
    %v6057 = vpop.permute.xlu0 %6056
    %6060 = vset.pattern.permute.xlu0 0
    %6061 = vperm.xlu0 %6060, %v4603
    %v6062 = vpop.permute.xlu0 %6061
    %6065 = vset.pattern.permute.xlu0 0
    %6066 = vperm.xlu0 %6065, %v4604
    %v6067 = vpop.permute.xlu0 %6066
    %6070 = vset.pattern.permute.xlu0 0
    %6071 = vperm.xlu0 %6070, %v4605
    %v6072 = vpop.permute.xlu0 %6071
    %6075 = vset.pattern.permute.xlu0 0
    %6076 = vperm.xlu0 %6075, %v4606
    %v6077 = vpop.permute.xlu0 %6076
    %6080 = vset.pattern.permute.xlu0 0
    %6081 = vperm.xlu0 %6080, %v4607
    %v6082 = vpop.permute.xlu0 %6081
    %6085 = vset.pattern.permute.xlu0 0
    %6086 = vperm.xlu0 %6085, %v4608
    %v6087 = vpop.permute.xlu0 %6086
    %6090 = vset.pattern.permute.xlu0 0
    %6091 = vperm.xlu0 %6090, %v4609
    %v6092 = vpop.permute.xlu0 %6091
    %6095 = vset.pattern.permute.xlu0 0
    %6096 = vperm.xlu0 %6095, %v4610
    %v6097 = vpop.permute.xlu0 %6096
    %6100 = vset.pattern.permute.xlu0 0
    %6101 = vperm.xlu0 %6100, %v4611
    %v6102 = vpop.permute.xlu0 %6101
    %6105 = vset.pattern.permute.xlu0 0
    %6106 = vperm.xlu0 %6105, %v4612
    %v6107 = vpop.permute.xlu0 %6106
    %6110 = vset.pattern.permute.xlu0 0
    %6111 = vperm.xlu0 %6110, %v4613
    %v6112 = vpop.permute.xlu0 %6111
    %6115 = vset.pattern.permute.xlu0 0
    %6116 = vperm.xlu0 %6115, %v4614
    %v6117 = vpop.permute.xlu0 %6116
    %6120 = vset.pattern.permute.xlu0 0
    %6121 = vperm.xlu0 %6120, %v4615
    %v6122 = vpop.permute.xlu0 %6121
    %6125 = vset.pattern.permute.xlu0 0
    %6126 = vperm.xlu0 %6125, %v4616
    %v6127 = vpop.permute.xlu0 %6126
    %6130 = vset.pattern.permute.xlu0 0
    %6131 = vperm.xlu0 %6130, %v4617
    %v6132 = vpop.permute.xlu0 %6131
    %6135 = vset.pattern.permute.xlu0 0
    %6136 = vperm.xlu0 %6135, %v4618
    %v6137 = vpop.permute.xlu0 %6136
    %6140 = vset.pattern.permute.xlu0 0
    %6141 = vperm.xlu0 %6140, %v4619
    %v6142 = vpop.permute.xlu0 %6141
    %6145 = vset.pattern.permute.xlu0 0
    %6146 = vperm.xlu0 %6145, %v4620
    %v6147 = vpop.permute.xlu0 %6146
    %6150 = vset.pattern.permute.xlu0 0
    %6151 = vperm.xlu0 %6150, %v4621
    %v6152 = vpop.permute.xlu0 %6151
    %6155 = vset.pattern.permute.xlu0 0
    %6156 = vperm.xlu0 %6155, %v4622
    %v6157 = vpop.permute.xlu0 %6156
    %6160 = vset.pattern.permute.xlu0 0
    %6161 = vperm.xlu0 %6160, %v4623
    %v6162 = vpop.permute.xlu0 %6161
    %6165 = vset.pattern.permute.xlu0 0
    %6166 = vperm.xlu0 %6165, %v4624
    %v6167 = vpop.permute.xlu0 %6166
    %6170 = vset.pattern.permute.xlu0 0
    %6171 = vperm.xlu0 %6170, %v4625
    %v6172 = vpop.permute.xlu0 %6171
    %6175 = vset.pattern.permute.xlu0 0
    %6176 = vperm.xlu0 %6175, %v4626
    %v6177 = vpop.permute.xlu0 %6176
    %6180 = vset.pattern.permute.xlu0 0
    %6181 = vperm.xlu0 %6180, %v4627
    %v6182 = vpop.permute.xlu0 %6181
    %6185 = vset.pattern.permute.xlu0 0
    %6186 = vperm.xlu0 %6185, %v4628
    %v6187 = vpop.permute.xlu0 %6186
    %6190 = vset.pattern.permute.xlu0 0
    %6191 = vperm.xlu0 %6190, %v4629
    %v6192 = vpop.permute.xlu0 %6191
    %6195 = vset.pattern.permute.xlu0 0
    %6196 = vperm.xlu0 %6195, %v4630
    %v6197 = vpop.permute.xlu0 %6196
    %6200 = vset.pattern.permute.xlu0 0
    %6201 = vperm.xlu0 %6200, %v4631
    %v6202 = vpop.permute.xlu0 %6201
    %6205 = vset.pattern.permute.xlu0 0
    %6206 = vperm.xlu0 %6205, %v4632
    %v6207 = vpop.permute.xlu0 %6206
    %6210 = vset.pattern.permute.xlu0 0
    %6211 = vperm.xlu0 %6210, %v4633
    %v6212 = vpop.permute.xlu0 %6211
    %6215 = vset.pattern.permute.xlu0 0
    %6216 = vperm.xlu0 %6215, %v4634
    %v6217 = vpop.permute.xlu0 %6216
    %6220 = vset.pattern.permute.xlu0 0
    %6221 = vperm.xlu0 %6220, %v4635
    %v6222 = vpop.permute.xlu0 %6221
    %6225 = vset.pattern.permute.xlu0 0
    %6226 = vperm.xlu0 %6225, %v4636
    %v6227 = vpop.permute.xlu0 %6226
    %6230 = vset.pattern.permute.xlu0 0
    %6231 = vperm.xlu0 %6230, %v4637
    %v6232 = vpop.permute.xlu0 %6231
    %6235 = vset.pattern.permute.xlu0 0
    %6236 = vperm.xlu0 %6235, %v4638
    %v6237 = vpop.permute.xlu0 %6236
    %6240 = vset.pattern.permute.xlu0 0
    %6241 = vperm.xlu0 %6240, %v4639
    %v6242 = vpop.permute.xlu0 %6241
    %6245 = vset.pattern.permute.xlu0 0
    %6246 = vperm.xlu0 %6245, %v4640
    %v6247 = vpop.permute.xlu0 %6246
    %6250 = vset.pattern.permute.xlu0 0
    %6251 = vperm.xlu0 %6250, %v4641
    %v6252 = vpop.permute.xlu0 %6251
    %6255 = vset.pattern.permute.xlu0 0
    %6256 = vperm.xlu0 %6255, %v4642
    %v6257 = vpop.permute.xlu0 %6256
    %6260 = vset.pattern.permute.xlu0 0
    %6261 = vperm.xlu0 %6260, %v4643
    %v6262 = vpop.permute.xlu0 %6261
    %6265 = vset.pattern.permute.xlu0 0
    %6266 = vperm.xlu0 %6265, %v4644
    %v6267 = vpop.permute.xlu0 %6266
    %6270 = vset.pattern.permute.xlu0 0
    %6271 = vperm.xlu0 %6270, %v4645
    %v6272 = vpop.permute.xlu0 %6271
    %6275 = vset.pattern.permute.xlu0 0
    %6276 = vperm.xlu0 %6275, %v4646
    %v6277 = vpop.permute.xlu0 %6276
    %6280 = vset.pattern.permute.xlu0 0
    %6281 = vperm.xlu0 %6280, %v4647
    %v6282 = vpop.permute.xlu0 %6281
    %6285 = vset.pattern.permute.xlu0 0
    %6286 = vperm.xlu0 %6285, %v4648
    %v6287 = vpop.permute.xlu0 %6286
    %6290 = vset.pattern.permute.xlu0 0
    %6291 = vperm.xlu0 %6290, %v4649
    %v6292 = vpop.permute.xlu0 %6291
    %6295 = vset.pattern.permute.xlu0 0
    %6296 = vperm.xlu0 %6295, %v4650
    %v6297 = vpop.permute.xlu0 %6296
    %6300 = vset.pattern.permute.xlu0 0
    %6301 = vperm.xlu0 %6300, %v4651
    %v6302 = vpop.permute.xlu0 %6301
    %6305 = vset.pattern.permute.xlu0 0
    %6306 = vperm.xlu0 %6305, %v4652
    %v6307 = vpop.permute.xlu0 %6306
    %6310 = vset.pattern.permute.xlu0 0
    %6311 = vperm.xlu0 %6310, %v4653
    %v6312 = vpop.permute.xlu0 %6311
    %6315 = vset.pattern.permute.xlu0 0
    %6316 = vperm.xlu0 %6315, %v4654
    %v6317 = vpop.permute.xlu0 %6316
    %6320 = vset.pattern.permute.xlu0 0
    %6321 = vperm.xlu0 %6320, %v4655
    %v6322 = vpop.permute.xlu0 %6321
    %6325 = vset.pattern.permute.xlu0 0
    %6326 = vperm.xlu0 %6325, %v4656
    %v6327 = vpop.permute.xlu0 %6326
    %6330 = vset.pattern.permute.xlu0 0
    %6331 = vperm.xlu0 %6330, %v4657
    %v6332 = vpop.permute.xlu0 %6331
    %6335 = vset.pattern.permute.xlu0 0
    %6336 = vperm.xlu0 %6335, %v4658
    %v6337 = vpop.permute.xlu0 %6336
    %6340 = vset.pattern.permute.xlu0 0
    %6341 = vperm.xlu0 %6340, %v4659
    %v6342 = vpop.permute.xlu0 %6341
    %6345 = vset.pattern.permute.xlu0 0
    %6346 = vperm.xlu0 %6345, %v4660
    %v6347 = vpop.permute.xlu0 %6346
    %6350 = vset.pattern.permute.xlu0 0
    %6351 = vperm.xlu0 %6350, %v4661
    %v6352 = vpop.permute.xlu0 %6351
    %6355 = vset.pattern.permute.xlu0 0
    %6356 = vperm.xlu0 %6355, %v4662
    %v6357 = vpop.permute.xlu0 %6356
    %6360 = vset.pattern.permute.xlu0 0
    %6361 = vperm.xlu0 %6360, %v4663
    %v6362 = vpop.permute.xlu0 %6361
    %6365 = vset.pattern.permute.xlu0 0
    %6366 = vperm.xlu0 %6365, %v4664
    %v6367 = vpop.permute.xlu0 %6366
    %6370 = vset.pattern.permute.xlu0 0
    %6371 = vperm.xlu0 %6370, %v4665
    %v6372 = vpop.permute.xlu0 %6371
    %6375 = vset.pattern.permute.xlu0 0
    %6376 = vperm.xlu0 %6375, %v4666
    %v6377 = vpop.permute.xlu0 %6376
    %6380 = vset.pattern.permute.xlu0 0
    %6381 = vperm.xlu0 %6380, %v4667
    %v6382 = vpop.permute.xlu0 %6381
    %6385 = vset.pattern.permute.xlu0 0
    %6386 = vperm.xlu0 %6385, %v4668
    %v6387 = vpop.permute.xlu0 %6386
    %6390 = vset.pattern.permute.xlu0 0
    %6391 = vperm.xlu0 %6390, %v4669
    %v6392 = vpop.permute.xlu0 %6391
    %6395 = vset.pattern.permute.xlu0 0
    %6396 = vperm.xlu0 %6395, %v4670
    %v6397 = vpop.permute.xlu0 %6396
    %6400 = vset.pattern.permute.xlu0 0
    %6401 = vperm.xlu0 %6400, %v4671
    %v6402 = vpop.permute.xlu0 %6401
    %6405 = vset.pattern.permute.xlu0 0
    %6406 = vperm.xlu0 %6405, %v4672
    %v6407 = vpop.permute.xlu0 %6406
    %6410 = vset.pattern.permute.xlu0 0
    %6411 = vperm.xlu0 %6410, %v4673
    %v6412 = vpop.permute.xlu0 %6411
    %6415 = vset.pattern.permute.xlu0 0
    %6416 = vperm.xlu0 %6415, %v4674
    %v6417 = vpop.permute.xlu0 %6416
    %6420 = vset.pattern.permute.xlu0 0
    %6421 = vperm.xlu0 %6420, %v4675
    %v6422 = vpop.permute.xlu0 %6421
    %6425 = vset.pattern.permute.xlu0 0
    %6426 = vperm.xlu0 %6425, %v4676
    %v6427 = vpop.permute.xlu0 %6426
    %6430 = vset.pattern.permute.xlu0 0
    %6431 = vperm.xlu0 %6430, %v4677
    %v6432 = vpop.permute.xlu0 %6431
    %6435 = vset.pattern.permute.xlu0 0
    %6436 = vperm.xlu0 %6435, %v4678
    %v6437 = vpop.permute.xlu0 %6436
    %6440 = vset.pattern.permute.xlu0 0
    %6441 = vperm.xlu0 %6440, %v4679
    %v6442 = vpop.permute.xlu0 %6441
    %6445 = vset.pattern.permute.xlu0 0
    %6446 = vperm.xlu0 %6445, %v4680
    %v6447 = vpop.permute.xlu0 %6446
    %6450 = vset.pattern.permute.xlu0 0
    %6451 = vperm.xlu0 %6450, %v4681
    %v6452 = vpop.permute.xlu0 %6451
    %6455 = vset.pattern.permute.xlu0 0
    %6456 = vperm.xlu0 %6455, %v4682
    %v6457 = vpop.permute.xlu0 %6456
    %6460 = vset.pattern.permute.xlu0 0
    %6461 = vperm.xlu0 %6460, %v4683
    %v6462 = vpop.permute.xlu0 %6461
    %6465 = vset.pattern.permute.xlu0 0
    %6466 = vperm.xlu0 %6465, %v4684
    %v6467 = vpop.permute.xlu0 %6466
    %6470 = vset.pattern.permute.xlu0 0
    %6471 = vperm.xlu0 %6470, %v4685
    %v6472 = vpop.permute.xlu0 %6471
    %6475 = vset.pattern.permute.xlu0 0
    %6476 = vperm.xlu0 %6475, %v4686
    %v6477 = vpop.permute.xlu0 %6476
    %6480 = vset.pattern.permute.xlu0 0
    %6481 = vperm.xlu0 %6480, %v4687
    %v6482 = vpop.permute.xlu0 %6481
    %6485 = vset.pattern.permute.xlu0 0
    %6486 = vperm.xlu0 %6485, %v4688
    %v6487 = vpop.permute.xlu0 %6486
    %6490 = vset.pattern.permute.xlu0 0
    %6491 = vperm.xlu0 %6490, %v4689
    %v6492 = vpop.permute.xlu0 %6491
    %6495 = vset.pattern.permute.xlu0 0
    %6496 = vperm.xlu0 %6495, %v4690
    %v6497 = vpop.permute.xlu0 %6496
    %6500 = vset.pattern.permute.xlu0 0
    %6501 = vperm.xlu0 %6500, %v4691
    %v6502 = vpop.permute.xlu0 %6501
    %6505 = vset.pattern.permute.xlu0 0
    %6506 = vperm.xlu0 %6505, %v4692
    %v6507 = vpop.permute.xlu0 %6506
    %6510 = vset.pattern.permute.xlu0 0
    %6511 = vperm.xlu0 %6510, %v4693
    %v6512 = vpop.permute.xlu0 %6511
    %6515 = vset.pattern.permute.xlu0 0
    %6516 = vperm.xlu0 %6515, %v4694
    %v6517 = vpop.permute.xlu0 %6516
    %6520 = vset.pattern.permute.xlu0 0
    %6521 = vperm.xlu0 %6520, %v4695
    %v6522 = vpop.permute.xlu0 %6521
    %6525 = vset.pattern.permute.xlu0 0
    %6526 = vperm.xlu0 %6525, %v4696
    %v6527 = vpop.permute.xlu0 %6526
    %6530 = vset.pattern.permute.xlu0 0
    %6531 = vperm.xlu0 %6530, %v4697
    %v6532 = vpop.permute.xlu0 %6531
    %6535 = vset.pattern.permute.xlu0 0
    %6536 = vperm.xlu0 %6535, %v4698
    %v6537 = vpop.permute.xlu0 %6536
    %6540 = vset.pattern.permute.xlu0 0
    %6541 = vperm.xlu0 %6540, %v4699
    %v6542 = vpop.permute.xlu0 %6541
    %6545 = vset.pattern.permute.xlu0 0
    %6546 = vperm.xlu0 %6545, %v4700
    %v6547 = vpop.permute.xlu0 %6546
    %6550 = vset.pattern.permute.xlu0 0
    %6551 = vperm.xlu0 %6550, %v4701
    %v6552 = vpop.permute.xlu0 %6551
    %6555 = vset.pattern.permute.xlu0 0
    %6556 = vperm.xlu0 %6555, %v4702
    %v6557 = vpop.permute.xlu0 %6556
    %6560 = vset.pattern.permute.xlu0 0
    %6561 = vperm.xlu0 %6560, %v4703
    %v6562 = vpop.permute.xlu0 %6561
    %6565 = vset.pattern.permute.xlu0 0
    %6566 = vperm.xlu0 %6565, %v4704
    %v6567 = vpop.permute.xlu0 %6566
    %6570 = vset.pattern.permute.xlu0 0
    %6571 = vperm.xlu0 %6570, %v4705
    %v6572 = vpop.permute.xlu0 %6571
    %6575 = vset.pattern.permute.xlu0 0
    %6576 = vperm.xlu0 %6575, %v4706
    %v6577 = vpop.permute.xlu0 %6576
    %6580 = vset.pattern.permute.xlu0 0
    %6581 = vperm.xlu0 %6580, %v4707
    %v6582 = vpop.permute.xlu0 %6581
    %6585 = vset.pattern.permute.xlu0 0
    %6586 = vperm.xlu0 %6585, %v4708
    %v6587 = vpop.permute.xlu0 %6586
    %6590 = vset.pattern.permute.xlu0 0
    %6591 = vperm.xlu0 %6590, %v4709
    %v6592 = vpop.permute.xlu0 %6591
    %6595 = vset.pattern.permute.xlu0 0
    %6596 = vperm.xlu0 %6595, %v4710
    %v6597 = vpop.permute.xlu0 %6596
    %6600 = vset.pattern.permute.xlu0 0
    %6601 = vperm.xlu0 %6600, %v4711
    %v6602 = vpop.permute.xlu0 %6601
    %6605 = vset.pattern.permute.xlu0 0
    %6606 = vperm.xlu0 %6605, %v4712
    %v6607 = vpop.permute.xlu0 %6606
    %6610 = vset.pattern.permute.xlu0 0
    %6611 = vperm.xlu0 %6610, %v4713
    %v6612 = vpop.permute.xlu0 %6611
    %6615 = vset.pattern.permute.xlu0 0
    %6616 = vperm.xlu0 %6615, %v4714
    %v6617 = vpop.permute.xlu0 %6616
    %6620 = vset.pattern.permute.xlu0 0
    %6621 = vperm.xlu0 %6620, %v4715
    %v6622 = vpop.permute.xlu0 %6621
    %6625 = vset.pattern.permute.xlu0 0
    %6626 = vperm.xlu0 %6625, %v4716
    %v6627 = vpop.permute.xlu0 %6626
    %6630 = vset.pattern.permute.xlu0 0
    %6631 = vperm.xlu0 %6630, %v4717
    %v6632 = vpop.permute.xlu0 %6631
    %6635 = vset.pattern.permute.xlu0 0
    %6636 = vperm.xlu0 %6635, %v4718
    %v6637 = vpop.permute.xlu0 %6636
    %6640 = vset.pattern.permute.xlu0 0
    %6641 = vperm.xlu0 %6640, %v4719
    %v6642 = vpop.permute.xlu0 %6641
    %6645 = vset.pattern.permute.xlu0 0
    %6646 = vperm.xlu0 %6645, %v4720
    %v6647 = vpop.permute.xlu0 %6646
    %6650 = vset.pattern.permute.xlu0 0
    %6651 = vperm.xlu0 %6650, %v4721
    %v6652 = vpop.permute.xlu0 %6651
    %6655 = vset.pattern.permute.xlu0 0
    %6656 = vperm.xlu0 %6655, %v4722
    %v6657 = vpop.permute.xlu0 %6656
    %6660 = vset.pattern.permute.xlu0 0
    %6661 = vperm.xlu0 %6660, %v4723
    %v6662 = vpop.permute.xlu0 %6661
    %6665 = vset.pattern.permute.xlu0 0
    %6666 = vperm.xlu0 %6665, %v4724
    %v6667 = vpop.permute.xlu0 %6666
    %6670 = vset.pattern.permute.xlu0 0
    %6671 = vperm.xlu0 %6670, %v4725
    %v6672 = vpop.permute.xlu0 %6671
    %6675 = vset.pattern.permute.xlu0 0
    %6676 = vperm.xlu0 %6675, %v4726
    %v6677 = vpop.permute.xlu0 %6676
    %6680 = vset.pattern.permute.xlu0 0
    %6681 = vperm.xlu0 %6680, %v4727
    %v6682 = vpop.permute.xlu0 %6681
    %6685 = vset.pattern.permute.xlu0 0
    %6686 = vperm.xlu0 %6685, %v4728
    %v6687 = vpop.permute.xlu0 %6686
    %6690 = vset.pattern.permute.xlu0 0
    %6691 = vperm.xlu0 %6690, %v4729
    %v6692 = vpop.permute.xlu0 %6691
    %6695 = vset.pattern.permute.xlu0 0
    %6696 = vperm.xlu0 %6695, %v4730
    %v6697 = vpop.permute.xlu0 %6696
    %6700 = vset.pattern.permute.xlu0 0
    %6701 = vperm.xlu0 %6700, %v4731
    %v6702 = vpop.permute.xlu0 %6701
    %6705 = vset.pattern.permute.xlu0 0
    %6706 = vperm.xlu0 %6705, %v4732
    %v6707 = vpop.permute.xlu0 %6706
    %6710 = vset.pattern.permute.xlu0 0
    %6711 = vperm.xlu0 %6710, %v4733
    %v6712 = vpop.permute.xlu0 %6711
    %6715 = vset.pattern.permute.xlu0 0
    %6716 = vperm.xlu0 %6715, %v4734
    %v6717 = vpop.permute.xlu0 %6716
    %6720 = vset.pattern.permute.xlu0 0
    %6721 = vperm.xlu0 %6720, %v4735
    %v6722 = vpop.permute.xlu0 %6721
    %6725 = vset.pattern.permute.xlu0 0
    %6726 = vperm.xlu0 %6725, %v4736
    %v6727 = vpop.permute.xlu0 %6726
    %6730 = vset.pattern.permute.xlu0 0
    %6731 = vperm.xlu0 %6730, %v4737
    %v6732 = vpop.permute.xlu0 %6731
    %6735 = vset.pattern.permute.xlu0 0
    %6736 = vperm.xlu0 %6735, %v4738
    %v6737 = vpop.permute.xlu0 %6736
    %6740 = vset.pattern.permute.xlu0 0
    %6741 = vperm.xlu0 %6740, %v4739
    %v6742 = vpop.permute.xlu0 %6741
    %6745 = vset.pattern.permute.xlu0 0
    %6746 = vperm.xlu0 %6745, %v4740
    %v6747 = vpop.permute.xlu0 %6746
    %6750 = vset.pattern.permute.xlu0 0
    %6751 = vperm.xlu0 %6750, %v4741
    %v6752 = vpop.permute.xlu0 %6751
    %6755 = vset.pattern.permute.xlu0 0
    %6756 = vperm.xlu0 %6755, %v4742
    %v6757 = vpop.permute.xlu0 %6756
    %6760 = vset.pattern.permute.xlu0 0
    %6761 = vperm.xlu0 %6760, %v4743
    %v6762 = vpop.permute.xlu0 %6761
    %6765 = vset.pattern.permute.xlu0 0
    %6766 = vperm.xlu0 %6765, %v4744
    %v6767 = vpop.permute.xlu0 %6766
    %6770 = vset.pattern.permute.xlu0 0
    %6771 = vperm.xlu0 %6770, %v4745
    %v6772 = vpop.permute.xlu0 %6771
    %6775 = vset.pattern.permute.xlu0 0
    %6776 = vperm.xlu0 %6775, %v4746
    %v6777 = vpop.permute.xlu0 %6776
    %6780 = vset.pattern.permute.xlu0 0
    %6781 = vperm.xlu0 %6780, %v4747
    %v6782 = vpop.permute.xlu0 %6781
    %6785 = vset.pattern.permute.xlu0 0
    %6786 = vperm.xlu0 %6785, %v4748
    %v6787 = vpop.permute.xlu0 %6786
    %6790 = vset.pattern.permute.xlu0 0
    %6791 = vperm.xlu0 %6790, %v4749
    %v6792 = vpop.permute.xlu0 %6791
    %6795 = vset.pattern.permute.xlu0 0
    %6796 = vperm.xlu0 %6795, %v4750
    %v6797 = vpop.permute.xlu0 %6796
    %6800 = vset.pattern.permute.xlu0 0
    %6801 = vperm.xlu0 %6800, %v4751
    %v6802 = vpop.permute.xlu0 %6801
    %6805 = vset.pattern.permute.xlu0 0
    %6806 = vperm.xlu0 %6805, %v4752
    %v6807 = vpop.permute.xlu0 %6806
    %6810 = vset.pattern.permute.xlu0 0
    %6811 = vperm.xlu0 %6810, %v4753
    %v6812 = vpop.permute.xlu0 %6811
    %6815 = vset.pattern.permute.xlu0 0
    %6816 = vperm.xlu0 %6815, %v4754
    %v6817 = vpop.permute.xlu0 %6816
    %6820 = vset.pattern.permute.xlu0 0
    %6821 = vperm.xlu0 %6820, %v4755
    %v6822 = vpop.permute.xlu0 %6821
    %6825 = vset.pattern.permute.xlu0 0
    %6826 = vperm.xlu0 %6825, %v4756
    %v6827 = vpop.permute.xlu0 %6826
    %6830 = vset.pattern.permute.xlu0 0
    %6831 = vperm.xlu0 %6830, %v4757
    %v6832 = vpop.permute.xlu0 %6831
    %6835 = vset.pattern.permute.xlu0 0
    %6836 = vperm.xlu0 %6835, %v4758
    %v6837 = vpop.permute.xlu0 %6836
    %6840 = vset.pattern.permute.xlu0 0
    %6841 = vperm.xlu0 %6840, %v4759
    %v6842 = vpop.permute.xlu0 %6841
    %6845 = vset.pattern.permute.xlu0 0
    %6846 = vperm.xlu0 %6845, %v4760
    %v6847 = vpop.permute.xlu0 %6846
    %6850 = vset.pattern.permute.xlu0 0
    %6851 = vperm.xlu0 %6850, %v4761
    %v6852 = vpop.permute.xlu0 %6851
    %6855 = vset.pattern.permute.xlu0 0
    %6856 = vperm.xlu0 %6855, %v4762
    %v6857 = vpop.permute.xlu0 %6856
    %6860 = vset.pattern.permute.xlu0 0
    %6861 = vperm.xlu0 %6860, %v4763
    %v6862 = vpop.permute.xlu0 %6861
    %6865 = vset.pattern.permute.xlu0 0
    %6866 = vperm.xlu0 %6865, %v4764
    %v6867 = vpop.permute.xlu0 %6866
    %6870 = vset.pattern.permute.xlu0 0
    %6871 = vperm.xlu0 %6870, %v4765
    %v6872 = vpop.permute.xlu0 %6871
    %6875 = vset.pattern.permute.xlu0 0
    %6876 = vperm.xlu0 %6875, %v4766
    %v6877 = vpop.permute.xlu0 %6876
    %6880 = vset.pattern.permute.xlu0 0
    %6881 = vperm.xlu0 %6880, %v4767
    %v6882 = vpop.permute.xlu0 %6881
    %6885 = vset.pattern.permute.xlu0 0
    %6886 = vperm.xlu0 %6885, %v4768
    %v6887 = vpop.permute.xlu0 %6886
    %6890 = vset.pattern.permute.xlu0 0
    %6891 = vperm.xlu0 %6890, %v4769
    %v6892 = vpop.permute.xlu0 %6891
    %6895 = vset.pattern.permute.xlu0 0
    %6896 = vperm.xlu0 %6895, %v4770
    %v6897 = vpop.permute.xlu0 %6896
    %6900 = vset.pattern.permute.xlu0 0
    %6901 = vperm.xlu0 %6900, %v4771
    %v6902 = vpop.permute.xlu0 %6901
    %6905 = vset.pattern.permute.xlu0 0
    %6906 = vperm.xlu0 %6905, %v4772
    %v6907 = vpop.permute.xlu0 %6906
    %6910 = vset.pattern.permute.xlu0 0
    %6911 = vperm.xlu0 %6910, %v4773
    %v6912 = vpop.permute.xlu0 %6911
    %6915 = vset.pattern.permute.xlu0 0
    %6916 = vperm.xlu0 %6915, %v4774
    %v6917 = vpop.permute.xlu0 %6916
    %6920 = vset.pattern.permute.xlu0 0
    %6921 = vperm.xlu0 %6920, %v4775
    %v6922 = vpop.permute.xlu0 %6921
    %6925 = vset.pattern.permute.xlu0 0
    %6926 = vperm.xlu0 %6925, %v4776
    %v6927 = vpop.permute.xlu0 %6926
    %6930 = vset.pattern.permute.xlu0 0
    %6931 = vperm.xlu0 %6930, %v4777
    %v6932 = vpop.permute.xlu0 %6931
    %6935 = vset.pattern.permute.xlu0 0
    %6936 = vperm.xlu0 %6935, %v4778
    %v6937 = vpop.permute.xlu0 %6936
    %6940 = vset.pattern.permute.xlu0 0
    %6941 = vperm.xlu0 %6940, %v4779
    %v6942 = vpop.permute.xlu0 %6941
    %6945 = vset.pattern.permute.xlu0 0
    %6946 = vperm.xlu0 %6945, %v4780
    %v6947 = vpop.permute.xlu0 %6946
    %6950 = vset.pattern.permute.xlu0 0
    %6951 = vperm.xlu0 %6950, %v4781
    %v6952 = vpop.permute.xlu0 %6951
    %6955 = vset.pattern.permute.xlu0 0
    %6956 = vperm.xlu0 %6955, %v4782
    %v6957 = vpop.permute.xlu0 %6956
    %6960 = vset.pattern.permute.xlu0 0
    %6961 = vperm.xlu0 %6960, %v4783
    %v6962 = vpop.permute.xlu0 %6961
    %6965 = vset.pattern.permute.xlu0 0
    %6966 = vperm.xlu0 %6965, %v4784
    %v6967 = vpop.permute.xlu0 %6966
    %6970 = vset.pattern.permute.xlu0 0
    %6971 = vperm.xlu0 %6970, %v4785
    %v6972 = vpop.permute.xlu0 %6971
    %6975 = vset.pattern.permute.xlu0 0
    %6976 = vperm.xlu0 %6975, %v4786
    %v6977 = vpop.permute.xlu0 %6976
    %6980 = vset.pattern.permute.xlu0 0
    %6981 = vperm.xlu0 %6980, %v4787
    %v6982 = vpop.permute.xlu0 %6981
    %6985 = vset.pattern.permute.xlu0 0
    %6986 = vperm.xlu0 %6985, %v4788
    %v6987 = vpop.permute.xlu0 %6986
    %6990 = vset.pattern.permute.xlu0 0
    %6991 = vperm.xlu0 %6990, %v4789
    %v6992 = vpop.permute.xlu0 %6991
    %6995 = vset.pattern.permute.xlu0 0
    %6996 = vperm.xlu0 %6995, %v4790
    %v6997 = vpop.permute.xlu0 %6996
    %7000 = vset.pattern.permute.xlu0 0
    %7001 = vperm.xlu0 %7000, %v4791
    %v7002 = vpop.permute.xlu0 %7001
    %7005 = vset.pattern.permute.xlu0 0
    %7006 = vperm.xlu0 %7005, %v4792
    %v7007 = vpop.permute.xlu0 %7006
    %7010 = vset.pattern.permute.xlu0 0
    %7011 = vperm.xlu0 %7010, %v4793
    %v7012 = vpop.permute.xlu0 %7011
    %7015 = vset.pattern.permute.xlu0 0
    %7016 = vperm.xlu0 %7015, %v4794
    %v7017 = vpop.permute.xlu0 %7016
    %7020 = vset.pattern.permute.xlu0 0
    %7021 = vperm.xlu0 %7020, %v4795
    %v7022 = vpop.permute.xlu0 %7021
    %7025 = vset.pattern.permute.xlu0 0
    %7026 = vperm.xlu0 %7025, %v4796
    %v7027 = vpop.permute.xlu0 %7026
    %7030 = vset.pattern.permute.xlu0 0
    %7031 = vperm.xlu0 %7030, %v4797
    %v7032 = vpop.permute.xlu0 %7031
    %7035 = vset.pattern.permute.xlu0 0
    %7036 = vperm.xlu0 %7035, %v4798
    %v7037 = vpop.permute.xlu0 %7036
    %7040 = vset.pattern.permute.xlu0 0
    %7041 = vperm.xlu0 %7040, %v4799
    %v7042 = vpop.permute.xlu0 %7041
    %7045 = vset.pattern.permute.xlu0 0
    %7046 = vperm.xlu0 %7045, %v4800
    %v7047 = vpop.permute.xlu0 %7046
    %7050 = vset.pattern.permute.xlu0 0
    %7051 = vperm.xlu0 %7050, %v4801
    %v7052 = vpop.permute.xlu0 %7051
    %7055 = vset.pattern.permute.xlu0 0
    %7056 = vperm.xlu0 %7055, %v4802
    %v7057 = vpop.permute.xlu0 %7056
    %7060 = vset.pattern.permute.xlu0 0
    %7061 = vperm.xlu0 %7060, %v4803
    %v7062 = vpop.permute.xlu0 %7061
    %7065 = vset.pattern.permute.xlu0 0
    %7066 = vperm.xlu0 %7065, %v4804
    %v7067 = vpop.permute.xlu0 %7066
    %7070 = vset.pattern.permute.xlu0 0
    %7071 = vperm.xlu0 %7070, %v4805
    %v7072 = vpop.permute.xlu0 %7071
    %7075 = vset.pattern.permute.xlu0 0
    %7076 = vperm.xlu0 %7075, %v4806
    %v7077 = vpop.permute.xlu0 %7076
    %7080 = vset.pattern.permute.xlu0 0
    %7081 = vperm.xlu0 %7080, %v4807
    %v7082 = vpop.permute.xlu0 %7081
    %7085 = vset.pattern.permute.xlu0 0
    %7086 = vperm.xlu0 %7085, %v4808
    %v7087 = vpop.permute.xlu0 %7086
    %7090 = vset.pattern.permute.xlu0 0
    %7091 = vperm.xlu0 %7090, %v4809
    %v7092 = vpop.permute.xlu0 %7091
    %7095 = vset.pattern.permute.xlu0 0
    %7096 = vperm.xlu0 %7095, %v4810
    %v7097 = vpop.permute.xlu0 %7096
    %7100 = vset.pattern.permute.xlu0 0
    %7101 = vperm.xlu0 %7100, %v4811
    %v7102 = vpop.permute.xlu0 %7101
    %7105 = vset.pattern.permute.xlu0 0
    %7106 = vperm.xlu0 %7105, %v4812
    %v7107 = vpop.permute.xlu0 %7106
    %7110 = vset.pattern.permute.xlu0 0
    %7111 = vperm.xlu0 %7110, %v4813
    %v7112 = vpop.permute.xlu0 %7111
    %7115 = vset.pattern.permute.xlu0 0
    %7116 = vperm.xlu0 %7115, %v4814
    %v7117 = vpop.permute.xlu0 %7116
    %7120 = vset.pattern.permute.xlu0 0
    %7121 = vperm.xlu0 %7120, %v4815
    %v7122 = vpop.permute.xlu0 %7121
    %7125 = vset.pattern.permute.xlu0 0
    %7126 = vperm.xlu0 %7125, %v4816
    %v7127 = vpop.permute.xlu0 %7126
    %7130 = vset.pattern.permute.xlu0 0
    %7131 = vperm.xlu0 %7130, %v4817
    %v7132 = vpop.permute.xlu0 %7131
    %7135 = vset.pattern.permute.xlu0 0
    %7136 = vperm.xlu0 %7135, %v4818
    %v7137 = vpop.permute.xlu0 %7136
    %7140 = vset.pattern.permute.xlu0 0
    %7141 = vperm.xlu0 %7140, %v4819
    %v7142 = vpop.permute.xlu0 %7141
    %7145 = vset.pattern.permute.xlu0 0
    %7146 = vperm.xlu0 %7145, %v4820
    %v7147 = vpop.permute.xlu0 %7146
    %7150 = vset.pattern.permute.xlu0 0
    %7151 = vperm.xlu0 %7150, %v4821
    %v7152 = vpop.permute.xlu0 %7151
    %7155 = vset.pattern.permute.xlu0 0
    %7156 = vperm.xlu0 %7155, %v4822
    %v7157 = vpop.permute.xlu0 %7156
    %7160 = vset.pattern.permute.xlu0 0
    %7161 = vperm.xlu0 %7160, %v4823
    %v7162 = vpop.permute.xlu0 %7161
    %7165 = vset.pattern.permute.xlu0 0
    %7166 = vperm.xlu0 %7165, %v4824
    %v7167 = vpop.permute.xlu0 %7166
    %7170 = vset.pattern.permute.xlu0 0
    %7171 = vperm.xlu0 %7170, %v4825
    %v7172 = vpop.permute.xlu0 %7171
    %7175 = vset.pattern.permute.xlu0 0
    %7176 = vperm.xlu0 %7175, %v4826
    %v7177 = vpop.permute.xlu0 %7176
    %7180 = vset.pattern.permute.xlu0 0
    %7181 = vperm.xlu0 %7180, %v4827
    %v7182 = vpop.permute.xlu0 %7181
    %7185 = vset.pattern.permute.xlu0 0
    %7186 = vperm.xlu0 %7185, %v4828
    %v7187 = vpop.permute.xlu0 %7186
    %7190 = vset.pattern.permute.xlu0 0
    %7191 = vperm.xlu0 %7190, %v4829
    %v7192 = vpop.permute.xlu0 %7191
    %7195 = vset.pattern.permute.xlu0 0
    %7196 = vperm.xlu0 %7195, %v4830
    %v7197 = vpop.permute.xlu0 %7196
    %7200 = vset.pattern.permute.xlu0 0
    %7201 = vperm.xlu0 %7200, %v4831
    %v7202 = vpop.permute.xlu0 %7201
    %7205 = vset.pattern.permute.xlu0 0
    %7206 = vperm.xlu0 %7205, %v4832
    %v7207 = vpop.permute.xlu0 %7206
    %7210 = vset.pattern.permute.xlu0 0
    %7211 = vperm.xlu0 %7210, %v4833
    %v7212 = vpop.permute.xlu0 %7211
    %7215 = vset.pattern.permute.xlu0 0
    %7216 = vperm.xlu0 %7215, %v4834
    %v7217 = vpop.permute.xlu0 %7216
    %7220 = vset.pattern.permute.xlu0 0
    %7221 = vperm.xlu0 %7220, %v4835
    %v7222 = vpop.permute.xlu0 %7221
    %7225 = vset.pattern.permute.xlu0 0
    %7226 = vperm.xlu0 %7225, %v4836
    %v7227 = vpop.permute.xlu0 %7226
    %7230 = vset.pattern.permute.xlu0 0
    %7231 = vperm.xlu0 %7230, %v4837
    %v7232 = vpop.permute.xlu0 %7231
    %7235 = vset.pattern.permute.xlu0 0
    %7236 = vperm.xlu0 %7235, %v4838
    %v7237 = vpop.permute.xlu0 %7236
    %7240 = vset.pattern.permute.xlu0 0
    %7241 = vperm.xlu0 %7240, %v4839
    %v7242 = vpop.permute.xlu0 %7241
    %7245 = vset.pattern.permute.xlu0 0
    %7246 = vperm.xlu0 %7245, %v4840
    %v7247 = vpop.permute.xlu0 %7246
    %7250 = vset.pattern.permute.xlu0 0
    %7251 = vperm.xlu0 %7250, %v4841
    %v7252 = vpop.permute.xlu0 %7251
    %7255 = vset.pattern.permute.xlu0 0
    %7256 = vperm.xlu0 %7255, %v4842
    %v7257 = vpop.permute.xlu0 %7256
    %7260 = vset.pattern.permute.xlu0 0
    %7261 = vperm.xlu0 %7260, %v4843
    %v7262 = vpop.permute.xlu0 %7261
    %7265 = vset.pattern.permute.xlu0 0
    %7266 = vperm.xlu0 %7265, %v4844
    %v7267 = vpop.permute.xlu0 %7266
    %7270 = vset.pattern.permute.xlu0 0
    %7271 = vperm.xlu0 %7270, %v4845
    %v7272 = vpop.permute.xlu0 %7271
    %7275 = vset.pattern.permute.xlu0 0
    %7276 = vperm.xlu0 %7275, %v4846
    %v7277 = vpop.permute.xlu0 %7276
    %7280 = vset.pattern.permute.xlu0 0
    %7281 = vperm.xlu0 %7280, %v4847
    %v7282 = vpop.permute.xlu0 %7281
    %7285 = vset.pattern.permute.xlu0 0
    %7286 = vperm.xlu0 %7285, %v4848
    %v7287 = vpop.permute.xlu0 %7286
    %7290 = vset.pattern.permute.xlu0 0
    %7291 = vperm.xlu0 %7290, %v4849
    %v7292 = vpop.permute.xlu0 %7291
    %7295 = vset.pattern.permute.xlu0 0
    %7296 = vperm.xlu0 %7295, %v4850
    %v7297 = vpop.permute.xlu0 %7296
    %7300 = vset.pattern.permute.xlu0 0
    %7301 = vperm.xlu0 %7300, %v4851
    %v7302 = vpop.permute.xlu0 %7301
    %7305 = vset.pattern.permute.xlu0 0
    %7306 = vperm.xlu0 %7305, %v4852
    %v7307 = vpop.permute.xlu0 %7306
    %7310 = vset.pattern.permute.xlu0 0
    %7311 = vperm.xlu0 %7310, %v4853
    %v7312 = vpop.permute.xlu0 %7311
    %7315 = vset.pattern.permute.xlu0 0
    %7316 = vperm.xlu0 %7315, %v4854
    %v7317 = vpop.permute.xlu0 %7316
    %7320 = vset.pattern.permute.xlu0 0
    %7321 = vperm.xlu0 %7320, %v4855
    %v7322 = vpop.permute.xlu0 %7321
    %7325 = vset.pattern.permute.xlu0 0
    %7326 = vperm.xlu0 %7325, %v4856
    %v7327 = vpop.permute.xlu0 %7326
    %7330 = vset.pattern.permute.xlu0 0
    %7331 = vperm.xlu0 %7330, %v4857
    %v7332 = vpop.permute.xlu0 %7331
    %7335 = vset.pattern.permute.xlu0 0
    %7336 = vperm.xlu0 %7335, %v4858
    %v7337 = vpop.permute.xlu0 %7336
    %7340 = vset.pattern.permute.xlu0 0
    %7341 = vperm.xlu0 %7340, %v4859
    %v7342 = vpop.permute.xlu0 %7341
    %7345 = vset.pattern.permute.xlu0 0
    %7346 = vperm.xlu0 %7345, %v4860
    %v7347 = vpop.permute.xlu0 %7346
    %7350 = vset.pattern.permute.xlu0 0
    %7351 = vperm.xlu0 %7350, %v4861
    %v7352 = vpop.permute.xlu0 %7351
    %7355 = vset.pattern.permute.xlu0 0
    %7356 = vperm.xlu0 %7355, %v4862
    %v7357 = vpop.permute.xlu0 %7356
    %7360 = vset.pattern.permute.xlu0 0
    %7361 = vperm.xlu0 %7360, %v4863
    %v7362 = vpop.permute.xlu0 %7361
    %7365 = vset.pattern.permute.xlu0 0
    %7366 = vperm.xlu0 %7365, %v4864
    %v7367 = vpop.permute.xlu0 %7366
    %7370 = vset.pattern.permute.xlu0 0
    %7371 = vperm.xlu0 %7370, %v4865
    %v7372 = vpop.permute.xlu0 %7371
    %7375 = vset.pattern.permute.xlu0 0
    %7376 = vperm.xlu0 %7375, %v4866
    %v7377 = vpop.permute.xlu0 %7376
    %7380 = vset.pattern.permute.xlu0 0
    %7381 = vperm.xlu0 %7380, %v4867
    %v7382 = vpop.permute.xlu0 %7381
    %7385 = vset.pattern.permute.xlu0 0
    %7386 = vperm.xlu0 %7385, %v4868
    %v7387 = vpop.permute.xlu0 %7386
    %7390 = vset.pattern.permute.xlu0 0
    %7391 = vperm.xlu0 %7390, %v4869
    %v7392 = vpop.permute.xlu0 %7391
    %7395 = vset.pattern.permute.xlu0 0
    %7396 = vperm.xlu0 %7395, %v4870
    %v7397 = vpop.permute.xlu0 %7396
    %7400 = vset.pattern.permute.xlu0 0
    %7401 = vperm.xlu0 %7400, %v4871
    %v7402 = vpop.permute.xlu0 %7401
    %7405 = vset.pattern.permute.xlu0 0
    %7406 = vperm.xlu0 %7405, %v4872
    %v7407 = vpop.permute.xlu0 %7406
    %7410 = vset.pattern.permute.xlu0 0
    %7411 = vperm.xlu0 %7410, %v4873
    %v7412 = vpop.permute.xlu0 %7411
    %7415 = vset.pattern.permute.xlu0 0
    %7416 = vperm.xlu0 %7415, %v4874
    %v7417 = vpop.permute.xlu0 %7416
    %7420 = vset.pattern.permute.xlu0 0
    %7421 = vperm.xlu0 %7420, %v4875
    %v7422 = vpop.permute.xlu0 %7421
    %7425 = vset.pattern.permute.xlu0 0
    %7426 = vperm.xlu0 %7425, %v4876
    %v7427 = vpop.permute.xlu0 %7426
    %7430 = vset.pattern.permute.xlu0 0
    %7431 = vperm.xlu0 %7430, %v4877
    %v7432 = vpop.permute.xlu0 %7431
    %7435 = vset.pattern.permute.xlu0 0
    %7436 = vperm.xlu0 %7435, %v4878
    %v7437 = vpop.permute.xlu0 %7436
    %v7439 = vsub.f32 %v3855, %v4882
    %v7440 = vsub.f32 %v3856, %v4887
    %v7441 = vsub.f32 %v3857, %v4892
    %v7442 = vsub.f32 %v3858, %v4897
    %v7443 = vsub.f32 %v3859, %v4902
    %v7444 = vsub.f32 %v3860, %v4907
    %v7445 = vsub.f32 %v3861, %v4912
    %v7446 = vsub.f32 %v3862, %v4917
    %v7447 = vsub.f32 %v3863, %v4922
    %v7448 = vsub.f32 %v3864, %v4927
    %v7449 = vsub.f32 %v3865, %v4932
    %v7450 = vsub.f32 %v3866, %v4937
    %v7451 = vsub.f32 %v3867, %v4942
    %v7452 = vsub.f32 %v3868, %v4947
    %v7453 = vsub.f32 %v3869, %v4952
    %v7454 = vsub.f32 %v3870, %v4957
    %v7455 = vsub.f32 %v3871, %v4962
    %v7456 = vsub.f32 %v3872, %v4967
    %v7457 = vsub.f32 %v3873, %v4972
    %v7458 = vsub.f32 %v3874, %v4977
    %v7459 = vsub.f32 %v3875, %v4982
    %v7460 = vsub.f32 %v3876, %v4987
    %v7461 = vsub.f32 %v3877, %v4992
    %v7462 = vsub.f32 %v3878, %v4997
    %v7463 = vsub.f32 %v3879, %v5002
    %v7464 = vsub.f32 %v3880, %v5007
    %v7465 = vsub.f32 %v3881, %v5012
    %v7466 = vsub.f32 %v3882, %v5017
    %v7467 = vsub.f32 %v3883, %v5022
    %v7468 = vsub.f32 %v3884, %v5027
    %v7469 = vsub.f32 %v3885, %v5032
    %v7470 = vsub.f32 %v3886, %v5037
    %v7471 = vsub.f32 %v3887, %v5042
    %v7472 = vsub.f32 %v3888, %v5047
    %v7473 = vsub.f32 %v3889, %v5052
    %v7474 = vsub.f32 %v3890, %v5057
    %v7475 = vsub.f32 %v3891, %v5062
    %v7476 = vsub.f32 %v3892, %v5067
    %v7477 = vsub.f32 %v3893, %v5072
    %v7478 = vsub.f32 %v3894, %v5077
    %v7479 = vsub.f32 %v3895, %v5082
    %v7480 = vsub.f32 %v3896, %v5087
    %v7481 = vsub.f32 %v3897, %v5092
    %v7482 = vsub.f32 %v3898, %v5097
    %v7483 = vsub.f32 %v3899, %v5102
    %v7484 = vsub.f32 %v3900, %v5107
    %v7485 = vsub.f32 %v3901, %v5112
    %v7486 = vsub.f32 %v3902, %v5117
    %v7487 = vsub.f32 %v3903, %v5122
    %v7488 = vsub.f32 %v3904, %v5127
    %v7489 = vsub.f32 %v3905, %v5132
    %v7490 = vsub.f32 %v3906, %v5137
    %v7491 = vsub.f32 %v3907, %v5142
    %v7492 = vsub.f32 %v3908, %v5147
    %v7493 = vsub.f32 %v3909, %v5152
    %v7494 = vsub.f32 %v3910, %v5157
    %v7495 = vsub.f32 %v3911, %v5162
    %v7496 = vsub.f32 %v3912, %v5167
    %v7497 = vsub.f32 %v3913, %v5172
    %v7498 = vsub.f32 %v3914, %v5177
    %v7499 = vsub.f32 %v3915, %v5182
    %v7500 = vsub.f32 %v3916, %v5187
    %v7501 = vsub.f32 %v3917, %v5192
    %v7502 = vsub.f32 %v3918, %v5197
    %v7503 = vsub.f32 %v3919, %v5202
    %v7504 = vsub.f32 %v3920, %v5207
    %v7505 = vsub.f32 %v3921, %v5212
    %v7506 = vsub.f32 %v3922, %v5217
    %v7507 = vsub.f32 %v3923, %v5222
    %v7508 = vsub.f32 %v3924, %v5227
    %v7509 = vsub.f32 %v3925, %v5232
    %v7510 = vsub.f32 %v3926, %v5237
    %v7511 = vsub.f32 %v3927, %v5242
    %v7512 = vsub.f32 %v3928, %v5247
    %v7513 = vsub.f32 %v3929, %v5252
    %v7514 = vsub.f32 %v3930, %v5257
    %v7515 = vsub.f32 %v3931, %v5262
    %v7516 = vsub.f32 %v3932, %v5267
    %v7517 = vsub.f32 %v3933, %v5272
    %v7518 = vsub.f32 %v3934, %v5277
    %v7519 = vsub.f32 %v3935, %v5282
    %v7520 = vsub.f32 %v3936, %v5287
    %v7521 = vsub.f32 %v3937, %v5292
    %v7522 = vsub.f32 %v3938, %v5297
    %v7523 = vsub.f32 %v3939, %v5302
    %v7524 = vsub.f32 %v3940, %v5307
    %v7525 = vsub.f32 %v3941, %v5312
    %v7526 = vsub.f32 %v3942, %v5317
    %v7527 = vsub.f32 %v3943, %v5322
    %v7528 = vsub.f32 %v3944, %v5327
    %v7529 = vsub.f32 %v3945, %v5332
    %v7530 = vsub.f32 %v3946, %v5337
    %v7531 = vsub.f32 %v3947, %v5342
    %v7532 = vsub.f32 %v3948, %v5347
    %v7533 = vsub.f32 %v3949, %v5352
    %v7534 = vsub.f32 %v3950, %v5357
    %v7535 = vsub.f32 %v3951, %v5362
    %v7536 = vsub.f32 %v3952, %v5367
    %v7537 = vsub.f32 %v3953, %v5372
    %v7538 = vsub.f32 %v3954, %v5377
    %v7539 = vsub.f32 %v3955, %v5382
    %v7540 = vsub.f32 %v3956, %v5387
    %v7541 = vsub.f32 %v3957, %v5392
    %v7542 = vsub.f32 %v3958, %v5397
    %v7543 = vsub.f32 %v3959, %v5402
    %v7544 = vsub.f32 %v3960, %v5407
    %v7545 = vsub.f32 %v3961, %v5412
    %v7546 = vsub.f32 %v3962, %v5417
    %v7547 = vsub.f32 %v3963, %v5422
    %v7548 = vsub.f32 %v3964, %v5427
    %v7549 = vsub.f32 %v3965, %v5432
    %v7550 = vsub.f32 %v3966, %v5437
    %v7551 = vsub.f32 %v3967, %v5442
    %v7552 = vsub.f32 %v3968, %v5447
    %v7553 = vsub.f32 %v3969, %v5452
    %v7554 = vsub.f32 %v3970, %v5457
    %v7555 = vsub.f32 %v3971, %v5462
    %v7556 = vsub.f32 %v3972, %v5467
    %v7557 = vsub.f32 %v3973, %v5472
    %v7558 = vsub.f32 %v3974, %v5477
    %v7559 = vsub.f32 %v3975, %v5482
    %v7560 = vsub.f32 %v3976, %v5487
    %v7561 = vsub.f32 %v3977, %v5492
    %v7562 = vsub.f32 %v3978, %v5497
    %v7563 = vsub.f32 %v3979, %v5502
    %v7564 = vsub.f32 %v3980, %v5507
    %v7565 = vsub.f32 %v3981, %v5512
    %v7566 = vsub.f32 %v3982, %v5517
    %v7567 = vsub.f32 %v3983, %v5522
    %v7568 = vsub.f32 %v3984, %v5527
    %v7569 = vsub.f32 %v3985, %v5532
    %v7570 = vsub.f32 %v3986, %v5537
    %v7571 = vsub.f32 %v3987, %v5542
    %v7572 = vsub.f32 %v3988, %v5547
    %v7573 = vsub.f32 %v3989, %v5552
    %v7574 = vsub.f32 %v3990, %v5557
    %v7575 = vsub.f32 %v3991, %v5562
    %v7576 = vsub.f32 %v3992, %v5567
    %v7577 = vsub.f32 %v3993, %v5572
    %v7578 = vsub.f32 %v3994, %v5577
    %v7579 = vsub.f32 %v3995, %v5582
    %v7580 = vsub.f32 %v3996, %v5587
    %v7581 = vsub.f32 %v3997, %v5592
    %v7582 = vsub.f32 %v3998, %v5597
    %v7583 = vsub.f32 %v3999, %v5602
    %v7584 = vsub.f32 %v4000, %v5607
    %v7585 = vsub.f32 %v4001, %v5612
    %v7586 = vsub.f32 %v4002, %v5617
    %v7587 = vsub.f32 %v4003, %v5622
    %v7588 = vsub.f32 %v4004, %v5627
    %v7589 = vsub.f32 %v4005, %v5632
    %v7590 = vsub.f32 %v4006, %v5637
    %v7591 = vsub.f32 %v4007, %v5642
    %v7592 = vsub.f32 %v4008, %v5647
    %v7593 = vsub.f32 %v4009, %v5652
    %v7594 = vsub.f32 %v4010, %v5657
    %v7595 = vsub.f32 %v4011, %v5662
    %v7596 = vsub.f32 %v4012, %v5667
    %v7597 = vsub.f32 %v4013, %v5672
    %v7598 = vsub.f32 %v4014, %v5677
    %v7599 = vsub.f32 %v4015, %v5682
    %v7600 = vsub.f32 %v4016, %v5687
    %v7601 = vsub.f32 %v4017, %v5692
    %v7602 = vsub.f32 %v4018, %v5697
    %v7603 = vsub.f32 %v4019, %v5702
    %v7604 = vsub.f32 %v4020, %v5707
    %v7605 = vsub.f32 %v4021, %v5712
    %v7606 = vsub.f32 %v4022, %v5717
    %v7607 = vsub.f32 %v4023, %v5722
    %v7608 = vsub.f32 %v4024, %v5727
    %v7609 = vsub.f32 %v4025, %v5732
    %v7610 = vsub.f32 %v4026, %v5737
    %v7611 = vsub.f32 %v4027, %v5742
    %v7612 = vsub.f32 %v4028, %v5747
    %v7613 = vsub.f32 %v4029, %v5752
    %v7614 = vsub.f32 %v4030, %v5757
    %v7615 = vsub.f32 %v4031, %v5762
    %v7616 = vsub.f32 %v4032, %v5767
    %v7617 = vsub.f32 %v4033, %v5772
    %v7618 = vsub.f32 %v4034, %v5777
    %v7619 = vsub.f32 %v4035, %v5782
    %v7620 = vsub.f32 %v4036, %v5787
    %v7621 = vsub.f32 %v4037, %v5792
    %v7622 = vsub.f32 %v4038, %v5797
    %v7623 = vsub.f32 %v4039, %v5802
    %v7624 = vsub.f32 %v4040, %v5807
    %v7625 = vsub.f32 %v4041, %v5812
    %v7626 = vsub.f32 %v4042, %v5817
    %v7627 = vsub.f32 %v4043, %v5822
    %v7628 = vsub.f32 %v4044, %v5827
    %v7629 = vsub.f32 %v4045, %v5832
    %v7630 = vsub.f32 %v4046, %v5837
    %v7631 = vsub.f32 %v4047, %v5842
    %v7632 = vsub.f32 %v4048, %v5847
    %v7633 = vsub.f32 %v4049, %v5852
    %v7634 = vsub.f32 %v4050, %v5857
    %v7635 = vsub.f32 %v4051, %v5862
    %v7636 = vsub.f32 %v4052, %v5867
    %v7637 = vsub.f32 %v4053, %v5872
    %v7638 = vsub.f32 %v4054, %v5877
    %v7639 = vsub.f32 %v4055, %v5882
    %v7640 = vsub.f32 %v4056, %v5887
    %v7641 = vsub.f32 %v4057, %v5892
    %v7642 = vsub.f32 %v4058, %v5897
    %v7643 = vsub.f32 %v4059, %v5902
    %v7644 = vsub.f32 %v4060, %v5907
    %v7645 = vsub.f32 %v4061, %v5912
    %v7646 = vsub.f32 %v4062, %v5917
    %v7647 = vsub.f32 %v4063, %v5922
    %v7648 = vsub.f32 %v4064, %v5927
    %v7649 = vsub.f32 %v4065, %v5932
    %v7650 = vsub.f32 %v4066, %v5937
    %v7651 = vsub.f32 %v4067, %v5942
    %v7652 = vsub.f32 %v4068, %v5947
    %v7653 = vsub.f32 %v4069, %v5952
    %v7654 = vsub.f32 %v4070, %v5957
    %v7655 = vsub.f32 %v4071, %v5962
    %v7656 = vsub.f32 %v4072, %v5967
    %v7657 = vsub.f32 %v4073, %v5972
    %v7658 = vsub.f32 %v4074, %v5977
    %v7659 = vsub.f32 %v4075, %v5982
    %v7660 = vsub.f32 %v4076, %v5987
    %v7661 = vsub.f32 %v4077, %v5992
    %v7662 = vsub.f32 %v4078, %v5997
    %v7663 = vsub.f32 %v4079, %v6002
    %v7664 = vsub.f32 %v4080, %v6007
    %v7665 = vsub.f32 %v4081, %v6012
    %v7666 = vsub.f32 %v4082, %v6017
    %v7667 = vsub.f32 %v4083, %v6022
    %v7668 = vsub.f32 %v4084, %v6027
    %v7669 = vsub.f32 %v4085, %v6032
    %v7670 = vsub.f32 %v4086, %v6037
    %v7671 = vsub.f32 %v4087, %v6042
    %v7672 = vsub.f32 %v4088, %v6047
    %v7673 = vsub.f32 %v4089, %v6052
    %v7674 = vsub.f32 %v4090, %v6057
    %v7675 = vsub.f32 %v4091, %v6062
    %v7676 = vsub.f32 %v4092, %v6067
    %v7677 = vsub.f32 %v4093, %v6072
    %v7678 = vsub.f32 %v4094, %v6077
    %v7679 = vsub.f32 %v4095, %v6082
    %v7680 = vsub.f32 %v4096, %v6087
    %v7681 = vsub.f32 %v4097, %v6092
    %v7682 = vsub.f32 %v4098, %v6097
    %v7683 = vsub.f32 %v4099, %v6102
    %v7684 = vsub.f32 %v4100, %v6107
    %v7685 = vsub.f32 %v4101, %v6112
    %v7686 = vsub.f32 %v4102, %v6117
    %v7687 = vsub.f32 %v4103, %v6122
    %v7688 = vsub.f32 %v4104, %v6127
    %v7689 = vsub.f32 %v4105, %v6132
    %v7690 = vsub.f32 %v4106, %v6137
    %v7691 = vsub.f32 %v4107, %v6142
    %v7692 = vsub.f32 %v4108, %v6147
    %v7693 = vsub.f32 %v4109, %v6152
    %v7694 = vsub.f32 %v4110, %v6157
    %v7695 = vsub.f32 %v4111, %v6162
    %v7696 = vsub.f32 %v4112, %v6167
    %v7697 = vsub.f32 %v4113, %v6172
    %v7698 = vsub.f32 %v4114, %v6177
    %v7699 = vsub.f32 %v4115, %v6182
    %v7700 = vsub.f32 %v4116, %v6187
    %v7701 = vsub.f32 %v4117, %v6192
    %v7702 = vsub.f32 %v4118, %v6197
    %v7703 = vsub.f32 %v4119, %v6202
    %v7704 = vsub.f32 %v4120, %v6207
    %v7705 = vsub.f32 %v4121, %v6212
    %v7706 = vsub.f32 %v4122, %v6217
    %v7707 = vsub.f32 %v4123, %v6222
    %v7708 = vsub.f32 %v4124, %v6227
    %v7709 = vsub.f32 %v4125, %v6232
    %v7710 = vsub.f32 %v4126, %v6237
    %v7711 = vsub.f32 %v4127, %v6242
    %v7712 = vsub.f32 %v4128, %v6247
    %v7713 = vsub.f32 %v4129, %v6252
    %v7714 = vsub.f32 %v4130, %v6257
    %v7715 = vsub.f32 %v4131, %v6262
    %v7716 = vsub.f32 %v4132, %v6267
    %v7717 = vsub.f32 %v4133, %v6272
    %v7718 = vsub.f32 %v4134, %v6277
    %v7719 = vsub.f32 %v4135, %v6282
    %v7720 = vsub.f32 %v4136, %v6287
    %v7721 = vsub.f32 %v4137, %v6292
    %v7722 = vsub.f32 %v4138, %v6297
    %v7723 = vsub.f32 %v4139, %v6302
    %v7724 = vsub.f32 %v4140, %v6307
    %v7725 = vsub.f32 %v4141, %v6312
    %v7726 = vsub.f32 %v4142, %v6317
    %v7727 = vsub.f32 %v4143, %v6322
    %v7728 = vsub.f32 %v4144, %v6327
    %v7729 = vsub.f32 %v4145, %v6332
    %v7730 = vsub.f32 %v4146, %v6337
    %v7731 = vsub.f32 %v4147, %v6342
    %v7732 = vsub.f32 %v4148, %v6347
    %v7733 = vsub.f32 %v4149, %v6352
    %v7734 = vsub.f32 %v4150, %v6357
    %v7735 = vsub.f32 %v4151, %v6362
    %v7736 = vsub.f32 %v4152, %v6367
    %v7737 = vsub.f32 %v4153, %v6372
    %v7738 = vsub.f32 %v4154, %v6377
    %v7739 = vsub.f32 %v4155, %v6382
    %v7740 = vsub.f32 %v4156, %v6387
    %v7741 = vsub.f32 %v4157, %v6392
    %v7742 = vsub.f32 %v4158, %v6397
    %v7743 = vsub.f32 %v4159, %v6402
    %v7744 = vsub.f32 %v4160, %v6407
    %v7745 = vsub.f32 %v4161, %v6412
    %v7746 = vsub.f32 %v4162, %v6417
    %v7747 = vsub.f32 %v4163, %v6422
    %v7748 = vsub.f32 %v4164, %v6427
    %v7749 = vsub.f32 %v4165, %v6432
    %v7750 = vsub.f32 %v4166, %v6437
    %v7751 = vsub.f32 %v4167, %v6442
    %v7752 = vsub.f32 %v4168, %v6447
    %v7753 = vsub.f32 %v4169, %v6452
    %v7754 = vsub.f32 %v4170, %v6457
    %v7755 = vsub.f32 %v4171, %v6462
    %v7756 = vsub.f32 %v4172, %v6467
    %v7757 = vsub.f32 %v4173, %v6472
    %v7758 = vsub.f32 %v4174, %v6477
    %v7759 = vsub.f32 %v4175, %v6482
    %v7760 = vsub.f32 %v4176, %v6487
    %v7761 = vsub.f32 %v4177, %v6492
    %v7762 = vsub.f32 %v4178, %v6497
    %v7763 = vsub.f32 %v4179, %v6502
    %v7764 = vsub.f32 %v4180, %v6507
    %v7765 = vsub.f32 %v4181, %v6512
    %v7766 = vsub.f32 %v4182, %v6517
    %v7767 = vsub.f32 %v4183, %v6522
    %v7768 = vsub.f32 %v4184, %v6527
    %v7769 = vsub.f32 %v4185, %v6532
    %v7770 = vsub.f32 %v4186, %v6537
    %v7771 = vsub.f32 %v4187, %v6542
    %v7772 = vsub.f32 %v4188, %v6547
    %v7773 = vsub.f32 %v4189, %v6552
    %v7774 = vsub.f32 %v4190, %v6557
    %v7775 = vsub.f32 %v4191, %v6562
    %v7776 = vsub.f32 %v4192, %v6567
    %v7777 = vsub.f32 %v4193, %v6572
    %v7778 = vsub.f32 %v4194, %v6577
    %v7779 = vsub.f32 %v4195, %v6582
    %v7780 = vsub.f32 %v4196, %v6587
    %v7781 = vsub.f32 %v4197, %v6592
    %v7782 = vsub.f32 %v4198, %v6597
    %v7783 = vsub.f32 %v4199, %v6602
    %v7784 = vsub.f32 %v4200, %v6607
    %v7785 = vsub.f32 %v4201, %v6612
    %v7786 = vsub.f32 %v4202, %v6617
    %v7787 = vsub.f32 %v4203, %v6622
    %v7788 = vsub.f32 %v4204, %v6627
    %v7789 = vsub.f32 %v4205, %v6632
    %v7790 = vsub.f32 %v4206, %v6637
    %v7791 = vsub.f32 %v4207, %v6642
    %v7792 = vsub.f32 %v4208, %v6647
    %v7793 = vsub.f32 %v4209, %v6652
    %v7794 = vsub.f32 %v4210, %v6657
    %v7795 = vsub.f32 %v4211, %v6662
    %v7796 = vsub.f32 %v4212, %v6667
    %v7797 = vsub.f32 %v4213, %v6672
    %v7798 = vsub.f32 %v4214, %v6677
    %v7799 = vsub.f32 %v4215, %v6682
    %v7800 = vsub.f32 %v4216, %v6687
    %v7801 = vsub.f32 %v4217, %v6692
    %v7802 = vsub.f32 %v4218, %v6697
    %v7803 = vsub.f32 %v4219, %v6702
    %v7804 = vsub.f32 %v4220, %v6707
    %v7805 = vsub.f32 %v4221, %v6712
    %v7806 = vsub.f32 %v4222, %v6717
    %v7807 = vsub.f32 %v4223, %v6722
    %v7808 = vsub.f32 %v4224, %v6727
    %v7809 = vsub.f32 %v4225, %v6732
    %v7810 = vsub.f32 %v4226, %v6737
    %v7811 = vsub.f32 %v4227, %v6742
    %v7812 = vsub.f32 %v4228, %v6747
    %v7813 = vsub.f32 %v4229, %v6752
    %v7814 = vsub.f32 %v4230, %v6757
    %v7815 = vsub.f32 %v4231, %v6762
    %v7816 = vsub.f32 %v4232, %v6767
    %v7817 = vsub.f32 %v4233, %v6772
    %v7818 = vsub.f32 %v4234, %v6777
    %v7819 = vsub.f32 %v4235, %v6782
    %v7820 = vsub.f32 %v4236, %v6787
    %v7821 = vsub.f32 %v4237, %v6792
    %v7822 = vsub.f32 %v4238, %v6797
    %v7823 = vsub.f32 %v4239, %v6802
    %v7824 = vsub.f32 %v4240, %v6807
    %v7825 = vsub.f32 %v4241, %v6812
    %v7826 = vsub.f32 %v4242, %v6817
    %v7827 = vsub.f32 %v4243, %v6822
    %v7828 = vsub.f32 %v4244, %v6827
    %v7829 = vsub.f32 %v4245, %v6832
    %v7830 = vsub.f32 %v4246, %v6837
    %v7831 = vsub.f32 %v4247, %v6842
    %v7832 = vsub.f32 %v4248, %v6847
    %v7833 = vsub.f32 %v4249, %v6852
    %v7834 = vsub.f32 %v4250, %v6857
    %v7835 = vsub.f32 %v4251, %v6862
    %v7836 = vsub.f32 %v4252, %v6867
    %v7837 = vsub.f32 %v4253, %v6872
    %v7838 = vsub.f32 %v4254, %v6877
    %v7839 = vsub.f32 %v4255, %v6882
    %v7840 = vsub.f32 %v4256, %v6887
    %v7841 = vsub.f32 %v4257, %v6892
    %v7842 = vsub.f32 %v4258, %v6897
    %v7843 = vsub.f32 %v4259, %v6902
    %v7844 = vsub.f32 %v4260, %v6907
    %v7845 = vsub.f32 %v4261, %v6912
    %v7846 = vsub.f32 %v4262, %v6917
    %v7847 = vsub.f32 %v4263, %v6922
    %v7848 = vsub.f32 %v4264, %v6927
    %v7849 = vsub.f32 %v4265, %v6932
    %v7850 = vsub.f32 %v4266, %v6937
    %v7851 = vsub.f32 %v4267, %v6942
    %v7852 = vsub.f32 %v4268, %v6947
    %v7853 = vsub.f32 %v4269, %v6952
    %v7854 = vsub.f32 %v4270, %v6957
    %v7855 = vsub.f32 %v4271, %v6962
    %v7856 = vsub.f32 %v4272, %v6967
    %v7857 = vsub.f32 %v4273, %v6972
    %v7858 = vsub.f32 %v4274, %v6977
    %v7859 = vsub.f32 %v4275, %v6982
    %v7860 = vsub.f32 %v4276, %v6987
    %v7861 = vsub.f32 %v4277, %v6992
    %v7862 = vsub.f32 %v4278, %v6997
    %v7863 = vsub.f32 %v4279, %v7002
    %v7864 = vsub.f32 %v4280, %v7007
    %v7865 = vsub.f32 %v4281, %v7012
    %v7866 = vsub.f32 %v4282, %v7017
    %v7867 = vsub.f32 %v4283, %v7022
    %v7868 = vsub.f32 %v4284, %v7027
    %v7869 = vsub.f32 %v4285, %v7032
    %v7870 = vsub.f32 %v4286, %v7037
    %v7871 = vsub.f32 %v4287, %v7042
    %v7872 = vsub.f32 %v4288, %v7047
    %v7873 = vsub.f32 %v4289, %v7052
    %v7874 = vsub.f32 %v4290, %v7057
    %v7875 = vsub.f32 %v4291, %v7062
    %v7876 = vsub.f32 %v4292, %v7067
    %v7877 = vsub.f32 %v4293, %v7072
    %v7878 = vsub.f32 %v4294, %v7077
    %v7879 = vsub.f32 %v4295, %v7082
    %v7880 = vsub.f32 %v4296, %v7087
    %v7881 = vsub.f32 %v4297, %v7092
    %v7882 = vsub.f32 %v4298, %v7097
    %v7883 = vsub.f32 %v4299, %v7102
    %v7884 = vsub.f32 %v4300, %v7107
    %v7885 = vsub.f32 %v4301, %v7112
    %v7886 = vsub.f32 %v4302, %v7117
    %v7887 = vsub.f32 %v4303, %v7122
    %v7888 = vsub.f32 %v4304, %v7127
    %v7889 = vsub.f32 %v4305, %v7132
    %v7890 = vsub.f32 %v4306, %v7137
    %v7891 = vsub.f32 %v4307, %v7142
    %v7892 = vsub.f32 %v4308, %v7147
    %v7893 = vsub.f32 %v4309, %v7152
    %v7894 = vsub.f32 %v4310, %v7157
    %v7895 = vsub.f32 %v4311, %v7162
    %v7896 = vsub.f32 %v4312, %v7167
    %v7897 = vsub.f32 %v4313, %v7172
    %v7898 = vsub.f32 %v4314, %v7177
    %v7899 = vsub.f32 %v4315, %v7182
    %v7900 = vsub.f32 %v4316, %v7187
    %v7901 = vsub.f32 %v4317, %v7192
    %v7902 = vsub.f32 %v4318, %v7197
    %v7903 = vsub.f32 %v4319, %v7202
    %v7904 = vsub.f32 %v4320, %v7207
    %v7905 = vsub.f32 %v4321, %v7212
    %v7906 = vsub.f32 %v4322, %v7217
    %v7907 = vsub.f32 %v4323, %v7222
    %v7908 = vsub.f32 %v4324, %v7227
    %v7909 = vsub.f32 %v4325, %v7232
    %v7910 = vsub.f32 %v4326, %v7237
    %v7911 = vsub.f32 %v4327, %v7242
    %v7912 = vsub.f32 %v4328, %v7247
    %v7913 = vsub.f32 %v4329, %v7252
    %v7914 = vsub.f32 %v4330, %v7257
    %v7915 = vsub.f32 %v4331, %v7262
    %v7916 = vsub.f32 %v4332, %v7267
    %v7917 = vsub.f32 %v4333, %v7272
    %v7918 = vsub.f32 %v4334, %v7277
    %v7919 = vsub.f32 %v4335, %v7282
    %v7920 = vsub.f32 %v4336, %v7287
    %v7921 = vsub.f32 %v4337, %v7292
    %v7922 = vsub.f32 %v4338, %v7297
    %v7923 = vsub.f32 %v4339, %v7302
    %v7924 = vsub.f32 %v4340, %v7307
    %v7925 = vsub.f32 %v4341, %v7312
    %v7926 = vsub.f32 %v4342, %v7317
    %v7927 = vsub.f32 %v4343, %v7322
    %v7928 = vsub.f32 %v4344, %v7327
    %v7929 = vsub.f32 %v4345, %v7332
    %v7930 = vsub.f32 %v4346, %v7337
    %v7931 = vsub.f32 %v4347, %v7342
    %v7932 = vsub.f32 %v4348, %v7347
    %v7933 = vsub.f32 %v4349, %v7352
    %v7934 = vsub.f32 %v4350, %v7357
    %v7935 = vsub.f32 %v4351, %v7362
    %v7936 = vsub.f32 %v4352, %v7367
    %v7937 = vsub.f32 %v4353, %v7372
    %v7938 = vsub.f32 %v4354, %v7377
    %v7939 = vsub.f32 %v4355, %v7382
    %v7940 = vsub.f32 %v4356, %v7387
    %v7941 = vsub.f32 %v4357, %v7392
    %v7942 = vsub.f32 %v4358, %v7397
    %v7943 = vsub.f32 %v4359, %v7402
    %v7944 = vsub.f32 %v4360, %v7407
    %v7945 = vsub.f32 %v4361, %v7412
    %v7946 = vsub.f32 %v4362, %v7417
    %v7947 = vsub.f32 %v4363, %v7422
    %v7948 = vsub.f32 %v4364, %v7427
    %v7949 = vsub.f32 %v4365, %v7432
    %v7950 = vsub.f32 %v4366, %v7437
    %v7951 = vmul.f32 %v7439, %v7439
    %v7952 = vmul.f32 %v7440, %v7440
    %v7953 = vmul.f32 %v7441, %v7441
    %v7954 = vmul.f32 %v7442, %v7442
    %v7955 = vmul.f32 %v7443, %v7443
    %v7956 = vmul.f32 %v7444, %v7444
    %v7957 = vmul.f32 %v7445, %v7445
    %v7958 = vmul.f32 %v7446, %v7446
    %v7959 = vmul.f32 %v7447, %v7447
    %v7960 = vmul.f32 %v7448, %v7448
    %v7961 = vmul.f32 %v7449, %v7449
    %v7962 = vmul.f32 %v7450, %v7450
    %v7963 = vmul.f32 %v7451, %v7451
    %v7964 = vmul.f32 %v7452, %v7452
    %v7965 = vmul.f32 %v7453, %v7453
    %v7966 = vmul.f32 %v7454, %v7454
    %v7967 = vmul.f32 %v7455, %v7455
    %v7968 = vmul.f32 %v7456, %v7456
    %v7969 = vmul.f32 %v7457, %v7457
    %v7970 = vmul.f32 %v7458, %v7458
    %v7971 = vmul.f32 %v7459, %v7459
    %v7972 = vmul.f32 %v7460, %v7460
    %v7973 = vmul.f32 %v7461, %v7461
    %v7974 = vmul.f32 %v7462, %v7462
    %v7975 = vmul.f32 %v7463, %v7463
    %v7976 = vmul.f32 %v7464, %v7464
    %v7977 = vmul.f32 %v7465, %v7465
    %v7978 = vmul.f32 %v7466, %v7466
    %v7979 = vmul.f32 %v7467, %v7467
    %v7980 = vmul.f32 %v7468, %v7468
    %v7981 = vmul.f32 %v7469, %v7469
    %v7982 = vmul.f32 %v7470, %v7470
    %v7983 = vmul.f32 %v7471, %v7471
    %v7984 = vmul.f32 %v7472, %v7472
    %v7985 = vmul.f32 %v7473, %v7473
    %v7986 = vmul.f32 %v7474, %v7474
    %v7987 = vmul.f32 %v7475, %v7475
    %v7988 = vmul.f32 %v7476, %v7476
    %v7989 = vmul.f32 %v7477, %v7477
    %v7990 = vmul.f32 %v7478, %v7478
    %v7991 = vmul.f32 %v7479, %v7479
    %v7992 = vmul.f32 %v7480, %v7480
    %v7993 = vmul.f32 %v7481, %v7481
    %v7994 = vmul.f32 %v7482, %v7482
    %v7995 = vmul.f32 %v7483, %v7483
    %v7996 = vmul.f32 %v7484, %v7484
    %v7997 = vmul.f32 %v7485, %v7485
    %v7998 = vmul.f32 %v7486, %v7486
    %v7999 = vmul.f32 %v7487, %v7487
    %v8000 = vmul.f32 %v7488, %v7488
    %v8001 = vmul.f32 %v7489, %v7489
    %v8002 = vmul.f32 %v7490, %v7490
    %v8003 = vmul.f32 %v7491, %v7491
    %v8004 = vmul.f32 %v7492, %v7492
    %v8005 = vmul.f32 %v7493, %v7493
    %v8006 = vmul.f32 %v7494, %v7494
    %v8007 = vmul.f32 %v7495, %v7495
    %v8008 = vmul.f32 %v7496, %v7496
    %v8009 = vmul.f32 %v7497, %v7497
    %v8010 = vmul.f32 %v7498, %v7498
    %v8011 = vmul.f32 %v7499, %v7499
    %v8012 = vmul.f32 %v7500, %v7500
    %v8013 = vmul.f32 %v7501, %v7501
    %v8014 = vmul.f32 %v7502, %v7502
    %v8015 = vmul.f32 %v7503, %v7503
    %v8016 = vmul.f32 %v7504, %v7504
    %v8017 = vmul.f32 %v7505, %v7505
    %v8018 = vmul.f32 %v7506, %v7506
    %v8019 = vmul.f32 %v7507, %v7507
    %v8020 = vmul.f32 %v7508, %v7508
    %v8021 = vmul.f32 %v7509, %v7509
    %v8022 = vmul.f32 %v7510, %v7510
    %v8023 = vmul.f32 %v7511, %v7511
    %v8024 = vmul.f32 %v7512, %v7512
    %v8025 = vmul.f32 %v7513, %v7513
    %v8026 = vmul.f32 %v7514, %v7514
    %v8027 = vmul.f32 %v7515, %v7515
    %v8028 = vmul.f32 %v7516, %v7516
    %v8029 = vmul.f32 %v7517, %v7517
    %v8030 = vmul.f32 %v7518, %v7518
    %v8031 = vmul.f32 %v7519, %v7519
    %v8032 = vmul.f32 %v7520, %v7520
    %v8033 = vmul.f32 %v7521, %v7521
    %v8034 = vmul.f32 %v7522, %v7522
    %v8035 = vmul.f32 %v7523, %v7523
    %v8036 = vmul.f32 %v7524, %v7524
    %v8037 = vmul.f32 %v7525, %v7525
    %v8038 = vmul.f32 %v7526, %v7526
    %v8039 = vmul.f32 %v7527, %v7527
    %v8040 = vmul.f32 %v7528, %v7528
    %v8041 = vmul.f32 %v7529, %v7529
    %v8042 = vmul.f32 %v7530, %v7530
    %v8043 = vmul.f32 %v7531, %v7531
    %v8044 = vmul.f32 %v7532, %v7532
    %v8045 = vmul.f32 %v7533, %v7533
    %v8046 = vmul.f32 %v7534, %v7534
    %v8047 = vmul.f32 %v7535, %v7535
    %v8048 = vmul.f32 %v7536, %v7536
    %v8049 = vmul.f32 %v7537, %v7537
    %v8050 = vmul.f32 %v7538, %v7538
    %v8051 = vmul.f32 %v7539, %v7539
    %v8052 = vmul.f32 %v7540, %v7540
    %v8053 = vmul.f32 %v7541, %v7541
    %v8054 = vmul.f32 %v7542, %v7542
    %v8055 = vmul.f32 %v7543, %v7543
    %v8056 = vmul.f32 %v7544, %v7544
    %v8057 = vmul.f32 %v7545, %v7545
    %v8058 = vmul.f32 %v7546, %v7546
    %v8059 = vmul.f32 %v7547, %v7547
    %v8060 = vmul.f32 %v7548, %v7548
    %v8061 = vmul.f32 %v7549, %v7549
    %v8062 = vmul.f32 %v7550, %v7550
    %v8063 = vmul.f32 %v7551, %v7551
    %v8064 = vmul.f32 %v7552, %v7552
    %v8065 = vmul.f32 %v7553, %v7553
    %v8066 = vmul.f32 %v7554, %v7554
    %v8067 = vmul.f32 %v7555, %v7555
    %v8068 = vmul.f32 %v7556, %v7556
    %v8069 = vmul.f32 %v7557, %v7557
    %v8070 = vmul.f32 %v7558, %v7558
    %v8071 = vmul.f32 %v7559, %v7559
    %v8072 = vmul.f32 %v7560, %v7560
    %v8073 = vmul.f32 %v7561, %v7561
    %v8074 = vmul.f32 %v7562, %v7562
    %v8075 = vmul.f32 %v7563, %v7563
    %v8076 = vmul.f32 %v7564, %v7564
    %v8077 = vmul.f32 %v7565, %v7565
    %v8078 = vmul.f32 %v7566, %v7566
    %v8079 = vmul.f32 %v7567, %v7567
    %v8080 = vmul.f32 %v7568, %v7568
    %v8081 = vmul.f32 %v7569, %v7569
    %v8082 = vmul.f32 %v7570, %v7570
    %v8083 = vmul.f32 %v7571, %v7571
    %v8084 = vmul.f32 %v7572, %v7572
    %v8085 = vmul.f32 %v7573, %v7573
    %v8086 = vmul.f32 %v7574, %v7574
    %v8087 = vmul.f32 %v7575, %v7575
    %v8088 = vmul.f32 %v7576, %v7576
    %v8089 = vmul.f32 %v7577, %v7577
    %v8090 = vmul.f32 %v7578, %v7578
    %v8091 = vmul.f32 %v7579, %v7579
    %v8092 = vmul.f32 %v7580, %v7580
    %v8093 = vmul.f32 %v7581, %v7581
    %v8094 = vmul.f32 %v7582, %v7582
    %v8095 = vmul.f32 %v7583, %v7583
    %v8096 = vmul.f32 %v7584, %v7584
    %v8097 = vmul.f32 %v7585, %v7585
    %v8098 = vmul.f32 %v7586, %v7586
    %v8099 = vmul.f32 %v7587, %v7587
    %v8100 = vmul.f32 %v7588, %v7588
    %v8101 = vmul.f32 %v7589, %v7589
    %v8102 = vmul.f32 %v7590, %v7590
    %v8103 = vmul.f32 %v7591, %v7591
    %v8104 = vmul.f32 %v7592, %v7592
    %v8105 = vmul.f32 %v7593, %v7593
    %v8106 = vmul.f32 %v7594, %v7594
    %v8107 = vmul.f32 %v7595, %v7595
    %v8108 = vmul.f32 %v7596, %v7596
    %v8109 = vmul.f32 %v7597, %v7597
    %v8110 = vmul.f32 %v7598, %v7598
    %v8111 = vmul.f32 %v7599, %v7599
    %v8112 = vmul.f32 %v7600, %v7600
    %v8113 = vmul.f32 %v7601, %v7601
    %v8114 = vmul.f32 %v7602, %v7602
    %v8115 = vmul.f32 %v7603, %v7603
    %v8116 = vmul.f32 %v7604, %v7604
    %v8117 = vmul.f32 %v7605, %v7605
    %v8118 = vmul.f32 %v7606, %v7606
    %v8119 = vmul.f32 %v7607, %v7607
    %v8120 = vmul.f32 %v7608, %v7608
    %v8121 = vmul.f32 %v7609, %v7609
    %v8122 = vmul.f32 %v7610, %v7610
    %v8123 = vmul.f32 %v7611, %v7611
    %v8124 = vmul.f32 %v7612, %v7612
    %v8125 = vmul.f32 %v7613, %v7613
    %v8126 = vmul.f32 %v7614, %v7614
    %v8127 = vmul.f32 %v7615, %v7615
    %v8128 = vmul.f32 %v7616, %v7616
    %v8129 = vmul.f32 %v7617, %v7617
    %v8130 = vmul.f32 %v7618, %v7618
    %v8131 = vmul.f32 %v7619, %v7619
    %v8132 = vmul.f32 %v7620, %v7620
    %v8133 = vmul.f32 %v7621, %v7621
    %v8134 = vmul.f32 %v7622, %v7622
    %v8135 = vmul.f32 %v7623, %v7623
    %v8136 = vmul.f32 %v7624, %v7624
    %v8137 = vmul.f32 %v7625, %v7625
    %v8138 = vmul.f32 %v7626, %v7626
    %v8139 = vmul.f32 %v7627, %v7627
    %v8140 = vmul.f32 %v7628, %v7628
    %v8141 = vmul.f32 %v7629, %v7629
    %v8142 = vmul.f32 %v7630, %v7630
    %v8143 = vmul.f32 %v7631, %v7631
    %v8144 = vmul.f32 %v7632, %v7632
    %v8145 = vmul.f32 %v7633, %v7633
    %v8146 = vmul.f32 %v7634, %v7634
    %v8147 = vmul.f32 %v7635, %v7635
    %v8148 = vmul.f32 %v7636, %v7636
    %v8149 = vmul.f32 %v7637, %v7637
    %v8150 = vmul.f32 %v7638, %v7638
    %v8151 = vmul.f32 %v7639, %v7639
    %v8152 = vmul.f32 %v7640, %v7640
    %v8153 = vmul.f32 %v7641, %v7641
    %v8154 = vmul.f32 %v7642, %v7642
    %v8155 = vmul.f32 %v7643, %v7643
    %v8156 = vmul.f32 %v7644, %v7644
    %v8157 = vmul.f32 %v7645, %v7645
    %v8158 = vmul.f32 %v7646, %v7646
    %v8159 = vmul.f32 %v7647, %v7647
    %v8160 = vmul.f32 %v7648, %v7648
    %v8161 = vmul.f32 %v7649, %v7649
    %v8162 = vmul.f32 %v7650, %v7650
    %v8163 = vmul.f32 %v7651, %v7651
    %v8164 = vmul.f32 %v7652, %v7652
    %v8165 = vmul.f32 %v7653, %v7653
    %v8166 = vmul.f32 %v7654, %v7654
    %v8167 = vmul.f32 %v7655, %v7655
    %v8168 = vmul.f32 %v7656, %v7656
    %v8169 = vmul.f32 %v7657, %v7657
    %v8170 = vmul.f32 %v7658, %v7658
    %v8171 = vmul.f32 %v7659, %v7659
    %v8172 = vmul.f32 %v7660, %v7660
    %v8173 = vmul.f32 %v7661, %v7661
    %v8174 = vmul.f32 %v7662, %v7662
    %v8175 = vmul.f32 %v7663, %v7663
    %v8176 = vmul.f32 %v7664, %v7664
    %v8177 = vmul.f32 %v7665, %v7665
    %v8178 = vmul.f32 %v7666, %v7666
    %v8179 = vmul.f32 %v7667, %v7667
    %v8180 = vmul.f32 %v7668, %v7668
    %v8181 = vmul.f32 %v7669, %v7669
    %v8182 = vmul.f32 %v7670, %v7670
    %v8183 = vmul.f32 %v7671, %v7671
    %v8184 = vmul.f32 %v7672, %v7672
    %v8185 = vmul.f32 %v7673, %v7673
    %v8186 = vmul.f32 %v7674, %v7674
    %v8187 = vmul.f32 %v7675, %v7675
    %v8188 = vmul.f32 %v7676, %v7676
    %v8189 = vmul.f32 %v7677, %v7677
    %v8190 = vmul.f32 %v7678, %v7678
    %v8191 = vmul.f32 %v7679, %v7679
    %v8192 = vmul.f32 %v7680, %v7680
    %v8193 = vmul.f32 %v7681, %v7681
    %v8194 = vmul.f32 %v7682, %v7682
    %v8195 = vmul.f32 %v7683, %v7683
    %v8196 = vmul.f32 %v7684, %v7684
    %v8197 = vmul.f32 %v7685, %v7685
    %v8198 = vmul.f32 %v7686, %v7686
    %v8199 = vmul.f32 %v7687, %v7687
    %v8200 = vmul.f32 %v7688, %v7688
    %v8201 = vmul.f32 %v7689, %v7689
    %v8202 = vmul.f32 %v7690, %v7690
    %v8203 = vmul.f32 %v7691, %v7691
    %v8204 = vmul.f32 %v7692, %v7692
    %v8205 = vmul.f32 %v7693, %v7693
    %v8206 = vmul.f32 %v7694, %v7694
    %v8207 = vmul.f32 %v7695, %v7695
    %v8208 = vmul.f32 %v7696, %v7696
    %v8209 = vmul.f32 %v7697, %v7697
    %v8210 = vmul.f32 %v7698, %v7698
    %v8211 = vmul.f32 %v7699, %v7699
    %v8212 = vmul.f32 %v7700, %v7700
    %v8213 = vmul.f32 %v7701, %v7701
    %v8214 = vmul.f32 %v7702, %v7702
    %v8215 = vmul.f32 %v7703, %v7703
    %v8216 = vmul.f32 %v7704, %v7704
    %v8217 = vmul.f32 %v7705, %v7705
    %v8218 = vmul.f32 %v7706, %v7706
    %v8219 = vmul.f32 %v7707, %v7707
    %v8220 = vmul.f32 %v7708, %v7708
    %v8221 = vmul.f32 %v7709, %v7709
    %v8222 = vmul.f32 %v7710, %v7710
    %v8223 = vmul.f32 %v7711, %v7711
    %v8224 = vmul.f32 %v7712, %v7712
    %v8225 = vmul.f32 %v7713, %v7713
    %v8226 = vmul.f32 %v7714, %v7714
    %v8227 = vmul.f32 %v7715, %v7715
    %v8228 = vmul.f32 %v7716, %v7716
    %v8229 = vmul.f32 %v7717, %v7717
    %v8230 = vmul.f32 %v7718, %v7718
    %v8231 = vmul.f32 %v7719, %v7719
    %v8232 = vmul.f32 %v7720, %v7720
    %v8233 = vmul.f32 %v7721, %v7721
    %v8234 = vmul.f32 %v7722, %v7722
    %v8235 = vmul.f32 %v7723, %v7723
    %v8236 = vmul.f32 %v7724, %v7724
    %v8237 = vmul.f32 %v7725, %v7725
    %v8238 = vmul.f32 %v7726, %v7726
    %v8239 = vmul.f32 %v7727, %v7727
    %v8240 = vmul.f32 %v7728, %v7728
    %v8241 = vmul.f32 %v7729, %v7729
    %v8242 = vmul.f32 %v7730, %v7730
    %v8243 = vmul.f32 %v7731, %v7731
    %v8244 = vmul.f32 %v7732, %v7732
    %v8245 = vmul.f32 %v7733, %v7733
    %v8246 = vmul.f32 %v7734, %v7734
    %v8247 = vmul.f32 %v7735, %v7735
    %v8248 = vmul.f32 %v7736, %v7736
    %v8249 = vmul.f32 %v7737, %v7737
    %v8250 = vmul.f32 %v7738, %v7738
    %v8251 = vmul.f32 %v7739, %v7739
    %v8252 = vmul.f32 %v7740, %v7740
    %v8253 = vmul.f32 %v7741, %v7741
    %v8254 = vmul.f32 %v7742, %v7742
    %v8255 = vmul.f32 %v7743, %v7743
    %v8256 = vmul.f32 %v7744, %v7744
    %v8257 = vmul.f32 %v7745, %v7745
    %v8258 = vmul.f32 %v7746, %v7746
    %v8259 = vmul.f32 %v7747, %v7747
    %v8260 = vmul.f32 %v7748, %v7748
    %v8261 = vmul.f32 %v7749, %v7749
    %v8262 = vmul.f32 %v7750, %v7750
    %v8263 = vmul.f32 %v7751, %v7751
    %v8264 = vmul.f32 %v7752, %v7752
    %v8265 = vmul.f32 %v7753, %v7753
    %v8266 = vmul.f32 %v7754, %v7754
    %v8267 = vmul.f32 %v7755, %v7755
    %v8268 = vmul.f32 %v7756, %v7756
    %v8269 = vmul.f32 %v7757, %v7757
    %v8270 = vmul.f32 %v7758, %v7758
    %v8271 = vmul.f32 %v7759, %v7759
    %v8272 = vmul.f32 %v7760, %v7760
    %v8273 = vmul.f32 %v7761, %v7761
    %v8274 = vmul.f32 %v7762, %v7762
    %v8275 = vmul.f32 %v7763, %v7763
    %v8276 = vmul.f32 %v7764, %v7764
    %v8277 = vmul.f32 %v7765, %v7765
    %v8278 = vmul.f32 %v7766, %v7766
    %v8279 = vmul.f32 %v7767, %v7767
    %v8280 = vmul.f32 %v7768, %v7768
    %v8281 = vmul.f32 %v7769, %v7769
    %v8282 = vmul.f32 %v7770, %v7770
    %v8283 = vmul.f32 %v7771, %v7771
    %v8284 = vmul.f32 %v7772, %v7772
    %v8285 = vmul.f32 %v7773, %v7773
    %v8286 = vmul.f32 %v7774, %v7774
    %v8287 = vmul.f32 %v7775, %v7775
    %v8288 = vmul.f32 %v7776, %v7776
    %v8289 = vmul.f32 %v7777, %v7777
    %v8290 = vmul.f32 %v7778, %v7778
    %v8291 = vmul.f32 %v7779, %v7779
    %v8292 = vmul.f32 %v7780, %v7780
    %v8293 = vmul.f32 %v7781, %v7781
    %v8294 = vmul.f32 %v7782, %v7782
    %v8295 = vmul.f32 %v7783, %v7783
    %v8296 = vmul.f32 %v7784, %v7784
    %v8297 = vmul.f32 %v7785, %v7785
    %v8298 = vmul.f32 %v7786, %v7786
    %v8299 = vmul.f32 %v7787, %v7787
    %v8300 = vmul.f32 %v7788, %v7788
    %v8301 = vmul.f32 %v7789, %v7789
    %v8302 = vmul.f32 %v7790, %v7790
    %v8303 = vmul.f32 %v7791, %v7791
    %v8304 = vmul.f32 %v7792, %v7792
    %v8305 = vmul.f32 %v7793, %v7793
    %v8306 = vmul.f32 %v7794, %v7794
    %v8307 = vmul.f32 %v7795, %v7795
    %v8308 = vmul.f32 %v7796, %v7796
    %v8309 = vmul.f32 %v7797, %v7797
    %v8310 = vmul.f32 %v7798, %v7798
    %v8311 = vmul.f32 %v7799, %v7799
    %v8312 = vmul.f32 %v7800, %v7800
    %v8313 = vmul.f32 %v7801, %v7801
    %v8314 = vmul.f32 %v7802, %v7802
    %v8315 = vmul.f32 %v7803, %v7803
    %v8316 = vmul.f32 %v7804, %v7804
    %v8317 = vmul.f32 %v7805, %v7805
    %v8318 = vmul.f32 %v7806, %v7806
    %v8319 = vmul.f32 %v7807, %v7807
    %v8320 = vmul.f32 %v7808, %v7808
    %v8321 = vmul.f32 %v7809, %v7809
    %v8322 = vmul.f32 %v7810, %v7810
    %v8323 = vmul.f32 %v7811, %v7811
    %v8324 = vmul.f32 %v7812, %v7812
    %v8325 = vmul.f32 %v7813, %v7813
    %v8326 = vmul.f32 %v7814, %v7814
    %v8327 = vmul.f32 %v7815, %v7815
    %v8328 = vmul.f32 %v7816, %v7816
    %v8329 = vmul.f32 %v7817, %v7817
    %v8330 = vmul.f32 %v7818, %v7818
    %v8331 = vmul.f32 %v7819, %v7819
    %v8332 = vmul.f32 %v7820, %v7820
    %v8333 = vmul.f32 %v7821, %v7821
    %v8334 = vmul.f32 %v7822, %v7822
    %v8335 = vmul.f32 %v7823, %v7823
    %v8336 = vmul.f32 %v7824, %v7824
    %v8337 = vmul.f32 %v7825, %v7825
    %v8338 = vmul.f32 %v7826, %v7826
    %v8339 = vmul.f32 %v7827, %v7827
    %v8340 = vmul.f32 %v7828, %v7828
    %v8341 = vmul.f32 %v7829, %v7829
    %v8342 = vmul.f32 %v7830, %v7830
    %v8343 = vmul.f32 %v7831, %v7831
    %v8344 = vmul.f32 %v7832, %v7832
    %v8345 = vmul.f32 %v7833, %v7833
    %v8346 = vmul.f32 %v7834, %v7834
    %v8347 = vmul.f32 %v7835, %v7835
    %v8348 = vmul.f32 %v7836, %v7836
    %v8349 = vmul.f32 %v7837, %v7837
    %v8350 = vmul.f32 %v7838, %v7838
    %v8351 = vmul.f32 %v7839, %v7839
    %v8352 = vmul.f32 %v7840, %v7840
    %v8353 = vmul.f32 %v7841, %v7841
    %v8354 = vmul.f32 %v7842, %v7842
    %v8355 = vmul.f32 %v7843, %v7843
    %v8356 = vmul.f32 %v7844, %v7844
    %v8357 = vmul.f32 %v7845, %v7845
    %v8358 = vmul.f32 %v7846, %v7846
    %v8359 = vmul.f32 %v7847, %v7847
    %v8360 = vmul.f32 %v7848, %v7848
    %v8361 = vmul.f32 %v7849, %v7849
    %v8362 = vmul.f32 %v7850, %v7850
    %v8363 = vmul.f32 %v7851, %v7851
    %v8364 = vmul.f32 %v7852, %v7852
    %v8365 = vmul.f32 %v7853, %v7853
    %v8366 = vmul.f32 %v7854, %v7854
    %v8367 = vmul.f32 %v7855, %v7855
    %v8368 = vmul.f32 %v7856, %v7856
    %v8369 = vmul.f32 %v7857, %v7857
    %v8370 = vmul.f32 %v7858, %v7858
    %v8371 = vmul.f32 %v7859, %v7859
    %v8372 = vmul.f32 %v7860, %v7860
    %v8373 = vmul.f32 %v7861, %v7861
    %v8374 = vmul.f32 %v7862, %v7862
    %v8375 = vmul.f32 %v7863, %v7863
    %v8376 = vmul.f32 %v7864, %v7864
    %v8377 = vmul.f32 %v7865, %v7865
    %v8378 = vmul.f32 %v7866, %v7866
    %v8379 = vmul.f32 %v7867, %v7867
    %v8380 = vmul.f32 %v7868, %v7868
    %v8381 = vmul.f32 %v7869, %v7869
    %v8382 = vmul.f32 %v7870, %v7870
    %v8383 = vmul.f32 %v7871, %v7871
    %v8384 = vmul.f32 %v7872, %v7872
    %v8385 = vmul.f32 %v7873, %v7873
    %v8386 = vmul.f32 %v7874, %v7874
    %v8387 = vmul.f32 %v7875, %v7875
    %v8388 = vmul.f32 %v7876, %v7876
    %v8389 = vmul.f32 %v7877, %v7877
    %v8390 = vmul.f32 %v7878, %v7878
    %v8391 = vmul.f32 %v7879, %v7879
    %v8392 = vmul.f32 %v7880, %v7880
    %v8393 = vmul.f32 %v7881, %v7881
    %v8394 = vmul.f32 %v7882, %v7882
    %v8395 = vmul.f32 %v7883, %v7883
    %v8396 = vmul.f32 %v7884, %v7884
    %v8397 = vmul.f32 %v7885, %v7885
    %v8398 = vmul.f32 %v7886, %v7886
    %v8399 = vmul.f32 %v7887, %v7887
    %v8400 = vmul.f32 %v7888, %v7888
    %v8401 = vmul.f32 %v7889, %v7889
    %v8402 = vmul.f32 %v7890, %v7890
    %v8403 = vmul.f32 %v7891, %v7891
    %v8404 = vmul.f32 %v7892, %v7892
    %v8405 = vmul.f32 %v7893, %v7893
    %v8406 = vmul.f32 %v7894, %v7894
    %v8407 = vmul.f32 %v7895, %v7895
    %v8408 = vmul.f32 %v7896, %v7896
    %v8409 = vmul.f32 %v7897, %v7897
    %v8410 = vmul.f32 %v7898, %v7898
    %v8411 = vmul.f32 %v7899, %v7899
    %v8412 = vmul.f32 %v7900, %v7900
    %v8413 = vmul.f32 %v7901, %v7901
    %v8414 = vmul.f32 %v7902, %v7902
    %v8415 = vmul.f32 %v7903, %v7903
    %v8416 = vmul.f32 %v7904, %v7904
    %v8417 = vmul.f32 %v7905, %v7905
    %v8418 = vmul.f32 %v7906, %v7906
    %v8419 = vmul.f32 %v7907, %v7907
    %v8420 = vmul.f32 %v7908, %v7908
    %v8421 = vmul.f32 %v7909, %v7909
    %v8422 = vmul.f32 %v7910, %v7910
    %v8423 = vmul.f32 %v7911, %v7911
    %v8424 = vmul.f32 %v7912, %v7912
    %v8425 = vmul.f32 %v7913, %v7913
    %v8426 = vmul.f32 %v7914, %v7914
    %v8427 = vmul.f32 %v7915, %v7915
    %v8428 = vmul.f32 %v7916, %v7916
    %v8429 = vmul.f32 %v7917, %v7917
    %v8430 = vmul.f32 %v7918, %v7918
    %v8431 = vmul.f32 %v7919, %v7919
    %v8432 = vmul.f32 %v7920, %v7920
    %v8433 = vmul.f32 %v7921, %v7921
    %v8434 = vmul.f32 %v7922, %v7922
    %v8435 = vmul.f32 %v7923, %v7923
    %v8436 = vmul.f32 %v7924, %v7924
    %v8437 = vmul.f32 %v7925, %v7925
    %v8438 = vmul.f32 %v7926, %v7926
    %v8439 = vmul.f32 %v7927, %v7927
    %v8440 = vmul.f32 %v7928, %v7928
    %v8441 = vmul.f32 %v7929, %v7929
    %v8442 = vmul.f32 %v7930, %v7930
    %v8443 = vmul.f32 %v7931, %v7931
    %v8444 = vmul.f32 %v7932, %v7932
    %v8445 = vmul.f32 %v7933, %v7933
    %v8446 = vmul.f32 %v7934, %v7934
    %v8447 = vmul.f32 %v7935, %v7935
    %v8448 = vmul.f32 %v7936, %v7936
    %v8449 = vmul.f32 %v7937, %v7937
    %v8450 = vmul.f32 %v7938, %v7938
    %v8451 = vmul.f32 %v7939, %v7939
    %v8452 = vmul.f32 %v7940, %v7940
    %v8453 = vmul.f32 %v7941, %v7941
    %v8454 = vmul.f32 %v7942, %v7942
    %v8455 = vmul.f32 %v7943, %v7943
    %v8456 = vmul.f32 %v7944, %v7944
    %v8457 = vmul.f32 %v7945, %v7945
    %v8458 = vmul.f32 %v7946, %v7946
    %v8459 = vmul.f32 %v7947, %v7947
    %v8460 = vmul.f32 %v7948, %v7948
    %v8461 = vmul.f32 %v7949, %v7949
    %v8462 = vmul.f32 %v7950, %v7950
    %v8463 = vadd.f32 %v7951, %v7955
    %v8464 = vadd.f32 %v8463, %v7959
    %v8465 = vadd.f32 %v8464, %v7963
    %v8466 = vadd.f32 %v8465, %v7967
    %v8467 = vadd.f32 %v8466, %v7971
    %v8468 = vadd.f32 %v8467, %v7975
    %v8469 = vadd.f32 %v8468, %v7979
    %v8470 = vadd.f32 %v8469, %v7983
    %v8471 = vadd.f32 %v8470, %v7987
    %v8472 = vadd.f32 %v8471, %v7991
    %v8473 = vadd.f32 %v8472, %v7995
    %v8474 = vadd.f32 %v8473, %v7999
    %v8475 = vadd.f32 %v8474, %v8003
    %v8476 = vadd.f32 %v8475, %v8007
    %v8477 = vadd.f32 %v8476, %v8011
    %v8478 = vadd.f32 %v8477, %v8015
    %v8479 = vadd.f32 %v8478, %v8019
    %v8480 = vadd.f32 %v8479, %v8023
    %v8481 = vadd.f32 %v8480, %v8027
    %v8482 = vadd.f32 %v8481, %v8031
    %v8483 = vadd.f32 %v8482, %v8035
    %v8484 = vadd.f32 %v8483, %v8039
    %v8485 = vadd.f32 %v8484, %v8043
    %v8486 = vadd.f32 %v8485, %v8047
    %v8487 = vadd.f32 %v8486, %v8051
    %v8488 = vadd.f32 %v8487, %v8055
    %v8489 = vadd.f32 %v8488, %v8059
    %v8490 = vadd.f32 %v8489, %v8063
    %v8491 = vadd.f32 %v8490, %v8067
    %v8492 = vadd.f32 %v8491, %v8071
    %v8493 = vadd.f32 %v8492, %v8075
    %v8494 = vadd.f32 %v8493, %v8079
    %v8495 = vadd.f32 %v8494, %v8083
    %v8496 = vadd.f32 %v8495, %v8087
    %v8497 = vadd.f32 %v8496, %v8091
    %v8498 = vadd.f32 %v8497, %v8095
    %v8499 = vadd.f32 %v8498, %v8099
    %v8500 = vadd.f32 %v8499, %v8103
    %v8501 = vadd.f32 %v8500, %v8107
    %v8502 = vadd.f32 %v8501, %v8111
    %v8503 = vadd.f32 %v8502, %v8115
    %v8504 = vadd.f32 %v8503, %v8119
    %v8505 = vadd.f32 %v8504, %v8123
    %v8506 = vadd.f32 %v8505, %v8127
    %v8507 = vadd.f32 %v8506, %v8131
    %v8508 = vadd.f32 %v8507, %v8135
    %v8509 = vadd.f32 %v8508, %v8139
    %v8510 = vadd.f32 %v8509, %v8143
    %v8511 = vadd.f32 %v8510, %v8147
    %v8512 = vadd.f32 %v8511, %v8151
    %v8513 = vadd.f32 %v8512, %v8155
    %v8514 = vadd.f32 %v8513, %v8159
    %v8515 = vadd.f32 %v8514, %v8163
    %v8516 = vadd.f32 %v8515, %v8167
    %v8517 = vadd.f32 %v8516, %v8171
    %v8518 = vadd.f32 %v8517, %v8175
    %v8519 = vadd.f32 %v8518, %v8179
    %v8520 = vadd.f32 %v8519, %v8183
    %v8521 = vadd.f32 %v8520, %v8187
    %v8522 = vadd.f32 %v8521, %v8191
    %v8523 = vadd.f32 %v8522, %v8195
    %v8524 = vadd.f32 %v8523, %v8199
    %v8525 = vadd.f32 %v8524, %v8203
    %v8526 = vadd.f32 %v8525, %v8207
    %v8527 = vadd.f32 %v8526, %v8211
    %v8528 = vadd.f32 %v8527, %v8215
    %v8529 = vadd.f32 %v8528, %v8219
    %v8530 = vadd.f32 %v8529, %v8223
    %v8531 = vadd.f32 %v8530, %v8227
    %v8532 = vadd.f32 %v8531, %v8231
    %v8533 = vadd.f32 %v8532, %v8235
    %v8534 = vadd.f32 %v8533, %v8239
    %v8535 = vadd.f32 %v8534, %v8243
    %v8536 = vadd.f32 %v8535, %v8247
    %v8537 = vadd.f32 %v8536, %v8251
    %v8538 = vadd.f32 %v8537, %v8255
    %v8539 = vadd.f32 %v8538, %v8259
    %v8540 = vadd.f32 %v8539, %v8263
    %v8541 = vadd.f32 %v8540, %v8267
    %v8542 = vadd.f32 %v8541, %v8271
    %v8543 = vadd.f32 %v8542, %v8275
    %v8544 = vadd.f32 %v8543, %v8279
    %v8545 = vadd.f32 %v8544, %v8283
    %v8546 = vadd.f32 %v8545, %v8287
    %v8547 = vadd.f32 %v8546, %v8291
    %v8548 = vadd.f32 %v8547, %v8295
    %v8549 = vadd.f32 %v8548, %v8299
    %v8550 = vadd.f32 %v8549, %v8303
    %v8551 = vadd.f32 %v8550, %v8307
    %v8552 = vadd.f32 %v8551, %v8311
    %v8553 = vadd.f32 %v8552, %v8315
    %v8554 = vadd.f32 %v8553, %v8319
    %v8555 = vadd.f32 %v8554, %v8323
    %v8556 = vadd.f32 %v8555, %v8327
    %v8557 = vadd.f32 %v8556, %v8331
    %v8558 = vadd.f32 %v8557, %v8335
    %v8559 = vadd.f32 %v8558, %v8339
    %v8560 = vadd.f32 %v8559, %v8343
    %v8561 = vadd.f32 %v8560, %v8347
    %v8562 = vadd.f32 %v8561, %v8351
    %v8563 = vadd.f32 %v8562, %v8355
    %v8564 = vadd.f32 %v8563, %v8359
    %v8565 = vadd.f32 %v8564, %v8363
    %v8566 = vadd.f32 %v8565, %v8367
    %v8567 = vadd.f32 %v8566, %v8371
    %v8568 = vadd.f32 %v8567, %v8375
    %v8569 = vadd.f32 %v8568, %v8379
    %v8570 = vadd.f32 %v8569, %v8383
    %v8571 = vadd.f32 %v8570, %v8387
    %v8572 = vadd.f32 %v8571, %v8391
    %v8573 = vadd.f32 %v8572, %v8395
    %v8574 = vadd.f32 %v8573, %v8399
    %v8575 = vadd.f32 %v8574, %v8403
    %v8576 = vadd.f32 %v8575, %v8407
    %v8577 = vadd.f32 %v8576, %v8411
    %v8578 = vadd.f32 %v8577, %v8415
    %v8579 = vadd.f32 %v8578, %v8419
    %v8580 = vadd.f32 %v8579, %v8423
    %v8581 = vadd.f32 %v8580, %v8427
    %v8582 = vadd.f32 %v8581, %v8431
    %v8583 = vadd.f32 %v8582, %v8435
    %v8584 = vadd.f32 %v8583, %v8439
    %v8585 = vadd.f32 %v8584, %v8443
    %v8586 = vadd.f32 %v8585, %v8447
    %v8587 = vadd.f32 %v8586, %v8451
    %v8588 = vadd.f32 %v8587, %v8455
    %v8589 = vadd.f32 %v8588, %v8459
    %v8590 = vadd.f32 %v7952, %v7956
    %v8591 = vadd.f32 %v8590, %v7960
    %v8592 = vadd.f32 %v8591, %v7964
    %v8593 = vadd.f32 %v8592, %v7968
    %v8594 = vadd.f32 %v8593, %v7972
    %v8595 = vadd.f32 %v8594, %v7976
    %v8596 = vadd.f32 %v8595, %v7980
    %v8597 = vadd.f32 %v8596, %v7984
    %v8598 = vadd.f32 %v8597, %v7988
    %v8599 = vadd.f32 %v8598, %v7992
    %v8600 = vadd.f32 %v8599, %v7996
    %v8601 = vadd.f32 %v8600, %v8000
    %v8602 = vadd.f32 %v8601, %v8004
    %v8603 = vadd.f32 %v8602, %v8008
    %v8604 = vadd.f32 %v8603, %v8012
    %v8605 = vadd.f32 %v8604, %v8016
    %v8606 = vadd.f32 %v8605, %v8020
    %v8607 = vadd.f32 %v8606, %v8024
    %v8608 = vadd.f32 %v8607, %v8028
    %v8609 = vadd.f32 %v8608, %v8032
    %v8610 = vadd.f32 %v8609, %v8036
    %v8611 = vadd.f32 %v8610, %v8040
    %v8612 = vadd.f32 %v8611, %v8044
    %v8613 = vadd.f32 %v8612, %v8048
    %v8614 = vadd.f32 %v8613, %v8052
    %v8615 = vadd.f32 %v8614, %v8056
    %v8616 = vadd.f32 %v8615, %v8060
    %v8617 = vadd.f32 %v8616, %v8064
    %v8618 = vadd.f32 %v8617, %v8068
    %v8619 = vadd.f32 %v8618, %v8072
    %v8620 = vadd.f32 %v8619, %v8076
    %v8621 = vadd.f32 %v8620, %v8080
    %v8622 = vadd.f32 %v8621, %v8084
    %v8623 = vadd.f32 %v8622, %v8088
    %v8624 = vadd.f32 %v8623, %v8092
    %v8625 = vadd.f32 %v8624, %v8096
    %v8626 = vadd.f32 %v8625, %v8100
    %v8627 = vadd.f32 %v8626, %v8104
    %v8628 = vadd.f32 %v8627, %v8108
    %v8629 = vadd.f32 %v8628, %v8112
    %v8630 = vadd.f32 %v8629, %v8116
    %v8631 = vadd.f32 %v8630, %v8120
    %v8632 = vadd.f32 %v8631, %v8124
    %v8633 = vadd.f32 %v8632, %v8128
    %v8634 = vadd.f32 %v8633, %v8132
    %v8635 = vadd.f32 %v8634, %v8136
    %v8636 = vadd.f32 %v8635, %v8140
    %v8637 = vadd.f32 %v8636, %v8144
    %v8638 = vadd.f32 %v8637, %v8148
    %v8639 = vadd.f32 %v8638, %v8152
    %v8640 = vadd.f32 %v8639, %v8156
    %v8641 = vadd.f32 %v8640, %v8160
    %v8642 = vadd.f32 %v8641, %v8164
    %v8643 = vadd.f32 %v8642, %v8168
    %v8644 = vadd.f32 %v8643, %v8172
    %v8645 = vadd.f32 %v8644, %v8176
    %v8646 = vadd.f32 %v8645, %v8180
    %v8647 = vadd.f32 %v8646, %v8184
    %v8648 = vadd.f32 %v8647, %v8188
    %v8649 = vadd.f32 %v8648, %v8192
    %v8650 = vadd.f32 %v8649, %v8196
    %v8651 = vadd.f32 %v8650, %v8200
    %v8652 = vadd.f32 %v8651, %v8204
    %v8653 = vadd.f32 %v8652, %v8208
    %v8654 = vadd.f32 %v8653, %v8212
    %v8655 = vadd.f32 %v8654, %v8216
    %v8656 = vadd.f32 %v8655, %v8220
    %v8657 = vadd.f32 %v8656, %v8224
    %v8658 = vadd.f32 %v8657, %v8228
    %v8659 = vadd.f32 %v8658, %v8232
    %v8660 = vadd.f32 %v8659, %v8236
    %v8661 = vadd.f32 %v8660, %v8240
    %v8662 = vadd.f32 %v8661, %v8244
    %v8663 = vadd.f32 %v8662, %v8248
    %v8664 = vadd.f32 %v8663, %v8252
    %v8665 = vadd.f32 %v8664, %v8256
    %v8666 = vadd.f32 %v8665, %v8260
    %v8667 = vadd.f32 %v8666, %v8264
    %v8668 = vadd.f32 %v8667, %v8268
    %v8669 = vadd.f32 %v8668, %v8272
    %v8670 = vadd.f32 %v8669, %v8276
    %v8671 = vadd.f32 %v8670, %v8280
    %v8672 = vadd.f32 %v8671, %v8284
    %v8673 = vadd.f32 %v8672, %v8288
    %v8674 = vadd.f32 %v8673, %v8292
    %v8675 = vadd.f32 %v8674, %v8296
    %v8676 = vadd.f32 %v8675, %v8300
    %v8677 = vadd.f32 %v8676, %v8304
    %v8678 = vadd.f32 %v8677, %v8308
    %v8679 = vadd.f32 %v8678, %v8312
    %v8680 = vadd.f32 %v8679, %v8316
    %v8681 = vadd.f32 %v8680, %v8320
    %v8682 = vadd.f32 %v8681, %v8324
    %v8683 = vadd.f32 %v8682, %v8328
    %v8684 = vadd.f32 %v8683, %v8332
    %v8685 = vadd.f32 %v8684, %v8336
    %v8686 = vadd.f32 %v8685, %v8340
    %v8687 = vadd.f32 %v8686, %v8344
    %v8688 = vadd.f32 %v8687, %v8348
    %v8689 = vadd.f32 %v8688, %v8352
    %v8690 = vadd.f32 %v8689, %v8356
    %v8691 = vadd.f32 %v8690, %v8360
    %v8692 = vadd.f32 %v8691, %v8364
    %v8693 = vadd.f32 %v8692, %v8368
    %v8694 = vadd.f32 %v8693, %v8372
    %v8695 = vadd.f32 %v8694, %v8376
    %v8696 = vadd.f32 %v8695, %v8380
    %v8697 = vadd.f32 %v8696, %v8384
    %v8698 = vadd.f32 %v8697, %v8388
    %v8699 = vadd.f32 %v8698, %v8392
    %v8700 = vadd.f32 %v8699, %v8396
    %v8701 = vadd.f32 %v8700, %v8400
    %v8702 = vadd.f32 %v8701, %v8404
    %v8703 = vadd.f32 %v8702, %v8408
    %v8704 = vadd.f32 %v8703, %v8412
    %v8705 = vadd.f32 %v8704, %v8416
    %v8706 = vadd.f32 %v8705, %v8420
    %v8707 = vadd.f32 %v8706, %v8424
    %v8708 = vadd.f32 %v8707, %v8428
    %v8709 = vadd.f32 %v8708, %v8432
    %v8710 = vadd.f32 %v8709, %v8436
    %v8711 = vadd.f32 %v8710, %v8440
    %v8712 = vadd.f32 %v8711, %v8444
    %v8713 = vadd.f32 %v8712, %v8448
    %v8714 = vadd.f32 %v8713, %v8452
    %v8715 = vadd.f32 %v8714, %v8456
    %v8716 = vadd.f32 %v8715, %v8460
    %v8717 = vadd.f32 %v7953, %v7957
    %v8718 = vadd.f32 %v8717, %v7961
    %v8719 = vadd.f32 %v8718, %v7965
    %v8720 = vadd.f32 %v8719, %v7969
    %v8721 = vadd.f32 %v8720, %v7973
    %v8722 = vadd.f32 %v8721, %v7977
    %v8723 = vadd.f32 %v8722, %v7981
    %v8724 = vadd.f32 %v8723, %v7985
    %v8725 = vadd.f32 %v8724, %v7989
    %v8726 = vadd.f32 %v8725, %v7993
    %v8727 = vadd.f32 %v8726, %v7997
    %v8728 = vadd.f32 %v8727, %v8001
    %v8729 = vadd.f32 %v8728, %v8005
    %v8730 = vadd.f32 %v8729, %v8009
    %v8731 = vadd.f32 %v8730, %v8013
    %v8732 = vadd.f32 %v8731, %v8017
    %v8733 = vadd.f32 %v8732, %v8021
    %v8734 = vadd.f32 %v8733, %v8025
    %v8735 = vadd.f32 %v8734, %v8029
    %v8736 = vadd.f32 %v8735, %v8033
    %v8737 = vadd.f32 %v8736, %v8037
    %v8738 = vadd.f32 %v8737, %v8041
    %v8739 = vadd.f32 %v8738, %v8045
    %v8740 = vadd.f32 %v8739, %v8049
    %v8741 = vadd.f32 %v8740, %v8053
    %v8742 = vadd.f32 %v8741, %v8057
    %v8743 = vadd.f32 %v8742, %v8061
    %v8744 = vadd.f32 %v8743, %v8065
    %v8745 = vadd.f32 %v8744, %v8069
    %v8746 = vadd.f32 %v8745, %v8073
    %v8747 = vadd.f32 %v8746, %v8077
    %v8748 = vadd.f32 %v8747, %v8081
    %v8749 = vadd.f32 %v8748, %v8085
    %v8750 = vadd.f32 %v8749, %v8089
    %v8751 = vadd.f32 %v8750, %v8093
    %v8752 = vadd.f32 %v8751, %v8097
    %v8753 = vadd.f32 %v8752, %v8101
    %v8754 = vadd.f32 %v8753, %v8105
    %v8755 = vadd.f32 %v8754, %v8109
    %v8756 = vadd.f32 %v8755, %v8113
    %v8757 = vadd.f32 %v8756, %v8117
    %v8758 = vadd.f32 %v8757, %v8121
    %v8759 = vadd.f32 %v8758, %v8125
    %v8760 = vadd.f32 %v8759, %v8129
    %v8761 = vadd.f32 %v8760, %v8133
    %v8762 = vadd.f32 %v8761, %v8137
    %v8763 = vadd.f32 %v8762, %v8141
    %v8764 = vadd.f32 %v8763, %v8145
    %v8765 = vadd.f32 %v8764, %v8149
    %v8766 = vadd.f32 %v8765, %v8153
    %v8767 = vadd.f32 %v8766, %v8157
    %v8768 = vadd.f32 %v8767, %v8161
    %v8769 = vadd.f32 %v8768, %v8165
    %v8770 = vadd.f32 %v8769, %v8169
    %v8771 = vadd.f32 %v8770, %v8173
    %v8772 = vadd.f32 %v8771, %v8177
    %v8773 = vadd.f32 %v8772, %v8181
    %v8774 = vadd.f32 %v8773, %v8185
    %v8775 = vadd.f32 %v8774, %v8189
    %v8776 = vadd.f32 %v8775, %v8193
    %v8777 = vadd.f32 %v8776, %v8197
    %v8778 = vadd.f32 %v8777, %v8201
    %v8779 = vadd.f32 %v8778, %v8205
    %v8780 = vadd.f32 %v8779, %v8209
    %v8781 = vadd.f32 %v8780, %v8213
    %v8782 = vadd.f32 %v8781, %v8217
    %v8783 = vadd.f32 %v8782, %v8221
    %v8784 = vadd.f32 %v8783, %v8225
    %v8785 = vadd.f32 %v8784, %v8229
    %v8786 = vadd.f32 %v8785, %v8233
    %v8787 = vadd.f32 %v8786, %v8237
    %v8788 = vadd.f32 %v8787, %v8241
    %v8789 = vadd.f32 %v8788, %v8245
    %v8790 = vadd.f32 %v8789, %v8249
    %v8791 = vadd.f32 %v8790, %v8253
    %v8792 = vadd.f32 %v8791, %v8257
    %v8793 = vadd.f32 %v8792, %v8261
    %v8794 = vadd.f32 %v8793, %v8265
    %v8795 = vadd.f32 %v8794, %v8269
    %v8796 = vadd.f32 %v8795, %v8273
    %v8797 = vadd.f32 %v8796, %v8277
    %v8798 = vadd.f32 %v8797, %v8281
    %v8799 = vadd.f32 %v8798, %v8285
    %v8800 = vadd.f32 %v8799, %v8289
    %v8801 = vadd.f32 %v8800, %v8293
    %v8802 = vadd.f32 %v8801, %v8297
    %v8803 = vadd.f32 %v8802, %v8301
    %v8804 = vadd.f32 %v8803, %v8305
    %v8805 = vadd.f32 %v8804, %v8309
    %v8806 = vadd.f32 %v8805, %v8313
    %v8807 = vadd.f32 %v8806, %v8317
    %v8808 = vadd.f32 %v8807, %v8321
    %v8809 = vadd.f32 %v8808, %v8325
    %v8810 = vadd.f32 %v8809, %v8329
    %v8811 = vadd.f32 %v8810, %v8333
    %v8812 = vadd.f32 %v8811, %v8337
    %v8813 = vadd.f32 %v8812, %v8341
    %v8814 = vadd.f32 %v8813, %v8345
    %v8815 = vadd.f32 %v8814, %v8349
    %v8816 = vadd.f32 %v8815, %v8353
    %v8817 = vadd.f32 %v8816, %v8357
    %v8818 = vadd.f32 %v8817, %v8361
    %v8819 = vadd.f32 %v8818, %v8365
    %v8820 = vadd.f32 %v8819, %v8369
    %v8821 = vadd.f32 %v8820, %v8373
    %v8822 = vadd.f32 %v8821, %v8377
    %v8823 = vadd.f32 %v8822, %v8381
    %v8824 = vadd.f32 %v8823, %v8385
    %v8825 = vadd.f32 %v8824, %v8389
    %v8826 = vadd.f32 %v8825, %v8393
    %v8827 = vadd.f32 %v8826, %v8397
    %v8828 = vadd.f32 %v8827, %v8401
    %v8829 = vadd.f32 %v8828, %v8405
    %v8830 = vadd.f32 %v8829, %v8409
    %v8831 = vadd.f32 %v8830, %v8413
    %v8832 = vadd.f32 %v8831, %v8417
    %v8833 = vadd.f32 %v8832, %v8421
    %v8834 = vadd.f32 %v8833, %v8425
    %v8835 = vadd.f32 %v8834, %v8429
    %v8836 = vadd.f32 %v8835, %v8433
    %v8837 = vadd.f32 %v8836, %v8437
    %v8838 = vadd.f32 %v8837, %v8441
    %v8839 = vadd.f32 %v8838, %v8445
    %v8840 = vadd.f32 %v8839, %v8449
    %v8841 = vadd.f32 %v8840, %v8453
    %v8842 = vadd.f32 %v8841, %v8457
    %v8843 = vadd.f32 %v8842, %v8461
    %v8844 = vadd.f32 %v7954, %v7958
    %v8845 = vadd.f32 %v8844, %v7962
    %v8846 = vadd.f32 %v8845, %v7966
    %v8847 = vadd.f32 %v8846, %v7970
    %v8848 = vadd.f32 %v8847, %v7974
    %v8849 = vadd.f32 %v8848, %v7978
    %v8850 = vadd.f32 %v8849, %v7982
    %v8851 = vadd.f32 %v8850, %v7986
    %v8852 = vadd.f32 %v8851, %v7990
    %v8853 = vadd.f32 %v8852, %v7994
    %v8854 = vadd.f32 %v8853, %v7998
    %v8855 = vadd.f32 %v8854, %v8002
    %v8856 = vadd.f32 %v8855, %v8006
    %v8857 = vadd.f32 %v8856, %v8010
    %v8858 = vadd.f32 %v8857, %v8014
    %v8859 = vadd.f32 %v8858, %v8018
    %v8860 = vadd.f32 %v8859, %v8022
    %v8861 = vadd.f32 %v8860, %v8026
    %v8862 = vadd.f32 %v8861, %v8030
    %v8863 = vadd.f32 %v8862, %v8034
    %v8864 = vadd.f32 %v8863, %v8038
    %v8865 = vadd.f32 %v8864, %v8042
    %v8866 = vadd.f32 %v8865, %v8046
    %v8867 = vadd.f32 %v8866, %v8050
    %v8868 = vadd.f32 %v8867, %v8054
    %v8869 = vadd.f32 %v8868, %v8058
    %v8870 = vadd.f32 %v8869, %v8062
    %v8871 = vadd.f32 %v8870, %v8066
    %v8872 = vadd.f32 %v8871, %v8070
    %v8873 = vadd.f32 %v8872, %v8074
    %v8874 = vadd.f32 %v8873, %v8078
    %v8875 = vadd.f32 %v8874, %v8082
    %v8876 = vadd.f32 %v8875, %v8086
    %v8877 = vadd.f32 %v8876, %v8090
    %v8878 = vadd.f32 %v8877, %v8094
    %v8879 = vadd.f32 %v8878, %v8098
    %v8880 = vadd.f32 %v8879, %v8102
    %v8881 = vadd.f32 %v8880, %v8106
    %v8882 = vadd.f32 %v8881, %v8110
    %v8883 = vadd.f32 %v8882, %v8114
    %v8884 = vadd.f32 %v8883, %v8118
    %v8885 = vadd.f32 %v8884, %v8122
    %v8886 = vadd.f32 %v8885, %v8126
    %v8887 = vadd.f32 %v8886, %v8130
    %v8888 = vadd.f32 %v8887, %v8134
    %v8889 = vadd.f32 %v8888, %v8138
    %v8890 = vadd.f32 %v8889, %v8142
    %v8891 = vadd.f32 %v8890, %v8146
    %v8892 = vadd.f32 %v8891, %v8150
    %v8893 = vadd.f32 %v8892, %v8154
    %v8894 = vadd.f32 %v8893, %v8158
    %v8895 = vadd.f32 %v8894, %v8162
    %v8896 = vadd.f32 %v8895, %v8166
    %v8897 = vadd.f32 %v8896, %v8170
    %v8898 = vadd.f32 %v8897, %v8174
    %v8899 = vadd.f32 %v8898, %v8178
    %v8900 = vadd.f32 %v8899, %v8182
    %v8901 = vadd.f32 %v8900, %v8186
    %v8902 = vadd.f32 %v8901, %v8190
    %v8903 = vadd.f32 %v8902, %v8194
    %v8904 = vadd.f32 %v8903, %v8198
    %v8905 = vadd.f32 %v8904, %v8202
    %v8906 = vadd.f32 %v8905, %v8206
    %v8907 = vadd.f32 %v8906, %v8210
    %v8908 = vadd.f32 %v8907, %v8214
    %v8909 = vadd.f32 %v8908, %v8218
    %v8910 = vadd.f32 %v8909, %v8222
    %v8911 = vadd.f32 %v8910, %v8226
    %v8912 = vadd.f32 %v8911, %v8230
    %v8913 = vadd.f32 %v8912, %v8234
    %v8914 = vadd.f32 %v8913, %v8238
    %v8915 = vadd.f32 %v8914, %v8242
    %v8916 = vadd.f32 %v8915, %v8246
    %v8917 = vadd.f32 %v8916, %v8250
    %v8918 = vadd.f32 %v8917, %v8254
    %v8919 = vadd.f32 %v8918, %v8258
    %v8920 = vadd.f32 %v8919, %v8262
    %v8921 = vadd.f32 %v8920, %v8266
    %v8922 = vadd.f32 %v8921, %v8270
    %v8923 = vadd.f32 %v8922, %v8274
    %v8924 = vadd.f32 %v8923, %v8278
    %v8925 = vadd.f32 %v8924, %v8282
    %v8926 = vadd.f32 %v8925, %v8286
    %v8927 = vadd.f32 %v8926, %v8290
    %v8928 = vadd.f32 %v8927, %v8294
    %v8929 = vadd.f32 %v8928, %v8298
    %v8930 = vadd.f32 %v8929, %v8302
    %v8931 = vadd.f32 %v8930, %v8306
    %v8932 = vadd.f32 %v8931, %v8310
    %v8933 = vadd.f32 %v8932, %v8314
    %v8934 = vadd.f32 %v8933, %v8318
    %v8935 = vadd.f32 %v8934, %v8322
    %v8936 = vadd.f32 %v8935, %v8326
    %v8937 = vadd.f32 %v8936, %v8330
    %v8938 = vadd.f32 %v8937, %v8334
    %v8939 = vadd.f32 %v8938, %v8338
    %v8940 = vadd.f32 %v8939, %v8342
    %v8941 = vadd.f32 %v8940, %v8346
    %v8942 = vadd.f32 %v8941, %v8350
    %v8943 = vadd.f32 %v8942, %v8354
    %v8944 = vadd.f32 %v8943, %v8358
    %v8945 = vadd.f32 %v8944, %v8362
    %v8946 = vadd.f32 %v8945, %v8366
    %v8947 = vadd.f32 %v8946, %v8370
    %v8948 = vadd.f32 %v8947, %v8374
    %v8949 = vadd.f32 %v8948, %v8378
    %v8950 = vadd.f32 %v8949, %v8382
    %v8951 = vadd.f32 %v8950, %v8386
    %v8952 = vadd.f32 %v8951, %v8390
    %v8953 = vadd.f32 %v8952, %v8394
    %v8954 = vadd.f32 %v8953, %v8398
    %v8955 = vadd.f32 %v8954, %v8402
    %v8956 = vadd.f32 %v8955, %v8406
    %v8957 = vadd.f32 %v8956, %v8410
    %v8958 = vadd.f32 %v8957, %v8414
    %v8959 = vadd.f32 %v8958, %v8418
    %v8960 = vadd.f32 %v8959, %v8422
    %v8961 = vadd.f32 %v8960, %v8426
    %v8962 = vadd.f32 %v8961, %v8430
    %v8963 = vadd.f32 %v8962, %v8434
    %v8964 = vadd.f32 %v8963, %v8438
    %v8965 = vadd.f32 %v8964, %v8442
    %v8966 = vadd.f32 %v8965, %v8446
    %v8967 = vadd.f32 %v8966, %v8450
    %v8968 = vadd.f32 %v8967, %v8454
    %v8969 = vadd.f32 %v8968, %v8458
    %v8970 = vadd.f32 %v8969, %v8462
    %v8971 = vadd.f32 %v8589, %v8716
    %v8972 = vadd.f32 %v8971, %v8843
    %v8973 = vadd.f32 %v8972, %v8970
    %v8974 = vrot.slane %v8973, 4
    %v8975 = vadd.f32 %v8973, %v8974
    %v8976 = vrot.slane %v8975, 2
    %v8977 = vadd.f32 %v8975, %v8976
    %v8978 = vrot.slane %v8977, 1
    %v8979 = vadd.f32 %v8977, %v8978
    %8980 = vst [vmem:[#allocation2] sm:$0x1] %v8979
    // Predicated region
    $region14: #{tpu_custom_call.1} parent=1 // pred_check
      _
    $region15: #{tpu_custom_call.1} parent=1 // pred_check_branch
      %8982 = sbr.rel (0) target = $region17
    $region16: #{tpu_custom_call.1} parent=1 // pred_region
      %s8984 = ssub.s32 16, 16
      %8985 = vsyncadd [#allocation3], %s8984
      %s8987 = sshll.u32 [#allocation2], 4
      %s8988 = int_to_ptr.vmem [resolvable:$true] %s8987
      %8990 = dma.vmem_to_hbm [thread:$0]  %s8988, 16, %s3, [#allocation3]
    $region17: #{tpu_custom_call.1} parent=1 // pred_fallthru
      _
    // Predicated region
    $region18: #{tpu_custom_call.1} parent=1 // pred_check
      _
    $region19: #{tpu_custom_call.1} parent=1 // pred_check_branch
      %8992 = sbr.rel (0) target = $region21
    $region20: #{tpu_custom_call.1} parent=1 // pred_region
      %8993 = dma.done [#allocation3], 16
    $region21: #{tpu_custom_call.1} parent=1 // pred_fallthru
      _
    %8994 = vsyncpa [#allocation3], 1

</llo_original>
